<compile_context>
chip_gen: v5e
topology: v5e:2x2
jax: 0.10.0
libtpu: 0.0.40
codegen_flags: <defaults>
</compile_context>

<pallas_src>
import functools

import jax
import jax.numpy as jnp
from jax.experimental import pallas as pl
from jax.experimental.pallas import tpu as pltpu

NEG_INF = -1e30   # finite stand-in for -inf in additive attention masks
LN_EPS = 1e-5

ENC_KEYS = ("w_qkv", "b_qkv", "wo", "bo", "ln1_g", "ln1_b",
            "w1", "b1", "w2t", "b2", "ln2_g", "ln2_b")
DEC_KEYS = ("w_qkv", "b_qkv", "wo", "bo", "ln1_g", "ln1_b",
            "wq_c", "bq_c", "w_kv_c", "b_kv_c", "wo_c", "bo_c",
            "ln2_g", "ln2_b",
            "w1", "b1", "w2t", "b2", "ln3_g", "ln3_b")


def _round_up(x, m):
    return ((x + m - 1) // m) * m


# --------------------------- in-kernel helpers -------------------------------

def _layer_norm(y, g, b, eps):
    """LayerNorm over the last axis; g/b are (1, D) f32."""
    mu = jnp.mean(y, axis=-1, keepdims=True)
    d = y - mu
    var = jnp.mean(d * d, axis=-1, keepdims=True)
    return d * jax.lax.rsqrt(var + eps) * g + b


def _mm(x_f32, w_bf16):
    """MXU matmul: f32 activation cast to bf16, bf16 weight, f32 accumulate."""
    return jnp.dot(x_f32.astype(jnp.bfloat16), w_bf16,
                   preferred_element_type=jnp.float32)


def _mha_proj(q, k, v, bias, wo_heads, num_heads):
    """Multi-head attention with the output projection folded into the loop.

    q: (Sq, D) f32; k, v: (Sk, D) f32; bias: additive f32 (1|Sq, Sk) or None;
    wo_heads: (H, Dh, D) bf16 = rows of the output projection, split per head.
    Returns concat_h(softmax(q_h k_h^T * scale + bias) v_h) @ Wo as (Sq, D)
    f32, but computed as sum_h (attn_h @ Wo[h]) so no head concatenation or
    lane assembly is ever materialized.
    """
    sq, d = q.shape
    dh = d // num_heads
    scale = 1.0 / (dh ** 0.5)
    acc = jnp.zeros((sq, d), jnp.float32)
    for h in range(num_heads):
        lo = h * dh
        qh = q[:, lo:lo + dh] * scale
        kh = k[:, lo:lo + dh]
        vh = v[:, lo:lo + dh]
        # (Sq, Dh) x (Sk, Dh) -> (Sq, Sk), contracting last dims (no transpose).
        s = jax.lax.dot_general(qh, kh, (((1,), (1,)), ((), ())),
                                preferred_element_type=jnp.float32)
        if bias is not None:
            s = s + bias
        s = s - jnp.max(s, axis=-1, keepdims=True)
        p = jnp.exp(s)
        inv = pl.reciprocal(jnp.sum(p, axis=-1, keepdims=True), approx=True)
        oh = jnp.dot(p, vh, preferred_element_type=jnp.float32) * inv
        acc = acc + jnp.dot(oh.astype(jnp.bfloat16), wo_heads[h],
                            preferred_element_type=jnp.float32)
    return acc


def _ffn(x, w1, b1, w2t, b2):
    """relu(x @ w1 + b1) @ w2 + b2 with w2 stored transposed as (D, F)."""
    h = _mm(x, w1) + b1
    h = jnp.maximum(h, 0.0)
    # TODO(synk): for larger row counts, stream F over an 'arbitrary' grid
    # axis with a VMEM accumulator instead of holding (rows, F) live.
    y = jax.lax.dot_general(h.astype(jnp.bfloat16), w2t,
                            (((1,), (1,)), ((), ())),
                            preferred_element_type=jnp.float32)
    return y + b2


# ------------------------------ the fused kernel ------------------------------

def _transformer_kernel(*refs, num_heads, n_enc, n_dec, eps):
    x_src_ref, x_tgt_ref, src_bias_ref, tgt_bias_ref = refs[:4]
    enc = refs[4:4 + len(ENC_KEYS)]
    dec = refs[4 + len(ENC_KEYS):4 + len(ENC_KEYS) + len(DEC_KEYS)]
    out_w_ref, out_b_ref, o_ref = refs[-3], refs[-2], refs[-1]

    (e_w_qkv, e_b_qkv, e_wo, e_bo, e_ln1_g, e_ln1_b,
     e_w1, e_b1, e_w2t, e_b2, e_ln2_g, e_ln2_b) = enc
    (d_w_qkv, d_b_qkv, d_wo, d_bo, d_ln1_g, d_ln1_b,
     d_wq_c, d_bq_c, d_w_kv_c, d_b_kv_c, d_wo_c, d_bo_c, d_ln2_g, d_ln2_b,
     d_w1, d_b1, d_w2t, d_b2, d_ln3_g, d_ln3_b) = dec

    x = x_src_ref[0]                 # (Ss, D) f32 — embedded source
    y = x_tgt_ref[0]                 # (St, D) f32 — embedded target
    src_bias = src_bias_ref[0]       # (1, Ss) additive key-padding bias
    tgt_pad = tgt_bias_ref[0]        # (1, St)
    dm = x.shape[-1]
    st = y.shape[0]

    # causal + key-padding bias for decoder self-attention, built in-kernel.
    rows = jax.lax.broadcasted_iota(jnp.int32, (st, st), 0)
    cols = jax.lax.broadcasted_iota(jnp.int32, (st, st), 1)
    tgt_bias = jnp.where(cols > rows, NEG_INF, 0.0).astype(jnp.float32) + tgt_pad

    # ------------------------------ encoder ----------------------------------
    for l in range(n_enc):
        qkv = _mm(x, e_w_qkv[l]) + e_b_qkv[l]                    # fused QKV
        a = _mha_proj(qkv[:, :dm], qkv[:, dm:2 * dm], qkv[:, 2 * dm:],
                      src_bias, e_wo[l], num_heads)
        x = _layer_norm(a + e_bo[l] + x, e_ln1_g[l], e_ln1_b[l], eps)
        f = _ffn(x, e_w1[l], e_b1[l], e_w2t[l], e_b2[l])
        x = _layer_norm(f + x, e_ln2_g[l], e_ln2_b[l], eps)
    memory = x

    # ------------------------------ decoder ----------------------------------
    for l in range(n_dec):
        # masked self-attention
        qkv = _mm(y, d_w_qkv[l]) + d_b_qkv[l]
        a = _mha_proj(qkv[:, :dm], qkv[:, dm:2 * dm], qkv[:, 2 * dm:],
                      tgt_bias, d_wo[l], num_heads)
        y = _layer_norm(a + d_bo[l] + y, d_ln1_g[l], d_ln1_b[l], eps)

        # cross-attention over encoder memory (no mask passed upstream)
        qc = _mm(y, d_wq_c[l]) + d_bq_c[l]
        kv = _mm(memory, d_w_kv_c[l]) + d_b_kv_c[l]              # fused KV
        a = _mha_proj(qc, kv[:, :dm], kv[:, dm:], None, d_wo_c[l], num_heads)
        y = _layer_norm(a + d_bo_c[l] + y, d_ln2_g[l], d_ln2_b[l], eps)

        # feed-forward
        f = _ffn(y, d_w1[l], d_b1[l], d_w2t[l], d_b2[l])
        y = _layer_norm(f + y, d_ln3_g[l], d_ln3_b[l], eps)

    # final vocabulary projection (columns lane-padded to a multiple of 128)
    o_ref[0] = _mm(y, out_w_ref[...]) + out_b_ref[...]


# -------------------------------- wrapper -------------------------------------

def transformer_forward(params, src, tgt, *, num_heads, pad_id, n_fr_words):
    B, s_src = src.shape
    s_tgt = tgt.shape[1]
    d_model = params["en_embedding"].shape[1]
    n_enc = params["enc"]["w_qkv"].shape[0]
    n_dec = params["dec"]["w_qkv"].shape[0]
    v_pad = params["out_w"].shape[1]

    # TODO(synk): embedding gathers and the final un-pad/permute stay in XLA
    # (single tiny ops); everything from the first encoder layer to the vocab
    # projection runs in ONE pallas_call with all weights resident in VMEM.
    x_src = jnp.take(params["en_embedding"], src, axis=0)        # (B, Ss, D)
    x_tgt = jnp.take(params["fr_embedding"], tgt, axis=0)        # (B, St, D)

    src_bias = jnp.where(src == pad_id, NEG_INF, 0.0).astype(jnp.float32)
    src_bias = src_bias.reshape(B, 1, s_src)
    tgt_bias = jnp.where(tgt == pad_id, NEG_INF, 0.0).astype(jnp.float32)
    tgt_bias = tgt_bias.reshape(B, 1, s_tgt)

    weight_args = ([params["enc"][k] for k in ENC_KEYS]
                   + [params["dec"][k] for k in DEC_KEYS]
                   + [params["out_w"], params["out_b"]])

    def _full_spec(a):
        nd = a.ndim
        return pl.BlockSpec(a.shape, lambda b, _nd=nd: (0,) * _nd)

    in_specs = [
        pl.BlockSpec((1, s_src, d_model), lambda b: (b, 0, 0)),
        pl.BlockSpec((1, s_tgt, d_model), lambda b: (b, 0, 0)),
        pl.BlockSpec((1, 1, s_src), lambda b: (b, 0, 0)),
        pl.BlockSpec((1, 1, s_tgt), lambda b: (b, 0, 0)),
    ] + [_full_spec(a) for a in weight_args]

    out = pl.pallas_call(
        functools.partial(_transformer_kernel, num_heads=num_heads,
                          n_enc=n_enc, n_dec=n_dec, eps=LN_EPS),
        out_shape=jax.ShapeDtypeStruct((B, s_tgt, v_pad), jnp.float32),
        grid=(B,),
        in_specs=in_specs,
        out_specs=pl.BlockSpec((1, s_tgt, v_pad), lambda b: (b, 0, 0)),
        compiler_params=pltpu.CompilerParams(
            dimension_semantics=("parallel",)),
    )(x_src, x_tgt, src_bias, tgt_bias, *weight_args)

    logits = out[:, :, :n_fr_words]
    return logits.transpose(0, 2, 1)                             # (B, n_fr, St)


# ----------------------------- parameter init ---------------------------------

def init_params(key, n_enc, n_dec, d_model, dim_ff, num_heads,
                n_en_words, n_fr_words):
    dh = d_model // num_heads
    v_pad = _round_up(n_fr_words, 128)
    keys = iter(jax.random.split(key, 32))

    def w(shape, scale=0.02):
        # MXU operands stored directly as bf16 (halves weight HBM/DMA bytes).
        return (scale * jax.random.normal(next(keys), shape)).astype(jnp.bfloat16)

    def zeros(shape):
        return jnp.zeros(shape, jnp.float32)

    def ones(shape):
        return jnp.ones(shape, jnp.float32)

    def enc_stack(L):
        return {
            "w_qkv": w((L, d_model, 3 * d_model)),
            "b_qkv": zeros((L, 1, 3 * d_model)),
            "wo":    w((L, num_heads, dh, d_model)),   # out-proj rows, per head
            "bo":    zeros((L, 1, d_model)),
            "ln1_g": ones((L, 1, d_model)), "ln1_b": zeros((L, 1, d_model)),
            "w1":    w((L, d_model, dim_ff)),
            "b1":    zeros((L, 1, dim_ff)),
            "w2t":   w((L, d_model, dim_ff)),          # stored transposed (lane-dense)
            "b2":    zeros((L, 1, d_model)),
            "ln2_g": ones((L, 1, d_model)), "ln2_b": zeros((L, 1, d_model)),
        }

    def dec_stack(L):
        return {
            "w_qkv": w((L, d_model, 3 * d_model)),
            "b_qkv": zeros((L, 1, 3 * d_model)),
            "wo":    w((L, num_heads, dh, d_model)),
            "bo":    zeros((L, 1, d_model)),
            "ln1_g": ones((L, 1, d_model)), "ln1_b": zeros((L, 1, d_model)),
            "wq_c":  w((L, d_model, d_model)),
            "bq_c":  zeros((L, 1, d_model)),
            "w_kv_c": w((L, d_model, 2 * d_model)),
            "b_kv_c": zeros((L, 1, 2 * d_model)),
            "wo_c":  w((L, num_heads, dh, d_model)),
            "bo_c":  zeros((L, 1, d_model)),
            "ln2_g": ones((L, 1, d_model)), "ln2_b": zeros((L, 1, d_model)),
            "w1":    w((L, d_model, dim_ff)),
            "b1":    zeros((L, 1, dim_ff)),
            "w2t":   w((L, d_model, dim_ff)),
            "b2":    zeros((L, 1, d_model)),
            "ln3_g": ones((L, 1, d_model)), "ln3_b": zeros((L, 1, d_model)),
        }

    out_w = jnp.zeros((d_model, v_pad), jnp.float32)
    out_w = out_w.at[:, :n_fr_words].set(
        0.02 * jax.random.normal(next(keys), (d_model, n_fr_words)))

    return {
        "en_embedding": jax.random.normal(
            next(keys), (n_en_words, d_model)).astype(jnp.float32),
        "fr_embedding": jax.random.normal(
            next(keys), (n_fr_words, d_model)).astype(jnp.float32),
        "enc": enc_stack(n_enc),
        "dec": dec_stack(n_dec),
        "out_w": out_w.astype(jnp.bfloat16),
        "out_b": jnp.zeros((1, v_pad), jnp.float32),
    }


# ---------------------------------- main ---------------------------------------

if __name__ == "__main__":
    n_encoder_layers = 2
    n_decoder_layers = 2
    d_model = 32
    num_heads = 4
    dim_feedforward = 2048          # PyTorch Transformer*Layer default
    n_en_words = 64
    n_fr_words = 48
    pad_token_id = 0
    B, S_src, S_tgt = 2, 8, 8

    root = jax.random.PRNGKey(0)
    k_params, k_src, k_tgt = jax.random.split(root, 3)

    params = init_params(k_params, n_encoder_layers, n_decoder_layers,
                         d_model, dim_feedforward, num_heads,
                         n_en_words, n_fr_words)

    src = jax.random.randint(k_src, (B, S_src), 1, n_en_words, dtype=jnp.int32)
    tgt = jax.random.randint(k_tgt, (B, S_tgt), 1, n_fr_words, dtype=jnp.int32)
    # trailing padding to exercise the key-padding masks
    src = src.at[:, -2:].set(pad_token_id)
    tgt = tgt.at[:, -1:].set(pad_token_id)

    fwd = jax.jit(functools.partial(transformer_forward,
                                    num_heads=num_heads,
                                    pad_id=pad_token_id,
                                    n_fr_words=n_fr_words))
    pred = fwd(params, src, tgt)
    pred = jax.block_until_ready(pred)

    assert pred.shape == (B, n_fr_words, S_tgt), pred.shape
    assert bool(jnp.all(jnp.isfinite(pred)))
    print("KERNEL_OK")
</pallas_src>

<mosaic_0001>
module attributes {stable_mosaic.version = 11 : i64} {
  func.func @_transformer_kernel(%arg0: i32, %arg1: memref<1x8x32xf32, #tpu.memory_space<vmem>>, %arg2: memref<1x8x32xf32, #tpu.memory_space<vmem>>, %arg3: memref<1x1x8xf32, #tpu.memory_space<vmem>>, %arg4: memref<1x1x8xf32, #tpu.memory_space<vmem>>, %arg5: memref<2x32x96xbf16, #tpu.memory_space<vmem>>, %arg6: memref<2x1x96xf32, #tpu.memory_space<vmem>>, %arg7: memref<2x4x8x32xbf16, #tpu.memory_space<vmem>>, %arg8: memref<2x1x32xf32, #tpu.memory_space<vmem>>, %arg9: memref<2x1x32xf32, #tpu.memory_space<vmem>>, %arg10: memref<2x1x32xf32, #tpu.memory_space<vmem>>, %arg11: memref<2x32x2048xbf16, #tpu.memory_space<vmem>>, %arg12: memref<2x1x2048xf32, #tpu.memory_space<vmem>>, %arg13: memref<2x32x2048xbf16, #tpu.memory_space<vmem>>, %arg14: memref<2x1x32xf32, #tpu.memory_space<vmem>>, %arg15: memref<2x1x32xf32, #tpu.memory_space<vmem>>, %arg16: memref<2x1x32xf32, #tpu.memory_space<vmem>>, %arg17: memref<2x32x96xbf16, #tpu.memory_space<vmem>>, %arg18: memref<2x1x96xf32, #tpu.memory_space<vmem>>, %arg19: memref<2x4x8x32xbf16, #tpu.memory_space<vmem>>, %arg20: memref<2x1x32xf32, #tpu.memory_space<vmem>>, %arg21: memref<2x1x32xf32, #tpu.memory_space<vmem>>, %arg22: memref<2x1x32xf32, #tpu.memory_space<vmem>>, %arg23: memref<2x32x32xbf16, #tpu.memory_space<vmem>>, %arg24: memref<2x1x32xf32, #tpu.memory_space<vmem>>, %arg25: memref<2x32x64xbf16, #tpu.memory_space<vmem>>, %arg26: memref<2x1x64xf32, #tpu.memory_space<vmem>>, %arg27: memref<2x4x8x32xbf16, #tpu.memory_space<vmem>>, %arg28: memref<2x1x32xf32, #tpu.memory_space<vmem>>, %arg29: memref<2x1x32xf32, #tpu.memory_space<vmem>>, %arg30: memref<2x1x32xf32, #tpu.memory_space<vmem>>, %arg31: memref<2x32x2048xbf16, #tpu.memory_space<vmem>>, %arg32: memref<2x1x2048xf32, #tpu.memory_space<vmem>>, %arg33: memref<2x32x2048xbf16, #tpu.memory_space<vmem>>, %arg34: memref<2x1x32xf32, #tpu.memory_space<vmem>>, %arg35: memref<2x1x32xf32, #tpu.memory_space<vmem>>, %arg36: memref<2x1x32xf32, #tpu.memory_space<vmem>>, %arg37: memref<32x128xbf16, #tpu.memory_space<vmem>>, %arg38: memref<1x128xf32, #tpu.memory_space<vmem>>, %arg39: memref<1x8x128xf32, #tpu.memory_space<vmem>>) attributes {dimension_semantics = [#tpu.dimension_semantics<parallel>], iteration_bounds = array<i64: 2>, scalar_prefetch = 0 : i64, scratch_operands = 0 : i64, tpu.core_type = #tpu.core_type<tc>, window_params = [{transform_indices = @transform_0, window_bounds = array<i64: 1, 8, 32>}, {transform_indices = @transform_1, window_bounds = array<i64: 1, 8, 32>}, {transform_indices = @transform_2, window_bounds = array<i64: 1, 1, 8>}, {transform_indices = @transform_3, window_bounds = array<i64: 1, 1, 8>}, {pipeline_mode = #tpu.pipeline_mode<synchronous>, transform_indices = @transform_4, window_bounds = array<i64: 2, 32, 96>}, {pipeline_mode = #tpu.pipeline_mode<synchronous>, transform_indices = @transform_5, window_bounds = array<i64: 2, 1, 96>}, {pipeline_mode = #tpu.pipeline_mode<synchronous>, transform_indices = @transform_6, window_bounds = array<i64: 2, 4, 8, 32>}, {pipeline_mode = #tpu.pipeline_mode<synchronous>, transform_indices = @transform_7, window_bounds = array<i64: 2, 1, 32>}, {pipeline_mode = #tpu.pipeline_mode<synchronous>, transform_indices = @transform_8, window_bounds = array<i64: 2, 1, 32>}, {pipeline_mode = #tpu.pipeline_mode<synchronous>, transform_indices = @transform_9, window_bounds = array<i64: 2, 1, 32>}, {pipeline_mode = #tpu.pipeline_mode<synchronous>, transform_indices = @transform_10, window_bounds = array<i64: 2, 32, 2048>}, {pipeline_mode = #tpu.pipeline_mode<synchronous>, transform_indices = @transform_11, window_bounds = array<i64: 2, 1, 2048>}, {pipeline_mode = #tpu.pipeline_mode<synchronous>, transform_indices = @transform_12, window_bounds = array<i64: 2, 32, 2048>}, {pipeline_mode = #tpu.pipeline_mode<synchronous>, transform_indices = @transform_13, window_bounds = array<i64: 2, 1, 32>}, {pipeline_mode = #tpu.pipeline_mode<synchronous>, transform_indices = @transform_14, window_bounds = array<i64: 2, 1, 32>}, {pipeline_mode = #tpu.pipeline_mode<synchronous>, transform_indices = @transform_15, window_bounds = array<i64: 2, 1, 32>}, {pipeline_mode = #tpu.pipeline_mode<synchronous>, transform_indices = @transform_16, window_bounds = array<i64: 2, 32, 96>}, {pipeline_mode = #tpu.pipeline_mode<synchronous>, transform_indices = @transform_17, window_bounds = array<i64: 2, 1, 96>}, {pipeline_mode = #tpu.pipeline_mode<synchronous>, transform_indices = @transform_18, window_bounds = array<i64: 2, 4, 8, 32>}, {pipeline_mode = #tpu.pipeline_mode<synchronous>, transform_indices = @transform_19, window_bounds = array<i64: 2, 1, 32>}, {pipeline_mode = #tpu.pipeline_mode<synchronous>, transform_indices = @transform_20, window_bounds = array<i64: 2, 1, 32>}, {pipeline_mode = #tpu.pipeline_mode<synchronous>, transform_indices = @transform_21, window_bounds = array<i64: 2, 1, 32>}, {pipeline_mode = #tpu.pipeline_mode<synchronous>, transform_indices = @transform_22, window_bounds = array<i64: 2, 32, 32>}, {pipeline_mode = #tpu.pipeline_mode<synchronous>, transform_indices = @transform_23, window_bounds = array<i64: 2, 1, 32>}, {pipeline_mode = #tpu.pipeline_mode<synchronous>, transform_indices = @transform_24, window_bounds = array<i64: 2, 32, 64>}, {pipeline_mode = #tpu.pipeline_mode<synchronous>, transform_indices = @transform_25, window_bounds = array<i64: 2, 1, 64>}, {pipeline_mode = #tpu.pipeline_mode<synchronous>, transform_indices = @transform_26, window_bounds = array<i64: 2, 4, 8, 32>}, {pipeline_mode = #tpu.pipeline_mode<synchronous>, transform_indices = @transform_27, window_bounds = array<i64: 2, 1, 32>}, {pipeline_mode = #tpu.pipeline_mode<synchronous>, transform_indices = @transform_28, window_bounds = array<i64: 2, 1, 32>}, {pipeline_mode = #tpu.pipeline_mode<synchronous>, transform_indices = @transform_29, window_bounds = array<i64: 2, 1, 32>}, {pipeline_mode = #tpu.pipeline_mode<synchronous>, transform_indices = @transform_30, window_bounds = array<i64: 2, 32, 2048>}, {pipeline_mode = #tpu.pipeline_mode<synchronous>, transform_indices = @transform_31, window_bounds = array<i64: 2, 1, 2048>}, {pipeline_mode = #tpu.pipeline_mode<synchronous>, transform_indices = @transform_32, window_bounds = array<i64: 2, 32, 2048>}, {pipeline_mode = #tpu.pipeline_mode<synchronous>, transform_indices = @transform_33, window_bounds = array<i64: 2, 1, 32>}, {pipeline_mode = #tpu.pipeline_mode<synchronous>, transform_indices = @transform_34, window_bounds = array<i64: 2, 1, 32>}, {pipeline_mode = #tpu.pipeline_mode<synchronous>, transform_indices = @transform_35, window_bounds = array<i64: 2, 1, 32>}, {pipeline_mode = #tpu.pipeline_mode<synchronous>, transform_indices = @transform_36, window_bounds = array<i64: 32, 128>}, {pipeline_mode = #tpu.pipeline_mode<synchronous>, transform_indices = @transform_37, window_bounds = array<i64: 1, 128>}, {transform_indices = @transform_38, window_bounds = array<i64: 1, 8, 128>}]} {
    %c0 = arith.constant 0 : index
    %c0_0 = arith.constant 0 : index
    %c0_1 = arith.constant 0 : index
    %0 = vector.load %arg1[%c0, %c0_0, %c0_1] : memref<1x8x32xf32, #tpu.memory_space<vmem>>, vector<1x8x32xf32>
    %1 = vector.shape_cast %0 : vector<1x8x32xf32> to vector<8x32xf32>
    %c0_2 = arith.constant 0 : index
    %c0_3 = arith.constant 0 : index
    %c0_4 = arith.constant 0 : index
    %2 = vector.load %arg2[%c0_2, %c0_3, %c0_4] : memref<1x8x32xf32, #tpu.memory_space<vmem>>, vector<1x8x32xf32>
    %3 = vector.shape_cast %2 : vector<1x8x32xf32> to vector<8x32xf32>
    %c0_5 = arith.constant 0 : index
    %c0_6 = arith.constant 0 : index
    %c0_7 = arith.constant 0 : index
    %4 = vector.load %arg3[%c0_5, %c0_6, %c0_7] : memref<1x1x8xf32, #tpu.memory_space<vmem>>, vector<1x1x8xf32>
    %5 = vector.shape_cast %4 : vector<1x1x8xf32> to vector<1x8xf32>
    %c0_8 = arith.constant 0 : index
    %c0_9 = arith.constant 0 : index
    %c0_10 = arith.constant 0 : index
    %6 = vector.load %arg4[%c0_8, %c0_9, %c0_10] : memref<1x1x8xf32, #tpu.memory_space<vmem>>, vector<1x1x8xf32>
    %7 = vector.shape_cast %6 : vector<1x1x8xf32> to vector<1x8xf32>
    %8 = tpu.iota {dimensions = array<i32: 0>} : vector<8x8xi32>
    %9 = tpu.iota {dimensions = array<i32: 1>} : vector<8x8xi32>
    %10 = arith.cmpi sgt, %9, %8 : vector<8x8xi32>
    %cst = arith.constant -1.000000e+30 : f32
    %cst_11 = arith.constant 0.000000e+00 : f32
    %11 = vector.broadcast %cst : f32 to vector<8x8xf32>
    %12 = vector.broadcast %cst_11 : f32 to vector<8x8xf32>
    %13 = arith.select %10, %11, %12 : vector<8x8xi1>, vector<8x8xf32>
    %14 = vector.broadcast %7 : vector<1x8xf32> to vector<8x8xf32>
    %15 = arith.addf %13, %14 : vector<8x8xf32>
    %c0_12 = arith.constant 0 : index
    %c0_13 = arith.constant 0 : index
    %c0_14 = arith.constant 0 : index
    %16 = vector.load %arg5[%c0_12, %c0_13, %c0_14] : memref<2x32x96xbf16, #tpu.memory_space<vmem>>, vector<1x32x96xbf16>
    %17 = vector.shape_cast %16 : vector<1x32x96xbf16> to vector<32x96xbf16>
    %18 = arith.truncf %1 : vector<8x32xf32> to vector<8x32xbf16>
    %cst_15 = arith.constant dense<0.000000e+00> : vector<8x96xf32>
    %19 = tpu.matmul %18, %17, %cst_15 {dimension_numbers = #tpu.dot_dimension_numbers<[1], [0], [0], [1], [0, 0, 1, 1], [], []>} : vector<8x32xbf16>, vector<32x96xbf16>, vector<8x96xf32> -> vector<8x96xf32>
    %c0_16 = arith.constant 0 : index
    %c0_17 = arith.constant 0 : index
    %c0_18 = arith.constant 0 : index
    %20 = vector.load %arg6[%c0_16, %c0_17, %c0_18] : memref<2x1x96xf32, #tpu.memory_space<vmem>>, vector<1x1x96xf32>
    %21 = vector.shape_cast %20 : vector<1x1x96xf32> to vector<1x96xf32>
    %22 = vector.broadcast %21 : vector<1x96xf32> to vector<8x96xf32>
    %23 = arith.addf %19, %22 : vector<8x96xf32>
    %24 = vector.extract_strided_slice %23 {offsets = [0, 0], sizes = [8, 32], strides = [1, 1]} : vector<8x96xf32> to vector<8x32xf32>
    %25 = vector.extract_strided_slice %23 {offsets = [0, 32], sizes = [8, 32], strides = [1, 1]} : vector<8x96xf32> to vector<8x32xf32>
    %26 = vector.extract_strided_slice %23 {offsets = [0, 64], sizes = [8, 32], strides = [1, 1]} : vector<8x96xf32> to vector<8x32xf32>
    %c0_19 = arith.constant 0 : index
    %c0_20 = arith.constant 0 : index
    %c0_21 = arith.constant 0 : index
    %c0_22 = arith.constant 0 : index
    %27 = vector.load %arg7[%c0_19, %c0_20, %c0_21, %c0_22] : memref<2x4x8x32xbf16, #tpu.memory_space<vmem>>, vector<1x4x8x32xbf16>
    %28 = vector.shape_cast %27 : vector<1x4x8x32xbf16> to vector<4x8x32xbf16>
    %cst_23 = arith.constant 0.000000e+00 : f32
    %29 = vector.broadcast %cst_23 : f32 to vector<8x32xf32>
    %30 = vector.extract_strided_slice %24 {offsets = [0, 0], sizes = [8, 8], strides = [1, 1]} : vector<8x32xf32> to vector<8x8xf32>
    %cst_24 = arith.constant 0.353553385 : f32
    %31 = vector.broadcast %cst_24 : f32 to vector<8x8xf32>
    %32 = arith.mulf %30, %31 : vector<8x8xf32>
    %33 = vector.extract_strided_slice %25 {offsets = [0, 0], sizes = [8, 8], strides = [1, 1]} : vector<8x32xf32> to vector<8x8xf32>
    %34 = vector.extract_strided_slice %26 {offsets = [0, 0], sizes = [8, 8], strides = [1, 1]} : vector<8x32xf32> to vector<8x8xf32>
    %cst_25 = arith.constant dense<0.000000e+00> : vector<8x8xf32>
    %35 = tpu.matmul %32, %33, %cst_25 {dimension_numbers = #tpu.dot_dimension_numbers<[1], [1], [0], [0], [0, 0, 1, 0], [], []>} : vector<8x8xf32>, vector<8x8xf32>, vector<8x8xf32> -> vector<8x8xf32>
    %36 = vector.broadcast %5 : vector<1x8xf32> to vector<8x8xf32>
    %37 = arith.addf %35, %36 : vector<8x8xf32>
    %cst_26 = arith.constant dense<0xFF800000> : vector<8xf32>
    %38 = vector.multi_reduction <maximumf>, %37, %cst_26 [1] : vector<8x8xf32> to vector<8xf32>
    %39 = vector.shape_cast %38 : vector<8xf32> to vector<8x1xf32>
    %40 = vector.broadcast %39 : vector<8x1xf32> to vector<8x8xf32>
    %41 = arith.subf %37, %40 : vector<8x8xf32>
    %42 = math.exp %41 : vector<8x8xf32>
    %cst_27 = arith.constant dense<0.000000e+00> : vector<8xf32>
    %43 = vector.multi_reduction <add>, %42, %cst_27 [1] : vector<8x8xf32> to vector<8xf32>
    %44 = vector.shape_cast %43 : vector<8xf32> to vector<8x1xf32>
    %45 = tpu.reciprocal %44 {approx = true} : vector<8x1xf32> -> vector<8x1xf32>
    %cst_28 = arith.constant dense<0.000000e+00> : vector<8x8xf32>
    %46 = tpu.matmul %42, %34, %cst_28 {dimension_numbers = #tpu.dot_dimension_numbers<[1], [0], [0], [1], [0, 0, 1, 1], [], []>} : vector<8x8xf32>, vector<8x8xf32>, vector<8x8xf32> -> vector<8x8xf32>
    %47 = vector.broadcast %45 : vector<8x1xf32> to vector<8x8xf32>
    %48 = arith.mulf %46, %47 : vector<8x8xf32>
    %49 = arith.truncf %48 : vector<8x8xf32> to vector<8x8xbf16>
    %50 = vector.extract_strided_slice %28 {offsets = [0, 0, 0], sizes = [1, 8, 32], strides = [1, 1, 1]} : vector<4x8x32xbf16> to vector<1x8x32xbf16>
    %51 = vector.shape_cast %50 : vector<1x8x32xbf16> to vector<8x32xbf16>
    %cst_29 = arith.constant dense<0.000000e+00> : vector<8x32xf32>
    %52 = tpu.matmul %49, %51, %cst_29 {dimension_numbers = #tpu.dot_dimension_numbers<[1], [0], [0], [1], [0, 0, 1, 1], [], []>} : vector<8x8xbf16>, vector<8x32xbf16>, vector<8x32xf32> -> vector<8x32xf32>
    %53 = arith.addf %29, %52 : vector<8x32xf32>
    %54 = vector.extract_strided_slice %24 {offsets = [0, 8], sizes = [8, 8], strides = [1, 1]} : vector<8x32xf32> to vector<8x8xf32>
    %cst_30 = arith.constant 0.353553385 : f32
    %55 = vector.broadcast %cst_30 : f32 to vector<8x8xf32>
    %56 = arith.mulf %54, %55 : vector<8x8xf32>
    %57 = vector.extract_strided_slice %25 {offsets = [0, 8], sizes = [8, 8], strides = [1, 1]} : vector<8x32xf32> to vector<8x8xf32>
    %58 = vector.extract_strided_slice %26 {offsets = [0, 8], sizes = [8, 8], strides = [1, 1]} : vector<8x32xf32> to vector<8x8xf32>
    %cst_31 = arith.constant dense<0.000000e+00> : vector<8x8xf32>
    %59 = tpu.matmul %56, %57, %cst_31 {dimension_numbers = #tpu.dot_dimension_numbers<[1], [1], [0], [0], [0, 0, 1, 0], [], []>} : vector<8x8xf32>, vector<8x8xf32>, vector<8x8xf32> -> vector<8x8xf32>
    %60 = vector.broadcast %5 : vector<1x8xf32> to vector<8x8xf32>
    %61 = arith.addf %59, %60 : vector<8x8xf32>
    %cst_32 = arith.constant dense<0xFF800000> : vector<8xf32>
    %62 = vector.multi_reduction <maximumf>, %61, %cst_32 [1] : vector<8x8xf32> to vector<8xf32>
    %63 = vector.shape_cast %62 : vector<8xf32> to vector<8x1xf32>
    %64 = vector.broadcast %63 : vector<8x1xf32> to vector<8x8xf32>
    %65 = arith.subf %61, %64 : vector<8x8xf32>
    %66 = math.exp %65 : vector<8x8xf32>
    %cst_33 = arith.constant dense<0.000000e+00> : vector<8xf32>
    %67 = vector.multi_reduction <add>, %66, %cst_33 [1] : vector<8x8xf32> to vector<8xf32>
    %68 = vector.shape_cast %67 : vector<8xf32> to vector<8x1xf32>
    %69 = tpu.reciprocal %68 {approx = true} : vector<8x1xf32> -> vector<8x1xf32>
    %cst_34 = arith.constant dense<0.000000e+00> : vector<8x8xf32>
    %70 = tpu.matmul %66, %58, %cst_34 {dimension_numbers = #tpu.dot_dimension_numbers<[1], [0], [0], [1], [0, 0, 1, 1], [], []>} : vector<8x8xf32>, vector<8x8xf32>, vector<8x8xf32> -> vector<8x8xf32>
    %71 = vector.broadcast %69 : vector<8x1xf32> to vector<8x8xf32>
    %72 = arith.mulf %70, %71 : vector<8x8xf32>
    %73 = arith.truncf %72 : vector<8x8xf32> to vector<8x8xbf16>
    %74 = vector.extract_strided_slice %28 {offsets = [1, 0, 0], sizes = [1, 8, 32], strides = [1, 1, 1]} : vector<4x8x32xbf16> to vector<1x8x32xbf16>
    %75 = vector.shape_cast %74 : vector<1x8x32xbf16> to vector<8x32xbf16>
    %cst_35 = arith.constant dense<0.000000e+00> : vector<8x32xf32>
    %76 = tpu.matmul %73, %75, %cst_35 {dimension_numbers = #tpu.dot_dimension_numbers<[1], [0], [0], [1], [0, 0, 1, 1], [], []>} : vector<8x8xbf16>, vector<8x32xbf16>, vector<8x32xf32> -> vector<8x32xf32>
    %77 = arith.addf %53, %76 : vector<8x32xf32>
    %78 = vector.extract_strided_slice %24 {offsets = [0, 16], sizes = [8, 8], strides = [1, 1]} : vector<8x32xf32> to vector<8x8xf32>
    %cst_36 = arith.constant 0.353553385 : f32
    %79 = vector.broadcast %cst_36 : f32 to vector<8x8xf32>
    %80 = arith.mulf %78, %79 : vector<8x8xf32>
    %81 = vector.extract_strided_slice %25 {offsets = [0, 16], sizes = [8, 8], strides = [1, 1]} : vector<8x32xf32> to vector<8x8xf32>
    %82 = vector.extract_strided_slice %26 {offsets = [0, 16], sizes = [8, 8], strides = [1, 1]} : vector<8x32xf32> to vector<8x8xf32>
    %cst_37 = arith.constant dense<0.000000e+00> : vector<8x8xf32>
    %83 = tpu.matmul %80, %81, %cst_37 {dimension_numbers = #tpu.dot_dimension_numbers<[1], [1], [0], [0], [0, 0, 1, 0], [], []>} : vector<8x8xf32>, vector<8x8xf32>, vector<8x8xf32> -> vector<8x8xf32>
    %84 = vector.broadcast %5 : vector<1x8xf32> to vector<8x8xf32>
    %85 = arith.addf %83, %84 : vector<8x8xf32>
    %cst_38 = arith.constant dense<0xFF800000> : vector<8xf32>
    %86 = vector.multi_reduction <maximumf>, %85, %cst_38 [1] : vector<8x8xf32> to vector<8xf32>
    %87 = vector.shape_cast %86 : vector<8xf32> to vector<8x1xf32>
    %88 = vector.broadcast %87 : vector<8x1xf32> to vector<8x8xf32>
    %89 = arith.subf %85, %88 : vector<8x8xf32>
    %90 = math.exp %89 : vector<8x8xf32>
    %cst_39 = arith.constant dense<0.000000e+00> : vector<8xf32>
    %91 = vector.multi_reduction <add>, %90, %cst_39 [1] : vector<8x8xf32> to vector<8xf32>
    %92 = vector.shape_cast %91 : vector<8xf32> to vector<8x1xf32>
    %93 = tpu.reciprocal %92 {approx = true} : vector<8x1xf32> -> vector<8x1xf32>
    %cst_40 = arith.constant dense<0.000000e+00> : vector<8x8xf32>
    %94 = tpu.matmul %90, %82, %cst_40 {dimension_numbers = #tpu.dot_dimension_numbers<[1], [0], [0], [1], [0, 0, 1, 1], [], []>} : vector<8x8xf32>, vector<8x8xf32>, vector<8x8xf32> -> vector<8x8xf32>
    %95 = vector.broadcast %93 : vector<8x1xf32> to vector<8x8xf32>
    %96 = arith.mulf %94, %95 : vector<8x8xf32>
    %97 = arith.truncf %96 : vector<8x8xf32> to vector<8x8xbf16>
    %98 = vector.extract_strided_slice %28 {offsets = [2, 0, 0], sizes = [1, 8, 32], strides = [1, 1, 1]} : vector<4x8x32xbf16> to vector<1x8x32xbf16>
    %99 = vector.shape_cast %98 : vector<1x8x32xbf16> to vector<8x32xbf16>
    %cst_41 = arith.constant dense<0.000000e+00> : vector<8x32xf32>
    %100 = tpu.matmul %97, %99, %cst_41 {dimension_numbers = #tpu.dot_dimension_numbers<[1], [0], [0], [1], [0, 0, 1, 1], [], []>} : vector<8x8xbf16>, vector<8x32xbf16>, vector<8x32xf32> -> vector<8x32xf32>
    %101 = arith.addf %77, %100 : vector<8x32xf32>
    %102 = vector.extract_strided_slice %24 {offsets = [0, 24], sizes = [8, 8], strides = [1, 1]} : vector<8x32xf32> to vector<8x8xf32>
    %cst_42 = arith.constant 0.353553385 : f32
    %103 = vector.broadcast %cst_42 : f32 to vector<8x8xf32>
    %104 = arith.mulf %102, %103 : vector<8x8xf32>
    %105 = vector.extract_strided_slice %25 {offsets = [0, 24], sizes = [8, 8], strides = [1, 1]} : vector<8x32xf32> to vector<8x8xf32>
    %106 = vector.extract_strided_slice %26 {offsets = [0, 24], sizes = [8, 8], strides = [1, 1]} : vector<8x32xf32> to vector<8x8xf32>
    %cst_43 = arith.constant dense<0.000000e+00> : vector<8x8xf32>
    %107 = tpu.matmul %104, %105, %cst_43 {dimension_numbers = #tpu.dot_dimension_numbers<[1], [1], [0], [0], [0, 0, 1, 0], [], []>} : vector<8x8xf32>, vector<8x8xf32>, vector<8x8xf32> -> vector<8x8xf32>
    %108 = vector.broadcast %5 : vector<1x8xf32> to vector<8x8xf32>
    %109 = arith.addf %107, %108 : vector<8x8xf32>
    %cst_44 = arith.constant dense<0xFF800000> : vector<8xf32>
    %110 = vector.multi_reduction <maximumf>, %109, %cst_44 [1] : vector<8x8xf32> to vector<8xf32>
    %111 = vector.shape_cast %110 : vector<8xf32> to vector<8x1xf32>
    %112 = vector.broadcast %111 : vector<8x1xf32> to vector<8x8xf32>
    %113 = arith.subf %109, %112 : vector<8x8xf32>
    %114 = math.exp %113 : vector<8x8xf32>
    %cst_45 = arith.constant dense<0.000000e+00> : vector<8xf32>
    %115 = vector.multi_reduction <add>, %114, %cst_45 [1] : vector<8x8xf32> to vector<8xf32>
    %116 = vector.shape_cast %115 : vector<8xf32> to vector<8x1xf32>
    %117 = tpu.reciprocal %116 {approx = true} : vector<8x1xf32> -> vector<8x1xf32>
    %cst_46 = arith.constant dense<0.000000e+00> : vector<8x8xf32>
    %118 = tpu.matmul %114, %106, %cst_46 {dimension_numbers = #tpu.dot_dimension_numbers<[1], [0], [0], [1], [0, 0, 1, 1], [], []>} : vector<8x8xf32>, vector<8x8xf32>, vector<8x8xf32> -> vector<8x8xf32>
    %119 = vector.broadcast %117 : vector<8x1xf32> to vector<8x8xf32>
    %120 = arith.mulf %118, %119 : vector<8x8xf32>
    %121 = arith.truncf %120 : vector<8x8xf32> to vector<8x8xbf16>
    %122 = vector.extract_strided_slice %28 {offsets = [3, 0, 0], sizes = [1, 8, 32], strides = [1, 1, 1]} : vector<4x8x32xbf16> to vector<1x8x32xbf16>
    %123 = vector.shape_cast %122 : vector<1x8x32xbf16> to vector<8x32xbf16>
    %cst_47 = arith.constant dense<0.000000e+00> : vector<8x32xf32>
    %124 = tpu.matmul %121, %123, %cst_47 {dimension_numbers = #tpu.dot_dimension_numbers<[1], [0], [0], [1], [0, 0, 1, 1], [], []>} : vector<8x8xbf16>, vector<8x32xbf16>, vector<8x32xf32> -> vector<8x32xf32>
    %125 = arith.addf %101, %124 : vector<8x32xf32>
    %c0_48 = arith.constant 0 : index
    %c0_49 = arith.constant 0 : index
    %c0_50 = arith.constant 0 : index
    %126 = vector.load %arg8[%c0_48, %c0_49, %c0_50] : memref<2x1x32xf32, #tpu.memory_space<vmem>>, vector<1x1x32xf32>
    %127 = vector.shape_cast %126 : vector<1x1x32xf32> to vector<1x32xf32>
    %128 = vector.broadcast %127 : vector<1x32xf32> to vector<8x32xf32>
    %129 = arith.addf %125, %128 : vector<8x32xf32>
    %130 = arith.addf %129, %1 : vector<8x32xf32>
    %c0_51 = arith.constant 0 : index
    %c0_52 = arith.constant 0 : index
    %c0_53 = arith.constant 0 : index
    %131 = vector.load %arg9[%c0_51, %c0_52, %c0_53] : memref<2x1x32xf32, #tpu.memory_space<vmem>>, vector<1x1x32xf32>
    %132 = vector.shape_cast %131 : vector<1x1x32xf32> to vector<1x32xf32>
    %c0_54 = arith.constant 0 : index
    %c0_55 = arith.constant 0 : index
    %c0_56 = arith.constant 0 : index
    %133 = vector.load %arg10[%c0_54, %c0_55, %c0_56] : memref<2x1x32xf32, #tpu.memory_space<vmem>>, vector<1x1x32xf32>
    %134 = vector.shape_cast %133 : vector<1x1x32xf32> to vector<1x32xf32>
    %cst_57 = arith.constant dense<0.000000e+00> : vector<8xf32>
    %135 = vector.multi_reduction <add>, %130, %cst_57 [1] : vector<8x32xf32> to vector<8xf32>
    %136 = vector.shape_cast %135 : vector<8xf32> to vector<8x1xf32>
    %cst_58 = arith.constant 3.200000e+01 : f32
    %137 = vector.broadcast %cst_58 : f32 to vector<8x1xf32>
    %138 = arith.divf %136, %137 : vector<8x1xf32>
    %139 = vector.broadcast %138 : vector<8x1xf32> to vector<8x32xf32>
    %140 = arith.subf %130, %139 : vector<8x32xf32>
    %141 = arith.mulf %140, %140 : vector<8x32xf32>
    %cst_59 = arith.constant dense<0.000000e+00> : vector<8xf32>
    %142 = vector.multi_reduction <add>, %141, %cst_59 [1] : vector<8x32xf32> to vector<8xf32>
    %143 = vector.shape_cast %142 : vector<8xf32> to vector<8x1xf32>
    %cst_60 = arith.constant 3.200000e+01 : f32
    %144 = vector.broadcast %cst_60 : f32 to vector<8x1xf32>
    %145 = arith.divf %143, %144 : vector<8x1xf32>
    %cst_61 = arith.constant 9.99999974E-6 : f32
    %146 = vector.broadcast %cst_61 : f32 to vector<8x1xf32>
    %147 = arith.addf %145, %146 : vector<8x1xf32>
    %148 = math.rsqrt %147 : vector<8x1xf32>
    %149 = vector.broadcast %148 : vector<8x1xf32> to vector<8x32xf32>
    %150 = arith.mulf %140, %149 : vector<8x32xf32>
    %151 = vector.broadcast %132 : vector<1x32xf32> to vector<8x32xf32>
    %152 = arith.mulf %150, %151 : vector<8x32xf32>
    %153 = vector.broadcast %134 : vector<1x32xf32> to vector<8x32xf32>
    %154 = arith.addf %152, %153 : vector<8x32xf32>
    %c0_62 = arith.constant 0 : index
    %c0_63 = arith.constant 0 : index
    %c0_64 = arith.constant 0 : index
    %155 = vector.load %arg11[%c0_62, %c0_63, %c0_64] : memref<2x32x2048xbf16, #tpu.memory_space<vmem>>, vector<1x32x2048xbf16>
    %156 = vector.shape_cast %155 : vector<1x32x2048xbf16> to vector<32x2048xbf16>
    %c0_65 = arith.constant 0 : index
    %c0_66 = arith.constant 0 : index
    %c0_67 = arith.constant 0 : index
    %157 = vector.load %arg12[%c0_65, %c0_66, %c0_67] : memref<2x1x2048xf32, #tpu.memory_space<vmem>>, vector<1x1x2048xf32>
    %158 = vector.shape_cast %157 : vector<1x1x2048xf32> to vector<1x2048xf32>
    %c0_68 = arith.constant 0 : index
    %c0_69 = arith.constant 0 : index
    %c0_70 = arith.constant 0 : index
    %159 = vector.load %arg13[%c0_68, %c0_69, %c0_70] : memref<2x32x2048xbf16, #tpu.memory_space<vmem>>, vector<1x32x2048xbf16>
    %160 = vector.shape_cast %159 : vector<1x32x2048xbf16> to vector<32x2048xbf16>
    %c0_71 = arith.constant 0 : index
    %c0_72 = arith.constant 0 : index
    %c0_73 = arith.constant 0 : index
    %161 = vector.load %arg14[%c0_71, %c0_72, %c0_73] : memref<2x1x32xf32, #tpu.memory_space<vmem>>, vector<1x1x32xf32>
    %162 = vector.shape_cast %161 : vector<1x1x32xf32> to vector<1x32xf32>
    %163 = arith.truncf %154 : vector<8x32xf32> to vector<8x32xbf16>
    %cst_74 = arith.constant dense<0.000000e+00> : vector<8x2048xf32>
    %164 = tpu.matmul %163, %156, %cst_74 {dimension_numbers = #tpu.dot_dimension_numbers<[1], [0], [0], [1], [0, 0, 1, 1], [], []>} : vector<8x32xbf16>, vector<32x2048xbf16>, vector<8x2048xf32> -> vector<8x2048xf32>
    %165 = vector.broadcast %158 : vector<1x2048xf32> to vector<8x2048xf32>
    %166 = arith.addf %164, %165 : vector<8x2048xf32>
    %cst_75 = arith.constant 0.000000e+00 : f32
    %167 = vector.broadcast %cst_75 : f32 to vector<8x2048xf32>
    %168 = arith.maximumf %166, %167 : vector<8x2048xf32>
    %169 = arith.truncf %168 : vector<8x2048xf32> to vector<8x2048xbf16>
    %cst_76 = arith.constant dense<0.000000e+00> : vector<8x32xf32>
    %170 = tpu.matmul %169, %160, %cst_76 {dimension_numbers = #tpu.dot_dimension_numbers<[1], [1], [0], [0], [0, 0, 1, 0], [], []>} : vector<8x2048xbf16>, vector<32x2048xbf16>, vector<8x32xf32> -> vector<8x32xf32>
    %171 = vector.broadcast %162 : vector<1x32xf32> to vector<8x32xf32>
    %172 = arith.addf %170, %171 : vector<8x32xf32>
    %173 = arith.addf %172, %154 : vector<8x32xf32>
    %c0_77 = arith.constant 0 : index
    %c0_78 = arith.constant 0 : index
    %c0_79 = arith.constant 0 : index
    %174 = vector.load %arg15[%c0_77, %c0_78, %c0_79] : memref<2x1x32xf32, #tpu.memory_space<vmem>>, vector<1x1x32xf32>
    %175 = vector.shape_cast %174 : vector<1x1x32xf32> to vector<1x32xf32>
    %c0_80 = arith.constant 0 : index
    %c0_81 = arith.constant 0 : index
    %c0_82 = arith.constant 0 : index
    %176 = vector.load %arg16[%c0_80, %c0_81, %c0_82] : memref<2x1x32xf32, #tpu.memory_space<vmem>>, vector<1x1x32xf32>
    %177 = vector.shape_cast %176 : vector<1x1x32xf32> to vector<1x32xf32>
    %cst_83 = arith.constant dense<0.000000e+00> : vector<8xf32>
    %178 = vector.multi_reduction <add>, %173, %cst_83 [1] : vector<8x32xf32> to vector<8xf32>
    %179 = vector.shape_cast %178 : vector<8xf32> to vector<8x1xf32>
    %cst_84 = arith.constant 3.200000e+01 : f32
    %180 = vector.broadcast %cst_84 : f32 to vector<8x1xf32>
    %181 = arith.divf %179, %180 : vector<8x1xf32>
    %182 = vector.broadcast %181 : vector<8x1xf32> to vector<8x32xf32>
    %183 = arith.subf %173, %182 : vector<8x32xf32>
    %184 = arith.mulf %183, %183 : vector<8x32xf32>
    %cst_85 = arith.constant dense<0.000000e+00> : vector<8xf32>
    %185 = vector.multi_reduction <add>, %184, %cst_85 [1] : vector<8x32xf32> to vector<8xf32>
    %186 = vector.shape_cast %185 : vector<8xf32> to vector<8x1xf32>
    %cst_86 = arith.constant 3.200000e+01 : f32
    %187 = vector.broadcast %cst_86 : f32 to vector<8x1xf32>
    %188 = arith.divf %186, %187 : vector<8x1xf32>
    %cst_87 = arith.constant 9.99999974E-6 : f32
    %189 = vector.broadcast %cst_87 : f32 to vector<8x1xf32>
    %190 = arith.addf %188, %189 : vector<8x1xf32>
    %191 = math.rsqrt %190 : vector<8x1xf32>
    %192 = vector.broadcast %191 : vector<8x1xf32> to vector<8x32xf32>
    %193 = arith.mulf %183, %192 : vector<8x32xf32>
    %194 = vector.broadcast %175 : vector<1x32xf32> to vector<8x32xf32>
    %195 = arith.mulf %193, %194 : vector<8x32xf32>
    %196 = vector.broadcast %177 : vector<1x32xf32> to vector<8x32xf32>
    %197 = arith.addf %195, %196 : vector<8x32xf32>
    %c1 = arith.constant 1 : index
    %c0_88 = arith.constant 0 : index
    %c0_89 = arith.constant 0 : index
    %198 = vector.load %arg5[%c1, %c0_88, %c0_89] : memref<2x32x96xbf16, #tpu.memory_space<vmem>>, vector<1x32x96xbf16>
    %199 = vector.shape_cast %198 : vector<1x32x96xbf16> to vector<32x96xbf16>
    %200 = arith.truncf %197 : vector<8x32xf32> to vector<8x32xbf16>
    %cst_90 = arith.constant dense<0.000000e+00> : vector<8x96xf32>
    %201 = tpu.matmul %200, %199, %cst_90 {dimension_numbers = #tpu.dot_dimension_numbers<[1], [0], [0], [1], [0, 0, 1, 1], [], []>} : vector<8x32xbf16>, vector<32x96xbf16>, vector<8x96xf32> -> vector<8x96xf32>
    %c1_91 = arith.constant 1 : index
    %c0_92 = arith.constant 0 : index
    %c0_93 = arith.constant 0 : index
    %202 = vector.load %arg6[%c1_91, %c0_92, %c0_93] : memref<2x1x96xf32, #tpu.memory_space<vmem>>, vector<1x1x96xf32>
    %203 = vector.shape_cast %202 : vector<1x1x96xf32> to vector<1x96xf32>
    %204 = vector.broadcast %203 : vector<1x96xf32> to vector<8x96xf32>
    %205 = arith.addf %201, %204 : vector<8x96xf32>
    %206 = vector.extract_strided_slice %205 {offsets = [0, 0], sizes = [8, 32], strides = [1, 1]} : vector<8x96xf32> to vector<8x32xf32>
    %207 = vector.extract_strided_slice %205 {offsets = [0, 32], sizes = [8, 32], strides = [1, 1]} : vector<8x96xf32> to vector<8x32xf32>
    %208 = vector.extract_strided_slice %205 {offsets = [0, 64], sizes = [8, 32], strides = [1, 1]} : vector<8x96xf32> to vector<8x32xf32>
    %c1_94 = arith.constant 1 : index
    %c0_95 = arith.constant 0 : index
    %c0_96 = arith.constant 0 : index
    %c0_97 = arith.constant 0 : index
    %209 = vector.load %arg7[%c1_94, %c0_95, %c0_96, %c0_97] : memref<2x4x8x32xbf16, #tpu.memory_space<vmem>>, vector<1x4x8x32xbf16>
    %210 = vector.shape_cast %209 : vector<1x4x8x32xbf16> to vector<4x8x32xbf16>
    %cst_98 = arith.constant 0.000000e+00 : f32
    %211 = vector.broadcast %cst_98 : f32 to vector<8x32xf32>
    %212 = vector.extract_strided_slice %206 {offsets = [0, 0], sizes = [8, 8], strides = [1, 1]} : vector<8x32xf32> to vector<8x8xf32>
    %cst_99 = arith.constant 0.353553385 : f32
    %213 = vector.broadcast %cst_99 : f32 to vector<8x8xf32>
    %214 = arith.mulf %212, %213 : vector<8x8xf32>
    %215 = vector.extract_strided_slice %207 {offsets = [0, 0], sizes = [8, 8], strides = [1, 1]} : vector<8x32xf32> to vector<8x8xf32>
    %216 = vector.extract_strided_slice %208 {offsets = [0, 0], sizes = [8, 8], strides = [1, 1]} : vector<8x32xf32> to vector<8x8xf32>
    %cst_100 = arith.constant dense<0.000000e+00> : vector<8x8xf32>
    %217 = tpu.matmul %214, %215, %cst_100 {dimension_numbers = #tpu.dot_dimension_numbers<[1], [1], [0], [0], [0, 0, 1, 0], [], []>} : vector<8x8xf32>, vector<8x8xf32>, vector<8x8xf32> -> vector<8x8xf32>
    %218 = vector.broadcast %5 : vector<1x8xf32> to vector<8x8xf32>
    %219 = arith.addf %217, %218 : vector<8x8xf32>
    %cst_101 = arith.constant dense<0xFF800000> : vector<8xf32>
    %220 = vector.multi_reduction <maximumf>, %219, %cst_101 [1] : vector<8x8xf32> to vector<8xf32>
    %221 = vector.shape_cast %220 : vector<8xf32> to vector<8x1xf32>
    %222 = vector.broadcast %221 : vector<8x1xf32> to vector<8x8xf32>
    %223 = arith.subf %219, %222 : vector<8x8xf32>
    %224 = math.exp %223 : vector<8x8xf32>
    %cst_102 = arith.constant dense<0.000000e+00> : vector<8xf32>
    %225 = vector.multi_reduction <add>, %224, %cst_102 [1] : vector<8x8xf32> to vector<8xf32>
    %226 = vector.shape_cast %225 : vector<8xf32> to vector<8x1xf32>
    %227 = tpu.reciprocal %226 {approx = true} : vector<8x1xf32> -> vector<8x1xf32>
    %cst_103 = arith.constant dense<0.000000e+00> : vector<8x8xf32>
    %228 = tpu.matmul %224, %216, %cst_103 {dimension_numbers = #tpu.dot_dimension_numbers<[1], [0], [0], [1], [0, 0, 1, 1], [], []>} : vector<8x8xf32>, vector<8x8xf32>, vector<8x8xf32> -> vector<8x8xf32>
    %229 = vector.broadcast %227 : vector<8x1xf32> to vector<8x8xf32>
    %230 = arith.mulf %228, %229 : vector<8x8xf32>
    %231 = arith.truncf %230 : vector<8x8xf32> to vector<8x8xbf16>
    %232 = vector.extract_strided_slice %210 {offsets = [0, 0, 0], sizes = [1, 8, 32], strides = [1, 1, 1]} : vector<4x8x32xbf16> to vector<1x8x32xbf16>
    %233 = vector.shape_cast %232 : vector<1x8x32xbf16> to vector<8x32xbf16>
    %cst_104 = arith.constant dense<0.000000e+00> : vector<8x32xf32>
    %234 = tpu.matmul %231, %233, %cst_104 {dimension_numbers = #tpu.dot_dimension_numbers<[1], [0], [0], [1], [0, 0, 1, 1], [], []>} : vector<8x8xbf16>, vector<8x32xbf16>, vector<8x32xf32> -> vector<8x32xf32>
    %235 = arith.addf %211, %234 : vector<8x32xf32>
    %236 = vector.extract_strided_slice %206 {offsets = [0, 8], sizes = [8, 8], strides = [1, 1]} : vector<8x32xf32> to vector<8x8xf32>
    %cst_105 = arith.constant 0.353553385 : f32
    %237 = vector.broadcast %cst_105 : f32 to vector<8x8xf32>
    %238 = arith.mulf %236, %237 : vector<8x8xf32>
    %239 = vector.extract_strided_slice %207 {offsets = [0, 8], sizes = [8, 8], strides = [1, 1]} : vector<8x32xf32> to vector<8x8xf32>
    %240 = vector.extract_strided_slice %208 {offsets = [0, 8], sizes = [8, 8], strides = [1, 1]} : vector<8x32xf32> to vector<8x8xf32>
    %cst_106 = arith.constant dense<0.000000e+00> : vector<8x8xf32>
    %241 = tpu.matmul %238, %239, %cst_106 {dimension_numbers = #tpu.dot_dimension_numbers<[1], [1], [0], [0], [0, 0, 1, 0], [], []>} : vector<8x8xf32>, vector<8x8xf32>, vector<8x8xf32> -> vector<8x8xf32>
    %242 = vector.broadcast %5 : vector<1x8xf32> to vector<8x8xf32>
    %243 = arith.addf %241, %242 : vector<8x8xf32>
    %cst_107 = arith.constant dense<0xFF800000> : vector<8xf32>
    %244 = vector.multi_reduction <maximumf>, %243, %cst_107 [1] : vector<8x8xf32> to vector<8xf32>
    %245 = vector.shape_cast %244 : vector<8xf32> to vector<8x1xf32>
    %246 = vector.broadcast %245 : vector<8x1xf32> to vector<8x8xf32>
    %247 = arith.subf %243, %246 : vector<8x8xf32>
    %248 = math.exp %247 : vector<8x8xf32>
    %cst_108 = arith.constant dense<0.000000e+00> : vector<8xf32>
    %249 = vector.multi_reduction <add>, %248, %cst_108 [1] : vector<8x8xf32> to vector<8xf32>
    %250 = vector.shape_cast %249 : vector<8xf32> to vector<8x1xf32>
    %251 = tpu.reciprocal %250 {approx = true} : vector<8x1xf32> -> vector<8x1xf32>
    %cst_109 = arith.constant dense<0.000000e+00> : vector<8x8xf32>
    %252 = tpu.matmul %248, %240, %cst_109 {dimension_numbers = #tpu.dot_dimension_numbers<[1], [0], [0], [1], [0, 0, 1, 1], [], []>} : vector<8x8xf32>, vector<8x8xf32>, vector<8x8xf32> -> vector<8x8xf32>
    %253 = vector.broadcast %251 : vector<8x1xf32> to vector<8x8xf32>
    %254 = arith.mulf %252, %253 : vector<8x8xf32>
    %255 = arith.truncf %254 : vector<8x8xf32> to vector<8x8xbf16>
    %256 = vector.extract_strided_slice %210 {offsets = [1, 0, 0], sizes = [1, 8, 32], strides = [1, 1, 1]} : vector<4x8x32xbf16> to vector<1x8x32xbf16>
    %257 = vector.shape_cast %256 : vector<1x8x32xbf16> to vector<8x32xbf16>
    %cst_110 = arith.constant dense<0.000000e+00> : vector<8x32xf32>
    %258 = tpu.matmul %255, %257, %cst_110 {dimension_numbers = #tpu.dot_dimension_numbers<[1], [0], [0], [1], [0, 0, 1, 1], [], []>} : vector<8x8xbf16>, vector<8x32xbf16>, vector<8x32xf32> -> vector<8x32xf32>
    %259 = arith.addf %235, %258 : vector<8x32xf32>
    %260 = vector.extract_strided_slice %206 {offsets = [0, 16], sizes = [8, 8], strides = [1, 1]} : vector<8x32xf32> to vector<8x8xf32>
    %cst_111 = arith.constant 0.353553385 : f32
    %261 = vector.broadcast %cst_111 : f32 to vector<8x8xf32>
    %262 = arith.mulf %260, %261 : vector<8x8xf32>
    %263 = vector.extract_strided_slice %207 {offsets = [0, 16], sizes = [8, 8], strides = [1, 1]} : vector<8x32xf32> to vector<8x8xf32>
    %264 = vector.extract_strided_slice %208 {offsets = [0, 16], sizes = [8, 8], strides = [1, 1]} : vector<8x32xf32> to vector<8x8xf32>
    %cst_112 = arith.constant dense<0.000000e+00> : vector<8x8xf32>
    %265 = tpu.matmul %262, %263, %cst_112 {dimension_numbers = #tpu.dot_dimension_numbers<[1], [1], [0], [0], [0, 0, 1, 0], [], []>} : vector<8x8xf32>, vector<8x8xf32>, vector<8x8xf32> -> vector<8x8xf32>
    %266 = vector.broadcast %5 : vector<1x8xf32> to vector<8x8xf32>
    %267 = arith.addf %265, %266 : vector<8x8xf32>
    %cst_113 = arith.constant dense<0xFF800000> : vector<8xf32>
    %268 = vector.multi_reduction <maximumf>, %267, %cst_113 [1] : vector<8x8xf32> to vector<8xf32>
    %269 = vector.shape_cast %268 : vector<8xf32> to vector<8x1xf32>
    %270 = vector.broadcast %269 : vector<8x1xf32> to vector<8x8xf32>
    %271 = arith.subf %267, %270 : vector<8x8xf32>
    %272 = math.exp %271 : vector<8x8xf32>
    %cst_114 = arith.constant dense<0.000000e+00> : vector<8xf32>
    %273 = vector.multi_reduction <add>, %272, %cst_114 [1] : vector<8x8xf32> to vector<8xf32>
    %274 = vector.shape_cast %273 : vector<8xf32> to vector<8x1xf32>
    %275 = tpu.reciprocal %274 {approx = true} : vector<8x1xf32> -> vector<8x1xf32>
    %cst_115 = arith.constant dense<0.000000e+00> : vector<8x8xf32>
    %276 = tpu.matmul %272, %264, %cst_115 {dimension_numbers = #tpu.dot_dimension_numbers<[1], [0], [0], [1], [0, 0, 1, 1], [], []>} : vector<8x8xf32>, vector<8x8xf32>, vector<8x8xf32> -> vector<8x8xf32>
    %277 = vector.broadcast %275 : vector<8x1xf32> to vector<8x8xf32>
    %278 = arith.mulf %276, %277 : vector<8x8xf32>
    %279 = arith.truncf %278 : vector<8x8xf32> to vector<8x8xbf16>
    %280 = vector.extract_strided_slice %210 {offsets = [2, 0, 0], sizes = [1, 8, 32], strides = [1, 1, 1]} : vector<4x8x32xbf16> to vector<1x8x32xbf16>
    %281 = vector.shape_cast %280 : vector<1x8x32xbf16> to vector<8x32xbf16>
    %cst_116 = arith.constant dense<0.000000e+00> : vector<8x32xf32>
    %282 = tpu.matmul %279, %281, %cst_116 {dimension_numbers = #tpu.dot_dimension_numbers<[1], [0], [0], [1], [0, 0, 1, 1], [], []>} : vector<8x8xbf16>, vector<8x32xbf16>, vector<8x32xf32> -> vector<8x32xf32>
    %283 = arith.addf %259, %282 : vector<8x32xf32>
    %284 = vector.extract_strided_slice %206 {offsets = [0, 24], sizes = [8, 8], strides = [1, 1]} : vector<8x32xf32> to vector<8x8xf32>
    %cst_117 = arith.constant 0.353553385 : f32
    %285 = vector.broadcast %cst_117 : f32 to vector<8x8xf32>
    %286 = arith.mulf %284, %285 : vector<8x8xf32>
    %287 = vector.extract_strided_slice %207 {offsets = [0, 24], sizes = [8, 8], strides = [1, 1]} : vector<8x32xf32> to vector<8x8xf32>
    %288 = vector.extract_strided_slice %208 {offsets = [0, 24], sizes = [8, 8], strides = [1, 1]} : vector<8x32xf32> to vector<8x8xf32>
    %cst_118 = arith.constant dense<0.000000e+00> : vector<8x8xf32>
    %289 = tpu.matmul %286, %287, %cst_118 {dimension_numbers = #tpu.dot_dimension_numbers<[1], [1], [0], [0], [0, 0, 1, 0], [], []>} : vector<8x8xf32>, vector<8x8xf32>, vector<8x8xf32> -> vector<8x8xf32>
    %290 = vector.broadcast %5 : vector<1x8xf32> to vector<8x8xf32>
    %291 = arith.addf %289, %290 : vector<8x8xf32>
    %cst_119 = arith.constant dense<0xFF800000> : vector<8xf32>
    %292 = vector.multi_reduction <maximumf>, %291, %cst_119 [1] : vector<8x8xf32> to vector<8xf32>
    %293 = vector.shape_cast %292 : vector<8xf32> to vector<8x1xf32>
    %294 = vector.broadcast %293 : vector<8x1xf32> to vector<8x8xf32>
    %295 = arith.subf %291, %294 : vector<8x8xf32>
    %296 = math.exp %295 : vector<8x8xf32>
    %cst_120 = arith.constant dense<0.000000e+00> : vector<8xf32>
    %297 = vector.multi_reduction <add>, %296, %cst_120 [1] : vector<8x8xf32> to vector<8xf32>
    %298 = vector.shape_cast %297 : vector<8xf32> to vector<8x1xf32>
    %299 = tpu.reciprocal %298 {approx = true} : vector<8x1xf32> -> vector<8x1xf32>
    %cst_121 = arith.constant dense<0.000000e+00> : vector<8x8xf32>
    %300 = tpu.matmul %296, %288, %cst_121 {dimension_numbers = #tpu.dot_dimension_numbers<[1], [0], [0], [1], [0, 0, 1, 1], [], []>} : vector<8x8xf32>, vector<8x8xf32>, vector<8x8xf32> -> vector<8x8xf32>
    %301 = vector.broadcast %299 : vector<8x1xf32> to vector<8x8xf32>
    %302 = arith.mulf %300, %301 : vector<8x8xf32>
    %303 = arith.truncf %302 : vector<8x8xf32> to vector<8x8xbf16>
    %304 = vector.extract_strided_slice %210 {offsets = [3, 0, 0], sizes = [1, 8, 32], strides = [1, 1, 1]} : vector<4x8x32xbf16> to vector<1x8x32xbf16>
    %305 = vector.shape_cast %304 : vector<1x8x32xbf16> to vector<8x32xbf16>
    %cst_122 = arith.constant dense<0.000000e+00> : vector<8x32xf32>
    %306 = tpu.matmul %303, %305, %cst_122 {dimension_numbers = #tpu.dot_dimension_numbers<[1], [0], [0], [1], [0, 0, 1, 1], [], []>} : vector<8x8xbf16>, vector<8x32xbf16>, vector<8x32xf32> -> vector<8x32xf32>
    %307 = arith.addf %283, %306 : vector<8x32xf32>
    %c1_123 = arith.constant 1 : index
    %c0_124 = arith.constant 0 : index
    %c0_125 = arith.constant 0 : index
    %308 = vector.load %arg8[%c1_123, %c0_124, %c0_125] : memref<2x1x32xf32, #tpu.memory_space<vmem>>, vector<1x1x32xf32>
    %309 = vector.shape_cast %308 : vector<1x1x32xf32> to vector<1x32xf32>
    %310 = vector.broadcast %309 : vector<1x32xf32> to vector<8x32xf32>
    %311 = arith.addf %307, %310 : vector<8x32xf32>
    %312 = arith.addf %311, %197 : vector<8x32xf32>
    %c1_126 = arith.constant 1 : index
    %c0_127 = arith.constant 0 : index
    %c0_128 = arith.constant 0 : index
    %313 = vector.load %arg9[%c1_126, %c0_127, %c0_128] : memref<2x1x32xf32, #tpu.memory_space<vmem>>, vector<1x1x32xf32>
    %314 = vector.shape_cast %313 : vector<1x1x32xf32> to vector<1x32xf32>
    %c1_129 = arith.constant 1 : index
    %c0_130 = arith.constant 0 : index
    %c0_131 = arith.constant 0 : index
    %315 = vector.load %arg10[%c1_129, %c0_130, %c0_131] : memref<2x1x32xf32, #tpu.memory_space<vmem>>, vector<1x1x32xf32>
    %316 = vector.shape_cast %315 : vector<1x1x32xf32> to vector<1x32xf32>
    %cst_132 = arith.constant dense<0.000000e+00> : vector<8xf32>
    %317 = vector.multi_reduction <add>, %312, %cst_132 [1] : vector<8x32xf32> to vector<8xf32>
    %318 = vector.shape_cast %317 : vector<8xf32> to vector<8x1xf32>
    %cst_133 = arith.constant 3.200000e+01 : f32
    %319 = vector.broadcast %cst_133 : f32 to vector<8x1xf32>
    %320 = arith.divf %318, %319 : vector<8x1xf32>
    %321 = vector.broadcast %320 : vector<8x1xf32> to vector<8x32xf32>
    %322 = arith.subf %312, %321 : vector<8x32xf32>
    %323 = arith.mulf %322, %322 : vector<8x32xf32>
    %cst_134 = arith.constant dense<0.000000e+00> : vector<8xf32>
    %324 = vector.multi_reduction <add>, %323, %cst_134 [1] : vector<8x32xf32> to vector<8xf32>
    %325 = vector.shape_cast %324 : vector<8xf32> to vector<8x1xf32>
    %cst_135 = arith.constant 3.200000e+01 : f32
    %326 = vector.broadcast %cst_135 : f32 to vector<8x1xf32>
    %327 = arith.divf %325, %326 : vector<8x1xf32>
    %cst_136 = arith.constant 9.99999974E-6 : f32
    %328 = vector.broadcast %cst_136 : f32 to vector<8x1xf32>
    %329 = arith.addf %327, %328 : vector<8x1xf32>
    %330 = math.rsqrt %329 : vector<8x1xf32>
    %331 = vector.broadcast %330 : vector<8x1xf32> to vector<8x32xf32>
    %332 = arith.mulf %322, %331 : vector<8x32xf32>
    %333 = vector.broadcast %314 : vector<1x32xf32> to vector<8x32xf32>
    %334 = arith.mulf %332, %333 : vector<8x32xf32>
    %335 = vector.broadcast %316 : vector<1x32xf32> to vector<8x32xf32>
    %336 = arith.addf %334, %335 : vector<8x32xf32>
    %c1_137 = arith.constant 1 : index
    %c0_138 = arith.constant 0 : index
    %c0_139 = arith.constant 0 : index
    %337 = vector.load %arg11[%c1_137, %c0_138, %c0_139] : memref<2x32x2048xbf16, #tpu.memory_space<vmem>>, vector<1x32x2048xbf16>
    %338 = vector.shape_cast %337 : vector<1x32x2048xbf16> to vector<32x2048xbf16>
    %c1_140 = arith.constant 1 : index
    %c0_141 = arith.constant 0 : index
    %c0_142 = arith.constant 0 : index
    %339 = vector.load %arg12[%c1_140, %c0_141, %c0_142] : memref<2x1x2048xf32, #tpu.memory_space<vmem>>, vector<1x1x2048xf32>
    %340 = vector.shape_cast %339 : vector<1x1x2048xf32> to vector<1x2048xf32>
    %c1_143 = arith.constant 1 : index
    %c0_144 = arith.constant 0 : index
    %c0_145 = arith.constant 0 : index
    %341 = vector.load %arg13[%c1_143, %c0_144, %c0_145] : memref<2x32x2048xbf16, #tpu.memory_space<vmem>>, vector<1x32x2048xbf16>
    %342 = vector.shape_cast %341 : vector<1x32x2048xbf16> to vector<32x2048xbf16>
    %c1_146 = arith.constant 1 : index
    %c0_147 = arith.constant 0 : index
    %c0_148 = arith.constant 0 : index
    %343 = vector.load %arg14[%c1_146, %c0_147, %c0_148] : memref<2x1x32xf32, #tpu.memory_space<vmem>>, vector<1x1x32xf32>
    %344 = vector.shape_cast %343 : vector<1x1x32xf32> to vector<1x32xf32>
    %345 = arith.truncf %336 : vector<8x32xf32> to vector<8x32xbf16>
    %cst_149 = arith.constant dense<0.000000e+00> : vector<8x2048xf32>
    %346 = tpu.matmul %345, %338, %cst_149 {dimension_numbers = #tpu.dot_dimension_numbers<[1], [0], [0], [1], [0, 0, 1, 1], [], []>} : vector<8x32xbf16>, vector<32x2048xbf16>, vector<8x2048xf32> -> vector<8x2048xf32>
    %347 = vector.broadcast %340 : vector<1x2048xf32> to vector<8x2048xf32>
    %348 = arith.addf %346, %347 : vector<8x2048xf32>
    %cst_150 = arith.constant 0.000000e+00 : f32
    %349 = vector.broadcast %cst_150 : f32 to vector<8x2048xf32>
    %350 = arith.maximumf %348, %349 : vector<8x2048xf32>
    %351 = arith.truncf %350 : vector<8x2048xf32> to vector<8x2048xbf16>
    %cst_151 = arith.constant dense<0.000000e+00> : vector<8x32xf32>
    %352 = tpu.matmul %351, %342, %cst_151 {dimension_numbers = #tpu.dot_dimension_numbers<[1], [1], [0], [0], [0, 0, 1, 0], [], []>} : vector<8x2048xbf16>, vector<32x2048xbf16>, vector<8x32xf32> -> vector<8x32xf32>
    %353 = vector.broadcast %344 : vector<1x32xf32> to vector<8x32xf32>
    %354 = arith.addf %352, %353 : vector<8x32xf32>
    %355 = arith.addf %354, %336 : vector<8x32xf32>
    %c1_152 = arith.constant 1 : index
    %c0_153 = arith.constant 0 : index
    %c0_154 = arith.constant 0 : index
    %356 = vector.load %arg15[%c1_152, %c0_153, %c0_154] : memref<2x1x32xf32, #tpu.memory_space<vmem>>, vector<1x1x32xf32>
    %357 = vector.shape_cast %356 : vector<1x1x32xf32> to vector<1x32xf32>
    %c1_155 = arith.constant 1 : index
    %c0_156 = arith.constant 0 : index
    %c0_157 = arith.constant 0 : index
    %358 = vector.load %arg16[%c1_155, %c0_156, %c0_157] : memref<2x1x32xf32, #tpu.memory_space<vmem>>, vector<1x1x32xf32>
    %359 = vector.shape_cast %358 : vector<1x1x32xf32> to vector<1x32xf32>
    %cst_158 = arith.constant dense<0.000000e+00> : vector<8xf32>
    %360 = vector.multi_reduction <add>, %355, %cst_158 [1] : vector<8x32xf32> to vector<8xf32>
    %361 = vector.shape_cast %360 : vector<8xf32> to vector<8x1xf32>
    %cst_159 = arith.constant 3.200000e+01 : f32
    %362 = vector.broadcast %cst_159 : f32 to vector<8x1xf32>
    %363 = arith.divf %361, %362 : vector<8x1xf32>
    %364 = vector.broadcast %363 : vector<8x1xf32> to vector<8x32xf32>
    %365 = arith.subf %355, %364 : vector<8x32xf32>
    %366 = arith.mulf %365, %365 : vector<8x32xf32>
    %cst_160 = arith.constant dense<0.000000e+00> : vector<8xf32>
    %367 = vector.multi_reduction <add>, %366, %cst_160 [1] : vector<8x32xf32> to vector<8xf32>
    %368 = vector.shape_cast %367 : vector<8xf32> to vector<8x1xf32>
    %cst_161 = arith.constant 3.200000e+01 : f32
    %369 = vector.broadcast %cst_161 : f32 to vector<8x1xf32>
    %370 = arith.divf %368, %369 : vector<8x1xf32>
    %cst_162 = arith.constant 9.99999974E-6 : f32
    %371 = vector.broadcast %cst_162 : f32 to vector<8x1xf32>
    %372 = arith.addf %370, %371 : vector<8x1xf32>
    %373 = math.rsqrt %372 : vector<8x1xf32>
    %374 = vector.broadcast %373 : vector<8x1xf32> to vector<8x32xf32>
    %375 = arith.mulf %365, %374 : vector<8x32xf32>
    %376 = vector.broadcast %357 : vector<1x32xf32> to vector<8x32xf32>
    %377 = arith.mulf %375, %376 : vector<8x32xf32>
    %378 = vector.broadcast %359 : vector<1x32xf32> to vector<8x32xf32>
    %379 = arith.addf %377, %378 : vector<8x32xf32>
    %c0_163 = arith.constant 0 : index
    %c0_164 = arith.constant 0 : index
    %c0_165 = arith.constant 0 : index
    %380 = vector.load %arg17[%c0_163, %c0_164, %c0_165] : memref<2x32x96xbf16, #tpu.memory_space<vmem>>, vector<1x32x96xbf16>
    %381 = vector.shape_cast %380 : vector<1x32x96xbf16> to vector<32x96xbf16>
    %382 = arith.truncf %3 : vector<8x32xf32> to vector<8x32xbf16>
    %cst_166 = arith.constant dense<0.000000e+00> : vector<8x96xf32>
    %383 = tpu.matmul %382, %381, %cst_166 {dimension_numbers = #tpu.dot_dimension_numbers<[1], [0], [0], [1], [0, 0, 1, 1], [], []>} : vector<8x32xbf16>, vector<32x96xbf16>, vector<8x96xf32> -> vector<8x96xf32>
    %c0_167 = arith.constant 0 : index
    %c0_168 = arith.constant 0 : index
    %c0_169 = arith.constant 0 : index
    %384 = vector.load %arg18[%c0_167, %c0_168, %c0_169] : memref<2x1x96xf32, #tpu.memory_space<vmem>>, vector<1x1x96xf32>
    %385 = vector.shape_cast %384 : vector<1x1x96xf32> to vector<1x96xf32>
    %386 = vector.broadcast %385 : vector<1x96xf32> to vector<8x96xf32>
    %387 = arith.addf %383, %386 : vector<8x96xf32>
    %388 = vector.extract_strided_slice %387 {offsets = [0, 0], sizes = [8, 32], strides = [1, 1]} : vector<8x96xf32> to vector<8x32xf32>
    %389 = vector.extract_strided_slice %387 {offsets = [0, 32], sizes = [8, 32], strides = [1, 1]} : vector<8x96xf32> to vector<8x32xf32>
    %390 = vector.extract_strided_slice %387 {offsets = [0, 64], sizes = [8, 32], strides = [1, 1]} : vector<8x96xf32> to vector<8x32xf32>
    %c0_170 = arith.constant 0 : index
    %c0_171 = arith.constant 0 : index
    %c0_172 = arith.constant 0 : index
    %c0_173 = arith.constant 0 : index
    %391 = vector.load %arg19[%c0_170, %c0_171, %c0_172, %c0_173] : memref<2x4x8x32xbf16, #tpu.memory_space<vmem>>, vector<1x4x8x32xbf16>
    %392 = vector.shape_cast %391 : vector<1x4x8x32xbf16> to vector<4x8x32xbf16>
    %cst_174 = arith.constant 0.000000e+00 : f32
    %393 = vector.broadcast %cst_174 : f32 to vector<8x32xf32>
    %394 = vector.extract_strided_slice %388 {offsets = [0, 0], sizes = [8, 8], strides = [1, 1]} : vector<8x32xf32> to vector<8x8xf32>
    %cst_175 = arith.constant 0.353553385 : f32
    %395 = vector.broadcast %cst_175 : f32 to vector<8x8xf32>
    %396 = arith.mulf %394, %395 : vector<8x8xf32>
    %397 = vector.extract_strided_slice %389 {offsets = [0, 0], sizes = [8, 8], strides = [1, 1]} : vector<8x32xf32> to vector<8x8xf32>
    %398 = vector.extract_strided_slice %390 {offsets = [0, 0], sizes = [8, 8], strides = [1, 1]} : vector<8x32xf32> to vector<8x8xf32>
    %cst_176 = arith.constant dense<0.000000e+00> : vector<8x8xf32>
    %399 = tpu.matmul %396, %397, %cst_176 {dimension_numbers = #tpu.dot_dimension_numbers<[1], [1], [0], [0], [0, 0, 1, 0], [], []>} : vector<8x8xf32>, vector<8x8xf32>, vector<8x8xf32> -> vector<8x8xf32>
    %400 = arith.addf %399, %15 : vector<8x8xf32>
    %cst_177 = arith.constant dense<0xFF800000> : vector<8xf32>
    %401 = vector.multi_reduction <maximumf>, %400, %cst_177 [1] : vector<8x8xf32> to vector<8xf32>
    %402 = vector.shape_cast %401 : vector<8xf32> to vector<8x1xf32>
    %403 = vector.broadcast %402 : vector<8x1xf32> to vector<8x8xf32>
    %404 = arith.subf %400, %403 : vector<8x8xf32>
    %405 = math.exp %404 : vector<8x8xf32>
    %cst_178 = arith.constant dense<0.000000e+00> : vector<8xf32>
    %406 = vector.multi_reduction <add>, %405, %cst_178 [1] : vector<8x8xf32> to vector<8xf32>
    %407 = vector.shape_cast %406 : vector<8xf32> to vector<8x1xf32>
    %408 = tpu.reciprocal %407 {approx = true} : vector<8x1xf32> -> vector<8x1xf32>
    %cst_179 = arith.constant dense<0.000000e+00> : vector<8x8xf32>
    %409 = tpu.matmul %405, %398, %cst_179 {dimension_numbers = #tpu.dot_dimension_numbers<[1], [0], [0], [1], [0, 0, 1, 1], [], []>} : vector<8x8xf32>, vector<8x8xf32>, vector<8x8xf32> -> vector<8x8xf32>
    %410 = vector.broadcast %408 : vector<8x1xf32> to vector<8x8xf32>
    %411 = arith.mulf %409, %410 : vector<8x8xf32>
    %412 = arith.truncf %411 : vector<8x8xf32> to vector<8x8xbf16>
    %413 = vector.extract_strided_slice %392 {offsets = [0, 0, 0], sizes = [1, 8, 32], strides = [1, 1, 1]} : vector<4x8x32xbf16> to vector<1x8x32xbf16>
    %414 = vector.shape_cast %413 : vector<1x8x32xbf16> to vector<8x32xbf16>
    %cst_180 = arith.constant dense<0.000000e+00> : vector<8x32xf32>
    %415 = tpu.matmul %412, %414, %cst_180 {dimension_numbers = #tpu.dot_dimension_numbers<[1], [0], [0], [1], [0, 0, 1, 1], [], []>} : vector<8x8xbf16>, vector<8x32xbf16>, vector<8x32xf32> -> vector<8x32xf32>
    %416 = arith.addf %393, %415 : vector<8x32xf32>
    %417 = vector.extract_strided_slice %388 {offsets = [0, 8], sizes = [8, 8], strides = [1, 1]} : vector<8x32xf32> to vector<8x8xf32>
    %cst_181 = arith.constant 0.353553385 : f32
    %418 = vector.broadcast %cst_181 : f32 to vector<8x8xf32>
    %419 = arith.mulf %417, %418 : vector<8x8xf32>
    %420 = vector.extract_strided_slice %389 {offsets = [0, 8], sizes = [8, 8], strides = [1, 1]} : vector<8x32xf32> to vector<8x8xf32>
    %421 = vector.extract_strided_slice %390 {offsets = [0, 8], sizes = [8, 8], strides = [1, 1]} : vector<8x32xf32> to vector<8x8xf32>
    %cst_182 = arith.constant dense<0.000000e+00> : vector<8x8xf32>
    %422 = tpu.matmul %419, %420, %cst_182 {dimension_numbers = #tpu.dot_dimension_numbers<[1], [1], [0], [0], [0, 0, 1, 0], [], []>} : vector<8x8xf32>, vector<8x8xf32>, vector<8x8xf32> -> vector<8x8xf32>
    %423 = arith.addf %422, %15 : vector<8x8xf32>
    %cst_183 = arith.constant dense<0xFF800000> : vector<8xf32>
    %424 = vector.multi_reduction <maximumf>, %423, %cst_183 [1] : vector<8x8xf32> to vector<8xf32>
    %425 = vector.shape_cast %424 : vector<8xf32> to vector<8x1xf32>
    %426 = vector.broadcast %425 : vector<8x1xf32> to vector<8x8xf32>
    %427 = arith.subf %423, %426 : vector<8x8xf32>
    %428 = math.exp %427 : vector<8x8xf32>
    %cst_184 = arith.constant dense<0.000000e+00> : vector<8xf32>
    %429 = vector.multi_reduction <add>, %428, %cst_184 [1] : vector<8x8xf32> to vector<8xf32>
    %430 = vector.shape_cast %429 : vector<8xf32> to vector<8x1xf32>
    %431 = tpu.reciprocal %430 {approx = true} : vector<8x1xf32> -> vector<8x1xf32>
    %cst_185 = arith.constant dense<0.000000e+00> : vector<8x8xf32>
    %432 = tpu.matmul %428, %421, %cst_185 {dimension_numbers = #tpu.dot_dimension_numbers<[1], [0], [0], [1], [0, 0, 1, 1], [], []>} : vector<8x8xf32>, vector<8x8xf32>, vector<8x8xf32> -> vector<8x8xf32>
    %433 = vector.broadcast %431 : vector<8x1xf32> to vector<8x8xf32>
    %434 = arith.mulf %432, %433 : vector<8x8xf32>
    %435 = arith.truncf %434 : vector<8x8xf32> to vector<8x8xbf16>
    %436 = vector.extract_strided_slice %392 {offsets = [1, 0, 0], sizes = [1, 8, 32], strides = [1, 1, 1]} : vector<4x8x32xbf16> to vector<1x8x32xbf16>
    %437 = vector.shape_cast %436 : vector<1x8x32xbf16> to vector<8x32xbf16>
    %cst_186 = arith.constant dense<0.000000e+00> : vector<8x32xf32>
    %438 = tpu.matmul %435, %437, %cst_186 {dimension_numbers = #tpu.dot_dimension_numbers<[1], [0], [0], [1], [0, 0, 1, 1], [], []>} : vector<8x8xbf16>, vector<8x32xbf16>, vector<8x32xf32> -> vector<8x32xf32>
    %439 = arith.addf %416, %438 : vector<8x32xf32>
    %440 = vector.extract_strided_slice %388 {offsets = [0, 16], sizes = [8, 8], strides = [1, 1]} : vector<8x32xf32> to vector<8x8xf32>
    %cst_187 = arith.constant 0.353553385 : f32
    %441 = vector.broadcast %cst_187 : f32 to vector<8x8xf32>
    %442 = arith.mulf %440, %441 : vector<8x8xf32>
    %443 = vector.extract_strided_slice %389 {offsets = [0, 16], sizes = [8, 8], strides = [1, 1]} : vector<8x32xf32> to vector<8x8xf32>
    %444 = vector.extract_strided_slice %390 {offsets = [0, 16], sizes = [8, 8], strides = [1, 1]} : vector<8x32xf32> to vector<8x8xf32>
    %cst_188 = arith.constant dense<0.000000e+00> : vector<8x8xf32>
    %445 = tpu.matmul %442, %443, %cst_188 {dimension_numbers = #tpu.dot_dimension_numbers<[1], [1], [0], [0], [0, 0, 1, 0], [], []>} : vector<8x8xf32>, vector<8x8xf32>, vector<8x8xf32> -> vector<8x8xf32>
    %446 = arith.addf %445, %15 : vector<8x8xf32>
    %cst_189 = arith.constant dense<0xFF800000> : vector<8xf32>
    %447 = vector.multi_reduction <maximumf>, %446, %cst_189 [1] : vector<8x8xf32> to vector<8xf32>
    %448 = vector.shape_cast %447 : vector<8xf32> to vector<8x1xf32>
    %449 = vector.broadcast %448 : vector<8x1xf32> to vector<8x8xf32>
    %450 = arith.subf %446, %449 : vector<8x8xf32>
    %451 = math.exp %450 : vector<8x8xf32>
    %cst_190 = arith.constant dense<0.000000e+00> : vector<8xf32>
    %452 = vector.multi_reduction <add>, %451, %cst_190 [1] : vector<8x8xf32> to vector<8xf32>
    %453 = vector.shape_cast %452 : vector<8xf32> to vector<8x1xf32>
    %454 = tpu.reciprocal %453 {approx = true} : vector<8x1xf32> -> vector<8x1xf32>
    %cst_191 = arith.constant dense<0.000000e+00> : vector<8x8xf32>
    %455 = tpu.matmul %451, %444, %cst_191 {dimension_numbers = #tpu.dot_dimension_numbers<[1], [0], [0], [1], [0, 0, 1, 1], [], []>} : vector<8x8xf32>, vector<8x8xf32>, vector<8x8xf32> -> vector<8x8xf32>
    %456 = vector.broadcast %454 : vector<8x1xf32> to vector<8x8xf32>
    %457 = arith.mulf %455, %456 : vector<8x8xf32>
    %458 = arith.truncf %457 : vector<8x8xf32> to vector<8x8xbf16>
    %459 = vector.extract_strided_slice %392 {offsets = [2, 0, 0], sizes = [1, 8, 32], strides = [1, 1, 1]} : vector<4x8x32xbf16> to vector<1x8x32xbf16>
    %460 = vector.shape_cast %459 : vector<1x8x32xbf16> to vector<8x32xbf16>
    %cst_192 = arith.constant dense<0.000000e+00> : vector<8x32xf32>
    %461 = tpu.matmul %458, %460, %cst_192 {dimension_numbers = #tpu.dot_dimension_numbers<[1], [0], [0], [1], [0, 0, 1, 1], [], []>} : vector<8x8xbf16>, vector<8x32xbf16>, vector<8x32xf32> -> vector<8x32xf32>
    %462 = arith.addf %439, %461 : vector<8x32xf32>
    %463 = vector.extract_strided_slice %388 {offsets = [0, 24], sizes = [8, 8], strides = [1, 1]} : vector<8x32xf32> to vector<8x8xf32>
    %cst_193 = arith.constant 0.353553385 : f32
    %464 = vector.broadcast %cst_193 : f32 to vector<8x8xf32>
    %465 = arith.mulf %463, %464 : vector<8x8xf32>
    %466 = vector.extract_strided_slice %389 {offsets = [0, 24], sizes = [8, 8], strides = [1, 1]} : vector<8x32xf32> to vector<8x8xf32>
    %467 = vector.extract_strided_slice %390 {offsets = [0, 24], sizes = [8, 8], strides = [1, 1]} : vector<8x32xf32> to vector<8x8xf32>
    %cst_194 = arith.constant dense<0.000000e+00> : vector<8x8xf32>
    %468 = tpu.matmul %465, %466, %cst_194 {dimension_numbers = #tpu.dot_dimension_numbers<[1], [1], [0], [0], [0, 0, 1, 0], [], []>} : vector<8x8xf32>, vector<8x8xf32>, vector<8x8xf32> -> vector<8x8xf32>
    %469 = arith.addf %468, %15 : vector<8x8xf32>
    %cst_195 = arith.constant dense<0xFF800000> : vector<8xf32>
    %470 = vector.multi_reduction <maximumf>, %469, %cst_195 [1] : vector<8x8xf32> to vector<8xf32>
    %471 = vector.shape_cast %470 : vector<8xf32> to vector<8x1xf32>
    %472 = vector.broadcast %471 : vector<8x1xf32> to vector<8x8xf32>
    %473 = arith.subf %469, %472 : vector<8x8xf32>
    %474 = math.exp %473 : vector<8x8xf32>
    %cst_196 = arith.constant dense<0.000000e+00> : vector<8xf32>
    %475 = vector.multi_reduction <add>, %474, %cst_196 [1] : vector<8x8xf32> to vector<8xf32>
    %476 = vector.shape_cast %475 : vector<8xf32> to vector<8x1xf32>
    %477 = tpu.reciprocal %476 {approx = true} : vector<8x1xf32> -> vector<8x1xf32>
    %cst_197 = arith.constant dense<0.000000e+00> : vector<8x8xf32>
    %478 = tpu.matmul %474, %467, %cst_197 {dimension_numbers = #tpu.dot_dimension_numbers<[1], [0], [0], [1], [0, 0, 1, 1], [], []>} : vector<8x8xf32>, vector<8x8xf32>, vector<8x8xf32> -> vector<8x8xf32>
    %479 = vector.broadcast %477 : vector<8x1xf32> to vector<8x8xf32>
    %480 = arith.mulf %478, %479 : vector<8x8xf32>
    %481 = arith.truncf %480 : vector<8x8xf32> to vector<8x8xbf16>
    %482 = vector.extract_strided_slice %392 {offsets = [3, 0, 0], sizes = [1, 8, 32], strides = [1, 1, 1]} : vector<4x8x32xbf16> to vector<1x8x32xbf16>
    %483 = vector.shape_cast %482 : vector<1x8x32xbf16> to vector<8x32xbf16>
    %cst_198 = arith.constant dense<0.000000e+00> : vector<8x32xf32>
    %484 = tpu.matmul %481, %483, %cst_198 {dimension_numbers = #tpu.dot_dimension_numbers<[1], [0], [0], [1], [0, 0, 1, 1], [], []>} : vector<8x8xbf16>, vector<8x32xbf16>, vector<8x32xf32> -> vector<8x32xf32>
    %485 = arith.addf %462, %484 : vector<8x32xf32>
    %c0_199 = arith.constant 0 : index
    %c0_200 = arith.constant 0 : index
    %c0_201 = arith.constant 0 : index
    %486 = vector.load %arg20[%c0_199, %c0_200, %c0_201] : memref<2x1x32xf32, #tpu.memory_space<vmem>>, vector<1x1x32xf32>
    %487 = vector.shape_cast %486 : vector<1x1x32xf32> to vector<1x32xf32>
    %488 = vector.broadcast %487 : vector<1x32xf32> to vector<8x32xf32>
    %489 = arith.addf %485, %488 : vector<8x32xf32>
    %490 = arith.addf %489, %3 : vector<8x32xf32>
    %c0_202 = arith.constant 0 : index
    %c0_203 = arith.constant 0 : index
    %c0_204 = arith.constant 0 : index
    %491 = vector.load %arg21[%c0_202, %c0_203, %c0_204] : memref<2x1x32xf32, #tpu.memory_space<vmem>>, vector<1x1x32xf32>
    %492 = vector.shape_cast %491 : vector<1x1x32xf32> to vector<1x32xf32>
    %c0_205 = arith.constant 0 : index
    %c0_206 = arith.constant 0 : index
    %c0_207 = arith.constant 0 : index
    %493 = vector.load %arg22[%c0_205, %c0_206, %c0_207] : memref<2x1x32xf32, #tpu.memory_space<vmem>>, vector<1x1x32xf32>
    %494 = vector.shape_cast %493 : vector<1x1x32xf32> to vector<1x32xf32>
    %cst_208 = arith.constant dense<0.000000e+00> : vector<8xf32>
    %495 = vector.multi_reduction <add>, %490, %cst_208 [1] : vector<8x32xf32> to vector<8xf32>
    %496 = vector.shape_cast %495 : vector<8xf32> to vector<8x1xf32>
    %cst_209 = arith.constant 3.200000e+01 : f32
    %497 = vector.broadcast %cst_209 : f32 to vector<8x1xf32>
    %498 = arith.divf %496, %497 : vector<8x1xf32>
    %499 = vector.broadcast %498 : vector<8x1xf32> to vector<8x32xf32>
    %500 = arith.subf %490, %499 : vector<8x32xf32>
    %501 = arith.mulf %500, %500 : vector<8x32xf32>
    %cst_210 = arith.constant dense<0.000000e+00> : vector<8xf32>
    %502 = vector.multi_reduction <add>, %501, %cst_210 [1] : vector<8x32xf32> to vector<8xf32>
    %503 = vector.shape_cast %502 : vector<8xf32> to vector<8x1xf32>
    %cst_211 = arith.constant 3.200000e+01 : f32
    %504 = vector.broadcast %cst_211 : f32 to vector<8x1xf32>
    %505 = arith.divf %503, %504 : vector<8x1xf32>
    %cst_212 = arith.constant 9.99999974E-6 : f32
    %506 = vector.broadcast %cst_212 : f32 to vector<8x1xf32>
    %507 = arith.addf %505, %506 : vector<8x1xf32>
    %508 = math.rsqrt %507 : vector<8x1xf32>
    %509 = vector.broadcast %508 : vector<8x1xf32> to vector<8x32xf32>
    %510 = arith.mulf %500, %509 : vector<8x32xf32>
    %511 = vector.broadcast %492 : vector<1x32xf32> to vector<8x32xf32>
    %512 = arith.mulf %510, %511 : vector<8x32xf32>
    %513 = vector.broadcast %494 : vector<1x32xf32> to vector<8x32xf32>
    %514 = arith.addf %512, %513 : vector<8x32xf32>
    %c0_213 = arith.constant 0 : index
    %c0_214 = arith.constant 0 : index
    %c0_215 = arith.constant 0 : index
    %515 = vector.load %arg23[%c0_213, %c0_214, %c0_215] : memref<2x32x32xbf16, #tpu.memory_space<vmem>>, vector<1x32x32xbf16>
    %516 = vector.shape_cast %515 : vector<1x32x32xbf16> to vector<32x32xbf16>
    %517 = arith.truncf %514 : vector<8x32xf32> to vector<8x32xbf16>
    %cst_216 = arith.constant dense<0.000000e+00> : vector<8x32xf32>
    %518 = tpu.matmul %517, %516, %cst_216 {dimension_numbers = #tpu.dot_dimension_numbers<[1], [0], [0], [1], [0, 0, 1, 1], [], []>} : vector<8x32xbf16>, vector<32x32xbf16>, vector<8x32xf32> -> vector<8x32xf32>
    %c0_217 = arith.constant 0 : index
    %c0_218 = arith.constant 0 : index
    %c0_219 = arith.constant 0 : index
    %519 = vector.load %arg24[%c0_217, %c0_218, %c0_219] : memref<2x1x32xf32, #tpu.memory_space<vmem>>, vector<1x1x32xf32>
    %520 = vector.shape_cast %519 : vector<1x1x32xf32> to vector<1x32xf32>
    %521 = vector.broadcast %520 : vector<1x32xf32> to vector<8x32xf32>
    %522 = arith.addf %518, %521 : vector<8x32xf32>
    %c0_220 = arith.constant 0 : index
    %c0_221 = arith.constant 0 : index
    %c0_222 = arith.constant 0 : index
    %523 = vector.load %arg25[%c0_220, %c0_221, %c0_222] : memref<2x32x64xbf16, #tpu.memory_space<vmem>>, vector<1x32x64xbf16>
    %524 = vector.shape_cast %523 : vector<1x32x64xbf16> to vector<32x64xbf16>
    %525 = arith.truncf %379 : vector<8x32xf32> to vector<8x32xbf16>
    %cst_223 = arith.constant dense<0.000000e+00> : vector<8x64xf32>
    %526 = tpu.matmul %525, %524, %cst_223 {dimension_numbers = #tpu.dot_dimension_numbers<[1], [0], [0], [1], [0, 0, 1, 1], [], []>} : vector<8x32xbf16>, vector<32x64xbf16>, vector<8x64xf32> -> vector<8x64xf32>
    %c0_224 = arith.constant 0 : index
    %c0_225 = arith.constant 0 : index
    %c0_226 = arith.constant 0 : index
    %527 = vector.load %arg26[%c0_224, %c0_225, %c0_226] : memref<2x1x64xf32, #tpu.memory_space<vmem>>, vector<1x1x64xf32>
    %528 = vector.shape_cast %527 : vector<1x1x64xf32> to vector<1x64xf32>
    %529 = vector.broadcast %528 : vector<1x64xf32> to vector<8x64xf32>
    %530 = arith.addf %526, %529 : vector<8x64xf32>
    %531 = vector.extract_strided_slice %530 {offsets = [0, 0], sizes = [8, 32], strides = [1, 1]} : vector<8x64xf32> to vector<8x32xf32>
    %532 = vector.extract_strided_slice %530 {offsets = [0, 32], sizes = [8, 32], strides = [1, 1]} : vector<8x64xf32> to vector<8x32xf32>
    %c0_227 = arith.constant 0 : index
    %c0_228 = arith.constant 0 : index
    %c0_229 = arith.constant 0 : index
    %c0_230 = arith.constant 0 : index
    %533 = vector.load %arg27[%c0_227, %c0_228, %c0_229, %c0_230] : memref<2x4x8x32xbf16, #tpu.memory_space<vmem>>, vector<1x4x8x32xbf16>
    %534 = vector.shape_cast %533 : vector<1x4x8x32xbf16> to vector<4x8x32xbf16>
    %cst_231 = arith.constant 0.000000e+00 : f32
    %535 = vector.broadcast %cst_231 : f32 to vector<8x32xf32>
    %536 = vector.extract_strided_slice %522 {offsets = [0, 0], sizes = [8, 8], strides = [1, 1]} : vector<8x32xf32> to vector<8x8xf32>
    %cst_232 = arith.constant 0.353553385 : f32
    %537 = vector.broadcast %cst_232 : f32 to vector<8x8xf32>
    %538 = arith.mulf %536, %537 : vector<8x8xf32>
    %539 = vector.extract_strided_slice %531 {offsets = [0, 0], sizes = [8, 8], strides = [1, 1]} : vector<8x32xf32> to vector<8x8xf32>
    %540 = vector.extract_strided_slice %532 {offsets = [0, 0], sizes = [8, 8], strides = [1, 1]} : vector<8x32xf32> to vector<8x8xf32>
    %cst_233 = arith.constant dense<0.000000e+00> : vector<8x8xf32>
    %541 = tpu.matmul %538, %539, %cst_233 {dimension_numbers = #tpu.dot_dimension_numbers<[1], [1], [0], [0], [0, 0, 1, 0], [], []>} : vector<8x8xf32>, vector<8x8xf32>, vector<8x8xf32> -> vector<8x8xf32>
    %cst_234 = arith.constant dense<0xFF800000> : vector<8xf32>
    %542 = vector.multi_reduction <maximumf>, %541, %cst_234 [1] : vector<8x8xf32> to vector<8xf32>
    %543 = vector.shape_cast %542 : vector<8xf32> to vector<8x1xf32>
    %544 = vector.broadcast %543 : vector<8x1xf32> to vector<8x8xf32>
    %545 = arith.subf %541, %544 : vector<8x8xf32>
    %546 = math.exp %545 : vector<8x8xf32>
    %cst_235 = arith.constant dense<0.000000e+00> : vector<8xf32>
    %547 = vector.multi_reduction <add>, %546, %cst_235 [1] : vector<8x8xf32> to vector<8xf32>
    %548 = vector.shape_cast %547 : vector<8xf32> to vector<8x1xf32>
    %549 = tpu.reciprocal %548 {approx = true} : vector<8x1xf32> -> vector<8x1xf32>
    %cst_236 = arith.constant dense<0.000000e+00> : vector<8x8xf32>
    %550 = tpu.matmul %546, %540, %cst_236 {dimension_numbers = #tpu.dot_dimension_numbers<[1], [0], [0], [1], [0, 0, 1, 1], [], []>} : vector<8x8xf32>, vector<8x8xf32>, vector<8x8xf32> -> vector<8x8xf32>
    %551 = vector.broadcast %549 : vector<8x1xf32> to vector<8x8xf32>
    %552 = arith.mulf %550, %551 : vector<8x8xf32>
    %553 = arith.truncf %552 : vector<8x8xf32> to vector<8x8xbf16>
    %554 = vector.extract_strided_slice %534 {offsets = [0, 0, 0], sizes = [1, 8, 32], strides = [1, 1, 1]} : vector<4x8x32xbf16> to vector<1x8x32xbf16>
    %555 = vector.shape_cast %554 : vector<1x8x32xbf16> to vector<8x32xbf16>
    %cst_237 = arith.constant dense<0.000000e+00> : vector<8x32xf32>
    %556 = tpu.matmul %553, %555, %cst_237 {dimension_numbers = #tpu.dot_dimension_numbers<[1], [0], [0], [1], [0, 0, 1, 1], [], []>} : vector<8x8xbf16>, vector<8x32xbf16>, vector<8x32xf32> -> vector<8x32xf32>
    %557 = arith.addf %535, %556 : vector<8x32xf32>
    %558 = vector.extract_strided_slice %522 {offsets = [0, 8], sizes = [8, 8], strides = [1, 1]} : vector<8x32xf32> to vector<8x8xf32>
    %cst_238 = arith.constant 0.353553385 : f32
    %559 = vector.broadcast %cst_238 : f32 to vector<8x8xf32>
    %560 = arith.mulf %558, %559 : vector<8x8xf32>
    %561 = vector.extract_strided_slice %531 {offsets = [0, 8], sizes = [8, 8], strides = [1, 1]} : vector<8x32xf32> to vector<8x8xf32>
    %562 = vector.extract_strided_slice %532 {offsets = [0, 8], sizes = [8, 8], strides = [1, 1]} : vector<8x32xf32> to vector<8x8xf32>
    %cst_239 = arith.constant dense<0.000000e+00> : vector<8x8xf32>
    %563 = tpu.matmul %560, %561, %cst_239 {dimension_numbers = #tpu.dot_dimension_numbers<[1], [1], [0], [0], [0, 0, 1, 0], [], []>} : vector<8x8xf32>, vector<8x8xf32>, vector<8x8xf32> -> vector<8x8xf32>
    %cst_240 = arith.constant dense<0xFF800000> : vector<8xf32>
    %564 = vector.multi_reduction <maximumf>, %563, %cst_240 [1] : vector<8x8xf32> to vector<8xf32>
    %565 = vector.shape_cast %564 : vector<8xf32> to vector<8x1xf32>
    %566 = vector.broadcast %565 : vector<8x1xf32> to vector<8x8xf32>
    %567 = arith.subf %563, %566 : vector<8x8xf32>
    %568 = math.exp %567 : vector<8x8xf32>
    %cst_241 = arith.constant dense<0.000000e+00> : vector<8xf32>
    %569 = vector.multi_reduction <add>, %568, %cst_241 [1] : vector<8x8xf32> to vector<8xf32>
    %570 = vector.shape_cast %569 : vector<8xf32> to vector<8x1xf32>
    %571 = tpu.reciprocal %570 {approx = true} : vector<8x1xf32> -> vector<8x1xf32>
    %cst_242 = arith.constant dense<0.000000e+00> : vector<8x8xf32>
    %572 = tpu.matmul %568, %562, %cst_242 {dimension_numbers = #tpu.dot_dimension_numbers<[1], [0], [0], [1], [0, 0, 1, 1], [], []>} : vector<8x8xf32>, vector<8x8xf32>, vector<8x8xf32> -> vector<8x8xf32>
    %573 = vector.broadcast %571 : vector<8x1xf32> to vector<8x8xf32>
    %574 = arith.mulf %572, %573 : vector<8x8xf32>
    %575 = arith.truncf %574 : vector<8x8xf32> to vector<8x8xbf16>
    %576 = vector.extract_strided_slice %534 {offsets = [1, 0, 0], sizes = [1, 8, 32], strides = [1, 1, 1]} : vector<4x8x32xbf16> to vector<1x8x32xbf16>
    %577 = vector.shape_cast %576 : vector<1x8x32xbf16> to vector<8x32xbf16>
    %cst_243 = arith.constant dense<0.000000e+00> : vector<8x32xf32>
    %578 = tpu.matmul %575, %577, %cst_243 {dimension_numbers = #tpu.dot_dimension_numbers<[1], [0], [0], [1], [0, 0, 1, 1], [], []>} : vector<8x8xbf16>, vector<8x32xbf16>, vector<8x32xf32> -> vector<8x32xf32>
    %579 = arith.addf %557, %578 : vector<8x32xf32>
    %580 = vector.extract_strided_slice %522 {offsets = [0, 16], sizes = [8, 8], strides = [1, 1]} : vector<8x32xf32> to vector<8x8xf32>
    %cst_244 = arith.constant 0.353553385 : f32
    %581 = vector.broadcast %cst_244 : f32 to vector<8x8xf32>
    %582 = arith.mulf %580, %581 : vector<8x8xf32>
    %583 = vector.extract_strided_slice %531 {offsets = [0, 16], sizes = [8, 8], strides = [1, 1]} : vector<8x32xf32> to vector<8x8xf32>
    %584 = vector.extract_strided_slice %532 {offsets = [0, 16], sizes = [8, 8], strides = [1, 1]} : vector<8x32xf32> to vector<8x8xf32>
    %cst_245 = arith.constant dense<0.000000e+00> : vector<8x8xf32>
    %585 = tpu.matmul %582, %583, %cst_245 {dimension_numbers = #tpu.dot_dimension_numbers<[1], [1], [0], [0], [0, 0, 1, 0], [], []>} : vector<8x8xf32>, vector<8x8xf32>, vector<8x8xf32> -> vector<8x8xf32>
    %cst_246 = arith.constant dense<0xFF800000> : vector<8xf32>
    %586 = vector.multi_reduction <maximumf>, %585, %cst_246 [1] : vector<8x8xf32> to vector<8xf32>
    %587 = vector.shape_cast %586 : vector<8xf32> to vector<8x1xf32>
    %588 = vector.broadcast %587 : vector<8x1xf32> to vector<8x8xf32>
    %589 = arith.subf %585, %588 : vector<8x8xf32>
    %590 = math.exp %589 : vector<8x8xf32>
    %cst_247 = arith.constant dense<0.000000e+00> : vector<8xf32>
    %591 = vector.multi_reduction <add>, %590, %cst_247 [1] : vector<8x8xf32> to vector<8xf32>
    %592 = vector.shape_cast %591 : vector<8xf32> to vector<8x1xf32>
    %593 = tpu.reciprocal %592 {approx = true} : vector<8x1xf32> -> vector<8x1xf32>
    %cst_248 = arith.constant dense<0.000000e+00> : vector<8x8xf32>
    %594 = tpu.matmul %590, %584, %cst_248 {dimension_numbers = #tpu.dot_dimension_numbers<[1], [0], [0], [1], [0, 0, 1, 1], [], []>} : vector<8x8xf32>, vector<8x8xf32>, vector<8x8xf32> -> vector<8x8xf32>
    %595 = vector.broadcast %593 : vector<8x1xf32> to vector<8x8xf32>
    %596 = arith.mulf %594, %595 : vector<8x8xf32>
    %597 = arith.truncf %596 : vector<8x8xf32> to vector<8x8xbf16>
    %598 = vector.extract_strided_slice %534 {offsets = [2, 0, 0], sizes = [1, 8, 32], strides = [1, 1, 1]} : vector<4x8x32xbf16> to vector<1x8x32xbf16>
    %599 = vector.shape_cast %598 : vector<1x8x32xbf16> to vector<8x32xbf16>
    %cst_249 = arith.constant dense<0.000000e+00> : vector<8x32xf32>
    %600 = tpu.matmul %597, %599, %cst_249 {dimension_numbers = #tpu.dot_dimension_numbers<[1], [0], [0], [1], [0, 0, 1, 1], [], []>} : vector<8x8xbf16>, vector<8x32xbf16>, vector<8x32xf32> -> vector<8x32xf32>
    %601 = arith.addf %579, %600 : vector<8x32xf32>
    %602 = vector.extract_strided_slice %522 {offsets = [0, 24], sizes = [8, 8], strides = [1, 1]} : vector<8x32xf32> to vector<8x8xf32>
    %cst_250 = arith.constant 0.353553385 : f32
    %603 = vector.broadcast %cst_250 : f32 to vector<8x8xf32>
    %604 = arith.mulf %602, %603 : vector<8x8xf32>
    %605 = vector.extract_strided_slice %531 {offsets = [0, 24], sizes = [8, 8], strides = [1, 1]} : vector<8x32xf32> to vector<8x8xf32>
    %606 = vector.extract_strided_slice %532 {offsets = [0, 24], sizes = [8, 8], strides = [1, 1]} : vector<8x32xf32> to vector<8x8xf32>
    %cst_251 = arith.constant dense<0.000000e+00> : vector<8x8xf32>
    %607 = tpu.matmul %604, %605, %cst_251 {dimension_numbers = #tpu.dot_dimension_numbers<[1], [1], [0], [0], [0, 0, 1, 0], [], []>} : vector<8x8xf32>, vector<8x8xf32>, vector<8x8xf32> -> vector<8x8xf32>
    %cst_252 = arith.constant dense<0xFF800000> : vector<8xf32>
    %608 = vector.multi_reduction <maximumf>, %607, %cst_252 [1] : vector<8x8xf32> to vector<8xf32>
    %609 = vector.shape_cast %608 : vector<8xf32> to vector<8x1xf32>
    %610 = vector.broadcast %609 : vector<8x1xf32> to vector<8x8xf32>
    %611 = arith.subf %607, %610 : vector<8x8xf32>
    %612 = math.exp %611 : vector<8x8xf32>
    %cst_253 = arith.constant dense<0.000000e+00> : vector<8xf32>
    %613 = vector.multi_reduction <add>, %612, %cst_253 [1] : vector<8x8xf32> to vector<8xf32>
    %614 = vector.shape_cast %613 : vector<8xf32> to vector<8x1xf32>
    %615 = tpu.reciprocal %614 {approx = true} : vector<8x1xf32> -> vector<8x1xf32>
    %cst_254 = arith.constant dense<0.000000e+00> : vector<8x8xf32>
    %616 = tpu.matmul %612, %606, %cst_254 {dimension_numbers = #tpu.dot_dimension_numbers<[1], [0], [0], [1], [0, 0, 1, 1], [], []>} : vector<8x8xf32>, vector<8x8xf32>, vector<8x8xf32> -> vector<8x8xf32>
    %617 = vector.broadcast %615 : vector<8x1xf32> to vector<8x8xf32>
    %618 = arith.mulf %616, %617 : vector<8x8xf32>
    %619 = arith.truncf %618 : vector<8x8xf32> to vector<8x8xbf16>
    %620 = vector.extract_strided_slice %534 {offsets = [3, 0, 0], sizes = [1, 8, 32], strides = [1, 1, 1]} : vector<4x8x32xbf16> to vector<1x8x32xbf16>
    %621 = vector.shape_cast %620 : vector<1x8x32xbf16> to vector<8x32xbf16>
    %cst_255 = arith.constant dense<0.000000e+00> : vector<8x32xf32>
    %622 = tpu.matmul %619, %621, %cst_255 {dimension_numbers = #tpu.dot_dimension_numbers<[1], [0], [0], [1], [0, 0, 1, 1], [], []>} : vector<8x8xbf16>, vector<8x32xbf16>, vector<8x32xf32> -> vector<8x32xf32>
    %623 = arith.addf %601, %622 : vector<8x32xf32>
    %c0_256 = arith.constant 0 : index
    %c0_257 = arith.constant 0 : index
    %c0_258 = arith.constant 0 : index
    %624 = vector.load %arg28[%c0_256, %c0_257, %c0_258] : memref<2x1x32xf32, #tpu.memory_space<vmem>>, vector<1x1x32xf32>
    %625 = vector.shape_cast %624 : vector<1x1x32xf32> to vector<1x32xf32>
    %626 = vector.broadcast %625 : vector<1x32xf32> to vector<8x32xf32>
    %627 = arith.addf %623, %626 : vector<8x32xf32>
    %628 = arith.addf %627, %514 : vector<8x32xf32>
    %c0_259 = arith.constant 0 : index
    %c0_260 = arith.constant 0 : index
    %c0_261 = arith.constant 0 : index
    %629 = vector.load %arg29[%c0_259, %c0_260, %c0_261] : memref<2x1x32xf32, #tpu.memory_space<vmem>>, vector<1x1x32xf32>
    %630 = vector.shape_cast %629 : vector<1x1x32xf32> to vector<1x32xf32>
    %c0_262 = arith.constant 0 : index
    %c0_263 = arith.constant 0 : index
    %c0_264 = arith.constant 0 : index
    %631 = vector.load %arg30[%c0_262, %c0_263, %c0_264] : memref<2x1x32xf32, #tpu.memory_space<vmem>>, vector<1x1x32xf32>
    %632 = vector.shape_cast %631 : vector<1x1x32xf32> to vector<1x32xf32>
    %cst_265 = arith.constant dense<0.000000e+00> : vector<8xf32>
    %633 = vector.multi_reduction <add>, %628, %cst_265 [1] : vector<8x32xf32> to vector<8xf32>
    %634 = vector.shape_cast %633 : vector<8xf32> to vector<8x1xf32>
    %cst_266 = arith.constant 3.200000e+01 : f32
    %635 = vector.broadcast %cst_266 : f32 to vector<8x1xf32>
    %636 = arith.divf %634, %635 : vector<8x1xf32>
    %637 = vector.broadcast %636 : vector<8x1xf32> to vector<8x32xf32>
    %638 = arith.subf %628, %637 : vector<8x32xf32>
    %639 = arith.mulf %638, %638 : vector<8x32xf32>
    %cst_267 = arith.constant dense<0.000000e+00> : vector<8xf32>
    %640 = vector.multi_reduction <add>, %639, %cst_267 [1] : vector<8x32xf32> to vector<8xf32>
    %641 = vector.shape_cast %640 : vector<8xf32> to vector<8x1xf32>
    %cst_268 = arith.constant 3.200000e+01 : f32
    %642 = vector.broadcast %cst_268 : f32 to vector<8x1xf32>
    %643 = arith.divf %641, %642 : vector<8x1xf32>
    %cst_269 = arith.constant 9.99999974E-6 : f32
    %644 = vector.broadcast %cst_269 : f32 to vector<8x1xf32>
    %645 = arith.addf %643, %644 : vector<8x1xf32>
    %646 = math.rsqrt %645 : vector<8x1xf32>
    %647 = vector.broadcast %646 : vector<8x1xf32> to vector<8x32xf32>
    %648 = arith.mulf %638, %647 : vector<8x32xf32>
    %649 = vector.broadcast %630 : vector<1x32xf32> to vector<8x32xf32>
    %650 = arith.mulf %648, %649 : vector<8x32xf32>
    %651 = vector.broadcast %632 : vector<1x32xf32> to vector<8x32xf32>
    %652 = arith.addf %650, %651 : vector<8x32xf32>
    %c0_270 = arith.constant 0 : index
    %c0_271 = arith.constant 0 : index
    %c0_272 = arith.constant 0 : index
    %653 = vector.load %arg31[%c0_270, %c0_271, %c0_272] : memref<2x32x2048xbf16, #tpu.memory_space<vmem>>, vector<1x32x2048xbf16>
    %654 = vector.shape_cast %653 : vector<1x32x2048xbf16> to vector<32x2048xbf16>
    %c0_273 = arith.constant 0 : index
    %c0_274 = arith.constant 0 : index
    %c0_275 = arith.constant 0 : index
    %655 = vector.load %arg32[%c0_273, %c0_274, %c0_275] : memref<2x1x2048xf32, #tpu.memory_space<vmem>>, vector<1x1x2048xf32>
    %656 = vector.shape_cast %655 : vector<1x1x2048xf32> to vector<1x2048xf32>
    %c0_276 = arith.constant 0 : index
    %c0_277 = arith.constant 0 : index
    %c0_278 = arith.constant 0 : index
    %657 = vector.load %arg33[%c0_276, %c0_277, %c0_278] : memref<2x32x2048xbf16, #tpu.memory_space<vmem>>, vector<1x32x2048xbf16>
    %658 = vector.shape_cast %657 : vector<1x32x2048xbf16> to vector<32x2048xbf16>
    %c0_279 = arith.constant 0 : index
    %c0_280 = arith.constant 0 : index
    %c0_281 = arith.constant 0 : index
    %659 = vector.load %arg34[%c0_279, %c0_280, %c0_281] : memref<2x1x32xf32, #tpu.memory_space<vmem>>, vector<1x1x32xf32>
    %660 = vector.shape_cast %659 : vector<1x1x32xf32> to vector<1x32xf32>
    %661 = arith.truncf %652 : vector<8x32xf32> to vector<8x32xbf16>
    %cst_282 = arith.constant dense<0.000000e+00> : vector<8x2048xf32>
    %662 = tpu.matmul %661, %654, %cst_282 {dimension_numbers = #tpu.dot_dimension_numbers<[1], [0], [0], [1], [0, 0, 1, 1], [], []>} : vector<8x32xbf16>, vector<32x2048xbf16>, vector<8x2048xf32> -> vector<8x2048xf32>
    %663 = vector.broadcast %656 : vector<1x2048xf32> to vector<8x2048xf32>
    %664 = arith.addf %662, %663 : vector<8x2048xf32>
    %cst_283 = arith.constant 0.000000e+00 : f32
    %665 = vector.broadcast %cst_283 : f32 to vector<8x2048xf32>
    %666 = arith.maximumf %664, %665 : vector<8x2048xf32>
    %667 = arith.truncf %666 : vector<8x2048xf32> to vector<8x2048xbf16>
    %cst_284 = arith.constant dense<0.000000e+00> : vector<8x32xf32>
    %668 = tpu.matmul %667, %658, %cst_284 {dimension_numbers = #tpu.dot_dimension_numbers<[1], [1], [0], [0], [0, 0, 1, 0], [], []>} : vector<8x2048xbf16>, vector<32x2048xbf16>, vector<8x32xf32> -> vector<8x32xf32>
    %669 = vector.broadcast %660 : vector<1x32xf32> to vector<8x32xf32>
    %670 = arith.addf %668, %669 : vector<8x32xf32>
    %671 = arith.addf %670, %652 : vector<8x32xf32>
    %c0_285 = arith.constant 0 : index
    %c0_286 = arith.constant 0 : index
    %c0_287 = arith.constant 0 : index
    %672 = vector.load %arg35[%c0_285, %c0_286, %c0_287] : memref<2x1x32xf32, #tpu.memory_space<vmem>>, vector<1x1x32xf32>
    %673 = vector.shape_cast %672 : vector<1x1x32xf32> to vector<1x32xf32>
    %c0_288 = arith.constant 0 : index
    %c0_289 = arith.constant 0 : index
    %c0_290 = arith.constant 0 : index
    %674 = vector.load %arg36[%c0_288, %c0_289, %c0_290] : memref<2x1x32xf32, #tpu.memory_space<vmem>>, vector<1x1x32xf32>
    %675 = vector.shape_cast %674 : vector<1x1x32xf32> to vector<1x32xf32>
    %cst_291 = arith.constant dense<0.000000e+00> : vector<8xf32>
    %676 = vector.multi_reduction <add>, %671, %cst_291 [1] : vector<8x32xf32> to vector<8xf32>
    %677 = vector.shape_cast %676 : vector<8xf32> to vector<8x1xf32>
    %cst_292 = arith.constant 3.200000e+01 : f32
    %678 = vector.broadcast %cst_292 : f32 to vector<8x1xf32>
    %679 = arith.divf %677, %678 : vector<8x1xf32>
    %680 = vector.broadcast %679 : vector<8x1xf32> to vector<8x32xf32>
    %681 = arith.subf %671, %680 : vector<8x32xf32>
    %682 = arith.mulf %681, %681 : vector<8x32xf32>
    %cst_293 = arith.constant dense<0.000000e+00> : vector<8xf32>
    %683 = vector.multi_reduction <add>, %682, %cst_293 [1] : vector<8x32xf32> to vector<8xf32>
    %684 = vector.shape_cast %683 : vector<8xf32> to vector<8x1xf32>
    %cst_294 = arith.constant 3.200000e+01 : f32
    %685 = vector.broadcast %cst_294 : f32 to vector<8x1xf32>
    %686 = arith.divf %684, %685 : vector<8x1xf32>
    %cst_295 = arith.constant 9.99999974E-6 : f32
    %687 = vector.broadcast %cst_295 : f32 to vector<8x1xf32>
    %688 = arith.addf %686, %687 : vector<8x1xf32>
    %689 = math.rsqrt %688 : vector<8x1xf32>
    %690 = vector.broadcast %689 : vector<8x1xf32> to vector<8x32xf32>
    %691 = arith.mulf %681, %690 : vector<8x32xf32>
    %692 = vector.broadcast %673 : vector<1x32xf32> to vector<8x32xf32>
    %693 = arith.mulf %691, %692 : vector<8x32xf32>
    %694 = vector.broadcast %675 : vector<1x32xf32> to vector<8x32xf32>
    %695 = arith.addf %693, %694 : vector<8x32xf32>
    %c1_296 = arith.constant 1 : index
    %c0_297 = arith.constant 0 : index
    %c0_298 = arith.constant 0 : index
    %696 = vector.load %arg17[%c1_296, %c0_297, %c0_298] : memref<2x32x96xbf16, #tpu.memory_space<vmem>>, vector<1x32x96xbf16>
    %697 = vector.shape_cast %696 : vector<1x32x96xbf16> to vector<32x96xbf16>
    %698 = arith.truncf %695 : vector<8x32xf32> to vector<8x32xbf16>
    %cst_299 = arith.constant dense<0.000000e+00> : vector<8x96xf32>
    %699 = tpu.matmul %698, %697, %cst_299 {dimension_numbers = #tpu.dot_dimension_numbers<[1], [0], [0], [1], [0, 0, 1, 1], [], []>} : vector<8x32xbf16>, vector<32x96xbf16>, vector<8x96xf32> -> vector<8x96xf32>
    %c1_300 = arith.constant 1 : index
    %c0_301 = arith.constant 0 : index
    %c0_302 = arith.constant 0 : index
    %700 = vector.load %arg18[%c1_300, %c0_301, %c0_302] : memref<2x1x96xf32, #tpu.memory_space<vmem>>, vector<1x1x96xf32>
    %701 = vector.shape_cast %700 : vector<1x1x96xf32> to vector<1x96xf32>
    %702 = vector.broadcast %701 : vector<1x96xf32> to vector<8x96xf32>
    %703 = arith.addf %699, %702 : vector<8x96xf32>
    %704 = vector.extract_strided_slice %703 {offsets = [0, 0], sizes = [8, 32], strides = [1, 1]} : vector<8x96xf32> to vector<8x32xf32>
    %705 = vector.extract_strided_slice %703 {offsets = [0, 32], sizes = [8, 32], strides = [1, 1]} : vector<8x96xf32> to vector<8x32xf32>
    %706 = vector.extract_strided_slice %703 {offsets = [0, 64], sizes = [8, 32], strides = [1, 1]} : vector<8x96xf32> to vector<8x32xf32>
    %c1_303 = arith.constant 1 : index
    %c0_304 = arith.constant 0 : index
    %c0_305 = arith.constant 0 : index
    %c0_306 = arith.constant 0 : index
    %707 = vector.load %arg19[%c1_303, %c0_304, %c0_305, %c0_306] : memref<2x4x8x32xbf16, #tpu.memory_space<vmem>>, vector<1x4x8x32xbf16>
    %708 = vector.shape_cast %707 : vector<1x4x8x32xbf16> to vector<4x8x32xbf16>
    %cst_307 = arith.constant 0.000000e+00 : f32
    %709 = vector.broadcast %cst_307 : f32 to vector<8x32xf32>
    %710 = vector.extract_strided_slice %704 {offsets = [0, 0], sizes = [8, 8], strides = [1, 1]} : vector<8x32xf32> to vector<8x8xf32>
    %cst_308 = arith.constant 0.353553385 : f32
    %711 = vector.broadcast %cst_308 : f32 to vector<8x8xf32>
    %712 = arith.mulf %710, %711 : vector<8x8xf32>
    %713 = vector.extract_strided_slice %705 {offsets = [0, 0], sizes = [8, 8], strides = [1, 1]} : vector<8x32xf32> to vector<8x8xf32>
    %714 = vector.extract_strided_slice %706 {offsets = [0, 0], sizes = [8, 8], strides = [1, 1]} : vector<8x32xf32> to vector<8x8xf32>
    %cst_309 = arith.constant dense<0.000000e+00> : vector<8x8xf32>
    %715 = tpu.matmul %712, %713, %cst_309 {dimension_numbers = #tpu.dot_dimension_numbers<[1], [1], [0], [0], [0, 0, 1, 0], [], []>} : vector<8x8xf32>, vector<8x8xf32>, vector<8x8xf32> -> vector<8x8xf32>
    %716 = arith.addf %715, %15 : vector<8x8xf32>
    %cst_310 = arith.constant dense<0xFF800000> : vector<8xf32>
    %717 = vector.multi_reduction <maximumf>, %716, %cst_310 [1] : vector<8x8xf32> to vector<8xf32>
    %718 = vector.shape_cast %717 : vector<8xf32> to vector<8x1xf32>
    %719 = vector.broadcast %718 : vector<8x1xf32> to vector<8x8xf32>
    %720 = arith.subf %716, %719 : vector<8x8xf32>
    %721 = math.exp %720 : vector<8x8xf32>
    %cst_311 = arith.constant dense<0.000000e+00> : vector<8xf32>
    %722 = vector.multi_reduction <add>, %721, %cst_311 [1] : vector<8x8xf32> to vector<8xf32>
    %723 = vector.shape_cast %722 : vector<8xf32> to vector<8x1xf32>
    %724 = tpu.reciprocal %723 {approx = true} : vector<8x1xf32> -> vector<8x1xf32>
    %cst_312 = arith.constant dense<0.000000e+00> : vector<8x8xf32>
    %725 = tpu.matmul %721, %714, %cst_312 {dimension_numbers = #tpu.dot_dimension_numbers<[1], [0], [0], [1], [0, 0, 1, 1], [], []>} : vector<8x8xf32>, vector<8x8xf32>, vector<8x8xf32> -> vector<8x8xf32>
    %726 = vector.broadcast %724 : vector<8x1xf32> to vector<8x8xf32>
    %727 = arith.mulf %725, %726 : vector<8x8xf32>
    %728 = arith.truncf %727 : vector<8x8xf32> to vector<8x8xbf16>
    %729 = vector.extract_strided_slice %708 {offsets = [0, 0, 0], sizes = [1, 8, 32], strides = [1, 1, 1]} : vector<4x8x32xbf16> to vector<1x8x32xbf16>
    %730 = vector.shape_cast %729 : vector<1x8x32xbf16> to vector<8x32xbf16>
    %cst_313 = arith.constant dense<0.000000e+00> : vector<8x32xf32>
    %731 = tpu.matmul %728, %730, %cst_313 {dimension_numbers = #tpu.dot_dimension_numbers<[1], [0], [0], [1], [0, 0, 1, 1], [], []>} : vector<8x8xbf16>, vector<8x32xbf16>, vector<8x32xf32> -> vector<8x32xf32>
    %732 = arith.addf %709, %731 : vector<8x32xf32>
    %733 = vector.extract_strided_slice %704 {offsets = [0, 8], sizes = [8, 8], strides = [1, 1]} : vector<8x32xf32> to vector<8x8xf32>
    %cst_314 = arith.constant 0.353553385 : f32
    %734 = vector.broadcast %cst_314 : f32 to vector<8x8xf32>
    %735 = arith.mulf %733, %734 : vector<8x8xf32>
    %736 = vector.extract_strided_slice %705 {offsets = [0, 8], sizes = [8, 8], strides = [1, 1]} : vector<8x32xf32> to vector<8x8xf32>
    %737 = vector.extract_strided_slice %706 {offsets = [0, 8], sizes = [8, 8], strides = [1, 1]} : vector<8x32xf32> to vector<8x8xf32>
    %cst_315 = arith.constant dense<0.000000e+00> : vector<8x8xf32>
    %738 = tpu.matmul %735, %736, %cst_315 {dimension_numbers = #tpu.dot_dimension_numbers<[1], [1], [0], [0], [0, 0, 1, 0], [], []>} : vector<8x8xf32>, vector<8x8xf32>, vector<8x8xf32> -> vector<8x8xf32>
    %739 = arith.addf %738, %15 : vector<8x8xf32>
    %cst_316 = arith.constant dense<0xFF800000> : vector<8xf32>
    %740 = vector.multi_reduction <maximumf>, %739, %cst_316 [1] : vector<8x8xf32> to vector<8xf32>
    %741 = vector.shape_cast %740 : vector<8xf32> to vector<8x1xf32>
    %742 = vector.broadcast %741 : vector<8x1xf32> to vector<8x8xf32>
    %743 = arith.subf %739, %742 : vector<8x8xf32>
    %744 = math.exp %743 : vector<8x8xf32>
    %cst_317 = arith.constant dense<0.000000e+00> : vector<8xf32>
    %745 = vector.multi_reduction <add>, %744, %cst_317 [1] : vector<8x8xf32> to vector<8xf32>
    %746 = vector.shape_cast %745 : vector<8xf32> to vector<8x1xf32>
    %747 = tpu.reciprocal %746 {approx = true} : vector<8x1xf32> -> vector<8x1xf32>
    %cst_318 = arith.constant dense<0.000000e+00> : vector<8x8xf32>
    %748 = tpu.matmul %744, %737, %cst_318 {dimension_numbers = #tpu.dot_dimension_numbers<[1], [0], [0], [1], [0, 0, 1, 1], [], []>} : vector<8x8xf32>, vector<8x8xf32>, vector<8x8xf32> -> vector<8x8xf32>
    %749 = vector.broadcast %747 : vector<8x1xf32> to vector<8x8xf32>
    %750 = arith.mulf %748, %749 : vector<8x8xf32>
    %751 = arith.truncf %750 : vector<8x8xf32> to vector<8x8xbf16>
    %752 = vector.extract_strided_slice %708 {offsets = [1, 0, 0], sizes = [1, 8, 32], strides = [1, 1, 1]} : vector<4x8x32xbf16> to vector<1x8x32xbf16>
    %753 = vector.shape_cast %752 : vector<1x8x32xbf16> to vector<8x32xbf16>
    %cst_319 = arith.constant dense<0.000000e+00> : vector<8x32xf32>
    %754 = tpu.matmul %751, %753, %cst_319 {dimension_numbers = #tpu.dot_dimension_numbers<[1], [0], [0], [1], [0, 0, 1, 1], [], []>} : vector<8x8xbf16>, vector<8x32xbf16>, vector<8x32xf32> -> vector<8x32xf32>
    %755 = arith.addf %732, %754 : vector<8x32xf32>
    %756 = vector.extract_strided_slice %704 {offsets = [0, 16], sizes = [8, 8], strides = [1, 1]} : vector<8x32xf32> to vector<8x8xf32>
    %cst_320 = arith.constant 0.353553385 : f32
    %757 = vector.broadcast %cst_320 : f32 to vector<8x8xf32>
    %758 = arith.mulf %756, %757 : vector<8x8xf32>
    %759 = vector.extract_strided_slice %705 {offsets = [0, 16], sizes = [8, 8], strides = [1, 1]} : vector<8x32xf32> to vector<8x8xf32>
    %760 = vector.extract_strided_slice %706 {offsets = [0, 16], sizes = [8, 8], strides = [1, 1]} : vector<8x32xf32> to vector<8x8xf32>
    %cst_321 = arith.constant dense<0.000000e+00> : vector<8x8xf32>
    %761 = tpu.matmul %758, %759, %cst_321 {dimension_numbers = #tpu.dot_dimension_numbers<[1], [1], [0], [0], [0, 0, 1, 0], [], []>} : vector<8x8xf32>, vector<8x8xf32>, vector<8x8xf32> -> vector<8x8xf32>
    %762 = arith.addf %761, %15 : vector<8x8xf32>
    %cst_322 = arith.constant dense<0xFF800000> : vector<8xf32>
    %763 = vector.multi_reduction <maximumf>, %762, %cst_322 [1] : vector<8x8xf32> to vector<8xf32>
    %764 = vector.shape_cast %763 : vector<8xf32> to vector<8x1xf32>
    %765 = vector.broadcast %764 : vector<8x1xf32> to vector<8x8xf32>
    %766 = arith.subf %762, %765 : vector<8x8xf32>
    %767 = math.exp %766 : vector<8x8xf32>
    %cst_323 = arith.constant dense<0.000000e+00> : vector<8xf32>
    %768 = vector.multi_reduction <add>, %767, %cst_323 [1] : vector<8x8xf32> to vector<8xf32>
    %769 = vector.shape_cast %768 : vector<8xf32> to vector<8x1xf32>
    %770 = tpu.reciprocal %769 {approx = true} : vector<8x1xf32> -> vector<8x1xf32>
    %cst_324 = arith.constant dense<0.000000e+00> : vector<8x8xf32>
    %771 = tpu.matmul %767, %760, %cst_324 {dimension_numbers = #tpu.dot_dimension_numbers<[1], [0], [0], [1], [0, 0, 1, 1], [], []>} : vector<8x8xf32>, vector<8x8xf32>, vector<8x8xf32> -> vector<8x8xf32>
    %772 = vector.broadcast %770 : vector<8x1xf32> to vector<8x8xf32>
    %773 = arith.mulf %771, %772 : vector<8x8xf32>
    %774 = arith.truncf %773 : vector<8x8xf32> to vector<8x8xbf16>
    %775 = vector.extract_strided_slice %708 {offsets = [2, 0, 0], sizes = [1, 8, 32], strides = [1, 1, 1]} : vector<4x8x32xbf16> to vector<1x8x32xbf16>
    %776 = vector.shape_cast %775 : vector<1x8x32xbf16> to vector<8x32xbf16>
    %cst_325 = arith.constant dense<0.000000e+00> : vector<8x32xf32>
    %777 = tpu.matmul %774, %776, %cst_325 {dimension_numbers = #tpu.dot_dimension_numbers<[1], [0], [0], [1], [0, 0, 1, 1], [], []>} : vector<8x8xbf16>, vector<8x32xbf16>, vector<8x32xf32> -> vector<8x32xf32>
    %778 = arith.addf %755, %777 : vector<8x32xf32>
    %779 = vector.extract_strided_slice %704 {offsets = [0, 24], sizes = [8, 8], strides = [1, 1]} : vector<8x32xf32> to vector<8x8xf32>
    %cst_326 = arith.constant 0.353553385 : f32
    %780 = vector.broadcast %cst_326 : f32 to vector<8x8xf32>
    %781 = arith.mulf %779, %780 : vector<8x8xf32>
    %782 = vector.extract_strided_slice %705 {offsets = [0, 24], sizes = [8, 8], strides = [1, 1]} : vector<8x32xf32> to vector<8x8xf32>
    %783 = vector.extract_strided_slice %706 {offsets = [0, 24], sizes = [8, 8], strides = [1, 1]} : vector<8x32xf32> to vector<8x8xf32>
    %cst_327 = arith.constant dense<0.000000e+00> : vector<8x8xf32>
    %784 = tpu.matmul %781, %782, %cst_327 {dimension_numbers = #tpu.dot_dimension_numbers<[1], [1], [0], [0], [0, 0, 1, 0], [], []>} : vector<8x8xf32>, vector<8x8xf32>, vector<8x8xf32> -> vector<8x8xf32>
    %785 = arith.addf %784, %15 : vector<8x8xf32>
    %cst_328 = arith.constant dense<0xFF800000> : vector<8xf32>
    %786 = vector.multi_reduction <maximumf>, %785, %cst_328 [1] : vector<8x8xf32> to vector<8xf32>
    %787 = vector.shape_cast %786 : vector<8xf32> to vector<8x1xf32>
    %788 = vector.broadcast %787 : vector<8x1xf32> to vector<8x8xf32>
    %789 = arith.subf %785, %788 : vector<8x8xf32>
    %790 = math.exp %789 : vector<8x8xf32>
    %cst_329 = arith.constant dense<0.000000e+00> : vector<8xf32>
    %791 = vector.multi_reduction <add>, %790, %cst_329 [1] : vector<8x8xf32> to vector<8xf32>
    %792 = vector.shape_cast %791 : vector<8xf32> to vector<8x1xf32>
    %793 = tpu.reciprocal %792 {approx = true} : vector<8x1xf32> -> vector<8x1xf32>
    %cst_330 = arith.constant dense<0.000000e+00> : vector<8x8xf32>
    %794 = tpu.matmul %790, %783, %cst_330 {dimension_numbers = #tpu.dot_dimension_numbers<[1], [0], [0], [1], [0, 0, 1, 1], [], []>} : vector<8x8xf32>, vector<8x8xf32>, vector<8x8xf32> -> vector<8x8xf32>
    %795 = vector.broadcast %793 : vector<8x1xf32> to vector<8x8xf32>
    %796 = arith.mulf %794, %795 : vector<8x8xf32>
    %797 = arith.truncf %796 : vector<8x8xf32> to vector<8x8xbf16>
    %798 = vector.extract_strided_slice %708 {offsets = [3, 0, 0], sizes = [1, 8, 32], strides = [1, 1, 1]} : vector<4x8x32xbf16> to vector<1x8x32xbf16>
    %799 = vector.shape_cast %798 : vector<1x8x32xbf16> to vector<8x32xbf16>
    %cst_331 = arith.constant dense<0.000000e+00> : vector<8x32xf32>
    %800 = tpu.matmul %797, %799, %cst_331 {dimension_numbers = #tpu.dot_dimension_numbers<[1], [0], [0], [1], [0, 0, 1, 1], [], []>} : vector<8x8xbf16>, vector<8x32xbf16>, vector<8x32xf32> -> vector<8x32xf32>
    %801 = arith.addf %778, %800 : vector<8x32xf32>
    %c1_332 = arith.constant 1 : index
    %c0_333 = arith.constant 0 : index
    %c0_334 = arith.constant 0 : index
    %802 = vector.load %arg20[%c1_332, %c0_333, %c0_334] : memref<2x1x32xf32, #tpu.memory_space<vmem>>, vector<1x1x32xf32>
    %803 = vector.shape_cast %802 : vector<1x1x32xf32> to vector<1x32xf32>
    %804 = vector.broadcast %803 : vector<1x32xf32> to vector<8x32xf32>
    %805 = arith.addf %801, %804 : vector<8x32xf32>
    %806 = arith.addf %805, %695 : vector<8x32xf32>
    %c1_335 = arith.constant 1 : index
    %c0_336 = arith.constant 0 : index
    %c0_337 = arith.constant 0 : index
    %807 = vector.load %arg21[%c1_335, %c0_336, %c0_337] : memref<2x1x32xf32, #tpu.memory_space<vmem>>, vector<1x1x32xf32>
    %808 = vector.shape_cast %807 : vector<1x1x32xf32> to vector<1x32xf32>
    %c1_338 = arith.constant 1 : index
    %c0_339 = arith.constant 0 : index
    %c0_340 = arith.constant 0 : index
    %809 = vector.load %arg22[%c1_338, %c0_339, %c0_340] : memref<2x1x32xf32, #tpu.memory_space<vmem>>, vector<1x1x32xf32>
    %810 = vector.shape_cast %809 : vector<1x1x32xf32> to vector<1x32xf32>
    %cst_341 = arith.constant dense<0.000000e+00> : vector<8xf32>
    %811 = vector.multi_reduction <add>, %806, %cst_341 [1] : vector<8x32xf32> to vector<8xf32>
    %812 = vector.shape_cast %811 : vector<8xf32> to vector<8x1xf32>
    %cst_342 = arith.constant 3.200000e+01 : f32
    %813 = vector.broadcast %cst_342 : f32 to vector<8x1xf32>
    %814 = arith.divf %812, %813 : vector<8x1xf32>
    %815 = vector.broadcast %814 : vector<8x1xf32> to vector<8x32xf32>
    %816 = arith.subf %806, %815 : vector<8x32xf32>
    %817 = arith.mulf %816, %816 : vector<8x32xf32>
    %cst_343 = arith.constant dense<0.000000e+00> : vector<8xf32>
    %818 = vector.multi_reduction <add>, %817, %cst_343 [1] : vector<8x32xf32> to vector<8xf32>
    %819 = vector.shape_cast %818 : vector<8xf32> to vector<8x1xf32>
    %cst_344 = arith.constant 3.200000e+01 : f32
    %820 = vector.broadcast %cst_344 : f32 to vector<8x1xf32>
    %821 = arith.divf %819, %820 : vector<8x1xf32>
    %cst_345 = arith.constant 9.99999974E-6 : f32
    %822 = vector.broadcast %cst_345 : f32 to vector<8x1xf32>
    %823 = arith.addf %821, %822 : vector<8x1xf32>
    %824 = math.rsqrt %823 : vector<8x1xf32>
    %825 = vector.broadcast %824 : vector<8x1xf32> to vector<8x32xf32>
    %826 = arith.mulf %816, %825 : vector<8x32xf32>
    %827 = vector.broadcast %808 : vector<1x32xf32> to vector<8x32xf32>
    %828 = arith.mulf %826, %827 : vector<8x32xf32>
    %829 = vector.broadcast %810 : vector<1x32xf32> to vector<8x32xf32>
    %830 = arith.addf %828, %829 : vector<8x32xf32>
    %c1_346 = arith.constant 1 : index
    %c0_347 = arith.constant 0 : index
    %c0_348 = arith.constant 0 : index
    %831 = vector.load %arg23[%c1_346, %c0_347, %c0_348] : memref<2x32x32xbf16, #tpu.memory_space<vmem>>, vector<1x32x32xbf16>
    %832 = vector.shape_cast %831 : vector<1x32x32xbf16> to vector<32x32xbf16>
    %833 = arith.truncf %830 : vector<8x32xf32> to vector<8x32xbf16>
    %cst_349 = arith.constant dense<0.000000e+00> : vector<8x32xf32>
    %834 = tpu.matmul %833, %832, %cst_349 {dimension_numbers = #tpu.dot_dimension_numbers<[1], [0], [0], [1], [0, 0, 1, 1], [], []>} : vector<8x32xbf16>, vector<32x32xbf16>, vector<8x32xf32> -> vector<8x32xf32>
    %c1_350 = arith.constant 1 : index
    %c0_351 = arith.constant 0 : index
    %c0_352 = arith.constant 0 : index
    %835 = vector.load %arg24[%c1_350, %c0_351, %c0_352] : memref<2x1x32xf32, #tpu.memory_space<vmem>>, vector<1x1x32xf32>
    %836 = vector.shape_cast %835 : vector<1x1x32xf32> to vector<1x32xf32>
    %837 = vector.broadcast %836 : vector<1x32xf32> to vector<8x32xf32>
    %838 = arith.addf %834, %837 : vector<8x32xf32>
    %c1_353 = arith.constant 1 : index
    %c0_354 = arith.constant 0 : index
    %c0_355 = arith.constant 0 : index
    %839 = vector.load %arg25[%c1_353, %c0_354, %c0_355] : memref<2x32x64xbf16, #tpu.memory_space<vmem>>, vector<1x32x64xbf16>
    %840 = vector.shape_cast %839 : vector<1x32x64xbf16> to vector<32x64xbf16>
    %841 = arith.truncf %379 : vector<8x32xf32> to vector<8x32xbf16>
    %cst_356 = arith.constant dense<0.000000e+00> : vector<8x64xf32>
    %842 = tpu.matmul %841, %840, %cst_356 {dimension_numbers = #tpu.dot_dimension_numbers<[1], [0], [0], [1], [0, 0, 1, 1], [], []>} : vector<8x32xbf16>, vector<32x64xbf16>, vector<8x64xf32> -> vector<8x64xf32>
    %c1_357 = arith.constant 1 : index
    %c0_358 = arith.constant 0 : index
    %c0_359 = arith.constant 0 : index
    %843 = vector.load %arg26[%c1_357, %c0_358, %c0_359] : memref<2x1x64xf32, #tpu.memory_space<vmem>>, vector<1x1x64xf32>
    %844 = vector.shape_cast %843 : vector<1x1x64xf32> to vector<1x64xf32>
    %845 = vector.broadcast %844 : vector<1x64xf32> to vector<8x64xf32>
    %846 = arith.addf %842, %845 : vector<8x64xf32>
    %847 = vector.extract_strided_slice %846 {offsets = [0, 0], sizes = [8, 32], strides = [1, 1]} : vector<8x64xf32> to vector<8x32xf32>
    %848 = vector.extract_strided_slice %846 {offsets = [0, 32], sizes = [8, 32], strides = [1, 1]} : vector<8x64xf32> to vector<8x32xf32>
    %c1_360 = arith.constant 1 : index
    %c0_361 = arith.constant 0 : index
    %c0_362 = arith.constant 0 : index
    %c0_363 = arith.constant 0 : index
    %849 = vector.load %arg27[%c1_360, %c0_361, %c0_362, %c0_363] : memref<2x4x8x32xbf16, #tpu.memory_space<vmem>>, vector<1x4x8x32xbf16>
    %850 = vector.shape_cast %849 : vector<1x4x8x32xbf16> to vector<4x8x32xbf16>
    %cst_364 = arith.constant 0.000000e+00 : f32
    %851 = vector.broadcast %cst_364 : f32 to vector<8x32xf32>
    %852 = vector.extract_strided_slice %838 {offsets = [0, 0], sizes = [8, 8], strides = [1, 1]} : vector<8x32xf32> to vector<8x8xf32>
    %cst_365 = arith.constant 0.353553385 : f32
    %853 = vector.broadcast %cst_365 : f32 to vector<8x8xf32>
    %854 = arith.mulf %852, %853 : vector<8x8xf32>
    %855 = vector.extract_strided_slice %847 {offsets = [0, 0], sizes = [8, 8], strides = [1, 1]} : vector<8x32xf32> to vector<8x8xf32>
    %856 = vector.extract_strided_slice %848 {offsets = [0, 0], sizes = [8, 8], strides = [1, 1]} : vector<8x32xf32> to vector<8x8xf32>
    %cst_366 = arith.constant dense<0.000000e+00> : vector<8x8xf32>
    %857 = tpu.matmul %854, %855, %cst_366 {dimension_numbers = #tpu.dot_dimension_numbers<[1], [1], [0], [0], [0, 0, 1, 0], [], []>} : vector<8x8xf32>, vector<8x8xf32>, vector<8x8xf32> -> vector<8x8xf32>
    %cst_367 = arith.constant dense<0xFF800000> : vector<8xf32>
    %858 = vector.multi_reduction <maximumf>, %857, %cst_367 [1] : vector<8x8xf32> to vector<8xf32>
    %859 = vector.shape_cast %858 : vector<8xf32> to vector<8x1xf32>
    %860 = vector.broadcast %859 : vector<8x1xf32> to vector<8x8xf32>
    %861 = arith.subf %857, %860 : vector<8x8xf32>
    %862 = math.exp %861 : vector<8x8xf32>
    %cst_368 = arith.constant dense<0.000000e+00> : vector<8xf32>
    %863 = vector.multi_reduction <add>, %862, %cst_368 [1] : vector<8x8xf32> to vector<8xf32>
    %864 = vector.shape_cast %863 : vector<8xf32> to vector<8x1xf32>
    %865 = tpu.reciprocal %864 {approx = true} : vector<8x1xf32> -> vector<8x1xf32>
    %cst_369 = arith.constant dense<0.000000e+00> : vector<8x8xf32>
    %866 = tpu.matmul %862, %856, %cst_369 {dimension_numbers = #tpu.dot_dimension_numbers<[1], [0], [0], [1], [0, 0, 1, 1], [], []>} : vector<8x8xf32>, vector<8x8xf32>, vector<8x8xf32> -> vector<8x8xf32>
    %867 = vector.broadcast %865 : vector<8x1xf32> to vector<8x8xf32>
    %868 = arith.mulf %866, %867 : vector<8x8xf32>
    %869 = arith.truncf %868 : vector<8x8xf32> to vector<8x8xbf16>
    %870 = vector.extract_strided_slice %850 {offsets = [0, 0, 0], sizes = [1, 8, 32], strides = [1, 1, 1]} : vector<4x8x32xbf16> to vector<1x8x32xbf16>
    %871 = vector.shape_cast %870 : vector<1x8x32xbf16> to vector<8x32xbf16>
    %cst_370 = arith.constant dense<0.000000e+00> : vector<8x32xf32>
    %872 = tpu.matmul %869, %871, %cst_370 {dimension_numbers = #tpu.dot_dimension_numbers<[1], [0], [0], [1], [0, 0, 1, 1], [], []>} : vector<8x8xbf16>, vector<8x32xbf16>, vector<8x32xf32> -> vector<8x32xf32>
    %873 = arith.addf %851, %872 : vector<8x32xf32>
    %874 = vector.extract_strided_slice %838 {offsets = [0, 8], sizes = [8, 8], strides = [1, 1]} : vector<8x32xf32> to vector<8x8xf32>
    %cst_371 = arith.constant 0.353553385 : f32
    %875 = vector.broadcast %cst_371 : f32 to vector<8x8xf32>
    %876 = arith.mulf %874, %875 : vector<8x8xf32>
    %877 = vector.extract_strided_slice %847 {offsets = [0, 8], sizes = [8, 8], strides = [1, 1]} : vector<8x32xf32> to vector<8x8xf32>
    %878 = vector.extract_strided_slice %848 {offsets = [0, 8], sizes = [8, 8], strides = [1, 1]} : vector<8x32xf32> to vector<8x8xf32>
    %cst_372 = arith.constant dense<0.000000e+00> : vector<8x8xf32>
    %879 = tpu.matmul %876, %877, %cst_372 {dimension_numbers = #tpu.dot_dimension_numbers<[1], [1], [0], [0], [0, 0, 1, 0], [], []>} : vector<8x8xf32>, vector<8x8xf32>, vector<8x8xf32> -> vector<8x8xf32>
    %cst_373 = arith.constant dense<0xFF800000> : vector<8xf32>
    %880 = vector.multi_reduction <maximumf>, %879, %cst_373 [1] : vector<8x8xf32> to vector<8xf32>
    %881 = vector.shape_cast %880 : vector<8xf32> to vector<8x1xf32>
    %882 = vector.broadcast %881 : vector<8x1xf32> to vector<8x8xf32>
    %883 = arith.subf %879, %882 : vector<8x8xf32>
    %884 = math.exp %883 : vector<8x8xf32>
    %cst_374 = arith.constant dense<0.000000e+00> : vector<8xf32>
    %885 = vector.multi_reduction <add>, %884, %cst_374 [1] : vector<8x8xf32> to vector<8xf32>
    %886 = vector.shape_cast %885 : vector<8xf32> to vector<8x1xf32>
    %887 = tpu.reciprocal %886 {approx = true} : vector<8x1xf32> -> vector<8x1xf32>
    %cst_375 = arith.constant dense<0.000000e+00> : vector<8x8xf32>
    %888 = tpu.matmul %884, %878, %cst_375 {dimension_numbers = #tpu.dot_dimension_numbers<[1], [0], [0], [1], [0, 0, 1, 1], [], []>} : vector<8x8xf32>, vector<8x8xf32>, vector<8x8xf32> -> vector<8x8xf32>
    %889 = vector.broadcast %887 : vector<8x1xf32> to vector<8x8xf32>
    %890 = arith.mulf %888, %889 : vector<8x8xf32>
    %891 = arith.truncf %890 : vector<8x8xf32> to vector<8x8xbf16>
    %892 = vector.extract_strided_slice %850 {offsets = [1, 0, 0], sizes = [1, 8, 32], strides = [1, 1, 1]} : vector<4x8x32xbf16> to vector<1x8x32xbf16>
    %893 = vector.shape_cast %892 : vector<1x8x32xbf16> to vector<8x32xbf16>
    %cst_376 = arith.constant dense<0.000000e+00> : vector<8x32xf32>
    %894 = tpu.matmul %891, %893, %cst_376 {dimension_numbers = #tpu.dot_dimension_numbers<[1], [0], [0], [1], [0, 0, 1, 1], [], []>} : vector<8x8xbf16>, vector<8x32xbf16>, vector<8x32xf32> -> vector<8x32xf32>
    %895 = arith.addf %873, %894 : vector<8x32xf32>
    %896 = vector.extract_strided_slice %838 {offsets = [0, 16], sizes = [8, 8], strides = [1, 1]} : vector<8x32xf32> to vector<8x8xf32>
    %cst_377 = arith.constant 0.353553385 : f32
    %897 = vector.broadcast %cst_377 : f32 to vector<8x8xf32>
    %898 = arith.mulf %896, %897 : vector<8x8xf32>
    %899 = vector.extract_strided_slice %847 {offsets = [0, 16], sizes = [8, 8], strides = [1, 1]} : vector<8x32xf32> to vector<8x8xf32>
    %900 = vector.extract_strided_slice %848 {offsets = [0, 16], sizes = [8, 8], strides = [1, 1]} : vector<8x32xf32> to vector<8x8xf32>
    %cst_378 = arith.constant dense<0.000000e+00> : vector<8x8xf32>
    %901 = tpu.matmul %898, %899, %cst_378 {dimension_numbers = #tpu.dot_dimension_numbers<[1], [1], [0], [0], [0, 0, 1, 0], [], []>} : vector<8x8xf32>, vector<8x8xf32>, vector<8x8xf32> -> vector<8x8xf32>
    %cst_379 = arith.constant dense<0xFF800000> : vector<8xf32>
    %902 = vector.multi_reduction <maximumf>, %901, %cst_379 [1] : vector<8x8xf32> to vector<8xf32>
    %903 = vector.shape_cast %902 : vector<8xf32> to vector<8x1xf32>
    %904 = vector.broadcast %903 : vector<8x1xf32> to vector<8x8xf32>
    %905 = arith.subf %901, %904 : vector<8x8xf32>
    %906 = math.exp %905 : vector<8x8xf32>
    %cst_380 = arith.constant dense<0.000000e+00> : vector<8xf32>
    %907 = vector.multi_reduction <add>, %906, %cst_380 [1] : vector<8x8xf32> to vector<8xf32>
    %908 = vector.shape_cast %907 : vector<8xf32> to vector<8x1xf32>
    %909 = tpu.reciprocal %908 {approx = true} : vector<8x1xf32> -> vector<8x1xf32>
    %cst_381 = arith.constant dense<0.000000e+00> : vector<8x8xf32>
    %910 = tpu.matmul %906, %900, %cst_381 {dimension_numbers = #tpu.dot_dimension_numbers<[1], [0], [0], [1], [0, 0, 1, 1], [], []>} : vector<8x8xf32>, vector<8x8xf32>, vector<8x8xf32> -> vector<8x8xf32>
    %911 = vector.broadcast %909 : vector<8x1xf32> to vector<8x8xf32>
    %912 = arith.mulf %910, %911 : vector<8x8xf32>
    %913 = arith.truncf %912 : vector<8x8xf32> to vector<8x8xbf16>
    %914 = vector.extract_strided_slice %850 {offsets = [2, 0, 0], sizes = [1, 8, 32], strides = [1, 1, 1]} : vector<4x8x32xbf16> to vector<1x8x32xbf16>
    %915 = vector.shape_cast %914 : vector<1x8x32xbf16> to vector<8x32xbf16>
    %cst_382 = arith.constant dense<0.000000e+00> : vector<8x32xf32>
    %916 = tpu.matmul %913, %915, %cst_382 {dimension_numbers = #tpu.dot_dimension_numbers<[1], [0], [0], [1], [0, 0, 1, 1], [], []>} : vector<8x8xbf16>, vector<8x32xbf16>, vector<8x32xf32> -> vector<8x32xf32>
    %917 = arith.addf %895, %916 : vector<8x32xf32>
    %918 = vector.extract_strided_slice %838 {offsets = [0, 24], sizes = [8, 8], strides = [1, 1]} : vector<8x32xf32> to vector<8x8xf32>
    %cst_383 = arith.constant 0.353553385 : f32
    %919 = vector.broadcast %cst_383 : f32 to vector<8x8xf32>
    %920 = arith.mulf %918, %919 : vector<8x8xf32>
    %921 = vector.extract_strided_slice %847 {offsets = [0, 24], sizes = [8, 8], strides = [1, 1]} : vector<8x32xf32> to vector<8x8xf32>
    %922 = vector.extract_strided_slice %848 {offsets = [0, 24], sizes = [8, 8], strides = [1, 1]} : vector<8x32xf32> to vector<8x8xf32>
    %cst_384 = arith.constant dense<0.000000e+00> : vector<8x8xf32>
    %923 = tpu.matmul %920, %921, %cst_384 {dimension_numbers = #tpu.dot_dimension_numbers<[1], [1], [0], [0], [0, 0, 1, 0], [], []>} : vector<8x8xf32>, vector<8x8xf32>, vector<8x8xf32> -> vector<8x8xf32>
    %cst_385 = arith.constant dense<0xFF800000> : vector<8xf32>
    %924 = vector.multi_reduction <maximumf>, %923, %cst_385 [1] : vector<8x8xf32> to vector<8xf32>
    %925 = vector.shape_cast %924 : vector<8xf32> to vector<8x1xf32>
    %926 = vector.broadcast %925 : vector<8x1xf32> to vector<8x8xf32>
    %927 = arith.subf %923, %926 : vector<8x8xf32>
    %928 = math.exp %927 : vector<8x8xf32>
    %cst_386 = arith.constant dense<0.000000e+00> : vector<8xf32>
    %929 = vector.multi_reduction <add>, %928, %cst_386 [1] : vector<8x8xf32> to vector<8xf32>
    %930 = vector.shape_cast %929 : vector<8xf32> to vector<8x1xf32>
    %931 = tpu.reciprocal %930 {approx = true} : vector<8x1xf32> -> vector<8x1xf32>
    %cst_387 = arith.constant dense<0.000000e+00> : vector<8x8xf32>
    %932 = tpu.matmul %928, %922, %cst_387 {dimension_numbers = #tpu.dot_dimension_numbers<[1], [0], [0], [1], [0, 0, 1, 1], [], []>} : vector<8x8xf32>, vector<8x8xf32>, vector<8x8xf32> -> vector<8x8xf32>
    %933 = vector.broadcast %931 : vector<8x1xf32> to vector<8x8xf32>
    %934 = arith.mulf %932, %933 : vector<8x8xf32>
    %935 = arith.truncf %934 : vector<8x8xf32> to vector<8x8xbf16>
    %936 = vector.extract_strided_slice %850 {offsets = [3, 0, 0], sizes = [1, 8, 32], strides = [1, 1, 1]} : vector<4x8x32xbf16> to vector<1x8x32xbf16>
    %937 = vector.shape_cast %936 : vector<1x8x32xbf16> to vector<8x32xbf16>
    %cst_388 = arith.constant dense<0.000000e+00> : vector<8x32xf32>
    %938 = tpu.matmul %935, %937, %cst_388 {dimension_numbers = #tpu.dot_dimension_numbers<[1], [0], [0], [1], [0, 0, 1, 1], [], []>} : vector<8x8xbf16>, vector<8x32xbf16>, vector<8x32xf32> -> vector<8x32xf32>
    %939 = arith.addf %917, %938 : vector<8x32xf32>
    %c1_389 = arith.constant 1 : index
    %c0_390 = arith.constant 0 : index
    %c0_391 = arith.constant 0 : index
    %940 = vector.load %arg28[%c1_389, %c0_390, %c0_391] : memref<2x1x32xf32, #tpu.memory_space<vmem>>, vector<1x1x32xf32>
    %941 = vector.shape_cast %940 : vector<1x1x32xf32> to vector<1x32xf32>
    %942 = vector.broadcast %941 : vector<1x32xf32> to vector<8x32xf32>
    %943 = arith.addf %939, %942 : vector<8x32xf32>
    %944 = arith.addf %943, %830 : vector<8x32xf32>
    %c1_392 = arith.constant 1 : index
    %c0_393 = arith.constant 0 : index
    %c0_394 = arith.constant 0 : index
    %945 = vector.load %arg29[%c1_392, %c0_393, %c0_394] : memref<2x1x32xf32, #tpu.memory_space<vmem>>, vector<1x1x32xf32>
    %946 = vector.shape_cast %945 : vector<1x1x32xf32> to vector<1x32xf32>
    %c1_395 = arith.constant 1 : index
    %c0_396 = arith.constant 0 : index
    %c0_397 = arith.constant 0 : index
    %947 = vector.load %arg30[%c1_395, %c0_396, %c0_397] : memref<2x1x32xf32, #tpu.memory_space<vmem>>, vector<1x1x32xf32>
    %948 = vector.shape_cast %947 : vector<1x1x32xf32> to vector<1x32xf32>
    %cst_398 = arith.constant dense<0.000000e+00> : vector<8xf32>
    %949 = vector.multi_reduction <add>, %944, %cst_398 [1] : vector<8x32xf32> to vector<8xf32>
    %950 = vector.shape_cast %949 : vector<8xf32> to vector<8x1xf32>
    %cst_399 = arith.constant 3.200000e+01 : f32
    %951 = vector.broadcast %cst_399 : f32 to vector<8x1xf32>
    %952 = arith.divf %950, %951 : vector<8x1xf32>
    %953 = vector.broadcast %952 : vector<8x1xf32> to vector<8x32xf32>
    %954 = arith.subf %944, %953 : vector<8x32xf32>
    %955 = arith.mulf %954, %954 : vector<8x32xf32>
    %cst_400 = arith.constant dense<0.000000e+00> : vector<8xf32>
    %956 = vector.multi_reduction <add>, %955, %cst_400 [1] : vector<8x32xf32> to vector<8xf32>
    %957 = vector.shape_cast %956 : vector<8xf32> to vector<8x1xf32>
    %cst_401 = arith.constant 3.200000e+01 : f32
    %958 = vector.broadcast %cst_401 : f32 to vector<8x1xf32>
    %959 = arith.divf %957, %958 : vector<8x1xf32>
    %cst_402 = arith.constant 9.99999974E-6 : f32
    %960 = vector.broadcast %cst_402 : f32 to vector<8x1xf32>
    %961 = arith.addf %959, %960 : vector<8x1xf32>
    %962 = math.rsqrt %961 : vector<8x1xf32>
    %963 = vector.broadcast %962 : vector<8x1xf32> to vector<8x32xf32>
    %964 = arith.mulf %954, %963 : vector<8x32xf32>
    %965 = vector.broadcast %946 : vector<1x32xf32> to vector<8x32xf32>
    %966 = arith.mulf %964, %965 : vector<8x32xf32>
    %967 = vector.broadcast %948 : vector<1x32xf32> to vector<8x32xf32>
    %968 = arith.addf %966, %967 : vector<8x32xf32>
    %c1_403 = arith.constant 1 : index
    %c0_404 = arith.constant 0 : index
    %c0_405 = arith.constant 0 : index
    %969 = vector.load %arg31[%c1_403, %c0_404, %c0_405] : memref<2x32x2048xbf16, #tpu.memory_space<vmem>>, vector<1x32x2048xbf16>
    %970 = vector.shape_cast %969 : vector<1x32x2048xbf16> to vector<32x2048xbf16>
    %c1_406 = arith.constant 1 : index
    %c0_407 = arith.constant 0 : index
    %c0_408 = arith.constant 0 : index
    %971 = vector.load %arg32[%c1_406, %c0_407, %c0_408] : memref<2x1x2048xf32, #tpu.memory_space<vmem>>, vector<1x1x2048xf32>
    %972 = vector.shape_cast %971 : vector<1x1x2048xf32> to vector<1x2048xf32>
    %c1_409 = arith.constant 1 : index
    %c0_410 = arith.constant 0 : index
    %c0_411 = arith.constant 0 : index
    %973 = vector.load %arg33[%c1_409, %c0_410, %c0_411] : memref<2x32x2048xbf16, #tpu.memory_space<vmem>>, vector<1x32x2048xbf16>
    %974 = vector.shape_cast %973 : vector<1x32x2048xbf16> to vector<32x2048xbf16>
    %c1_412 = arith.constant 1 : index
    %c0_413 = arith.constant 0 : index
    %c0_414 = arith.constant 0 : index
    %975 = vector.load %arg34[%c1_412, %c0_413, %c0_414] : memref<2x1x32xf32, #tpu.memory_space<vmem>>, vector<1x1x32xf32>
    %976 = vector.shape_cast %975 : vector<1x1x32xf32> to vector<1x32xf32>
    %977 = arith.truncf %968 : vector<8x32xf32> to vector<8x32xbf16>
    %cst_415 = arith.constant dense<0.000000e+00> : vector<8x2048xf32>
    %978 = tpu.matmul %977, %970, %cst_415 {dimension_numbers = #tpu.dot_dimension_numbers<[1], [0], [0], [1], [0, 0, 1, 1], [], []>} : vector<8x32xbf16>, vector<32x2048xbf16>, vector<8x2048xf32> -> vector<8x2048xf32>
    %979 = vector.broadcast %972 : vector<1x2048xf32> to vector<8x2048xf32>
    %980 = arith.addf %978, %979 : vector<8x2048xf32>
    %cst_416 = arith.constant 0.000000e+00 : f32
    %981 = vector.broadcast %cst_416 : f32 to vector<8x2048xf32>
    %982 = arith.maximumf %980, %981 : vector<8x2048xf32>
    %983 = arith.truncf %982 : vector<8x2048xf32> to vector<8x2048xbf16>
    %cst_417 = arith.constant dense<0.000000e+00> : vector<8x32xf32>
    %984 = tpu.matmul %983, %974, %cst_417 {dimension_numbers = #tpu.dot_dimension_numbers<[1], [1], [0], [0], [0, 0, 1, 0], [], []>} : vector<8x2048xbf16>, vector<32x2048xbf16>, vector<8x32xf32> -> vector<8x32xf32>
    %985 = vector.broadcast %976 : vector<1x32xf32> to vector<8x32xf32>
    %986 = arith.addf %984, %985 : vector<8x32xf32>
    %987 = arith.addf %986, %968 : vector<8x32xf32>
    %c1_418 = arith.constant 1 : index
    %c0_419 = arith.constant 0 : index
    %c0_420 = arith.constant 0 : index
    %988 = vector.load %arg35[%c1_418, %c0_419, %c0_420] : memref<2x1x32xf32, #tpu.memory_space<vmem>>, vector<1x1x32xf32>
    %989 = vector.shape_cast %988 : vector<1x1x32xf32> to vector<1x32xf32>
    %c1_421 = arith.constant 1 : index
    %c0_422 = arith.constant 0 : index
    %c0_423 = arith.constant 0 : index
    %990 = vector.load %arg36[%c1_421, %c0_422, %c0_423] : memref<2x1x32xf32, #tpu.memory_space<vmem>>, vector<1x1x32xf32>
    %991 = vector.shape_cast %990 : vector<1x1x32xf32> to vector<1x32xf32>
    %cst_424 = arith.constant dense<0.000000e+00> : vector<8xf32>
    %992 = vector.multi_reduction <add>, %987, %cst_424 [1] : vector<8x32xf32> to vector<8xf32>
    %993 = vector.shape_cast %992 : vector<8xf32> to vector<8x1xf32>
    %cst_425 = arith.constant 3.200000e+01 : f32
    %994 = vector.broadcast %cst_425 : f32 to vector<8x1xf32>
    %995 = arith.divf %993, %994 : vector<8x1xf32>
    %996 = vector.broadcast %995 : vector<8x1xf32> to vector<8x32xf32>
    %997 = arith.subf %987, %996 : vector<8x32xf32>
    %998 = arith.mulf %997, %997 : vector<8x32xf32>
    %cst_426 = arith.constant dense<0.000000e+00> : vector<8xf32>
    %999 = vector.multi_reduction <add>, %998, %cst_426 [1] : vector<8x32xf32> to vector<8xf32>
    %1000 = vector.shape_cast %999 : vector<8xf32> to vector<8x1xf32>
    %cst_427 = arith.constant 3.200000e+01 : f32
    %1001 = vector.broadcast %cst_427 : f32 to vector<8x1xf32>
    %1002 = arith.divf %1000, %1001 : vector<8x1xf32>
    %cst_428 = arith.constant 9.99999974E-6 : f32
    %1003 = vector.broadcast %cst_428 : f32 to vector<8x1xf32>
    %1004 = arith.addf %1002, %1003 : vector<8x1xf32>
    %1005 = math.rsqrt %1004 : vector<8x1xf32>
    %1006 = vector.broadcast %1005 : vector<8x1xf32> to vector<8x32xf32>
    %1007 = arith.mulf %997, %1006 : vector<8x32xf32>
    %1008 = vector.broadcast %989 : vector<1x32xf32> to vector<8x32xf32>
    %1009 = arith.mulf %1007, %1008 : vector<8x32xf32>
    %1010 = vector.broadcast %991 : vector<1x32xf32> to vector<8x32xf32>
    %1011 = arith.addf %1009, %1010 : vector<8x32xf32>
    %c0_429 = arith.constant 0 : index
    %c0_430 = arith.constant 0 : index
    %1012 = vector.load %arg37[%c0_429, %c0_430] : memref<32x128xbf16, #tpu.memory_space<vmem>>, vector<32x128xbf16>
    %1013 = arith.truncf %1011 : vector<8x32xf32> to vector<8x32xbf16>
    %cst_431 = arith.constant dense<0.000000e+00> : vector<8x128xf32>
    %1014 = tpu.matmul %1013, %1012, %cst_431 {dimension_numbers = #tpu.dot_dimension_numbers<[1], [0], [0], [1], [0, 0, 1, 1], [], []>} : vector<8x32xbf16>, vector<32x128xbf16>, vector<8x128xf32> -> vector<8x128xf32>
    %c0_432 = arith.constant 0 : index
    %c0_433 = arith.constant 0 : index
    %1015 = vector.load %arg38[%c0_432, %c0_433] : memref<1x128xf32, #tpu.memory_space<vmem>>, vector<1x128xf32>
    %1016 = vector.broadcast %1015 : vector<1x128xf32> to vector<8x128xf32>
    %1017 = arith.addf %1014, %1016 : vector<8x128xf32>
    %c0_434 = arith.constant 0 : index
    %c0_435 = arith.constant 0 : index
    %c0_436 = arith.constant 0 : index
    %1018 = vector.load %arg39[%c0_434, %c0_435, %c0_436] : memref<1x8x128xf32, #tpu.memory_space<vmem>>, vector<1x8x128xf32>
    %1019 = vector.shape_cast %1018 : vector<1x8x128xf32> to vector<8x128xf32>
    %1020 = vector.shape_cast %1017 : vector<8x128xf32> to vector<1x8x128xf32>
    tpu.vector_store %arg39[%c0_434, %c0_435, %c0_436], %1020 {strides = array<i32>} : memref<1x8x128xf32, #tpu.memory_space<vmem>>, vector<1x8x128xf32>,
    return
  }
  func.func @transform_0(%arg0: i32) -> (i32, i32, i32) {
    %c0_i32 = arith.constant 0 : i32
    %c0_i32_0 = arith.constant 0 : i32
    %c0_i32_1 = arith.constant 0 : i32
    return %arg0, %c0_i32, %c0_i32_0 : i32, i32, i32
  }
  func.func @transform_1(%arg0: i32) -> (i32, i32, i32) {
    %c0_i32 = arith.constant 0 : i32
    %c0_i32_0 = arith.constant 0 : i32
    %c0_i32_1 = arith.constant 0 : i32
    return %arg0, %c0_i32, %c0_i32_0 : i32, i32, i32
  }
  func.func @transform_2(%arg0: i32) -> (i32, i32, i32) {
    %c0_i32 = arith.constant 0 : i32
    %c0_i32_0 = arith.constant 0 : i32
    %c0_i32_1 = arith.constant 0 : i32
    return %arg0, %c0_i32, %c0_i32_0 : i32, i32, i32
  }
  func.func @transform_3(%arg0: i32) -> (i32, i32, i32) {
    %c0_i32 = arith.constant 0 : i32
    %c0_i32_0 = arith.constant 0 : i32
    %c0_i32_1 = arith.constant 0 : i32
    return %arg0, %c0_i32, %c0_i32_0 : i32, i32, i32
  }
  func.func @transform_4(%arg0: i32) -> (i32, i32, i32) {
    %c0_i32 = arith.constant 0 : i32
    %c0_i32_0 = arith.constant 0 : i32
    %c0_i32_1 = arith.constant 0 : i32
    %c0_i32_2 = arith.constant 0 : i32
    return %c0_i32, %c0_i32_0, %c0_i32_1 : i32, i32, i32
  }
  func.func @transform_5(%arg0: i32) -> (i32, i32, i32) {
    %c0_i32 = arith.constant 0 : i32
    %c0_i32_0 = arith.constant 0 : i32
    %c0_i32_1 = arith.constant 0 : i32
    %c0_i32_2 = arith.constant 0 : i32
    return %c0_i32, %c0_i32_0, %c0_i32_1 : i32, i32, i32
  }
  func.func @transform_6(%arg0: i32) -> (i32, i32, i32, i32) {
    %c0_i32 = arith.constant 0 : i32
    %c0_i32_0 = arith.constant 0 : i32
    %c0_i32_1 = arith.constant 0 : i32
    %c0_i32_2 = arith.constant 0 : i32
    %c0_i32_3 = arith.constant 0 : i32
    return %c0_i32, %c0_i32_0, %c0_i32_1, %c0_i32_2 : i32, i32, i32, i32
  }
  func.func @transform_7(%arg0: i32) -> (i32, i32, i32) {
    %c0_i32 = arith.constant 0 : i32
    %c0_i32_0 = arith.constant 0 : i32
    %c0_i32_1 = arith.constant 0 : i32
    %c0_i32_2 = arith.constant 0 : i32
    return %c0_i32, %c0_i32_0, %c0_i32_1 : i32, i32, i32
  }
  func.func @transform_8(%arg0: i32) -> (i32, i32, i32) {
    %c0_i32 = arith.constant 0 : i32
    %c0_i32_0 = arith.constant 0 : i32
    %c0_i32_1 = arith.constant 0 : i32
    %c0_i32_2 = arith.constant 0 : i32
    return %c0_i32, %c0_i32_0, %c0_i32_1 : i32, i32, i32
  }
  func.func @transform_9(%arg0: i32) -> (i32, i32, i32) {
    %c0_i32 = arith.constant 0 : i32
    %c0_i32_0 = arith.constant 0 : i32
    %c0_i32_1 = arith.constant 0 : i32
    %c0_i32_2 = arith.constant 0 : i32
    return %c0_i32, %c0_i32_0, %c0_i32_1 : i32, i32, i32
  }
  func.func @transform_10(%arg0: i32) -> (i32, i32, i32) {
    %c0_i32 = arith.constant 0 : i32
    %c0_i32_0 = arith.constant 0 : i32
    %c0_i32_1 = arith.constant 0 : i32
    %c0_i32_2 = arith.constant 0 : i32
    return %c0_i32, %c0_i32_0, %c0_i32_1 : i32, i32, i32
  }
  func.func @transform_11(%arg0: i32) -> (i32, i32, i32) {
    %c0_i32 = arith.constant 0 : i32
    %c0_i32_0 = arith.constant 0 : i32
    %c0_i32_1 = arith.constant 0 : i32
    %c0_i32_2 = arith.constant 0 : i32
    return %c0_i32, %c0_i32_0, %c0_i32_1 : i32, i32, i32
  }
  func.func @transform_12(%arg0: i32) -> (i32, i32, i32) {
    %c0_i32 = arith.constant 0 : i32
    %c0_i32_0 = arith.constant 0 : i32
    %c0_i32_1 = arith.constant 0 : i32
    %c0_i32_2 = arith.constant 0 : i32
    return %c0_i32, %c0_i32_0, %c0_i32_1 : i32, i32, i32
  }
  func.func @transform_13(%arg0: i32) -> (i32, i32, i32) {
    %c0_i32 = arith.constant 0 : i32
    %c0_i32_0 = arith.constant 0 : i32
    %c0_i32_1 = arith.constant 0 : i32
    %c0_i32_2 = arith.constant 0 : i32
    return %c0_i32, %c0_i32_0, %c0_i32_1 : i32, i32, i32
  }
  func.func @transform_14(%arg0: i32) -> (i32, i32, i32) {
    %c0_i32 = arith.constant 0 : i32
    %c0_i32_0 = arith.constant 0 : i32
    %c0_i32_1 = arith.constant 0 : i32
    %c0_i32_2 = arith.constant 0 : i32
    return %c0_i32, %c0_i32_0, %c0_i32_1 : i32, i32, i32
  }
  func.func @transform_15(%arg0: i32) -> (i32, i32, i32) {
    %c0_i32 = arith.constant 0 : i32
    %c0_i32_0 = arith.constant 0 : i32
    %c0_i32_1 = arith.constant 0 : i32
    %c0_i32_2 = arith.constant 0 : i32
    return %c0_i32, %c0_i32_0, %c0_i32_1 : i32, i32, i32
  }
  func.func @transform_16(%arg0: i32) -> (i32, i32, i32) {
    %c0_i32 = arith.constant 0 : i32
    %c0_i32_0 = arith.constant 0 : i32
    %c0_i32_1 = arith.constant 0 : i32
    %c0_i32_2 = arith.constant 0 : i32
    return %c0_i32, %c0_i32_0, %c0_i32_1 : i32, i32, i32
  }
  func.func @transform_17(%arg0: i32) -> (i32, i32, i32) {
    %c0_i32 = arith.constant 0 : i32
    %c0_i32_0 = arith.constant 0 : i32
    %c0_i32_1 = arith.constant 0 : i32
    %c0_i32_2 = arith.constant 0 : i32
    return %c0_i32, %c0_i32_0, %c0_i32_1 : i32, i32, i32
  }
  func.func @transform_18(%arg0: i32) -> (i32, i32, i32, i32) {
    %c0_i32 = arith.constant 0 : i32
    %c0_i32_0 = arith.constant 0 : i32
    %c0_i32_1 = arith.constant 0 : i32
    %c0_i32_2 = arith.constant 0 : i32
    %c0_i32_3 = arith.constant 0 : i32
    return %c0_i32, %c0_i32_0, %c0_i32_1, %c0_i32_2 : i32, i32, i32, i32
  }
  func.func @transform_19(%arg0: i32) -> (i32, i32, i32) {
    %c0_i32 = arith.constant 0 : i32
    %c0_i32_0 = arith.constant 0 : i32
    %c0_i32_1 = arith.constant 0 : i32
    %c0_i32_2 = arith.constant 0 : i32
    return %c0_i32, %c0_i32_0, %c0_i32_1 : i32, i32, i32
  }
  func.func @transform_20(%arg0: i32) -> (i32, i32, i32) {
    %c0_i32 = arith.constant 0 : i32
    %c0_i32_0 = arith.constant 0 : i32
    %c0_i32_1 = arith.constant 0 : i32
    %c0_i32_2 = arith.constant 0 : i32
    return %c0_i32, %c0_i32_0, %c0_i32_1 : i32, i32, i32
  }
  func.func @transform_21(%arg0: i32) -> (i32, i32, i32) {
    %c0_i32 = arith.constant 0 : i32
    %c0_i32_0 = arith.constant 0 : i32
    %c0_i32_1 = arith.constant 0 : i32
    %c0_i32_2 = arith.constant 0 : i32
    return %c0_i32, %c0_i32_0, %c0_i32_1 : i32, i32, i32
  }
  func.func @transform_22(%arg0: i32) -> (i32, i32, i32) {
    %c0_i32 = arith.constant 0 : i32
    %c0_i32_0 = arith.constant 0 : i32
    %c0_i32_1 = arith.constant 0 : i32
    %c0_i32_2 = arith.constant 0 : i32
    return %c0_i32, %c0_i32_0, %c0_i32_1 : i32, i32, i32
  }
  func.func @transform_23(%arg0: i32) -> (i32, i32, i32) {
    %c0_i32 = arith.constant 0 : i32
    %c0_i32_0 = arith.constant 0 : i32
    %c0_i32_1 = arith.constant 0 : i32
    %c0_i32_2 = arith.constant 0 : i32
    return %c0_i32, %c0_i32_0, %c0_i32_1 : i32, i32, i32
  }
  func.func @transform_24(%arg0: i32) -> (i32, i32, i32) {
    %c0_i32 = arith.constant 0 : i32
    %c0_i32_0 = arith.constant 0 : i32
    %c0_i32_1 = arith.constant 0 : i32
    %c0_i32_2 = arith.constant 0 : i32
    return %c0_i32, %c0_i32_0, %c0_i32_1 : i32, i32, i32
  }
  func.func @transform_25(%arg0: i32) -> (i32, i32, i32) {
    %c0_i32 = arith.constant 0 : i32
    %c0_i32_0 = arith.constant 0 : i32
    %c0_i32_1 = arith.constant 0 : i32
    %c0_i32_2 = arith.constant 0 : i32
    return %c0_i32, %c0_i32_0, %c0_i32_1 : i32, i32, i32
  }
  func.func @transform_26(%arg0: i32) -> (i32, i32, i32, i32) {
    %c0_i32 = arith.constant 0 : i32
    %c0_i32_0 = arith.constant 0 : i32
    %c0_i32_1 = arith.constant 0 : i32
    %c0_i32_2 = arith.constant 0 : i32
    %c0_i32_3 = arith.constant 0 : i32
    return %c0_i32, %c0_i32_0, %c0_i32_1, %c0_i32_2 : i32, i32, i32, i32
  }
  func.func @transform_27(%arg0: i32) -> (i32, i32, i32) {
    %c0_i32 = arith.constant 0 : i32
    %c0_i32_0 = arith.constant 0 : i32
    %c0_i32_1 = arith.constant 0 : i32
    %c0_i32_2 = arith.constant 0 : i32
    return %c0_i32, %c0_i32_0, %c0_i32_1 : i32, i32, i32
  }
  func.func @transform_28(%arg0: i32) -> (i32, i32, i32) {
    %c0_i32 = arith.constant 0 : i32
    %c0_i32_0 = arith.constant 0 : i32
    %c0_i32_1 = arith.constant 0 : i32
    %c0_i32_2 = arith.constant 0 : i32
    return %c0_i32, %c0_i32_0, %c0_i32_1 : i32, i32, i32
  }
  func.func @transform_29(%arg0: i32) -> (i32, i32, i32) {
    %c0_i32 = arith.constant 0 : i32
    %c0_i32_0 = arith.constant 0 : i32
    %c0_i32_1 = arith.constant 0 : i32
    %c0_i32_2 = arith.constant 0 : i32
    return %c0_i32, %c0_i32_0, %c0_i32_1 : i32, i32, i32
  }
  func.func @transform_30(%arg0: i32) -> (i32, i32, i32) {
    %c0_i32 = arith.constant 0 : i32
    %c0_i32_0 = arith.constant 0 : i32
    %c0_i32_1 = arith.constant 0 : i32
    %c0_i32_2 = arith.constant 0 : i32
    return %c0_i32, %c0_i32_0, %c0_i32_1 : i32, i32, i32
  }
  func.func @transform_31(%arg0: i32) -> (i32, i32, i32) {
    %c0_i32 = arith.constant 0 : i32
    %c0_i32_0 = arith.constant 0 : i32
    %c0_i32_1 = arith.constant 0 : i32
    %c0_i32_2 = arith.constant 0 : i32
    return %c0_i32, %c0_i32_0, %c0_i32_1 : i32, i32, i32
  }
  func.func @transform_32(%arg0: i32) -> (i32, i32, i32) {
    %c0_i32 = arith.constant 0 : i32
    %c0_i32_0 = arith.constant 0 : i32
    %c0_i32_1 = arith.constant 0 : i32
    %c0_i32_2 = arith.constant 0 : i32
    return %c0_i32, %c0_i32_0, %c0_i32_1 : i32, i32, i32
  }
  func.func @transform_33(%arg0: i32) -> (i32, i32, i32) {
    %c0_i32 = arith.constant 0 : i32
    %c0_i32_0 = arith.constant 0 : i32
    %c0_i32_1 = arith.constant 0 : i32
    %c0_i32_2 = arith.constant 0 : i32
    return %c0_i32, %c0_i32_0, %c0_i32_1 : i32, i32, i32
  }
  func.func @transform_34(%arg0: i32) -> (i32, i32, i32) {
    %c0_i32 = arith.constant 0 : i32
    %c0_i32_0 = arith.constant 0 : i32
    %c0_i32_1 = arith.constant 0 : i32
    %c0_i32_2 = arith.constant 0 : i32
    return %c0_i32, %c0_i32_0, %c0_i32_1 : i32, i32, i32
  }
  func.func @transform_35(%arg0: i32) -> (i32, i32, i32) {
    %c0_i32 = arith.constant 0 : i32
    %c0_i32_0 = arith.constant 0 : i32
    %c0_i32_1 = arith.constant 0 : i32
    %c0_i32_2 = arith.constant 0 : i32
    return %c0_i32, %c0_i32_0, %c0_i32_1 : i32, i32, i32
  }
  func.func @transform_36(%arg0: i32) -> (i32, i32) {
    %c0_i32 = arith.constant 0 : i32
    %c0_i32_0 = arith.constant 0 : i32
    %c0_i32_1 = arith.constant 0 : i32
    return %c0_i32, %c0_i32_0 : i32, i32
  }
  func.func @transform_37(%arg0: i32) -> (i32, i32) {
    %c0_i32 = arith.constant 0 : i32
    %c0_i32_0 = arith.constant 0 : i32
    %c0_i32_1 = arith.constant 0 : i32
    return %c0_i32, %c0_i32_0 : i32, i32
  }
  func.func @transform_38(%arg0: i32) -> (i32, i32, i32) {
    %c0_i32 = arith.constant 0 : i32
    %c0_i32_0 = arith.constant 0 : i32
    %c0_i32_1 = arith.constant 0 : i32
    return %arg0, %c0_i32, %c0_i32_0 : i32, i32, i32
  }
}

</mosaic_0001>

<llo_original>
// kernel: transformer_forward.1
$region0: #{transformer_forward.1}
  #allocation0 [shape = 'u32[]', space=smem, size = 0x4, offset = 0x4, fixed_abs, tag = 'smem constant byte address 0x4 - core index']
  #allocation1 [shape = 'u32[72,128]{1,0:T(1,128)}', space=vmem, size = 0x9000, scoped, tag = 'internal scratch']
  %s0 = inlined_call_operand.smem [shape: u32[39], index: -1, kind: input, shape index: {}]
  %s1 = sld [smem:[%s0]]
  %s2 = scalar_lea.smem %s0, 1
  %s3 = sld [smem:[%s2]]
  %s4 = scalar_lea.smem %s0, 2
  %s5 = sld [smem:[%s4]]
  %s6 = scalar_lea.smem %s0, 3
  %s7 = sld [smem:[%s6]]
  %s8 = scalar_lea.smem %s0, 4
  %s9 = sld [smem:[%s8]]
  %s10 = scalar_lea.smem %s0, 5
  %s11 = sld [smem:[%s10]]
  %s12 = scalar_lea.smem %s0, 6
  %s13 = sld [smem:[%s12]]
  %s14 = scalar_lea.smem %s0, 7
  %s15 = sld [smem:[%s14]]
  %s16 = scalar_lea.smem %s0, 8
  %s17 = sld [smem:[%s16]]
  %s18 = scalar_lea.smem %s0, 9
  %s19 = sld [smem:[%s18]]
  %s20 = scalar_lea.smem %s0, 10
  %s21 = sld [smem:[%s20]]
  %s22 = scalar_lea.smem %s0, 11
  %s23 = sld [smem:[%s22]]
  %s24 = scalar_lea.smem %s0, 12
  %s25 = sld [smem:[%s24]]
  %s26 = scalar_lea.smem %s0, 13
  %s27 = sld [smem:[%s26]]
  %s28 = scalar_lea.smem %s0, 14
  %s29 = sld [smem:[%s28]]
  %s30 = scalar_lea.smem %s0, 15
  %s31 = sld [smem:[%s30]]
  %s32 = scalar_lea.smem %s0, 16
  %s33 = sld [smem:[%s32]]
  %s34 = scalar_lea.smem %s0, 17
  %s35 = sld [smem:[%s34]]
  %s36 = scalar_lea.smem %s0, 18
  %s37 = sld [smem:[%s36]]
  %s38 = scalar_lea.smem %s0, 19
  %s39 = sld [smem:[%s38]]
  %s40 = scalar_lea.smem %s0, 20
  %s41 = sld [smem:[%s40]]
  %s42 = scalar_lea.smem %s0, 21
  %s43 = sld [smem:[%s42]]
  %s44 = scalar_lea.smem %s0, 22
  %s45 = sld [smem:[%s44]]
  %s46 = scalar_lea.smem %s0, 23
  %s47 = sld [smem:[%s46]]
  %s48 = scalar_lea.smem %s0, 24
  %s49 = sld [smem:[%s48]]
  %s50 = scalar_lea.smem %s0, 25
  %s51 = sld [smem:[%s50]]
  %s52 = scalar_lea.smem %s0, 26
  %s53 = sld [smem:[%s52]]
  %s54 = scalar_lea.smem %s0, 27
  %s55 = sld [smem:[%s54]]
  %s56 = scalar_lea.smem %s0, 28
  %s57 = sld [smem:[%s56]]
  %s58 = scalar_lea.smem %s0, 29
  %s59 = sld [smem:[%s58]]
  %s60 = scalar_lea.smem %s0, 30
  %s61 = sld [smem:[%s60]]
  %s62 = scalar_lea.smem %s0, 31
  %s63 = sld [smem:[%s62]]
  %s64 = scalar_lea.smem %s0, 32
  %s65 = sld [smem:[%s64]]
  %s66 = scalar_lea.smem %s0, 33
  %s67 = sld [smem:[%s66]]
  %s68 = scalar_lea.smem %s0, 34
  %s69 = sld [smem:[%s68]]
  %s70 = scalar_lea.smem %s0, 35
  %s71 = sld [smem:[%s70]]
  %s72 = scalar_lea.smem %s0, 36
  %s73 = sld [smem:[%s72]]
  %s74 = scalar_lea.smem %s0, 37
  %s75 = sld [smem:[%s74]]
  %s76 = scalar_lea.smem %s0, 38
  %s77 = sld [smem:[%s76]]
  %s78 = sld [smem:[#allocation0]]
  $region201: #{transformer_forward.1} parent=0
    _
  %s80 = ssub.s32 1, %s78
  %s81 = scalar_select 0, %s80, %s78
  $region1: #{transformer_forward.1} parent=0
    #allocation2 [shape = 'u8[262144]{0}', space=vmem, size = 0x40000, scoped, tag = 'input window, operand 10, single buffered']
    #allocation3 [shape = 's32[2]{0}', space=sflag, size = 0x8, scoped, tag = 'scoped memory for transformer_forward.1']
    #allocation4 [shape = 'u8[262144]{0}', space=vmem, size = 0x40000, scoped, tag = 'input window, operand 12, single buffered']
    #allocation5 [shape = 's32[1]{0}', space=sflag, size = 0x4, scoped, tag = 'scoped memory for transformer_forward.1']
    #allocation6 [shape = 'u8[262144]{0}', space=vmem, size = 0x40000, scoped, tag = 'input window, operand 30, single buffered']
    #allocation7 [shape = 'u8[262144]{0}', space=vmem, size = 0x40000, scoped, tag = 'input window, operand 32, single buffered']
    #allocation8 [shape = 's32[1]{0}', space=sflag, size = 0x4, scoped, tag = 'scoped memory for transformer_forward.1']
    %82 = vsyncpa [#allocation3], 0
    %83 = vsyncpa [#allocation5], 0
    %84 = vsyncpa [#allocation8], 0
    loop: start=0, step=1, limit=4
    $region2: #{transformer_forward.1} parent=1 // loop_pre_header
      _
    $region3: #{transformer_forward.1} parent=1 // loop_header
      %s86 = sphi 0, %s90
      %p87 = scmp.ge.s32.totalorder %s86, 4
      %s96 = sphi 0, %s98
      %s99 = sphi 0, %s96
      %s100 = sphi 0, %s99
      %s116 = sphi 0, %s100
      %s122 = sphi 0, %s124
      %s125 = sphi 0, %s122
      %s126 = sphi 0, %s125
      %s142 = sphi 0, %s126
      %s148 = sphi 0, %s150
      %s151 = sphi 0, %s148
      %s152 = sphi 0, %s151
      %s168 = sphi 0, %s152
      %s174 = sphi 0, %s176
      %s177 = sphi 0, %s174
      %s178 = sphi 0, %s177
      %s194 = sphi 0, %s178
      %s198 = sphi 0, %s198
      %s200 = sphi 0, %s198
      %s201 = sphi 0, %s200
      %s215 = sphi 0, %s201
      %s219 = sphi 0, %s219
      %s221 = sphi 0, %s219
      %s222 = sphi 0, %s221
      %s236 = sphi 0, %s222
      %s240 = sphi 0, %s240
      %s242 = sphi 0, %s240
      %s243 = sphi 0, %s242
      %s257 = sphi 0, %s243
      %s261 = sphi 0, %s261
      %s263 = sphi 0, %s261
      %s264 = sphi 0, %s263
      %s278 = sphi 0, %s264
      %s282 = sphi 0, %s282
      %s284 = sphi 0, %s282
      %s285 = sphi 0, %s284
      %s299 = sphi 0, %s285
      %s303 = sphi 0, %s303
      %s305 = sphi 0, %s303
      %s306 = sphi 0, %s305
      %s320 = sphi 0, %s306
      %s324 = sphi 0, %s324
      %s326 = sphi 0, %s324
      %s327 = sphi 0, %s326
      %s341 = sphi 0, %s327
      %s345 = sphi 0, %s345
      %s347 = sphi 0, %s345
      %s348 = sphi 0, %s347
      %s362 = sphi 0, %s348
      %s366 = sphi 0, %s366
      %s368 = sphi 0, %s366
      %s369 = sphi 0, %s368
      %s383 = sphi 0, %s369
      %s387 = sphi 0, %s387
      %s389 = sphi 0, %s387
      %s390 = sphi 0, %s389
      %s404 = sphi 0, %s390
      %s408 = sphi 0, %s408
      %s410 = sphi 0, %s408
      %s411 = sphi 0, %s410
      %s425 = sphi 0, %s411
      %s429 = sphi 0, %s429
      %s431 = sphi 0, %s429
      %s432 = sphi 0, %s431
      %s446 = sphi 0, %s432
      %s450 = sphi 0, %s450
      %s452 = sphi 0, %s450
      %s453 = sphi 0, %s452
      %s467 = sphi 0, %s453
      %s471 = sphi 0, %s471
      %s473 = sphi 0, %s471
      %s474 = sphi 0, %s473
      %s488 = sphi 0, %s474
      %s492 = sphi 0, %s492
      %s494 = sphi 0, %s492
      %s495 = sphi 0, %s494
      %s509 = sphi 0, %s495
      %s513 = sphi 0, %s513
      %s515 = sphi 0, %s513
      %s516 = sphi 0, %s515
      %s530 = sphi 0, %s516
      %s534 = sphi 0, %s534
      %s536 = sphi 0, %s534
      %s537 = sphi 0, %s536
      %s551 = sphi 0, %s537
      %s555 = sphi 0, %s555
      %s557 = sphi 0, %s555
      %s558 = sphi 0, %s557
      %s572 = sphi 0, %s558
      %s576 = sphi 0, %s576
      %s578 = sphi 0, %s576
      %s579 = sphi 0, %s578
      %s593 = sphi 0, %s579
      %s597 = sphi 0, %s597
      %s599 = sphi 0, %s597
      %s600 = sphi 0, %s599
      %s614 = sphi 0, %s600
      %s618 = sphi 0, %s618
      %s620 = sphi 0, %s618
      %s621 = sphi 0, %s620
      %s635 = sphi 0, %s621
      %s639 = sphi 0, %s639
      %s641 = sphi 0, %s639
      %s642 = sphi 0, %s641
      %s656 = sphi 0, %s642
      %s660 = sphi 0, %s660
      %s662 = sphi 0, %s660
      %s663 = sphi 0, %s662
      %s677 = sphi 0, %s663
      %s681 = sphi 0, %s681
      %s683 = sphi 0, %s681
      %s684 = sphi 0, %s683
      %s698 = sphi 0, %s684
      %s702 = sphi 0, %s702
      %s704 = sphi 0, %s702
      %s705 = sphi 0, %s704
      %s719 = sphi 0, %s705
      %s723 = sphi 0, %s723
      %s725 = sphi 0, %s723
      %s726 = sphi 0, %s725
      %s740 = sphi 0, %s726
      %s744 = sphi 0, %s744
      %s746 = sphi 0, %s744
      %s747 = sphi 0, %s746
      %s761 = sphi 0, %s747
      %s765 = sphi 0, %s765
      %s767 = sphi 0, %s765
      %s768 = sphi 0, %s767
      %s782 = sphi 0, %s768
      %s786 = sphi 0, %s786
      %s788 = sphi 0, %s786
      %s789 = sphi 0, %s788
      %s803 = sphi 0, %s789
      %s807 = sphi 0, %s807
      %s809 = sphi 0, %s807
      %s810 = sphi 0, %s809
      %s824 = sphi 0, %s810
      %s828 = sphi 0, %s828
      %s830 = sphi 0, %s828
      %s831 = sphi 0, %s830
      %s845 = sphi 0, %s831
      %s849 = sphi 0, %s849
      %s851 = sphi 0, %s849
      %s852 = sphi 0, %s851
      %s866 = sphi 0, %s852
      %s870 = sphi 0, %s870
      %s872 = sphi 0, %s870
      %s873 = sphi 0, %s872
      %s887 = sphi 0, %s873
      %s891 = sphi 0, %s891
      %s893 = sphi 0, %s891
      %s894 = sphi 0, %s893
      %s908 = sphi 0, %s894
      %s914 = sphi 0, %s916
      %s917 = sphi 0, %s914
      %s918 = sphi 0, %s917
      %s934 = sphi 0, %s918
    $region4: #{transformer_forward.1} parent=1 // loop_header_branch
      %89 = sbr.rel (%p87) target = $region8
    $region5: #{transformer_forward.1} parent=1 // loop_body
      %s91 = ssub.s32 %s86, 1
      %s92 = ssub.s32 %s86, 2
      %s93 = sadd.s32 %s86, 1
      %s94 = ssub.s32 %s86, %s93
      %p95 = scmp.eq.s32.totalorder %s94, 0
      %s97 = sadd.s32 %s96, 1
      %s98 = scalar_select %p95, %s96, %s97
      %p101 = pneg %p95
      %p102 = scmp.eq.s32.totalorder %s86, 1
      %p103 = por %p101, %p102
      %p104 = scmp.ne.s32.totalorder %s96, %s99
      %p105 = scmp.eq.s32.totalorder %s86, 0
      %p106 = por %p104, %p105
      %p107 = scmp.ne.s32.totalorder %s96, %s99
      %p108 = scmp.eq.s32.totalorder %s91, 1
      %p109 = por %p107, %p108
      %p110 = scmp.ne.s32.totalorder %s99, %s100
      %p111 = scmp.eq.s32.totalorder %s91, 0
      %p112 = por %p110, %p111
      %p113 = scmp.ne.s32.totalorder %s99, %s100
      %p114 = scmp.eq.s32.totalorder %s92, 1
      %p115 = por %p113, %p114
      %p117 = scmp.ne.s32.totalorder %s100, %s116
      %p118 = scmp.eq.s32.totalorder %s92, 0
      %p119 = por %p117, %p118
      %s120 = ssub.s32 %s86, %s93
      %p121 = scmp.eq.s32.totalorder %s120, 0
      %s123 = sadd.s32 %s122, 1
      %s124 = scalar_select %p121, %s122, %s123
      %p127 = pneg %p121
      %p128 = scmp.eq.s32.totalorder %s86, 1
      %p129 = por %p127, %p128
      %p130 = scmp.ne.s32.totalorder %s122, %s125
      %p131 = scmp.eq.s32.totalorder %s86, 0
      %p132 = por %p130, %p131
      %p133 = scmp.ne.s32.totalorder %s122, %s125
      %p134 = scmp.eq.s32.totalorder %s91, 1
      %p135 = por %p133, %p134
      %p136 = scmp.ne.s32.totalorder %s125, %s126
      %p137 = scmp.eq.s32.totalorder %s91, 0
      %p138 = por %p136, %p137
      %p139 = scmp.ne.s32.totalorder %s125, %s126
      %p140 = scmp.eq.s32.totalorder %s92, 1
      %p141 = por %p139, %p140
      %p143 = scmp.ne.s32.totalorder %s126, %s142
      %p144 = scmp.eq.s32.totalorder %s92, 0
      %p145 = por %p143, %p144
      %s146 = ssub.s32 %s86, %s93
      %p147 = scmp.eq.s32.totalorder %s146, 0
      %s149 = sadd.s32 %s148, 1
      %s150 = scalar_select %p147, %s148, %s149
      %p153 = pneg %p147
      %p154 = scmp.eq.s32.totalorder %s86, 1
      %p155 = por %p153, %p154
      %p156 = scmp.ne.s32.totalorder %s148, %s151
      %p157 = scmp.eq.s32.totalorder %s86, 0
      %p158 = por %p156, %p157
      %p159 = scmp.ne.s32.totalorder %s148, %s151
      %p160 = scmp.eq.s32.totalorder %s91, 1
      %p161 = por %p159, %p160
      %p162 = scmp.ne.s32.totalorder %s151, %s152
      %p163 = scmp.eq.s32.totalorder %s91, 0
      %p164 = por %p162, %p163
      %p165 = scmp.ne.s32.totalorder %s151, %s152
      %p166 = scmp.eq.s32.totalorder %s92, 1
      %p167 = por %p165, %p166
      %p169 = scmp.ne.s32.totalorder %s152, %s168
      %p170 = scmp.eq.s32.totalorder %s92, 0
      %p171 = por %p169, %p170
      %s172 = ssub.s32 %s86, %s93
      %p173 = scmp.eq.s32.totalorder %s172, 0
      %s175 = sadd.s32 %s174, 1
      %s176 = scalar_select %p173, %s174, %s175
      %p179 = pneg %p173
      %p180 = scmp.eq.s32.totalorder %s86, 1
      %p181 = por %p179, %p180
      %p182 = scmp.ne.s32.totalorder %s174, %s177
      %p183 = scmp.eq.s32.totalorder %s86, 0
      %p184 = por %p182, %p183
      %p185 = scmp.ne.s32.totalorder %s174, %s177
      %p186 = scmp.eq.s32.totalorder %s91, 1
      %p187 = por %p185, %p186
      %p188 = scmp.ne.s32.totalorder %s177, %s178
      %p189 = scmp.eq.s32.totalorder %s91, 0
      %p190 = por %p188, %p189
      %p191 = scmp.ne.s32.totalorder %s177, %s178
      %p192 = scmp.eq.s32.totalorder %s92, 1
      %p193 = por %p191, %p192
      %p195 = scmp.ne.s32.totalorder %s178, %s194
      %p196 = scmp.eq.s32.totalorder %s92, 0
      %p197 = por %p195, %p196
      %s199 = sadd.s32 %s198, 1
      %p202 = scmp.eq.s32.totalorder %s86, 1
      %p203 = scmp.ne.s32.totalorder %s198, %s200
      %p204 = scmp.eq.s32.totalorder %s86, 0
      %p205 = por %p203, %p204
      %p206 = scmp.ne.s32.totalorder %s198, %s200
      %p207 = scmp.eq.s32.totalorder %s91, 1
      %p208 = por %p206, %p207
      %p209 = scmp.ne.s32.totalorder %s200, %s201
      %p210 = scmp.eq.s32.totalorder %s91, 0
      %p211 = por %p209, %p210
      %p212 = scmp.ne.s32.totalorder %s200, %s201
      %p213 = scmp.eq.s32.totalorder %s92, 1
      %p214 = por %p212, %p213
      %p216 = scmp.ne.s32.totalorder %s201, %s215
      %p217 = scmp.eq.s32.totalorder %s92, 0
      %p218 = por %p216, %p217
      %s220 = sadd.s32 %s219, 1
      %p223 = scmp.eq.s32.totalorder %s86, 1
      %p224 = scmp.ne.s32.totalorder %s219, %s221
      %p225 = scmp.eq.s32.totalorder %s86, 0
      %p226 = por %p224, %p225
      %p227 = scmp.ne.s32.totalorder %s219, %s221
      %p228 = scmp.eq.s32.totalorder %s91, 1
      %p229 = por %p227, %p228
      %p230 = scmp.ne.s32.totalorder %s221, %s222
      %p231 = scmp.eq.s32.totalorder %s91, 0
      %p232 = por %p230, %p231
      %p233 = scmp.ne.s32.totalorder %s221, %s222
      %p234 = scmp.eq.s32.totalorder %s92, 1
      %p235 = por %p233, %p234
      %p237 = scmp.ne.s32.totalorder %s222, %s236
      %p238 = scmp.eq.s32.totalorder %s92, 0
      %p239 = por %p237, %p238
      %s241 = sadd.s32 %s240, 1
      %p244 = scmp.eq.s32.totalorder %s86, 1
      %p245 = scmp.ne.s32.totalorder %s240, %s242
      %p246 = scmp.eq.s32.totalorder %s86, 0
      %p247 = por %p245, %p246
      %p248 = scmp.ne.s32.totalorder %s240, %s242
      %p249 = scmp.eq.s32.totalorder %s91, 1
      %p250 = por %p248, %p249
      %p251 = scmp.ne.s32.totalorder %s242, %s243
      %p252 = scmp.eq.s32.totalorder %s91, 0
      %p253 = por %p251, %p252
      %p254 = scmp.ne.s32.totalorder %s242, %s243
      %p255 = scmp.eq.s32.totalorder %s92, 1
      %p256 = por %p254, %p255
      %p258 = scmp.ne.s32.totalorder %s243, %s257
      %p259 = scmp.eq.s32.totalorder %s92, 0
      %p260 = por %p258, %p259
      %s262 = sadd.s32 %s261, 1
      %p265 = scmp.eq.s32.totalorder %s86, 1
      %p266 = scmp.ne.s32.totalorder %s261, %s263
      %p267 = scmp.eq.s32.totalorder %s86, 0
      %p268 = por %p266, %p267
      %p269 = scmp.ne.s32.totalorder %s261, %s263
      %p270 = scmp.eq.s32.totalorder %s91, 1
      %p271 = por %p269, %p270
      %p272 = scmp.ne.s32.totalorder %s263, %s264
      %p273 = scmp.eq.s32.totalorder %s91, 0
      %p274 = por %p272, %p273
      %p275 = scmp.ne.s32.totalorder %s263, %s264
      %p276 = scmp.eq.s32.totalorder %s92, 1
      %p277 = por %p275, %p276
      %p279 = scmp.ne.s32.totalorder %s264, %s278
      %p280 = scmp.eq.s32.totalorder %s92, 0
      %p281 = por %p279, %p280
      %s283 = sadd.s32 %s282, 1
      %p286 = scmp.eq.s32.totalorder %s86, 1
      %p287 = scmp.ne.s32.totalorder %s282, %s284
      %p288 = scmp.eq.s32.totalorder %s86, 0
      %p289 = por %p287, %p288
      %p290 = scmp.ne.s32.totalorder %s282, %s284
      %p291 = scmp.eq.s32.totalorder %s91, 1
      %p292 = por %p290, %p291
      %p293 = scmp.ne.s32.totalorder %s284, %s285
      %p294 = scmp.eq.s32.totalorder %s91, 0
      %p295 = por %p293, %p294
      %p296 = scmp.ne.s32.totalorder %s284, %s285
      %p297 = scmp.eq.s32.totalorder %s92, 1
      %p298 = por %p296, %p297
      %p300 = scmp.ne.s32.totalorder %s285, %s299
      %p301 = scmp.eq.s32.totalorder %s92, 0
      %p302 = por %p300, %p301
      %s304 = sadd.s32 %s303, 1
      %p307 = scmp.eq.s32.totalorder %s86, 1
      %p308 = scmp.ne.s32.totalorder %s303, %s305
      %p309 = scmp.eq.s32.totalorder %s86, 0
      %p310 = por %p308, %p309
      %p311 = scmp.ne.s32.totalorder %s303, %s305
      %p312 = scmp.eq.s32.totalorder %s91, 1
      %p313 = por %p311, %p312
      %p314 = scmp.ne.s32.totalorder %s305, %s306
      %p315 = scmp.eq.s32.totalorder %s91, 0
      %p316 = por %p314, %p315
      %p317 = scmp.ne.s32.totalorder %s305, %s306
      %p318 = scmp.eq.s32.totalorder %s92, 1
      %p319 = por %p317, %p318
      %p321 = scmp.ne.s32.totalorder %s306, %s320
      %p322 = scmp.eq.s32.totalorder %s92, 0
      %p323 = por %p321, %p322
      %s325 = sadd.s32 %s324, 1
      %p328 = scmp.eq.s32.totalorder %s86, 1
      %p329 = scmp.ne.s32.totalorder %s324, %s326
      %p330 = scmp.eq.s32.totalorder %s86, 0
      %p331 = por %p329, %p330
      %p332 = scmp.ne.s32.totalorder %s324, %s326
      %p333 = scmp.eq.s32.totalorder %s91, 1
      %p334 = por %p332, %p333
      %p335 = scmp.ne.s32.totalorder %s326, %s327
      %p336 = scmp.eq.s32.totalorder %s91, 0
      %p337 = por %p335, %p336
      %p338 = scmp.ne.s32.totalorder %s326, %s327
      %p339 = scmp.eq.s32.totalorder %s92, 1
      %p340 = por %p338, %p339
      %p342 = scmp.ne.s32.totalorder %s327, %s341
      %p343 = scmp.eq.s32.totalorder %s92, 0
      %p344 = por %p342, %p343
      %s346 = sadd.s32 %s345, 1
      %p349 = scmp.eq.s32.totalorder %s86, 1
      %p350 = scmp.ne.s32.totalorder %s345, %s347
      %p351 = scmp.eq.s32.totalorder %s86, 0
      %p352 = por %p350, %p351
      %p353 = scmp.ne.s32.totalorder %s345, %s347
      %p354 = scmp.eq.s32.totalorder %s91, 1
      %p355 = por %p353, %p354
      %p356 = scmp.ne.s32.totalorder %s347, %s348
      %p357 = scmp.eq.s32.totalorder %s91, 0
      %p358 = por %p356, %p357
      %p359 = scmp.ne.s32.totalorder %s347, %s348
      %p360 = scmp.eq.s32.totalorder %s92, 1
      %p361 = por %p359, %p360
      %p363 = scmp.ne.s32.totalorder %s348, %s362
      %p364 = scmp.eq.s32.totalorder %s92, 0
      %p365 = por %p363, %p364
      %s367 = sadd.s32 %s366, 1
      %p370 = scmp.eq.s32.totalorder %s86, 1
      %p371 = scmp.ne.s32.totalorder %s366, %s368
      %p372 = scmp.eq.s32.totalorder %s86, 0
      %p373 = por %p371, %p372
      %p374 = scmp.ne.s32.totalorder %s366, %s368
      %p375 = scmp.eq.s32.totalorder %s91, 1
      %p376 = por %p374, %p375
      %p377 = scmp.ne.s32.totalorder %s368, %s369
      %p378 = scmp.eq.s32.totalorder %s91, 0
      %p379 = por %p377, %p378
      %p380 = scmp.ne.s32.totalorder %s368, %s369
      %p381 = scmp.eq.s32.totalorder %s92, 1
      %p382 = por %p380, %p381
      %p384 = scmp.ne.s32.totalorder %s369, %s383
      %p385 = scmp.eq.s32.totalorder %s92, 0
      %p386 = por %p384, %p385
      %s388 = sadd.s32 %s387, 1
      %p391 = scmp.eq.s32.totalorder %s86, 1
      %p392 = scmp.ne.s32.totalorder %s387, %s389
      %p393 = scmp.eq.s32.totalorder %s86, 0
      %p394 = por %p392, %p393
      %p395 = scmp.ne.s32.totalorder %s387, %s389
      %p396 = scmp.eq.s32.totalorder %s91, 1
      %p397 = por %p395, %p396
      %p398 = scmp.ne.s32.totalorder %s389, %s390
      %p399 = scmp.eq.s32.totalorder %s91, 0
      %p400 = por %p398, %p399
      %p401 = scmp.ne.s32.totalorder %s389, %s390
      %p402 = scmp.eq.s32.totalorder %s92, 1
      %p403 = por %p401, %p402
      %p405 = scmp.ne.s32.totalorder %s390, %s404
      %p406 = scmp.eq.s32.totalorder %s92, 0
      %p407 = por %p405, %p406
      %s409 = sadd.s32 %s408, 1
      %p412 = scmp.eq.s32.totalorder %s86, 1
      %p413 = scmp.ne.s32.totalorder %s408, %s410
      %p414 = scmp.eq.s32.totalorder %s86, 0
      %p415 = por %p413, %p414
      %p416 = scmp.ne.s32.totalorder %s408, %s410
      %p417 = scmp.eq.s32.totalorder %s91, 1
      %p418 = por %p416, %p417
      %p419 = scmp.ne.s32.totalorder %s410, %s411
      %p420 = scmp.eq.s32.totalorder %s91, 0
      %p421 = por %p419, %p420
      %p422 = scmp.ne.s32.totalorder %s410, %s411
      %p423 = scmp.eq.s32.totalorder %s92, 1
      %p424 = por %p422, %p423
      %p426 = scmp.ne.s32.totalorder %s411, %s425
      %p427 = scmp.eq.s32.totalorder %s92, 0
      %p428 = por %p426, %p427
      %s430 = sadd.s32 %s429, 1
      %p433 = scmp.eq.s32.totalorder %s86, 1
      %p434 = scmp.ne.s32.totalorder %s429, %s431
      %p435 = scmp.eq.s32.totalorder %s86, 0
      %p436 = por %p434, %p435
      %p437 = scmp.ne.s32.totalorder %s429, %s431
      %p438 = scmp.eq.s32.totalorder %s91, 1
      %p439 = por %p437, %p438
      %p440 = scmp.ne.s32.totalorder %s431, %s432
      %p441 = scmp.eq.s32.totalorder %s91, 0
      %p442 = por %p440, %p441
      %p443 = scmp.ne.s32.totalorder %s431, %s432
      %p444 = scmp.eq.s32.totalorder %s92, 1
      %p445 = por %p443, %p444
      %p447 = scmp.ne.s32.totalorder %s432, %s446
      %p448 = scmp.eq.s32.totalorder %s92, 0
      %p449 = por %p447, %p448
      %s451 = sadd.s32 %s450, 1
      %p454 = scmp.eq.s32.totalorder %s86, 1
      %p455 = scmp.ne.s32.totalorder %s450, %s452
      %p456 = scmp.eq.s32.totalorder %s86, 0
      %p457 = por %p455, %p456
      %p458 = scmp.ne.s32.totalorder %s450, %s452
      %p459 = scmp.eq.s32.totalorder %s91, 1
      %p460 = por %p458, %p459
      %p461 = scmp.ne.s32.totalorder %s452, %s453
      %p462 = scmp.eq.s32.totalorder %s91, 0
      %p463 = por %p461, %p462
      %p464 = scmp.ne.s32.totalorder %s452, %s453
      %p465 = scmp.eq.s32.totalorder %s92, 1
      %p466 = por %p464, %p465
      %p468 = scmp.ne.s32.totalorder %s453, %s467
      %p469 = scmp.eq.s32.totalorder %s92, 0
      %p470 = por %p468, %p469
      %s472 = sadd.s32 %s471, 1
      %p475 = scmp.eq.s32.totalorder %s86, 1
      %p476 = scmp.ne.s32.totalorder %s471, %s473
      %p477 = scmp.eq.s32.totalorder %s86, 0
      %p478 = por %p476, %p477
      %p479 = scmp.ne.s32.totalorder %s471, %s473
      %p480 = scmp.eq.s32.totalorder %s91, 1
      %p481 = por %p479, %p480
      %p482 = scmp.ne.s32.totalorder %s473, %s474
      %p483 = scmp.eq.s32.totalorder %s91, 0
      %p484 = por %p482, %p483
      %p485 = scmp.ne.s32.totalorder %s473, %s474
      %p486 = scmp.eq.s32.totalorder %s92, 1
      %p487 = por %p485, %p486
      %p489 = scmp.ne.s32.totalorder %s474, %s488
      %p490 = scmp.eq.s32.totalorder %s92, 0
      %p491 = por %p489, %p490
      %s493 = sadd.s32 %s492, 1
      %p496 = scmp.eq.s32.totalorder %s86, 1
      %p497 = scmp.ne.s32.totalorder %s492, %s494
      %p498 = scmp.eq.s32.totalorder %s86, 0
      %p499 = por %p497, %p498
      %p500 = scmp.ne.s32.totalorder %s492, %s494
      %p501 = scmp.eq.s32.totalorder %s91, 1
      %p502 = por %p500, %p501
      %p503 = scmp.ne.s32.totalorder %s494, %s495
      %p504 = scmp.eq.s32.totalorder %s91, 0
      %p505 = por %p503, %p504
      %p506 = scmp.ne.s32.totalorder %s494, %s495
      %p507 = scmp.eq.s32.totalorder %s92, 1
      %p508 = por %p506, %p507
      %p510 = scmp.ne.s32.totalorder %s495, %s509
      %p511 = scmp.eq.s32.totalorder %s92, 0
      %p512 = por %p510, %p511
      %s514 = sadd.s32 %s513, 1
      %p517 = scmp.eq.s32.totalorder %s86, 1
      %p518 = scmp.ne.s32.totalorder %s513, %s515
      %p519 = scmp.eq.s32.totalorder %s86, 0
      %p520 = por %p518, %p519
      %p521 = scmp.ne.s32.totalorder %s513, %s515
      %p522 = scmp.eq.s32.totalorder %s91, 1
      %p523 = por %p521, %p522
      %p524 = scmp.ne.s32.totalorder %s515, %s516
      %p525 = scmp.eq.s32.totalorder %s91, 0
      %p526 = por %p524, %p525
      %p527 = scmp.ne.s32.totalorder %s515, %s516
      %p528 = scmp.eq.s32.totalorder %s92, 1
      %p529 = por %p527, %p528
      %p531 = scmp.ne.s32.totalorder %s516, %s530
      %p532 = scmp.eq.s32.totalorder %s92, 0
      %p533 = por %p531, %p532
      %s535 = sadd.s32 %s534, 1
      %p538 = scmp.eq.s32.totalorder %s86, 1
      %p539 = scmp.ne.s32.totalorder %s534, %s536
      %p540 = scmp.eq.s32.totalorder %s86, 0
      %p541 = por %p539, %p540
      %p542 = scmp.ne.s32.totalorder %s534, %s536
      %p543 = scmp.eq.s32.totalorder %s91, 1
      %p544 = por %p542, %p543
      %p545 = scmp.ne.s32.totalorder %s536, %s537
      %p546 = scmp.eq.s32.totalorder %s91, 0
      %p547 = por %p545, %p546
      %p548 = scmp.ne.s32.totalorder %s536, %s537
      %p549 = scmp.eq.s32.totalorder %s92, 1
      %p550 = por %p548, %p549
      %p552 = scmp.ne.s32.totalorder %s537, %s551
      %p553 = scmp.eq.s32.totalorder %s92, 0
      %p554 = por %p552, %p553
      %s556 = sadd.s32 %s555, 1
      %p559 = scmp.eq.s32.totalorder %s86, 1
      %p560 = scmp.ne.s32.totalorder %s555, %s557
      %p561 = scmp.eq.s32.totalorder %s86, 0
      %p562 = por %p560, %p561
      %p563 = scmp.ne.s32.totalorder %s555, %s557
      %p564 = scmp.eq.s32.totalorder %s91, 1
      %p565 = por %p563, %p564
      %p566 = scmp.ne.s32.totalorder %s557, %s558
      %p567 = scmp.eq.s32.totalorder %s91, 0
      %p568 = por %p566, %p567
      %p569 = scmp.ne.s32.totalorder %s557, %s558
      %p570 = scmp.eq.s32.totalorder %s92, 1
      %p571 = por %p569, %p570
      %p573 = scmp.ne.s32.totalorder %s558, %s572
      %p574 = scmp.eq.s32.totalorder %s92, 0
      %p575 = por %p573, %p574
      %s577 = sadd.s32 %s576, 1
      %p580 = scmp.eq.s32.totalorder %s86, 1
      %p581 = scmp.ne.s32.totalorder %s576, %s578
      %p582 = scmp.eq.s32.totalorder %s86, 0
      %p583 = por %p581, %p582
      %p584 = scmp.ne.s32.totalorder %s576, %s578
      %p585 = scmp.eq.s32.totalorder %s91, 1
      %p586 = por %p584, %p585
      %p587 = scmp.ne.s32.totalorder %s578, %s579
      %p588 = scmp.eq.s32.totalorder %s91, 0
      %p589 = por %p587, %p588
      %p590 = scmp.ne.s32.totalorder %s578, %s579
      %p591 = scmp.eq.s32.totalorder %s92, 1
      %p592 = por %p590, %p591
      %p594 = scmp.ne.s32.totalorder %s579, %s593
      %p595 = scmp.eq.s32.totalorder %s92, 0
      %p596 = por %p594, %p595
      %s598 = sadd.s32 %s597, 1
      %p601 = scmp.eq.s32.totalorder %s86, 1
      %p602 = scmp.ne.s32.totalorder %s597, %s599
      %p603 = scmp.eq.s32.totalorder %s86, 0
      %p604 = por %p602, %p603
      %p605 = scmp.ne.s32.totalorder %s597, %s599
      %p606 = scmp.eq.s32.totalorder %s91, 1
      %p607 = por %p605, %p606
      %p608 = scmp.ne.s32.totalorder %s599, %s600
      %p609 = scmp.eq.s32.totalorder %s91, 0
      %p610 = por %p608, %p609
      %p611 = scmp.ne.s32.totalorder %s599, %s600
      %p612 = scmp.eq.s32.totalorder %s92, 1
      %p613 = por %p611, %p612
      %p615 = scmp.ne.s32.totalorder %s600, %s614
      %p616 = scmp.eq.s32.totalorder %s92, 0
      %p617 = por %p615, %p616
      %s619 = sadd.s32 %s618, 1
      %p622 = scmp.eq.s32.totalorder %s86, 1
      %p623 = scmp.ne.s32.totalorder %s618, %s620
      %p624 = scmp.eq.s32.totalorder %s86, 0
      %p625 = por %p623, %p624
      %p626 = scmp.ne.s32.totalorder %s618, %s620
      %p627 = scmp.eq.s32.totalorder %s91, 1
      %p628 = por %p626, %p627
      %p629 = scmp.ne.s32.totalorder %s620, %s621
      %p630 = scmp.eq.s32.totalorder %s91, 0
      %p631 = por %p629, %p630
      %p632 = scmp.ne.s32.totalorder %s620, %s621
      %p633 = scmp.eq.s32.totalorder %s92, 1
      %p634 = por %p632, %p633
      %p636 = scmp.ne.s32.totalorder %s621, %s635
      %p637 = scmp.eq.s32.totalorder %s92, 0
      %p638 = por %p636, %p637
      %s640 = sadd.s32 %s639, 1
      %p643 = scmp.eq.s32.totalorder %s86, 1
      %p644 = scmp.ne.s32.totalorder %s639, %s641
      %p645 = scmp.eq.s32.totalorder %s86, 0
      %p646 = por %p644, %p645
      %p647 = scmp.ne.s32.totalorder %s639, %s641
      %p648 = scmp.eq.s32.totalorder %s91, 1
      %p649 = por %p647, %p648
      %p650 = scmp.ne.s32.totalorder %s641, %s642
      %p651 = scmp.eq.s32.totalorder %s91, 0
      %p652 = por %p650, %p651
      %p653 = scmp.ne.s32.totalorder %s641, %s642
      %p654 = scmp.eq.s32.totalorder %s92, 1
      %p655 = por %p653, %p654
      %p657 = scmp.ne.s32.totalorder %s642, %s656
      %p658 = scmp.eq.s32.totalorder %s92, 0
      %p659 = por %p657, %p658
      %s661 = sadd.s32 %s660, 1
      %p664 = scmp.eq.s32.totalorder %s86, 1
      %p665 = scmp.ne.s32.totalorder %s660, %s662
      %p666 = scmp.eq.s32.totalorder %s86, 0
      %p667 = por %p665, %p666
      %p668 = scmp.ne.s32.totalorder %s660, %s662
      %p669 = scmp.eq.s32.totalorder %s91, 1
      %p670 = por %p668, %p669
      %p671 = scmp.ne.s32.totalorder %s662, %s663
      %p672 = scmp.eq.s32.totalorder %s91, 0
      %p673 = por %p671, %p672
      %p674 = scmp.ne.s32.totalorder %s662, %s663
      %p675 = scmp.eq.s32.totalorder %s92, 1
      %p676 = por %p674, %p675
      %p678 = scmp.ne.s32.totalorder %s663, %s677
      %p679 = scmp.eq.s32.totalorder %s92, 0
      %p680 = por %p678, %p679
      %s682 = sadd.s32 %s681, 1
      %p685 = scmp.eq.s32.totalorder %s86, 1
      %p686 = scmp.ne.s32.totalorder %s681, %s683
      %p687 = scmp.eq.s32.totalorder %s86, 0
      %p688 = por %p686, %p687
      %p689 = scmp.ne.s32.totalorder %s681, %s683
      %p690 = scmp.eq.s32.totalorder %s91, 1
      %p691 = por %p689, %p690
      %p692 = scmp.ne.s32.totalorder %s683, %s684
      %p693 = scmp.eq.s32.totalorder %s91, 0
      %p694 = por %p692, %p693
      %p695 = scmp.ne.s32.totalorder %s683, %s684
      %p696 = scmp.eq.s32.totalorder %s92, 1
      %p697 = por %p695, %p696
      %p699 = scmp.ne.s32.totalorder %s684, %s698
      %p700 = scmp.eq.s32.totalorder %s92, 0
      %p701 = por %p699, %p700
      %s703 = sadd.s32 %s702, 1
      %p706 = scmp.eq.s32.totalorder %s86, 1
      %p707 = scmp.ne.s32.totalorder %s702, %s704
      %p708 = scmp.eq.s32.totalorder %s86, 0
      %p709 = por %p707, %p708
      %p710 = scmp.ne.s32.totalorder %s702, %s704
      %p711 = scmp.eq.s32.totalorder %s91, 1
      %p712 = por %p710, %p711
      %p713 = scmp.ne.s32.totalorder %s704, %s705
      %p714 = scmp.eq.s32.totalorder %s91, 0
      %p715 = por %p713, %p714
      %p716 = scmp.ne.s32.totalorder %s704, %s705
      %p717 = scmp.eq.s32.totalorder %s92, 1
      %p718 = por %p716, %p717
      %p720 = scmp.ne.s32.totalorder %s705, %s719
      %p721 = scmp.eq.s32.totalorder %s92, 0
      %p722 = por %p720, %p721
      %s724 = sadd.s32 %s723, 1
      %p727 = scmp.eq.s32.totalorder %s86, 1
      %p728 = scmp.ne.s32.totalorder %s723, %s725
      %p729 = scmp.eq.s32.totalorder %s86, 0
      %p730 = por %p728, %p729
      %p731 = scmp.ne.s32.totalorder %s723, %s725
      %p732 = scmp.eq.s32.totalorder %s91, 1
      %p733 = por %p731, %p732
      %p734 = scmp.ne.s32.totalorder %s725, %s726
      %p735 = scmp.eq.s32.totalorder %s91, 0
      %p736 = por %p734, %p735
      %p737 = scmp.ne.s32.totalorder %s725, %s726
      %p738 = scmp.eq.s32.totalorder %s92, 1
      %p739 = por %p737, %p738
      %p741 = scmp.ne.s32.totalorder %s726, %s740
      %p742 = scmp.eq.s32.totalorder %s92, 0
      %p743 = por %p741, %p742
      %s745 = sadd.s32 %s744, 1
      %p748 = scmp.eq.s32.totalorder %s86, 1
      %p749 = scmp.ne.s32.totalorder %s744, %s746
      %p750 = scmp.eq.s32.totalorder %s86, 0
      %p751 = por %p749, %p750
      %p752 = scmp.ne.s32.totalorder %s744, %s746
      %p753 = scmp.eq.s32.totalorder %s91, 1
      %p754 = por %p752, %p753
      %p755 = scmp.ne.s32.totalorder %s746, %s747
      %p756 = scmp.eq.s32.totalorder %s91, 0
      %p757 = por %p755, %p756
      %p758 = scmp.ne.s32.totalorder %s746, %s747
      %p759 = scmp.eq.s32.totalorder %s92, 1
      %p760 = por %p758, %p759
      %p762 = scmp.ne.s32.totalorder %s747, %s761
      %p763 = scmp.eq.s32.totalorder %s92, 0
      %p764 = por %p762, %p763
      %s766 = sadd.s32 %s765, 1
      %p769 = scmp.eq.s32.totalorder %s86, 1
      %p770 = scmp.ne.s32.totalorder %s765, %s767
      %p771 = scmp.eq.s32.totalorder %s86, 0
      %p772 = por %p770, %p771
      %p773 = scmp.ne.s32.totalorder %s765, %s767
      %p774 = scmp.eq.s32.totalorder %s91, 1
      %p775 = por %p773, %p774
      %p776 = scmp.ne.s32.totalorder %s767, %s768
      %p777 = scmp.eq.s32.totalorder %s91, 0
      %p778 = por %p776, %p777
      %p779 = scmp.ne.s32.totalorder %s767, %s768
      %p780 = scmp.eq.s32.totalorder %s92, 1
      %p781 = por %p779, %p780
      %p783 = scmp.ne.s32.totalorder %s768, %s782
      %p784 = scmp.eq.s32.totalorder %s92, 0
      %p785 = por %p783, %p784
      %s787 = sadd.s32 %s786, 1
      %p790 = scmp.eq.s32.totalorder %s86, 1
      %p791 = scmp.ne.s32.totalorder %s786, %s788
      %p792 = scmp.eq.s32.totalorder %s86, 0
      %p793 = por %p791, %p792
      %p794 = scmp.ne.s32.totalorder %s786, %s788
      %p795 = scmp.eq.s32.totalorder %s91, 1
      %p796 = por %p794, %p795
      %p797 = scmp.ne.s32.totalorder %s788, %s789
      %p798 = scmp.eq.s32.totalorder %s91, 0
      %p799 = por %p797, %p798
      %p800 = scmp.ne.s32.totalorder %s788, %s789
      %p801 = scmp.eq.s32.totalorder %s92, 1
      %p802 = por %p800, %p801
      %p804 = scmp.ne.s32.totalorder %s789, %s803
      %p805 = scmp.eq.s32.totalorder %s92, 0
      %p806 = por %p804, %p805
      %s808 = sadd.s32 %s807, 1
      %p811 = scmp.eq.s32.totalorder %s86, 1
      %p812 = scmp.ne.s32.totalorder %s807, %s809
      %p813 = scmp.eq.s32.totalorder %s86, 0
      %p814 = por %p812, %p813
      %p815 = scmp.ne.s32.totalorder %s807, %s809
      %p816 = scmp.eq.s32.totalorder %s91, 1
      %p817 = por %p815, %p816
      %p818 = scmp.ne.s32.totalorder %s809, %s810
      %p819 = scmp.eq.s32.totalorder %s91, 0
      %p820 = por %p818, %p819
      %p821 = scmp.ne.s32.totalorder %s809, %s810
      %p822 = scmp.eq.s32.totalorder %s92, 1
      %p823 = por %p821, %p822
      %p825 = scmp.ne.s32.totalorder %s810, %s824
      %p826 = scmp.eq.s32.totalorder %s92, 0
      %p827 = por %p825, %p826
      %s829 = sadd.s32 %s828, 1
      %p832 = scmp.eq.s32.totalorder %s86, 1
      %p833 = scmp.ne.s32.totalorder %s828, %s830
      %p834 = scmp.eq.s32.totalorder %s86, 0
      %p835 = por %p833, %p834
      %p836 = scmp.ne.s32.totalorder %s828, %s830
      %p837 = scmp.eq.s32.totalorder %s91, 1
      %p838 = por %p836, %p837
      %p839 = scmp.ne.s32.totalorder %s830, %s831
      %p840 = scmp.eq.s32.totalorder %s91, 0
      %p841 = por %p839, %p840
      %p842 = scmp.ne.s32.totalorder %s830, %s831
      %p843 = scmp.eq.s32.totalorder %s92, 1
      %p844 = por %p842, %p843
      %p846 = scmp.ne.s32.totalorder %s831, %s845
      %p847 = scmp.eq.s32.totalorder %s92, 0
      %p848 = por %p846, %p847
      %s850 = sadd.s32 %s849, 1
      %p853 = scmp.eq.s32.totalorder %s86, 1
      %p854 = scmp.ne.s32.totalorder %s849, %s851
      %p855 = scmp.eq.s32.totalorder %s86, 0
      %p856 = por %p854, %p855
      %p857 = scmp.ne.s32.totalorder %s849, %s851
      %p858 = scmp.eq.s32.totalorder %s91, 1
      %p859 = por %p857, %p858
      %p860 = scmp.ne.s32.totalorder %s851, %s852
      %p861 = scmp.eq.s32.totalorder %s91, 0
      %p862 = por %p860, %p861
      %p863 = scmp.ne.s32.totalorder %s851, %s852
      %p864 = scmp.eq.s32.totalorder %s92, 1
      %p865 = por %p863, %p864
      %p867 = scmp.ne.s32.totalorder %s852, %s866
      %p868 = scmp.eq.s32.totalorder %s92, 0
      %p869 = por %p867, %p868
      %s871 = sadd.s32 %s870, 1
      %p874 = scmp.eq.s32.totalorder %s86, 1
      %p875 = scmp.ne.s32.totalorder %s870, %s872
      %p876 = scmp.eq.s32.totalorder %s86, 0
      %p877 = por %p875, %p876
      %p878 = scmp.ne.s32.totalorder %s870, %s872
      %p879 = scmp.eq.s32.totalorder %s91, 1
      %p880 = por %p878, %p879
      %p881 = scmp.ne.s32.totalorder %s872, %s873
      %p882 = scmp.eq.s32.totalorder %s91, 0
      %p883 = por %p881, %p882
      %p884 = scmp.ne.s32.totalorder %s872, %s873
      %p885 = scmp.eq.s32.totalorder %s92, 1
      %p886 = por %p884, %p885
      %p888 = scmp.ne.s32.totalorder %s873, %s887
      %p889 = scmp.eq.s32.totalorder %s92, 0
      %p890 = por %p888, %p889
      %s892 = sadd.s32 %s891, 1
      %p895 = scmp.eq.s32.totalorder %s86, 1
      %p896 = scmp.ne.s32.totalorder %s891, %s893
      %p897 = scmp.eq.s32.totalorder %s86, 0
      %p898 = por %p896, %p897
      %p899 = scmp.ne.s32.totalorder %s891, %s893
      %p900 = scmp.eq.s32.totalorder %s91, 1
      %p901 = por %p899, %p900
      %p902 = scmp.ne.s32.totalorder %s893, %s894
      %p903 = scmp.eq.s32.totalorder %s91, 0
      %p904 = por %p902, %p903
      %p905 = scmp.ne.s32.totalorder %s893, %s894
      %p906 = scmp.eq.s32.totalorder %s92, 1
      %p907 = por %p905, %p906
      %p909 = scmp.ne.s32.totalorder %s894, %s908
      %p910 = scmp.eq.s32.totalorder %s92, 0
      %p911 = por %p909, %p910
      %s912 = ssub.s32 %s86, %s93
      %p913 = scmp.eq.s32.totalorder %s912, 0
      %s915 = sadd.s32 %s914, 1
      %s916 = scalar_select %p913, %s914, %s915
      %p919 = pneg %p913
      %p920 = scmp.eq.s32.totalorder %s86, 1
      %p921 = por %p919, %p920
      %p922 = scmp.ne.s32.totalorder %s914, %s917
      %p923 = scmp.eq.s32.totalorder %s86, 0
      %p924 = por %p922, %p923
      %p925 = scmp.ne.s32.totalorder %s914, %s917
      %p926 = scmp.eq.s32.totalorder %s91, 1
      %p927 = por %p925, %p926
      %p928 = scmp.ne.s32.totalorder %s917, %s918
      %p929 = scmp.eq.s32.totalorder %s91, 0
      %p930 = por %p928, %p929
      %p931 = scmp.ne.s32.totalorder %s917, %s918
      %p932 = scmp.eq.s32.totalorder %s92, 1
      %p933 = por %p931, %p932
      %p935 = scmp.ne.s32.totalorder %s918, %s934
      %p936 = scmp.eq.s32.totalorder %s92, 0
      %p937 = por %p935, %p936
      %p938 = scmp.le.s32.totalorder 1, %s86
      %p939 = scmp.lt.s32.totalorder %s86, 3
      %p940 = pnand %p938, %p939
      %p941 = pneg %p940
      // Predicated region
      $region9: #{transformer_forward.1} parent=5 // pred_check
        _
      $region10: #{transformer_forward.1} parent=5 // pred_check_branch
        %943 = sbr.rel (%p940) target = $region12
      $region11: #{transformer_forward.1} parent=5 // pred_region
        %s944 = ssub.s32 %s86, 1
        // Predicated region
        $region13: #{transformer_forward.1} parent=11 // pred_check
          %p945 = pneg %p211
        $region14: #{transformer_forward.1} parent=11 // pred_check_branch
          %947 = sbr.rel (%p945) target = $region16
        $region15: #{transformer_forward.1} parent=11 // pred_region
          _
        $region16: #{transformer_forward.1} parent=11 // pred_fallthru
          _
        // Predicated region
        $region17: #{transformer_forward.1} parent=11 // pred_check
          %p948 = pneg %p232
        $region18: #{transformer_forward.1} parent=11 // pred_check_branch
          %950 = sbr.rel (%p948) target = $region20
        $region19: #{transformer_forward.1} parent=11 // pred_region
          _
        $region20: #{transformer_forward.1} parent=11 // pred_fallthru
          _
        // Predicated region
        $region21: #{transformer_forward.1} parent=11 // pred_check
          %p951 = pneg %p253
        $region22: #{transformer_forward.1} parent=11 // pred_check_branch
          %953 = sbr.rel (%p951) target = $region24
        $region23: #{transformer_forward.1} parent=11 // pred_region
          _
        $region24: #{transformer_forward.1} parent=11 // pred_fallthru
          _
        // Predicated region
        $region25: #{transformer_forward.1} parent=11 // pred_check
          %p954 = pneg %p274
        $region26: #{transformer_forward.1} parent=11 // pred_check_branch
          %956 = sbr.rel (%p954) target = $region28
        $region27: #{transformer_forward.1} parent=11 // pred_region
          _
        $region28: #{transformer_forward.1} parent=11 // pred_fallthru
          _
        // Predicated region
        $region29: #{transformer_forward.1} parent=11 // pred_check
          %p957 = pneg %p295
        $region30: #{transformer_forward.1} parent=11 // pred_check_branch
          %959 = sbr.rel (%p957) target = $region32
        $region31: #{transformer_forward.1} parent=11 // pred_region
          _
        $region32: #{transformer_forward.1} parent=11 // pred_fallthru
          _
        // Predicated region
        $region33: #{transformer_forward.1} parent=11 // pred_check
          %p960 = pneg %p316
        $region34: #{transformer_forward.1} parent=11 // pred_check_branch
          %962 = sbr.rel (%p960) target = $region36
        $region35: #{transformer_forward.1} parent=11 // pred_region
          _
        $region36: #{transformer_forward.1} parent=11 // pred_fallthru
          _
        // Predicated region
        $region37: #{transformer_forward.1} parent=11 // pred_check
          %p963 = pneg %p337
        $region38: #{transformer_forward.1} parent=11 // pred_check_branch
          %965 = sbr.rel (%p963) target = $region40
        $region39: #{transformer_forward.1} parent=11 // pred_region
          %967 = vsyncadd [#allocation3], 0
          %s968 = sshll.u32 %s21, 4
          %s969 = int_to_ptr.hbm [resolvable:$true] %s968
          %s970 = sshll.u32 [#allocation2], 4
          %s971 = int_to_ptr.vmem [resolvable:$true] %s970
          %976 = dma.hbm_to_vmem [thread:$0]  %s969, 8192, %s971, [#allocation3], 1024, 1024, 64
        $region40: #{transformer_forward.1} parent=11 // pred_fallthru
          _
        // Predicated region
        $region41: #{transformer_forward.1} parent=11 // pred_check
          %p977 = pneg %p358
        $region42: #{transformer_forward.1} parent=11 // pred_check_branch
          %979 = sbr.rel (%p977) target = $region44
        $region43: #{transformer_forward.1} parent=11 // pred_region
          _
        $region44: #{transformer_forward.1} parent=11 // pred_fallthru
          _
        // Predicated region
        $region45: #{transformer_forward.1} parent=11 // pred_check
          %p980 = pneg %p379
        $region46: #{transformer_forward.1} parent=11 // pred_check_branch
          %982 = sbr.rel (%p980) target = $region48
        $region47: #{transformer_forward.1} parent=11 // pred_region
          %984 = vsyncadd [#allocation5], 0
          %s985 = sshll.u32 %s25, 4
          %s986 = int_to_ptr.hbm [resolvable:$true] %s985
          %s987 = sshll.u32 [#allocation4], 4
          %s988 = int_to_ptr.vmem [resolvable:$true] %s987
          %993 = dma.hbm_to_vmem [thread:$0]  %s986, 8192, %s988, [#allocation5], 1024, 1024, 64
        $region48: #{transformer_forward.1} parent=11 // pred_fallthru
          _
        // Predicated region
        $region49: #{transformer_forward.1} parent=11 // pred_check
          %p994 = pneg %p400
        $region50: #{transformer_forward.1} parent=11 // pred_check_branch
          %996 = sbr.rel (%p994) target = $region52
        $region51: #{transformer_forward.1} parent=11 // pred_region
          _
        $region52: #{transformer_forward.1} parent=11 // pred_fallthru
          _
        // Predicated region
        $region53: #{transformer_forward.1} parent=11 // pred_check
          %p997 = pneg %p421
        $region54: #{transformer_forward.1} parent=11 // pred_check_branch
          %999 = sbr.rel (%p997) target = $region56
        $region55: #{transformer_forward.1} parent=11 // pred_region
          _
        $region56: #{transformer_forward.1} parent=11 // pred_fallthru
          _
        // Predicated region
        $region57: #{transformer_forward.1} parent=11 // pred_check
          %p1000 = pneg %p442
        $region58: #{transformer_forward.1} parent=11 // pred_check_branch
          %1002 = sbr.rel (%p1000) target = $region60
        $region59: #{transformer_forward.1} parent=11 // pred_region
          _
        $region60: #{transformer_forward.1} parent=11 // pred_fallthru
          _
        // Predicated region
        $region61: #{transformer_forward.1} parent=11 // pred_check
          %p1003 = pneg %p463
        $region62: #{transformer_forward.1} parent=11 // pred_check_branch
          %1005 = sbr.rel (%p1003) target = $region64
        $region63: #{transformer_forward.1} parent=11 // pred_region
          _
        $region64: #{transformer_forward.1} parent=11 // pred_fallthru
          _
        // Predicated region
        $region65: #{transformer_forward.1} parent=11 // pred_check
          %p1006 = pneg %p484
        $region66: #{transformer_forward.1} parent=11 // pred_check_branch
          %1008 = sbr.rel (%p1006) target = $region68
        $region67: #{transformer_forward.1} parent=11 // pred_region
          _
        $region68: #{transformer_forward.1} parent=11 // pred_fallthru
          _
        // Predicated region
        $region69: #{transformer_forward.1} parent=11 // pred_check
          %p1009 = pneg %p505
        $region70: #{transformer_forward.1} parent=11 // pred_check_branch
          %1011 = sbr.rel (%p1009) target = $region72
        $region71: #{transformer_forward.1} parent=11 // pred_region
          _
        $region72: #{transformer_forward.1} parent=11 // pred_fallthru
          _
        // Predicated region
        $region73: #{transformer_forward.1} parent=11 // pred_check
          %p1012 = pneg %p526
        $region74: #{transformer_forward.1} parent=11 // pred_check_branch
          %1014 = sbr.rel (%p1012) target = $region76
        $region75: #{transformer_forward.1} parent=11 // pred_region
          _
        $region76: #{transformer_forward.1} parent=11 // pred_fallthru
          _
        // Predicated region
        $region77: #{transformer_forward.1} parent=11 // pred_check
          %p1015 = pneg %p547
        $region78: #{transformer_forward.1} parent=11 // pred_check_branch
          %1017 = sbr.rel (%p1015) target = $region80
        $region79: #{transformer_forward.1} parent=11 // pred_region
          _
        $region80: #{transformer_forward.1} parent=11 // pred_fallthru
          _
        // Predicated region
        $region81: #{transformer_forward.1} parent=11 // pred_check
          %p1018 = pneg %p568
        $region82: #{transformer_forward.1} parent=11 // pred_check_branch
          %1020 = sbr.rel (%p1018) target = $region84
        $region83: #{transformer_forward.1} parent=11 // pred_region
          _
        $region84: #{transformer_forward.1} parent=11 // pred_fallthru
          _
        // Predicated region
        $region85: #{transformer_forward.1} parent=11 // pred_check
          %p1021 = pneg %p589
        $region86: #{transformer_forward.1} parent=11 // pred_check_branch
          %1023 = sbr.rel (%p1021) target = $region88
        $region87: #{transformer_forward.1} parent=11 // pred_region
          _
        $region88: #{transformer_forward.1} parent=11 // pred_fallthru
          _
        // Predicated region
        $region89: #{transformer_forward.1} parent=11 // pred_check
          %p1024 = pneg %p610
        $region90: #{transformer_forward.1} parent=11 // pred_check_branch
          %1026 = sbr.rel (%p1024) target = $region92
        $region91: #{transformer_forward.1} parent=11 // pred_region
          _
        $region92: #{transformer_forward.1} parent=11 // pred_fallthru
          _
        // Predicated region
        $region93: #{transformer_forward.1} parent=11 // pred_check
          %p1027 = pneg %p631
        $region94: #{transformer_forward.1} parent=11 // pred_check_branch
          %1029 = sbr.rel (%p1027) target = $region96
        $region95: #{transformer_forward.1} parent=11 // pred_region
          _
        $region96: #{transformer_forward.1} parent=11 // pred_fallthru
          _
        // Predicated region
        $region97: #{transformer_forward.1} parent=11 // pred_check
          %p1030 = pneg %p652
        $region98: #{transformer_forward.1} parent=11 // pred_check_branch
          %1032 = sbr.rel (%p1030) target = $region100
        $region99: #{transformer_forward.1} parent=11 // pred_region
          _
        $region100: #{transformer_forward.1} parent=11 // pred_fallthru
          _
        // Predicated region
        $region101: #{transformer_forward.1} parent=11 // pred_check
          %p1033 = pneg %p673
        $region102: #{transformer_forward.1} parent=11 // pred_check_branch
          %1035 = sbr.rel (%p1033) target = $region104
        $region103: #{transformer_forward.1} parent=11 // pred_region
          _
        $region104: #{transformer_forward.1} parent=11 // pred_fallthru
          _
        // Predicated region
        $region105: #{transformer_forward.1} parent=11 // pred_check
          %p1036 = pneg %p694
        $region106: #{transformer_forward.1} parent=11 // pred_check_branch
          %1038 = sbr.rel (%p1036) target = $region108
        $region107: #{transformer_forward.1} parent=11 // pred_region
          _
        $region108: #{transformer_forward.1} parent=11 // pred_fallthru
          _
        // Predicated region
        $region109: #{transformer_forward.1} parent=11 // pred_check
          %p1039 = pneg %p715
        $region110: #{transformer_forward.1} parent=11 // pred_check_branch
          %1041 = sbr.rel (%p1039) target = $region112
        $region111: #{transformer_forward.1} parent=11 // pred_region
          _
        $region112: #{transformer_forward.1} parent=11 // pred_fallthru
          _
        // Predicated region
        $region113: #{transformer_forward.1} parent=11 // pred_check
          %p1042 = pneg %p736
        $region114: #{transformer_forward.1} parent=11 // pred_check_branch
          %1044 = sbr.rel (%p1042) target = $region116
        $region115: #{transformer_forward.1} parent=11 // pred_region
          _
        $region116: #{transformer_forward.1} parent=11 // pred_fallthru
          _
        // Predicated region
        $region117: #{transformer_forward.1} parent=11 // pred_check
          %p1045 = pneg %p757
        $region118: #{transformer_forward.1} parent=11 // pred_check_branch
          %1047 = sbr.rel (%p1045) target = $region120
        $region119: #{transformer_forward.1} parent=11 // pred_region
          %1049 = vsyncadd [#allocation5], 0
          %s1050 = sshll.u32 %s61, 4
          %s1051 = int_to_ptr.hbm [resolvable:$true] %s1050
          %s1052 = sshll.u32 [#allocation6], 4
          %s1053 = int_to_ptr.vmem [resolvable:$true] %s1052
          %1058 = dma.hbm_to_vmem [thread:$0]  %s1051, 8192, %s1053, [#allocation5], 1024, 1024, 64
        $region120: #{transformer_forward.1} parent=11 // pred_fallthru
          _
        // Predicated region
        $region121: #{transformer_forward.1} parent=11 // pred_check
          %p1059 = pneg %p778
        $region122: #{transformer_forward.1} parent=11 // pred_check_branch
          %1061 = sbr.rel (%p1059) target = $region124
        $region123: #{transformer_forward.1} parent=11 // pred_region
          _
        $region124: #{transformer_forward.1} parent=11 // pred_fallthru
          _
        // Predicated region
        $region125: #{transformer_forward.1} parent=11 // pred_check
          %p1062 = pneg %p799
        $region126: #{transformer_forward.1} parent=11 // pred_check_branch
          %1064 = sbr.rel (%p1062) target = $region128
        $region127: #{transformer_forward.1} parent=11 // pred_region
          %1066 = vsyncadd [#allocation8], 0
          %s1067 = sshll.u32 %s65, 4
          %s1068 = int_to_ptr.hbm [resolvable:$true] %s1067
          %s1069 = sshll.u32 [#allocation7], 4
          %s1070 = int_to_ptr.vmem [resolvable:$true] %s1069
          %1075 = dma.hbm_to_vmem [thread:$0]  %s1068, 8192, %s1070, [#allocation8], 1024, 1024, 64
        $region128: #{transformer_forward.1} parent=11 // pred_fallthru
          _
        // Predicated region
        $region129: #{transformer_forward.1} parent=11 // pred_check
          %p1076 = pneg %p820
        $region130: #{transformer_forward.1} parent=11 // pred_check_branch
          %1078 = sbr.rel (%p1076) target = $region132
        $region131: #{transformer_forward.1} parent=11 // pred_region
          _
        $region132: #{transformer_forward.1} parent=11 // pred_fallthru
          _
        // Predicated region
        $region133: #{transformer_forward.1} parent=11 // pred_check
          %p1079 = pneg %p841
        $region134: #{transformer_forward.1} parent=11 // pred_check_branch
          %1081 = sbr.rel (%p1079) target = $region136
        $region135: #{transformer_forward.1} parent=11 // pred_region
          _
        $region136: #{transformer_forward.1} parent=11 // pred_fallthru
          _
        // Predicated region
        $region137: #{transformer_forward.1} parent=11 // pred_check
          %p1082 = pneg %p862
        $region138: #{transformer_forward.1} parent=11 // pred_check_branch
          %1084 = sbr.rel (%p1082) target = $region140
        $region139: #{transformer_forward.1} parent=11 // pred_region
          _
        $region140: #{transformer_forward.1} parent=11 // pred_fallthru
          _
        // Predicated region
        $region141: #{transformer_forward.1} parent=11 // pred_check
          %p1085 = pneg %p883
        $region142: #{transformer_forward.1} parent=11 // pred_check_branch
          %1087 = sbr.rel (%p1085) target = $region144
        $region143: #{transformer_forward.1} parent=11 // pred_region
          _
        $region144: #{transformer_forward.1} parent=11 // pred_fallthru
          _
        // Predicated region
        $region145: #{transformer_forward.1} parent=11 // pred_check
          %p1088 = pneg %p904
        $region146: #{transformer_forward.1} parent=11 // pred_check_branch
          %1090 = sbr.rel (%p1088) target = $region148
        $region147: #{transformer_forward.1} parent=11 // pred_region
          _
        $region148: #{transformer_forward.1} parent=11 // pred_fallthru
          _
      $region12: #{transformer_forward.1} parent=5 // pred_fallthru
        _
      %p1091 = scmp.lt.s32.totalorder %s86, 2
      // Predicated region
      $region149: #{transformer_forward.1} parent=5 // pred_check
        %p1092 = pneg %p1091
      $region150: #{transformer_forward.1} parent=5 // pred_check_branch
        %1094 = sbr.rel (%p1092) target = $region152
      $region151: #{transformer_forward.1} parent=5 // pred_region
        // Predicated region
        $region153: #{transformer_forward.1} parent=151 // pred_check
          %p1095 = pneg %p106
        $region154: #{transformer_forward.1} parent=151 // pred_check_branch
          %1097 = sbr.rel (%p1095) target = $region156
        $region155: #{transformer_forward.1} parent=151 // pred_region
          %p1098 = scmp.lt.s32.totalorder %s86, 1
          %s1099 = scalar_select %p1098, %s86, 1
          %s1100 = smul.addr %s1099, 8
          %s1101 = scalar_lea.vmem %s1, %s1100
        $region156: #{transformer_forward.1} parent=151 // pred_fallthru
          _
        // Predicated region
        $region157: #{transformer_forward.1} parent=151 // pred_check
          %p1102 = pneg %p132
        $region158: #{transformer_forward.1} parent=151 // pred_check_branch
          %1104 = sbr.rel (%p1102) target = $region160
        $region159: #{transformer_forward.1} parent=151 // pred_region
          %p1105 = scmp.lt.s32.totalorder %s86, 1
          %s1106 = scalar_select %p1105, %s86, 1
          %s1107 = smul.addr %s1106, 8
          %s1108 = scalar_lea.vmem %s3, %s1107
        $region160: #{transformer_forward.1} parent=151 // pred_fallthru
          _
        // Predicated region
        $region161: #{transformer_forward.1} parent=151 // pred_check
          %p1109 = pneg %p158
        $region162: #{transformer_forward.1} parent=151 // pred_check_branch
          %1111 = sbr.rel (%p1109) target = $region164
        $region163: #{transformer_forward.1} parent=151 // pred_region
          %p1112 = scmp.lt.s32.totalorder %s86, 1
          %s1113 = scalar_select %p1112, %s86, 1
          %s1114 = scalar_lea.vmem %s5, %s1113
        $region164: #{transformer_forward.1} parent=151 // pred_fallthru
          _
        // Predicated region
        $region165: #{transformer_forward.1} parent=151 // pred_check
          %p1115 = pneg %p184
        $region166: #{transformer_forward.1} parent=151 // pred_check_branch
          %1117 = sbr.rel (%p1115) target = $region168
        $region167: #{transformer_forward.1} parent=151 // pred_region
          %p1118 = scmp.lt.s32.totalorder %s86, 1
          %s1119 = scalar_select %p1118, %s86, 1
          %s1120 = scalar_lea.vmem %s7, %s1119
        $region168: #{transformer_forward.1} parent=151 // pred_fallthru
          _
      $region152: #{transformer_forward.1} parent=5 // pred_fallthru
        _
      %p1121 = scmp.le.s32.totalorder 1, %s86
      %p1122 = scmp.lt.s32.totalorder %s86, 3
      %p1123 = pnand %p1121, %p1122
      %p1124 = pneg %p1123
      // Predicated region
      $region169: #{transformer_forward.1} parent=5 // pred_check
        _
      $region170: #{transformer_forward.1} parent=5 // pred_check_branch
        %1126 = sbr.rel (%p1123) target = $region172
      $region171: #{transformer_forward.1} parent=5 // pred_region
        %s1127 = ssub.s32 %s86, 1
        // Predicated region
        $region173: #{transformer_forward.1} parent=171 // pred_check
          %p1128 = pneg %p337
        $region174: #{transformer_forward.1} parent=171 // pred_check_branch
          %1130 = sbr.rel (%p1128) target = $region176
        $region175: #{transformer_forward.1} parent=171 // pred_region
          %1132 = dma.done [#allocation3], 8192
        $region176: #{transformer_forward.1} parent=171 // pred_fallthru
          _
        // Predicated region
        $region177: #{transformer_forward.1} parent=171 // pred_check
          %p1133 = pneg %p379
        $region178: #{transformer_forward.1} parent=171 // pred_check_branch
          %1135 = sbr.rel (%p1133) target = $region180
        $region179: #{transformer_forward.1} parent=171 // pred_region
          %1137 = dma.done [#allocation5], 8192
        $region180: #{transformer_forward.1} parent=171 // pred_fallthru
          _
        // Predicated region
        $region181: #{transformer_forward.1} parent=171 // pred_check
          %p1138 = pneg %p757
        $region182: #{transformer_forward.1} parent=171 // pred_check_branch
          %1140 = sbr.rel (%p1138) target = $region184
        $region183: #{transformer_forward.1} parent=171 // pred_region
          %1142 = dma.done [#allocation5], 8192
        $region184: #{transformer_forward.1} parent=171 // pred_fallthru
          _
        // Predicated region
        $region185: #{transformer_forward.1} parent=171 // pred_check
          %p1143 = pneg %p799
        $region186: #{transformer_forward.1} parent=171 // pred_check_branch
          %1145 = sbr.rel (%p1143) target = $region188
        $region187: #{transformer_forward.1} parent=171 // pred_region
          %1147 = dma.done [#allocation8], 8192
        $region188: #{transformer_forward.1} parent=171 // pred_fallthru
          _
        %p1148 = scmp.lt.s32.totalorder %s91, 1
        %s1149 = scalar_select %p1148, %s91, 1
        %s1150 = smul.addr %s1149, 8
        %s1151 = scalar_lea.vmem %s1, %s1150
        %p1152 = pneg %p112
        %p1153 = pneg %p109
        %p1154 = scmp.lt.s32.totalorder %s91, 1
        %s1155 = scalar_select %p1154, %s91, 1
        %s1156 = smul.addr %s1155, 8
        %s1157 = scalar_lea.vmem %s3, %s1156
        %p1158 = pneg %p138
        %p1159 = pneg %p135
        %p1160 = scmp.lt.s32.totalorder %s91, 1
        %s1161 = scalar_select %p1160, %s91, 1
        %s1162 = scalar_lea.vmem %s5, %s1161
        %p1163 = pneg %p164
        %p1164 = pneg %p161
        %p1165 = scmp.lt.s32.totalorder %s91, 1
        %s1166 = scalar_select %p1165, %s91, 1
        %s1167 = scalar_lea.vmem %s7, %s1166
        %p1168 = pneg %p190
        %p1169 = pneg %p187
        %p1170 = pneg %p211
        %p1171 = pneg %p208
        %p1172 = pneg %p232
        %p1173 = pneg %p229
        %p1174 = pneg %p253
        %p1175 = pneg %p250
        %p1176 = pneg %p274
        %p1177 = pneg %p271
        %p1178 = pneg %p295
        %p1179 = pneg %p292
        %p1180 = pneg %p316
        %p1181 = pneg %p313
        %p1182 = pneg %p337
        %p1183 = pneg %p334
        %p1184 = pneg %p358
        %p1185 = pneg %p355
        %p1186 = pneg %p379
        %p1187 = pneg %p376
        %p1188 = pneg %p400
        %p1189 = pneg %p397
        %p1190 = pneg %p421
        %p1191 = pneg %p418
        %p1192 = pneg %p442
        %p1193 = pneg %p439
        %p1194 = pneg %p463
        %p1195 = pneg %p460
        %p1196 = pneg %p484
        %p1197 = pneg %p481
        %p1198 = pneg %p505
        %p1199 = pneg %p502
        %p1200 = pneg %p526
        %p1201 = pneg %p523
        %p1202 = pneg %p547
        %p1203 = pneg %p544
        %p1204 = pneg %p568
        %p1205 = pneg %p565
        %p1206 = pneg %p589
        %p1207 = pneg %p586
        %p1208 = pneg %p610
        %p1209 = pneg %p607
        %p1210 = pneg %p631
        %p1211 = pneg %p628
        %p1212 = pneg %p652
        %p1213 = pneg %p649
        %p1214 = pneg %p673
        %p1215 = pneg %p670
        %p1216 = pneg %p694
        %p1217 = pneg %p691
        %p1218 = pneg %p715
        %p1219 = pneg %p712
        %p1220 = pneg %p736
        %p1221 = pneg %p733
        %p1222 = pneg %p757
        %p1223 = pneg %p754
        %p1224 = pneg %p778
        %p1225 = pneg %p775
        %p1226 = pneg %p799
        %p1227 = pneg %p796
        %p1228 = pneg %p820
        %p1229 = pneg %p817
        %p1230 = pneg %p841
        %p1231 = pneg %p838
        %p1232 = pneg %p862
        %p1233 = pneg %p859
        %p1234 = pneg %p883
        %p1235 = pneg %p880
        %p1236 = pneg %p904
        %p1237 = pneg %p901
        %p1238 = pneg %p930
        %p1239 = pneg %p927
        %p1240 = scmp.lt.s32.totalorder %s91, 1
        %s1241 = scalar_select %p1240, %s91, 1
        %s1242 = smul.addr %s1241, 8
        %s1243 = scalar_lea.vmem %s77, %s1242
        %p1244 = scmp.lt.s32.totalorder %s91, 1
        %s1245 = scalar_select %p1244, %s91, 1
        %s1246 = smul.addr %s1245, 8
        %s1247 = scalar_lea.vmem %s1, %s1246
        %p1248 = scmp.lt.s32.totalorder %s91, 1
        %s1249 = scalar_select %p1248, %s91, 1
        %s1250 = smul.addr %s1249, 8
        %s1251 = scalar_lea.vmem %s3, %s1250
        %p1252 = scmp.lt.s32.totalorder %s91, 1
        %s1253 = scalar_select %p1252, %s91, 1
        %s1254 = scalar_lea.vmem %s5, %s1253
        %p1255 = scmp.lt.s32.totalorder %s91, 1
        %s1256 = scalar_select %p1255, %s91, 1
        %s1257 = scalar_lea.vmem %s7, %s1256
        %p1258 = scmp.lt.s32.totalorder %s91, 1
        %s1259 = scalar_select %p1258, %s91, 1
        %s1260 = smul.addr %s1259, 8
        %s1261 = scalar_lea.vmem %s77, %s1260
        %v1263 = vld [vmem:[%s1247] sm:$0xff]
        %v1264 = vld [vmem:[%s1251] sm:$0xff]
        %v1265 = vld [vmem:[%s1254] sm:$0x1]
        %v1266 = vld [vmem:[%s1257] sm:$0x1]
        %v1267 = vlaneseq
        %v1268 = vshrl.u32 %v1267, 7
        %v1269 = vlaneseq
        %v1270 = vand.u32 %v1269, 127
        %vm1271 = vcmp.gt.s32.totalorder %v1270, %v1268
        %v1272 = vsel %vm1271, -1e+30, 0.0
        %v1274 = vperm.slane %v1266, 0
        %v1276 = vadd.f32 %v1272, %v1274
        %v1277 = vld [vmem:[%s9] sm:$0xf]
        %v1278 = vld [vmem:[%s9 + $0x4] sm:$0xf]
        %v1279 = vld [vmem:[%s9 + $0x8] sm:$0xf]
        %v1280 = vld [vmem:[%s9 + $0xc] sm:$0xf]
        %v1281 = vpack.c.bf16 %v1263, %v1263
        %v1282 = vld [vmem:[%s11] sm:$0x1]
        %v1284 = vperm.slane %v1282, 0
        %v1290 = vunpack.c.l.b16 %v1277
        %v1291 = vunpack.c.l.b16 %v1278
        %v1292 = vunpack.c.l.b16 %v1279
        %v1293 = vunpack.c.l.b16 %v1280
        %v1294 = vpack.c.b16 %v1291, %v1290
        %v1295 = vpack.c.b16 %v1293, %v1292
        %vm1298 = vcmask 261120
        %v1300 = vsel %vm1298, %v1281, 0
        %1302 = vmatpush.bf16.msra.mxu0 0
        %1303 = vmatpush.bf16.msra.mxu0 0
        %1304 = vmatpush.bf16.msra.mxu0 0
        %1305 = vmatpush.bf16.msra.mxu0 0
        %1306 = vmatpush.bf16.msra.mxu0 0
        %1307 = vmatpush.bf16.msra.mxu0 0
        %1308 = vmatpush.bf16.msra.mxu0 %v1295
        %1309 = vmatpush.bf16.msra.mxu0 %v1294
        %1310 = vmatmul.bf16.gmra.mxu0 %v1300
        %v1311 = vpop.f32.mrf.mxu0
        %v1312 = vadd.f32 %v1284, %v1311
        %v1313 = vpop.f32.mrf.mxu0
        %1314 = vdwg.mxu0
        %v1315 = vld [vmem:[%s13] sm:$0xf]
        %v1316 = vld [vmem:[%s13 + $0x4] sm:$0xf]
        %v1317 = vld [vmem:[%s13 + $0x8] sm:$0xf]
        %v1318 = vld [vmem:[%s13 + $0xc] sm:$0xf]
        %v1319 = vmul.f32 %v1312, 0.35355338
        %v1321 = vperm.slane %v1265, 0
        %1324 = vrot.lane.b32.xlu0 %v1312, 96
        %v1325 = vpop.permute.xlu0 %1324
        %vm1326 = vcmask 64512
        %v1328 = vsel %vm1326, %v1319, 0
        %v1330 = vsel %vm1326, %v1325, 0
        %1332 = vmatpush.xpose.msra.mxu0 0.0
        %1333 = vmatpush.xpose.msra.mxu0 0.0
        %1334 = vmatpush.xpose.msra.mxu0 0.0
        %1335 = vmatpush.xpose.msra.mxu0 0.0
        %1336 = vmatpush.xpose.msra.mxu0 0.0
        %1337 = vmatpush.xpose.msra.mxu0 0.0
        %1338 = vmatpush.xpose.msra.mxu0 0.0
        %1339 = vmatpush.xpose.msra.mxu0 0.0
        %1340 = vmatpush.xpose.msra.mxu0 0.0
        %1341 = vmatpush.xpose.msra.mxu0 0.0
        %1342 = vmatpush.xpose.msra.mxu0 0.0
        %1343 = vmatpush.xpose.msra.mxu0 0.0
        %1344 = vmatpush.xpose.msra.mxu0 0.0
        %1345 = vmatpush.xpose.msra.mxu0 0.0
        %1346 = vmatpush.xpose.msra.mxu0 0.0
        %1347 = vmatpush.xpose.msra.mxu0 %v1330
        %1348 = vmatmul.f32.gmra.mxu0 %v1328
        %v1349 = vpop.f32.mrf.mxu0
        %v1350 = vadd.f32 %v1321, %v1349
        %1351 = vdwg.mxu0
        %v1352 = vsel %vm1326, %v1350, -inf
        %1353 = vmax.xlane.f32.xlu0 %v1352
        %v1354 = vpop.xlane.xlu0 %1353
        %v1355 = vsub.f32 %v1350, %v1354
        %v1356 = vmul.f32 %v1355, 1.442695
        %v1357 = vpow.pop %v1356
        %v1358 = vsel %vm1326, %v1357, 0.0
        %1359 = vadd.xlane.f32.xlu0 %v1358
        %v1360 = vpop.xlane.xlu0 %1359
        %v1361 = vrcp.pop %v1360
        %1362 = vrot.lane.b32.xlu0 %v1312, 64
        %v1363 = vpop.permute.xlu0 %1362
        %v1366 = vsel %vm1326, %v1357, 0
        %1368 = vmatpush.msra.mxu0 0.0
        %1369 = vmatpush.msra.mxu0 0.0
        %1370 = vmatpush.msra.mxu0 0.0
        %1371 = vmatpush.msra.mxu0 0.0
        %1372 = vmatpush.msra.mxu0 0.0
        %1373 = vmatpush.msra.mxu0 0.0
        %1374 = vmatpush.msra.mxu0 0.0
        %1375 = vmatpush.msra.mxu0 0.0
        %1376 = vmatpush.msra.mxu0 0.0
        %1377 = vmatpush.msra.mxu0 0.0
        %1378 = vmatpush.msra.mxu0 0.0
        %1379 = vmatpush.msra.mxu0 0.0
        %1380 = vmatpush.msra.mxu0 0.0
        %1381 = vmatpush.msra.mxu0 0.0
        %1382 = vmatpush.msra.mxu0 0.0
        %1383 = vmatpush.msra.mxu0 %v1363
        %1384 = vmatmul.f32.gmra.mxu0 %v1366
        %v1385 = vpop.f32.mrf.mxu0
        %v1386 = vadd.f32 0.0, %v1385
        %1387 = vdwg.mxu0
        %v1388 = vmul.f32 %v1386, %v1361
        %v1389 = vpack.c.bf16 %v1388, %v1388
        %1390 = vrot.lane.b32.xlu0 %v1319, 120
        %v1391 = vpop.permute.xlu0 %1390
        %1392 = vrot.lane.b32.xlu0 %v1312, 88
        %v1393 = vpop.permute.xlu0 %1392
        %v1394 = vsel %vm1326, %v1391, 0
        %v1396 = vsel %vm1326, %v1393, 0
        %1398 = vmatpush.xpose.msra.mxu0 0.0
        %1399 = vmatpush.xpose.msra.mxu0 0.0
        %1400 = vmatpush.xpose.msra.mxu0 0.0
        %1401 = vmatpush.xpose.msra.mxu0 0.0
        %1402 = vmatpush.xpose.msra.mxu0 0.0
        %1403 = vmatpush.xpose.msra.mxu0 0.0
        %1404 = vmatpush.xpose.msra.mxu0 0.0
        %1405 = vmatpush.xpose.msra.mxu0 0.0
        %1406 = vmatpush.xpose.msra.mxu0 0.0
        %1407 = vmatpush.xpose.msra.mxu0 0.0
        %1408 = vmatpush.xpose.msra.mxu0 0.0
        %1409 = vmatpush.xpose.msra.mxu0 0.0
        %1410 = vmatpush.xpose.msra.mxu0 0.0
        %1411 = vmatpush.xpose.msra.mxu0 0.0
        %1412 = vmatpush.xpose.msra.mxu0 0.0
        %1413 = vmatpush.xpose.msra.mxu0 %v1396
        %1414 = vmatmul.f32.gmra.mxu0 %v1394
        %v1415 = vpop.f32.mrf.mxu0
        %v1416 = vadd.f32 %v1321, %v1415
        %1417 = vdwg.mxu0
        %v1418 = vsel %vm1326, %v1416, -inf
        %1419 = vmax.xlane.f32.xlu0 %v1418
        %v1420 = vpop.xlane.xlu0 %1419
        %v1421 = vsub.f32 %v1416, %v1420
        %v1422 = vmul.f32 %v1421, 1.442695
        %v1423 = vpow.pop %v1422
        %v1424 = vsel %vm1326, %v1423, 0.0
        %1425 = vadd.xlane.f32.xlu0 %v1424
        %v1426 = vpop.xlane.xlu0 %1425
        %v1427 = vrcp.pop %v1426
        %1428 = vrot.lane.b32.xlu0 %v1312, 56
        %v1429 = vpop.permute.xlu0 %1428
        %v1432 = vsel %vm1326, %v1423, 0
        %1434 = vmatpush.msra.mxu0 0.0
        %1435 = vmatpush.msra.mxu0 0.0
        %1436 = vmatpush.msra.mxu0 0.0
        %1437 = vmatpush.msra.mxu0 0.0
        %1438 = vmatpush.msra.mxu0 0.0
        %1439 = vmatpush.msra.mxu0 0.0
        %1440 = vmatpush.msra.mxu0 0.0
        %1441 = vmatpush.msra.mxu0 0.0
        %1442 = vmatpush.msra.mxu0 0.0
        %1443 = vmatpush.msra.mxu0 0.0
        %1444 = vmatpush.msra.mxu0 0.0
        %1445 = vmatpush.msra.mxu0 0.0
        %1446 = vmatpush.msra.mxu0 0.0
        %1447 = vmatpush.msra.mxu0 0.0
        %1448 = vmatpush.msra.mxu0 0.0
        %1449 = vmatpush.msra.mxu0 %v1429
        %1450 = vmatmul.f32.gmra.mxu0 %v1432
        %v1451 = vpop.f32.mrf.mxu0
        %v1452 = vadd.f32 0.0, %v1451
        %1453 = vdwg.mxu0
        %v1454 = vmul.f32 %v1452, %v1427
        %v1455 = vpack.c.bf16 %v1454, %v1454
        %v1457 = vsel %vm1326, %v1455, 0
        %vm1459 = vcmask 1043456
        %v1461 = vsel %vm1459, %v1316, 0
        %1463 = vmatpush.bf16.msra.mxu0 0
        %1464 = vmatpush.bf16.msra.mxu0 0
        %1465 = vmatpush.bf16.msra.mxu0 0
        %1466 = vmatpush.bf16.msra.mxu0 0
        %1467 = vmatpush.bf16.msra.mxu0 0
        %1468 = vmatpush.bf16.msra.mxu0 0
        %1469 = vmatpush.bf16.msra.mxu0 0
        %1470 = vmatpush.bf16.msra.mxu0 %v1461
        %1471 = vmatmul.bf16.gmra.mxu0 %v1457
        %v1472 = vpop.f32.mrf.mxu0
        %v1473 = vadd.f32 0.0, %v1472
        %v1474 = vpop.f32.mrf.mxu0
        %1475 = vdwg.mxu0
        %v1477 = vsel %vm1326, %v1389, 0
        %v1480 = vsel %vm1459, %v1315, 0
        %1482 = vmatpush.bf16.msra.mxu0 0
        %1483 = vmatpush.bf16.msra.mxu0 0
        %1484 = vmatpush.bf16.msra.mxu0 0
        %1485 = vmatpush.bf16.msra.mxu0 0
        %1486 = vmatpush.bf16.msra.mxu0 0
        %1487 = vmatpush.bf16.msra.mxu0 0
        %1488 = vmatpush.bf16.msra.mxu0 0
        %1489 = vmatpush.bf16.msra.mxu0 %v1480
        %1490 = vmatmul.bf16.gmra.mxu0 %v1477
        %v1491 = vpop.f32.mrf.mxu0
        %v1492 = vadd.f32 %v1473, %v1491
        %v1493 = vpop.f32.mrf.mxu0
        %1494 = vdwg.mxu0
        %1495 = vrot.lane.b32.xlu0 %v1319, 112
        %v1496 = vpop.permute.xlu0 %1495
        %1497 = vrot.lane.b32.xlu0 %v1312, 80
        %v1498 = vpop.permute.xlu0 %1497
        %v1499 = vsel %vm1326, %v1496, 0
        %v1501 = vsel %vm1326, %v1498, 0
        %1503 = vmatpush.xpose.msra.mxu0 0.0
        %1504 = vmatpush.xpose.msra.mxu0 0.0
        %1505 = vmatpush.xpose.msra.mxu0 0.0
        %1506 = vmatpush.xpose.msra.mxu0 0.0
        %1507 = vmatpush.xpose.msra.mxu0 0.0
        %1508 = vmatpush.xpose.msra.mxu0 0.0
        %1509 = vmatpush.xpose.msra.mxu0 0.0
        %1510 = vmatpush.xpose.msra.mxu0 0.0
        %1511 = vmatpush.xpose.msra.mxu0 0.0
        %1512 = vmatpush.xpose.msra.mxu0 0.0
        %1513 = vmatpush.xpose.msra.mxu0 0.0
        %1514 = vmatpush.xpose.msra.mxu0 0.0
        %1515 = vmatpush.xpose.msra.mxu0 0.0
        %1516 = vmatpush.xpose.msra.mxu0 0.0
        %1517 = vmatpush.xpose.msra.mxu0 0.0
        %1518 = vmatpush.xpose.msra.mxu0 %v1501
        %1519 = vmatmul.f32.gmra.mxu0 %v1499
        %v1520 = vpop.f32.mrf.mxu0
        %v1521 = vadd.f32 %v1321, %v1520
        %1522 = vdwg.mxu0
        %v1523 = vsel %vm1326, %v1521, -inf
        %1524 = vmax.xlane.f32.xlu0 %v1523
        %v1525 = vpop.xlane.xlu0 %1524
        %v1526 = vsub.f32 %v1521, %v1525
        %v1527 = vmul.f32 %v1526, 1.442695
        %v1528 = vpow.pop %v1527
        %v1529 = vsel %vm1326, %v1528, 0.0
        %1530 = vadd.xlane.f32.xlu0 %v1529
        %v1531 = vpop.xlane.xlu0 %1530
        %v1532 = vrcp.pop %v1531
        %1533 = vrot.lane.b32.xlu0 %v1312, 48
        %v1534 = vpop.permute.xlu0 %1533
        %v1537 = vsel %vm1326, %v1528, 0
        %1539 = vmatpush.msra.mxu0 0.0
        %1540 = vmatpush.msra.mxu0 0.0
        %1541 = vmatpush.msra.mxu0 0.0
        %1542 = vmatpush.msra.mxu0 0.0
        %1543 = vmatpush.msra.mxu0 0.0
        %1544 = vmatpush.msra.mxu0 0.0
        %1545 = vmatpush.msra.mxu0 0.0
        %1546 = vmatpush.msra.mxu0 0.0
        %1547 = vmatpush.msra.mxu0 0.0
        %1548 = vmatpush.msra.mxu0 0.0
        %1549 = vmatpush.msra.mxu0 0.0
        %1550 = vmatpush.msra.mxu0 0.0
        %1551 = vmatpush.msra.mxu0 0.0
        %1552 = vmatpush.msra.mxu0 0.0
        %1553 = vmatpush.msra.mxu0 0.0
        %1554 = vmatpush.msra.mxu0 %v1534
        %1555 = vmatmul.f32.gmra.mxu0 %v1537
        %v1556 = vpop.f32.mrf.mxu0
        %v1557 = vadd.f32 0.0, %v1556
        %1558 = vdwg.mxu0
        %v1559 = vmul.f32 %v1557, %v1532
        %v1560 = vpack.c.bf16 %v1559, %v1559
        %v1562 = vsel %vm1326, %v1560, 0
        %v1565 = vsel %vm1459, %v1317, 0
        %1567 = vmatpush.bf16.msra.mxu0 0
        %1568 = vmatpush.bf16.msra.mxu0 0
        %1569 = vmatpush.bf16.msra.mxu0 0
        %1570 = vmatpush.bf16.msra.mxu0 0
        %1571 = vmatpush.bf16.msra.mxu0 0
        %1572 = vmatpush.bf16.msra.mxu0 0
        %1573 = vmatpush.bf16.msra.mxu0 0
        %1574 = vmatpush.bf16.msra.mxu0 %v1565
        %1575 = vmatmul.bf16.gmra.mxu0 %v1562
        %v1576 = vpop.f32.mrf.mxu0
        %v1577 = vadd.f32 0.0, %v1576
        %v1578 = vpop.f32.mrf.mxu0
        %1579 = vdwg.mxu0
        %v1580 = vadd.f32 %v1492, %v1577
        %1581 = vrot.lane.b32.xlu0 %v1319, 104
        %v1582 = vpop.permute.xlu0 %1581
        %1583 = vrot.lane.b32.xlu0 %v1312, 72
        %v1584 = vpop.permute.xlu0 %1583
        %v1585 = vsel %vm1326, %v1582, 0
        %v1587 = vsel %vm1326, %v1584, 0
        %1589 = vmatpush.xpose.msra.mxu0 0.0
        %1590 = vmatpush.xpose.msra.mxu0 0.0
        %1591 = vmatpush.xpose.msra.mxu0 0.0
        %1592 = vmatpush.xpose.msra.mxu0 0.0
        %1593 = vmatpush.xpose.msra.mxu0 0.0
        %1594 = vmatpush.xpose.msra.mxu0 0.0
        %1595 = vmatpush.xpose.msra.mxu0 0.0
        %1596 = vmatpush.xpose.msra.mxu0 0.0
        %1597 = vmatpush.xpose.msra.mxu0 0.0
        %1598 = vmatpush.xpose.msra.mxu0 0.0
        %1599 = vmatpush.xpose.msra.mxu0 0.0
        %1600 = vmatpush.xpose.msra.mxu0 0.0
        %1601 = vmatpush.xpose.msra.mxu0 0.0
        %1602 = vmatpush.xpose.msra.mxu0 0.0
        %1603 = vmatpush.xpose.msra.mxu0 0.0
        %1604 = vmatpush.xpose.msra.mxu0 %v1587
        %1605 = vmatmul.f32.gmra.mxu0 %v1585
        %v1606 = vpop.f32.mrf.mxu0
        %v1607 = vadd.f32 %v1321, %v1606
        %1608 = vdwg.mxu0
        %v1609 = vsel %vm1326, %v1607, -inf
        %1610 = vmax.xlane.f32.xlu0 %v1609
        %v1611 = vpop.xlane.xlu0 %1610
        %v1612 = vsub.f32 %v1607, %v1611
        %v1613 = vmul.f32 %v1612, 1.442695
        %v1614 = vpow.pop %v1613
        %v1615 = vsel %vm1326, %v1614, 0.0
        %1616 = vadd.xlane.f32.xlu0 %v1615
        %v1617 = vpop.xlane.xlu0 %1616
        %v1618 = vrcp.pop %v1617
        %1619 = vrot.lane.b32.xlu0 %v1312, 40
        %v1620 = vpop.permute.xlu0 %1619
        %v1623 = vsel %vm1326, %v1614, 0
        %1625 = vmatpush.msra.mxu0 0.0
        %1626 = vmatpush.msra.mxu0 0.0
        %1627 = vmatpush.msra.mxu0 0.0
        %1628 = vmatpush.msra.mxu0 0.0
        %1629 = vmatpush.msra.mxu0 0.0
        %1630 = vmatpush.msra.mxu0 0.0
        %1631 = vmatpush.msra.mxu0 0.0
        %1632 = vmatpush.msra.mxu0 0.0
        %1633 = vmatpush.msra.mxu0 0.0
        %1634 = vmatpush.msra.mxu0 0.0
        %1635 = vmatpush.msra.mxu0 0.0
        %1636 = vmatpush.msra.mxu0 0.0
        %1637 = vmatpush.msra.mxu0 0.0
        %1638 = vmatpush.msra.mxu0 0.0
        %1639 = vmatpush.msra.mxu0 0.0
        %1640 = vmatpush.msra.mxu0 %v1620
        %1641 = vmatmul.f32.gmra.mxu0 %v1623
        %v1642 = vpop.f32.mrf.mxu0
        %v1643 = vadd.f32 0.0, %v1642
        %1644 = vdwg.mxu0
        %v1645 = vmul.f32 %v1643, %v1618
        %v1646 = vpack.c.bf16 %v1645, %v1645
        %v1648 = vsel %vm1326, %v1646, 0
        %v1651 = vsel %vm1459, %v1318, 0
        %1653 = vmatpush.bf16.msra.mxu0 0
        %1654 = vmatpush.bf16.msra.mxu0 0
        %1655 = vmatpush.bf16.msra.mxu0 0
        %1656 = vmatpush.bf16.msra.mxu0 0
        %1657 = vmatpush.bf16.msra.mxu0 0
        %1658 = vmatpush.bf16.msra.mxu0 0
        %1659 = vmatpush.bf16.msra.mxu0 0
        %1660 = vmatpush.bf16.msra.mxu0 %v1651
        %1661 = vmatmul.bf16.gmra.mxu0 %v1648
        %v1662 = vpop.f32.mrf.mxu0
        %v1663 = vadd.f32 0.0, %v1662
        %v1664 = vpop.f32.mrf.mxu0
        %1665 = vdwg.mxu0
        %v1666 = vadd.f32 %v1580, %v1663
        %v1667 = vld [vmem:[%s15] sm:$0x1]
        %v1669 = vperm.slane %v1667, 0
        %v1671 = vadd.f32 %v1666, %v1669
        %v1672 = vadd.f32 %v1671, %v1263
        %v1673 = vld [vmem:[%s17] sm:$0x1]
        %v1674 = vld [vmem:[%s19] sm:$0x1]
        %v1675 = vsel %vm1298, %v1672, 0.0
        %1676 = vadd.xlane.f32.xlu0 %v1675
        %v1677 = vpop.xlane.xlu0 %1676
        %v1678 = vrcp.pop 32.0
        %v1679 = vmul.f32 32.0, %v1678
        %v1680 = vsub.f32 1.0, %v1679
        %v1681 = vmul.f32 %v1678, %v1680
        %v1682 = vadd.f32 %v1678, %v1681
        %vm1683 = vweird.f32 %v1678
        %v1684 = vsel %vm1683, %v1678, %v1682
        %v1685 = vmul.f32 %v1677, %v1684
        %v1686 = vsub.f32 %v1672, %v1685
        %v1687 = vmul.f32 %v1686, %v1686
        %v1688 = vsel %vm1298, %v1687, 0.0
        %1689 = vadd.xlane.f32.xlu0 %v1688
        %v1690 = vpop.xlane.xlu0 %1689
        %v1691 = vmul.f32 %v1690, %v1684
        %v1692 = vadd.f32 %v1691, 1e-05
        %v1693 = vrsqrt.pop %v1692
        %v1694 = vmul.f32 %v1693, %v1692
        %v1695 = vmul.f32 %v1694, %v1693
        %v1696 = vmul.f32 0.5, %v1695
        %v1697 = vsub.f32 1.5, %v1696
        %v1698 = vmul.f32 %v1693, %v1697
        %vm1699 = vweird.f32 %v1692
        %vm1700 = vweird.f32 %v1693
        %vm1701 = vmor %vm1699, %vm1700
        %v1702 = vsel %vm1701, %v1693, %v1698
        %v1703 = vmul.f32 %v1686, %v1702
        %v1705 = vperm.slane %v1673, 0
        %v1707 = vmul.f32 %v1703, %v1705
        %v1709 = vperm.slane %v1674, 0
        %v1711 = vadd.f32 %v1707, %v1709
        %v1712 = vld [vmem:[#allocation2] sm:$0xff]
        %v1713 = vld [vmem:[#allocation2 + $0x8] sm:$0xff]
        %v1714 = vld [vmem:[#allocation2 + $0x10] sm:$0xff]
        %v1715 = vld [vmem:[#allocation2 + $0x18] sm:$0xff]
        %v1716 = vld [vmem:[#allocation2 + $0x20] sm:$0xff]
        %v1717 = vld [vmem:[#allocation2 + $0x28] sm:$0xff]
        %v1718 = vld [vmem:[#allocation2 + $0x30] sm:$0xff]
        %v1719 = vld [vmem:[#allocation2 + $0x38] sm:$0xff]
        %v1720 = vld [vmem:[#allocation2 + $0x40] sm:$0xff]
        %v1721 = vld [vmem:[#allocation2 + $0x48] sm:$0xff]
        %v1722 = vld [vmem:[#allocation2 + $0x50] sm:$0xff]
        %v1723 = vld [vmem:[#allocation2 + $0x58] sm:$0xff]
        %v1724 = vld [vmem:[#allocation2 + $0x60] sm:$0xff]
        %v1725 = vld [vmem:[#allocation2 + $0x68] sm:$0xff]
        %v1726 = vld [vmem:[#allocation2 + $0x70] sm:$0xff]
        %v1727 = vld [vmem:[#allocation2 + $0x78] sm:$0xff]
        %v1728 = vld [vmem:[#allocation2 + $0x80] sm:$0xff]
        %v1729 = vld [vmem:[#allocation2 + $0x88] sm:$0xff]
        %v1730 = vld [vmem:[#allocation2 + $0x90] sm:$0xff]
        %v1731 = vld [vmem:[#allocation2 + $0x98] sm:$0xff]
        %v1732 = vld [vmem:[#allocation2 + $0xa0] sm:$0xff]
        %v1733 = vld [vmem:[#allocation2 + $0xa8] sm:$0xff]
        %v1734 = vld [vmem:[#allocation2 + $0xb0] sm:$0xff]
        %v1735 = vld [vmem:[#allocation2 + $0xb8] sm:$0xff]
        %v1736 = vld [vmem:[#allocation2 + $0xc0] sm:$0xff]
        %v1737 = vld [vmem:[#allocation2 + $0xc8] sm:$0xff]
        %v1738 = vld [vmem:[#allocation2 + $0xd0] sm:$0xff]
        %v1739 = vld [vmem:[#allocation2 + $0xd8] sm:$0xff]
        %v1740 = vld [vmem:[#allocation2 + $0xe0] sm:$0xff]
        %v1741 = vld [vmem:[#allocation2 + $0xe8] sm:$0xff]
        %v1742 = vld [vmem:[#allocation2 + $0xf0] sm:$0xff]
        %v1743 = vld [vmem:[#allocation2 + $0xf8] sm:$0xff]
        %v1744 = vld [vmem:[%s23] sm:$0xff]
        %v1745 = vld [vmem:[%s23 + $0x8] sm:$0xff]
        %v1746 = vld [vmem:[#allocation4] sm:$0xff]
        %v1747 = vld [vmem:[#allocation4 + $0x8] sm:$0xff]
        %v1748 = vld [vmem:[#allocation4 + $0x10] sm:$0xff]
        %v1749 = vld [vmem:[#allocation4 + $0x18] sm:$0xff]
        %v1750 = vld [vmem:[#allocation4 + $0x20] sm:$0xff]
        %v1751 = vld [vmem:[#allocation4 + $0x28] sm:$0xff]
        %v1752 = vld [vmem:[#allocation4 + $0x30] sm:$0xff]
        %v1753 = vld [vmem:[#allocation4 + $0x38] sm:$0xff]
        %v1754 = vld [vmem:[#allocation4 + $0x40] sm:$0xff]
        %v1755 = vld [vmem:[#allocation4 + $0x48] sm:$0xff]
        %v1756 = vld [vmem:[#allocation4 + $0x50] sm:$0xff]
        %v1757 = vld [vmem:[#allocation4 + $0x58] sm:$0xff]
        %v1758 = vld [vmem:[#allocation4 + $0x60] sm:$0xff]
        %v1759 = vld [vmem:[#allocation4 + $0x68] sm:$0xff]
        %v1760 = vld [vmem:[#allocation4 + $0x70] sm:$0xff]
        %v1761 = vld [vmem:[#allocation4 + $0x78] sm:$0xff]
        %v1762 = vld [vmem:[#allocation4 + $0x80] sm:$0xff]
        %v1763 = vld [vmem:[#allocation4 + $0x88] sm:$0xff]
        %v1764 = vld [vmem:[#allocation4 + $0x90] sm:$0xff]
        %v1765 = vld [vmem:[#allocation4 + $0x98] sm:$0xff]
        %v1766 = vld [vmem:[#allocation4 + $0xa0] sm:$0xff]
        %v1767 = vld [vmem:[#allocation4 + $0xa8] sm:$0xff]
        %v1768 = vld [vmem:[#allocation4 + $0xb0] sm:$0xff]
        %v1769 = vld [vmem:[#allocation4 + $0xb8] sm:$0xff]
        %v1770 = vld [vmem:[#allocation4 + $0xc0] sm:$0xff]
        %v1771 = vld [vmem:[#allocation4 + $0xc8] sm:$0xff]
        %v1772 = vld [vmem:[#allocation4 + $0xd0] sm:$0xff]
        %v1773 = vld [vmem:[#allocation4 + $0xd8] sm:$0xff]
        %v1774 = vld [vmem:[#allocation4 + $0xe0] sm:$0xff]
        %v1775 = vld [vmem:[#allocation4 + $0xe8] sm:$0xff]
        %v1776 = vld [vmem:[#allocation4 + $0xf0] sm:$0xff]
        %v1777 = vld [vmem:[#allocation4 + $0xf8] sm:$0xff]
        %v1778 = vld [vmem:[%s27] sm:$0x1]
        %v1779 = vpack.c.bf16 %v1711, %v1711
        %v1782 = vperm.slane %v1744, 0
        %v1783 = vperm.slane %v1744, 1
        %v1784 = vperm.slane %v1744, 2
        %v1785 = vperm.slane %v1744, 3
        %v1786 = vperm.slane %v1744, 4
        %v1787 = vperm.slane %v1744, 5
        %v1788 = vperm.slane %v1744, 6
        %v1789 = vperm.slane %v1744, 7
        %v1790 = vperm.slane %v1745, 0
        %v1791 = vperm.slane %v1745, 1
        %v1792 = vperm.slane %v1745, 2
        %v1793 = vperm.slane %v1745, 3
        %v1794 = vperm.slane %v1745, 4
        %v1795 = vperm.slane %v1745, 5
        %v1796 = vperm.slane %v1745, 6
        %v1797 = vperm.slane %v1745, 7
        %v1846 = vunpack.c.l.b16 %v1712
        %v1847 = vunpack.c.h.b16 %v1712
        %v1848 = vunpack.c.l.b16 %v1713
        %v1849 = vunpack.c.h.b16 %v1713
        %v1850 = vunpack.c.l.b16 %v1714
        %v1851 = vunpack.c.h.b16 %v1714
        %v1852 = vunpack.c.l.b16 %v1715
        %v1853 = vunpack.c.h.b16 %v1715
        %v1854 = vunpack.c.l.b16 %v1716
        %v1855 = vunpack.c.h.b16 %v1716
        %v1856 = vunpack.c.l.b16 %v1717
        %v1857 = vunpack.c.h.b16 %v1717
        %v1858 = vunpack.c.l.b16 %v1718
        %v1859 = vunpack.c.h.b16 %v1718
        %v1860 = vunpack.c.l.b16 %v1719
        %v1861 = vunpack.c.h.b16 %v1719
        %v1862 = vunpack.c.l.b16 %v1720
        %v1863 = vunpack.c.h.b16 %v1720
        %v1864 = vunpack.c.l.b16 %v1721
        %v1865 = vunpack.c.h.b16 %v1721
        %v1866 = vunpack.c.l.b16 %v1722
        %v1867 = vunpack.c.h.b16 %v1722
        %v1868 = vunpack.c.l.b16 %v1723
        %v1869 = vunpack.c.h.b16 %v1723
        %v1870 = vunpack.c.l.b16 %v1724
        %v1871 = vunpack.c.h.b16 %v1724
        %v1872 = vunpack.c.l.b16 %v1725
        %v1873 = vunpack.c.h.b16 %v1725
        %v1874 = vunpack.c.l.b16 %v1726
        %v1875 = vunpack.c.h.b16 %v1726
        %v1876 = vunpack.c.l.b16 %v1727
        %v1877 = vunpack.c.h.b16 %v1727
        %v1878 = vunpack.c.l.b16 %v1728
        %v1879 = vunpack.c.h.b16 %v1728
        %v1880 = vunpack.c.l.b16 %v1729
        %v1881 = vunpack.c.h.b16 %v1729
        %v1882 = vunpack.c.l.b16 %v1730
        %v1883 = vunpack.c.h.b16 %v1730
        %v1884 = vunpack.c.l.b16 %v1731
        %v1885 = vunpack.c.h.b16 %v1731
        %v1886 = vunpack.c.l.b16 %v1732
        %v1887 = vunpack.c.h.b16 %v1732
        %v1888 = vunpack.c.l.b16 %v1733
        %v1889 = vunpack.c.h.b16 %v1733
        %v1890 = vunpack.c.l.b16 %v1734
        %v1891 = vunpack.c.h.b16 %v1734
        %v1892 = vunpack.c.l.b16 %v1735
        %v1893 = vunpack.c.h.b16 %v1735
        %v1894 = vunpack.c.l.b16 %v1736
        %v1895 = vunpack.c.h.b16 %v1736
        %v1896 = vunpack.c.l.b16 %v1737
        %v1897 = vunpack.c.h.b16 %v1737
        %v1898 = vunpack.c.l.b16 %v1738
        %v1899 = vunpack.c.h.b16 %v1738
        %v1900 = vunpack.c.l.b16 %v1739
        %v1901 = vunpack.c.h.b16 %v1739
        %v1902 = vunpack.c.l.b16 %v1740
        %v1903 = vunpack.c.h.b16 %v1740
        %v1904 = vunpack.c.l.b16 %v1741
        %v1905 = vunpack.c.h.b16 %v1741
        %v1906 = vunpack.c.l.b16 %v1742
        %v1907 = vunpack.c.h.b16 %v1742
        %v1908 = vunpack.c.l.b16 %v1743
        %v1909 = vunpack.c.h.b16 %v1743
        %v1910 = vpack.c.b16 %v1862, %v1846
        %v1911 = vpack.c.b16 %v1863, %v1847
        %v1912 = vpack.c.b16 %v1864, %v1848
        %v1913 = vpack.c.b16 %v1865, %v1849
        %v1914 = vpack.c.b16 %v1866, %v1850
        %v1915 = vpack.c.b16 %v1867, %v1851
        %v1916 = vpack.c.b16 %v1868, %v1852
        %v1917 = vpack.c.b16 %v1869, %v1853
        %v1918 = vpack.c.b16 %v1870, %v1854
        %v1919 = vpack.c.b16 %v1871, %v1855
        %v1920 = vpack.c.b16 %v1872, %v1856
        %v1921 = vpack.c.b16 %v1873, %v1857
        %v1922 = vpack.c.b16 %v1874, %v1858
        %v1923 = vpack.c.b16 %v1875, %v1859
        %v1924 = vpack.c.b16 %v1876, %v1860
        %v1925 = vpack.c.b16 %v1877, %v1861
        %v1926 = vpack.c.b16 %v1894, %v1878
        %v1927 = vpack.c.b16 %v1895, %v1879
        %v1928 = vpack.c.b16 %v1896, %v1880
        %v1929 = vpack.c.b16 %v1897, %v1881
        %v1930 = vpack.c.b16 %v1898, %v1882
        %v1931 = vpack.c.b16 %v1899, %v1883
        %v1932 = vpack.c.b16 %v1900, %v1884
        %v1933 = vpack.c.b16 %v1901, %v1885
        %v1934 = vpack.c.b16 %v1902, %v1886
        %v1935 = vpack.c.b16 %v1903, %v1887
        %v1936 = vpack.c.b16 %v1904, %v1888
        %v1937 = vpack.c.b16 %v1905, %v1889
        %v1938 = vpack.c.b16 %v1906, %v1890
        %v1939 = vpack.c.b16 %v1907, %v1891
        %v1940 = vpack.c.b16 %v1908, %v1892
        %v1941 = vpack.c.b16 %v1909, %v1893
        %v1975 = vsel %vm1298, %v1779, 0
        %1977 = vmatpush.bf16.msra.mxu0 0
        %1978 = vmatpush.bf16.msra.mxu0 0
        %1979 = vmatpush.bf16.msra.mxu0 0
        %1980 = vmatpush.bf16.msra.mxu0 0
        %1981 = vmatpush.bf16.msra.mxu0 0
        %1982 = vmatpush.bf16.msra.mxu0 0
        %1983 = vmatpush.bf16.msra.mxu0 %v1926
        %1984 = vmatpush.bf16.msra.mxu0 %v1910
        %1985 = vmatmul.bf16.gmra.mxu0 %v1975
        %v1986 = vpop.f32.mrf.mxu0
        %v1987 = vadd.f32 %v1782, %v1986
        %v1988 = vpop.f32.mrf.mxu0
        %1989 = vdwg.mxu0
        %1990 = vmatpush.bf16.msra.mxu0 0
        %1991 = vmatpush.bf16.msra.mxu0 0
        %1992 = vmatpush.bf16.msra.mxu0 0
        %1993 = vmatpush.bf16.msra.mxu0 0
        %1994 = vmatpush.bf16.msra.mxu0 0
        %1995 = vmatpush.bf16.msra.mxu0 0
        %1996 = vmatpush.bf16.msra.mxu0 %v1927
        %1997 = vmatpush.bf16.msra.mxu0 %v1911
        %1998 = vmatmul.bf16.gmra.mxu0 %v1975
        %v1999 = vpop.f32.mrf.mxu0
        %v2000 = vadd.f32 %v1783, %v1999
        %v2001 = vpop.f32.mrf.mxu0
        %2002 = vdwg.mxu0
        %2003 = vmatpush.bf16.msra.mxu0 0
        %2004 = vmatpush.bf16.msra.mxu0 0
        %2005 = vmatpush.bf16.msra.mxu0 0
        %2006 = vmatpush.bf16.msra.mxu0 0
        %2007 = vmatpush.bf16.msra.mxu0 0
        %2008 = vmatpush.bf16.msra.mxu0 0
        %2009 = vmatpush.bf16.msra.mxu0 %v1928
        %2010 = vmatpush.bf16.msra.mxu0 %v1912
        %2011 = vmatmul.bf16.gmra.mxu0 %v1975
        %v2012 = vpop.f32.mrf.mxu0
        %v2013 = vadd.f32 %v1784, %v2012
        %v2014 = vpop.f32.mrf.mxu0
        %2015 = vdwg.mxu0
        %2016 = vmatpush.bf16.msra.mxu0 0
        %2017 = vmatpush.bf16.msra.mxu0 0
        %2018 = vmatpush.bf16.msra.mxu0 0
        %2019 = vmatpush.bf16.msra.mxu0 0
        %2020 = vmatpush.bf16.msra.mxu0 0
        %2021 = vmatpush.bf16.msra.mxu0 0
        %2022 = vmatpush.bf16.msra.mxu0 %v1929
        %2023 = vmatpush.bf16.msra.mxu0 %v1913
        %2024 = vmatmul.bf16.gmra.mxu0 %v1975
        %v2025 = vpop.f32.mrf.mxu0
        %v2026 = vadd.f32 %v1785, %v2025
        %v2027 = vpop.f32.mrf.mxu0
        %2028 = vdwg.mxu0
        %2029 = vmatpush.bf16.msra.mxu0 0
        %2030 = vmatpush.bf16.msra.mxu0 0
        %2031 = vmatpush.bf16.msra.mxu0 0
        %2032 = vmatpush.bf16.msra.mxu0 0
        %2033 = vmatpush.bf16.msra.mxu0 0
        %2034 = vmatpush.bf16.msra.mxu0 0
        %2035 = vmatpush.bf16.msra.mxu0 %v1930
        %2036 = vmatpush.bf16.msra.mxu0 %v1914
        %2037 = vmatmul.bf16.gmra.mxu0 %v1975
        %v2038 = vpop.f32.mrf.mxu0
        %v2039 = vadd.f32 %v1786, %v2038
        %v2040 = vpop.f32.mrf.mxu0
        %2041 = vdwg.mxu0
        %2042 = vmatpush.bf16.msra.mxu0 0
        %2043 = vmatpush.bf16.msra.mxu0 0
        %2044 = vmatpush.bf16.msra.mxu0 0
        %2045 = vmatpush.bf16.msra.mxu0 0
        %2046 = vmatpush.bf16.msra.mxu0 0
        %2047 = vmatpush.bf16.msra.mxu0 0
        %2048 = vmatpush.bf16.msra.mxu0 %v1931
        %2049 = vmatpush.bf16.msra.mxu0 %v1915
        %2050 = vmatmul.bf16.gmra.mxu0 %v1975
        %v2051 = vpop.f32.mrf.mxu0
        %v2052 = vadd.f32 %v1787, %v2051
        %v2053 = vpop.f32.mrf.mxu0
        %2054 = vdwg.mxu0
        %2055 = vmatpush.bf16.msra.mxu0 0
        %2056 = vmatpush.bf16.msra.mxu0 0
        %2057 = vmatpush.bf16.msra.mxu0 0
        %2058 = vmatpush.bf16.msra.mxu0 0
        %2059 = vmatpush.bf16.msra.mxu0 0
        %2060 = vmatpush.bf16.msra.mxu0 0
        %2061 = vmatpush.bf16.msra.mxu0 %v1932
        %2062 = vmatpush.bf16.msra.mxu0 %v1916
        %2063 = vmatmul.bf16.gmra.mxu0 %v1975
        %v2064 = vpop.f32.mrf.mxu0
        %v2065 = vadd.f32 %v1788, %v2064
        %v2066 = vpop.f32.mrf.mxu0
        %2067 = vdwg.mxu0
        %2068 = vmatpush.bf16.msra.mxu0 0
        %2069 = vmatpush.bf16.msra.mxu0 0
        %2070 = vmatpush.bf16.msra.mxu0 0
        %2071 = vmatpush.bf16.msra.mxu0 0
        %2072 = vmatpush.bf16.msra.mxu0 0
        %2073 = vmatpush.bf16.msra.mxu0 0
        %2074 = vmatpush.bf16.msra.mxu0 %v1933
        %2075 = vmatpush.bf16.msra.mxu0 %v1917
        %2076 = vmatmul.bf16.gmra.mxu0 %v1975
        %v2077 = vpop.f32.mrf.mxu0
        %v2078 = vadd.f32 %v1789, %v2077
        %v2079 = vpop.f32.mrf.mxu0
        %2080 = vdwg.mxu0
        %2081 = vmatpush.bf16.msra.mxu0 0
        %2082 = vmatpush.bf16.msra.mxu0 0
        %2083 = vmatpush.bf16.msra.mxu0 0
        %2084 = vmatpush.bf16.msra.mxu0 0
        %2085 = vmatpush.bf16.msra.mxu0 0
        %2086 = vmatpush.bf16.msra.mxu0 0
        %2087 = vmatpush.bf16.msra.mxu0 %v1934
        %2088 = vmatpush.bf16.msra.mxu0 %v1918
        %2089 = vmatmul.bf16.gmra.mxu0 %v1975
        %v2090 = vpop.f32.mrf.mxu0
        %v2091 = vadd.f32 %v1790, %v2090
        %v2092 = vpop.f32.mrf.mxu0
        %2093 = vdwg.mxu0
        %2094 = vmatpush.bf16.msra.mxu0 0
        %2095 = vmatpush.bf16.msra.mxu0 0
        %2096 = vmatpush.bf16.msra.mxu0 0
        %2097 = vmatpush.bf16.msra.mxu0 0
        %2098 = vmatpush.bf16.msra.mxu0 0
        %2099 = vmatpush.bf16.msra.mxu0 0
        %2100 = vmatpush.bf16.msra.mxu0 %v1935
        %2101 = vmatpush.bf16.msra.mxu0 %v1919
        %2102 = vmatmul.bf16.gmra.mxu0 %v1975
        %v2103 = vpop.f32.mrf.mxu0
        %v2104 = vadd.f32 %v1791, %v2103
        %v2105 = vpop.f32.mrf.mxu0
        %2106 = vdwg.mxu0
        %2107 = vmatpush.bf16.msra.mxu0 0
        %2108 = vmatpush.bf16.msra.mxu0 0
        %2109 = vmatpush.bf16.msra.mxu0 0
        %2110 = vmatpush.bf16.msra.mxu0 0
        %2111 = vmatpush.bf16.msra.mxu0 0
        %2112 = vmatpush.bf16.msra.mxu0 0
        %2113 = vmatpush.bf16.msra.mxu0 %v1936
        %2114 = vmatpush.bf16.msra.mxu0 %v1920
        %2115 = vmatmul.bf16.gmra.mxu0 %v1975
        %v2116 = vpop.f32.mrf.mxu0
        %v2117 = vadd.f32 %v1792, %v2116
        %v2118 = vpop.f32.mrf.mxu0
        %2119 = vdwg.mxu0
        %2120 = vmatpush.bf16.msra.mxu0 0
        %2121 = vmatpush.bf16.msra.mxu0 0
        %2122 = vmatpush.bf16.msra.mxu0 0
        %2123 = vmatpush.bf16.msra.mxu0 0
        %2124 = vmatpush.bf16.msra.mxu0 0
        %2125 = vmatpush.bf16.msra.mxu0 0
        %2126 = vmatpush.bf16.msra.mxu0 %v1937
        %2127 = vmatpush.bf16.msra.mxu0 %v1921
        %2128 = vmatmul.bf16.gmra.mxu0 %v1975
        %v2129 = vpop.f32.mrf.mxu0
        %v2130 = vadd.f32 %v1793, %v2129
        %v2131 = vpop.f32.mrf.mxu0
        %2132 = vdwg.mxu0
        %2133 = vmatpush.bf16.msra.mxu0 0
        %2134 = vmatpush.bf16.msra.mxu0 0
        %2135 = vmatpush.bf16.msra.mxu0 0
        %2136 = vmatpush.bf16.msra.mxu0 0
        %2137 = vmatpush.bf16.msra.mxu0 0
        %2138 = vmatpush.bf16.msra.mxu0 0
        %2139 = vmatpush.bf16.msra.mxu0 %v1938
        %2140 = vmatpush.bf16.msra.mxu0 %v1922
        %2141 = vmatmul.bf16.gmra.mxu0 %v1975
        %v2142 = vpop.f32.mrf.mxu0
        %v2143 = vadd.f32 %v1794, %v2142
        %v2144 = vpop.f32.mrf.mxu0
        %2145 = vdwg.mxu0
        %2146 = vmatpush.bf16.msra.mxu0 0
        %2147 = vmatpush.bf16.msra.mxu0 0
        %2148 = vmatpush.bf16.msra.mxu0 0
        %2149 = vmatpush.bf16.msra.mxu0 0
        %2150 = vmatpush.bf16.msra.mxu0 0
        %2151 = vmatpush.bf16.msra.mxu0 0
        %2152 = vmatpush.bf16.msra.mxu0 %v1939
        %2153 = vmatpush.bf16.msra.mxu0 %v1923
        %2154 = vmatmul.bf16.gmra.mxu0 %v1975
        %v2155 = vpop.f32.mrf.mxu0
        %v2156 = vadd.f32 %v1795, %v2155
        %v2157 = vpop.f32.mrf.mxu0
        %2158 = vdwg.mxu0
        %2159 = vmatpush.bf16.msra.mxu0 0
        %2160 = vmatpush.bf16.msra.mxu0 0
        %2161 = vmatpush.bf16.msra.mxu0 0
        %2162 = vmatpush.bf16.msra.mxu0 0
        %2163 = vmatpush.bf16.msra.mxu0 0
        %2164 = vmatpush.bf16.msra.mxu0 0
        %2165 = vmatpush.bf16.msra.mxu0 %v1940
        %2166 = vmatpush.bf16.msra.mxu0 %v1924
        %2167 = vmatmul.bf16.gmra.mxu0 %v1975
        %v2168 = vpop.f32.mrf.mxu0
        %v2169 = vadd.f32 %v1796, %v2168
        %v2170 = vpop.f32.mrf.mxu0
        %2171 = vdwg.mxu0
        %2172 = vmatpush.bf16.msra.mxu0 0
        %2173 = vmatpush.bf16.msra.mxu0 0
        %2174 = vmatpush.bf16.msra.mxu0 0
        %2175 = vmatpush.bf16.msra.mxu0 0
        %2176 = vmatpush.bf16.msra.mxu0 0
        %2177 = vmatpush.bf16.msra.mxu0 0
        %2178 = vmatpush.bf16.msra.mxu0 %v1941
        %2179 = vmatpush.bf16.msra.mxu0 %v1925
        %2180 = vmatmul.bf16.gmra.mxu0 %v1975
        %v2181 = vpop.f32.mrf.mxu0
        %v2182 = vadd.f32 %v1797, %v2181
        %v2183 = vpop.f32.mrf.mxu0
        %2184 = vdwg.mxu0
        %v2185 = vmax.f32 %v1987, 0.0
        %v2186 = vmax.f32 %v2000, 0.0
        %v2187 = vmax.f32 %v2013, 0.0
        %v2188 = vmax.f32 %v2026, 0.0
        %v2189 = vmax.f32 %v2039, 0.0
        %v2190 = vmax.f32 %v2052, 0.0
        %v2191 = vmax.f32 %v2065, 0.0
        %v2192 = vmax.f32 %v2078, 0.0
        %v2193 = vmax.f32 %v2091, 0.0
        %v2194 = vmax.f32 %v2104, 0.0
        %v2195 = vmax.f32 %v2117, 0.0
        %v2196 = vmax.f32 %v2130, 0.0
        %v2197 = vmax.f32 %v2143, 0.0
        %v2198 = vmax.f32 %v2156, 0.0
        %v2199 = vmax.f32 %v2169, 0.0
        %v2200 = vmax.f32 %v2182, 0.0
        %v2201 = vpack.c.bf16 %v2185, %v2185
        %v2202 = vpack.c.bf16 %v2186, %v2186
        %v2203 = vpack.c.bf16 %v2187, %v2187
        %v2204 = vpack.c.bf16 %v2188, %v2188
        %v2205 = vpack.c.bf16 %v2189, %v2189
        %v2206 = vpack.c.bf16 %v2190, %v2190
        %v2207 = vpack.c.bf16 %v2191, %v2191
        %v2208 = vpack.c.bf16 %v2192, %v2192
        %v2209 = vpack.c.bf16 %v2193, %v2193
        %v2210 = vpack.c.bf16 %v2194, %v2194
        %v2211 = vpack.c.bf16 %v2195, %v2195
        %v2212 = vpack.c.bf16 %v2196, %v2196
        %v2213 = vpack.c.bf16 %v2197, %v2197
        %v2214 = vpack.c.bf16 %v2198, %v2198
        %v2215 = vpack.c.bf16 %v2199, %v2199
        %v2216 = vpack.c.bf16 %v2200, %v2200
        %v2218 = vperm.slane %v1778, 0
        %v2252 = vunpack.c.l.b16 %v1746
        %v2253 = vunpack.c.h.b16 %v1746
        %v2254 = vunpack.c.l.b16 %v1747
        %v2255 = vunpack.c.h.b16 %v1747
        %v2256 = vunpack.c.l.b16 %v1748
        %v2257 = vunpack.c.h.b16 %v1748
        %v2258 = vunpack.c.l.b16 %v1749
        %v2259 = vunpack.c.h.b16 %v1749
        %v2260 = vunpack.c.l.b16 %v1750
        %v2261 = vunpack.c.h.b16 %v1750
        %v2262 = vunpack.c.l.b16 %v1751
        %v2263 = vunpack.c.h.b16 %v1751
        %v2264 = vunpack.c.l.b16 %v1752
        %v2265 = vunpack.c.h.b16 %v1752
        %v2266 = vunpack.c.l.b16 %v1753
        %v2267 = vunpack.c.h.b16 %v1753
        %v2268 = vunpack.c.l.b16 %v1754
        %v2269 = vunpack.c.h.b16 %v1754
        %v2270 = vunpack.c.l.b16 %v1755
        %v2271 = vunpack.c.h.b16 %v1755
        %v2272 = vunpack.c.l.b16 %v1756
        %v2273 = vunpack.c.h.b16 %v1756
        %v2274 = vunpack.c.l.b16 %v1757
        %v2275 = vunpack.c.h.b16 %v1757
        %v2276 = vunpack.c.l.b16 %v1758
        %v2277 = vunpack.c.h.b16 %v1758
        %v2278 = vunpack.c.l.b16 %v1759
        %v2279 = vunpack.c.h.b16 %v1759
        %v2280 = vunpack.c.l.b16 %v1760
        %v2281 = vunpack.c.h.b16 %v1760
        %v2282 = vunpack.c.l.b16 %v1761
        %v2283 = vunpack.c.h.b16 %v1761
        %v2284 = vunpack.c.l.b16 %v1762
        %v2285 = vunpack.c.h.b16 %v1762
        %v2286 = vunpack.c.l.b16 %v1763
        %v2287 = vunpack.c.h.b16 %v1763
        %v2288 = vunpack.c.l.b16 %v1764
        %v2289 = vunpack.c.h.b16 %v1764
        %v2290 = vunpack.c.l.b16 %v1765
        %v2291 = vunpack.c.h.b16 %v1765
        %v2292 = vunpack.c.l.b16 %v1766
        %v2293 = vunpack.c.h.b16 %v1766
        %v2294 = vunpack.c.l.b16 %v1767
        %v2295 = vunpack.c.h.b16 %v1767
        %v2296 = vunpack.c.l.b16 %v1768
        %v2297 = vunpack.c.h.b16 %v1768
        %v2298 = vunpack.c.l.b16 %v1769
        %v2299 = vunpack.c.h.b16 %v1769
        %v2300 = vunpack.c.l.b16 %v1770
        %v2301 = vunpack.c.h.b16 %v1770
        %v2302 = vunpack.c.l.b16 %v1771
        %v2303 = vunpack.c.h.b16 %v1771
        %v2304 = vunpack.c.l.b16 %v1772
        %v2305 = vunpack.c.h.b16 %v1772
        %v2306 = vunpack.c.l.b16 %v1773
        %v2307 = vunpack.c.h.b16 %v1773
        %v2308 = vunpack.c.l.b16 %v1774
        %v2309 = vunpack.c.h.b16 %v1774
        %v2310 = vunpack.c.l.b16 %v1775
        %v2311 = vunpack.c.h.b16 %v1775
        %v2312 = vunpack.c.l.b16 %v1776
        %v2313 = vunpack.c.h.b16 %v1776
        %v2314 = vunpack.c.l.b16 %v1777
        %v2315 = vunpack.c.h.b16 %v1777
        %v2316 = vpack.c.b16 %v2268, %v2252
        %v2317 = vpack.c.b16 %v2269, %v2253
        %v2318 = vpack.c.b16 %v2270, %v2254
        %v2319 = vpack.c.b16 %v2271, %v2255
        %v2320 = vpack.c.b16 %v2272, %v2256
        %v2321 = vpack.c.b16 %v2273, %v2257
        %v2322 = vpack.c.b16 %v2274, %v2258
        %v2323 = vpack.c.b16 %v2275, %v2259
        %v2324 = vpack.c.b16 %v2276, %v2260
        %v2325 = vpack.c.b16 %v2277, %v2261
        %v2326 = vpack.c.b16 %v2278, %v2262
        %v2327 = vpack.c.b16 %v2279, %v2263
        %v2328 = vpack.c.b16 %v2280, %v2264
        %v2329 = vpack.c.b16 %v2281, %v2265
        %v2330 = vpack.c.b16 %v2282, %v2266
        %v2331 = vpack.c.b16 %v2283, %v2267
        %v2332 = vpack.c.b16 %v2300, %v2284
        %v2333 = vpack.c.b16 %v2301, %v2285
        %v2334 = vpack.c.b16 %v2302, %v2286
        %v2335 = vpack.c.b16 %v2303, %v2287
        %v2336 = vpack.c.b16 %v2304, %v2288
        %v2337 = vpack.c.b16 %v2305, %v2289
        %v2338 = vpack.c.b16 %v2306, %v2290
        %v2339 = vpack.c.b16 %v2307, %v2291
        %v2340 = vpack.c.b16 %v2308, %v2292
        %v2341 = vpack.c.b16 %v2309, %v2293
        %v2342 = vpack.c.b16 %v2310, %v2294
        %v2343 = vpack.c.b16 %v2311, %v2295
        %v2344 = vpack.c.b16 %v2312, %v2296
        %v2345 = vpack.c.b16 %v2313, %v2297
        %v2346 = vpack.c.b16 %v2314, %v2298
        %v2347 = vpack.c.b16 %v2315, %v2299
        %2380 = vmatpush.bf16.xpose.msra.mxu0 0
        %2381 = vmatpush.bf16.xpose.msra.mxu0 0
        %2382 = vmatpush.bf16.xpose.msra.mxu0 0
        %2383 = vmatpush.bf16.xpose.msra.mxu0 0
        %2384 = vmatpush.bf16.xpose.msra.mxu0 0
        %2385 = vmatpush.bf16.xpose.msra.mxu0 0
        %2386 = vmatpush.bf16.xpose.msra.mxu0 %v2332
        %2387 = vmatpush.bf16.xpose.msra.mxu0 %v2316
        %2388 = vmatmul.bf16.gmra.mxu0 %v2201
        %v2389 = vpop.f32.mrf.mxu0
        %v2390 = vadd.f32 %v2218, %v2389
        %v2391 = vpop.f32.mrf.mxu0
        %2392 = vdwg.mxu0
        %2393 = vmatpush.bf16.xpose.msra.mxu0 0
        %2394 = vmatpush.bf16.xpose.msra.mxu0 0
        %2395 = vmatpush.bf16.xpose.msra.mxu0 0
        %2396 = vmatpush.bf16.xpose.msra.mxu0 0
        %2397 = vmatpush.bf16.xpose.msra.mxu0 0
        %2398 = vmatpush.bf16.xpose.msra.mxu0 0
        %2399 = vmatpush.bf16.xpose.msra.mxu0 %v2333
        %2400 = vmatpush.bf16.xpose.msra.mxu0 %v2317
        %2401 = vmatmul.bf16.gmra.mxu0 %v2202
        %v2402 = vpop.f32.mrf.mxu0
        %v2403 = vadd.f32 %v2390, %v2402
        %v2404 = vpop.f32.mrf.mxu0
        %2405 = vdwg.mxu0
        %2406 = vmatpush.bf16.xpose.msra.mxu0 0
        %2407 = vmatpush.bf16.xpose.msra.mxu0 0
        %2408 = vmatpush.bf16.xpose.msra.mxu0 0
        %2409 = vmatpush.bf16.xpose.msra.mxu0 0
        %2410 = vmatpush.bf16.xpose.msra.mxu0 0
        %2411 = vmatpush.bf16.xpose.msra.mxu0 0
        %2412 = vmatpush.bf16.xpose.msra.mxu0 %v2334
        %2413 = vmatpush.bf16.xpose.msra.mxu0 %v2318
        %2414 = vmatmul.bf16.gmra.mxu0 %v2203
        %v2415 = vpop.f32.mrf.mxu0
        %v2416 = vadd.f32 %v2403, %v2415
        %v2417 = vpop.f32.mrf.mxu0
        %2418 = vdwg.mxu0
        %2419 = vmatpush.bf16.xpose.msra.mxu0 0
        %2420 = vmatpush.bf16.xpose.msra.mxu0 0
        %2421 = vmatpush.bf16.xpose.msra.mxu0 0
        %2422 = vmatpush.bf16.xpose.msra.mxu0 0
        %2423 = vmatpush.bf16.xpose.msra.mxu0 0
        %2424 = vmatpush.bf16.xpose.msra.mxu0 0
        %2425 = vmatpush.bf16.xpose.msra.mxu0 %v2335
        %2426 = vmatpush.bf16.xpose.msra.mxu0 %v2319
        %2427 = vmatmul.bf16.gmra.mxu0 %v2204
        %v2428 = vpop.f32.mrf.mxu0
        %v2429 = vadd.f32 %v2416, %v2428
        %v2430 = vpop.f32.mrf.mxu0
        %2431 = vdwg.mxu0
        %2432 = vmatpush.bf16.xpose.msra.mxu0 0
        %2433 = vmatpush.bf16.xpose.msra.mxu0 0
        %2434 = vmatpush.bf16.xpose.msra.mxu0 0
        %2435 = vmatpush.bf16.xpose.msra.mxu0 0
        %2436 = vmatpush.bf16.xpose.msra.mxu0 0
        %2437 = vmatpush.bf16.xpose.msra.mxu0 0
        %2438 = vmatpush.bf16.xpose.msra.mxu0 %v2336
        %2439 = vmatpush.bf16.xpose.msra.mxu0 %v2320
        %2440 = vmatmul.bf16.gmra.mxu0 %v2205
        %v2441 = vpop.f32.mrf.mxu0
        %v2442 = vadd.f32 %v2429, %v2441
        %v2443 = vpop.f32.mrf.mxu0
        %2444 = vdwg.mxu0
        %2445 = vmatpush.bf16.xpose.msra.mxu0 0
        %2446 = vmatpush.bf16.xpose.msra.mxu0 0
        %2447 = vmatpush.bf16.xpose.msra.mxu0 0
        %2448 = vmatpush.bf16.xpose.msra.mxu0 0
        %2449 = vmatpush.bf16.xpose.msra.mxu0 0
        %2450 = vmatpush.bf16.xpose.msra.mxu0 0
        %2451 = vmatpush.bf16.xpose.msra.mxu0 %v2337
        %2452 = vmatpush.bf16.xpose.msra.mxu0 %v2321
        %2453 = vmatmul.bf16.gmra.mxu0 %v2206
        %v2454 = vpop.f32.mrf.mxu0
        %v2455 = vadd.f32 %v2442, %v2454
        %v2456 = vpop.f32.mrf.mxu0
        %2457 = vdwg.mxu0
        %2458 = vmatpush.bf16.xpose.msra.mxu0 0
        %2459 = vmatpush.bf16.xpose.msra.mxu0 0
        %2460 = vmatpush.bf16.xpose.msra.mxu0 0
        %2461 = vmatpush.bf16.xpose.msra.mxu0 0
        %2462 = vmatpush.bf16.xpose.msra.mxu0 0
        %2463 = vmatpush.bf16.xpose.msra.mxu0 0
        %2464 = vmatpush.bf16.xpose.msra.mxu0 %v2338
        %2465 = vmatpush.bf16.xpose.msra.mxu0 %v2322
        %2466 = vmatmul.bf16.gmra.mxu0 %v2207
        %v2467 = vpop.f32.mrf.mxu0
        %v2468 = vadd.f32 %v2455, %v2467
        %v2469 = vpop.f32.mrf.mxu0
        %2470 = vdwg.mxu0
        %2471 = vmatpush.bf16.xpose.msra.mxu0 0
        %2472 = vmatpush.bf16.xpose.msra.mxu0 0
        %2473 = vmatpush.bf16.xpose.msra.mxu0 0
        %2474 = vmatpush.bf16.xpose.msra.mxu0 0
        %2475 = vmatpush.bf16.xpose.msra.mxu0 0
        %2476 = vmatpush.bf16.xpose.msra.mxu0 0
        %2477 = vmatpush.bf16.xpose.msra.mxu0 %v2339
        %2478 = vmatpush.bf16.xpose.msra.mxu0 %v2323
        %2479 = vmatmul.bf16.gmra.mxu0 %v2208
        %v2480 = vpop.f32.mrf.mxu0
        %v2481 = vadd.f32 %v2468, %v2480
        %v2482 = vpop.f32.mrf.mxu0
        %2483 = vdwg.mxu0
        %2484 = vmatpush.bf16.xpose.msra.mxu0 0
        %2485 = vmatpush.bf16.xpose.msra.mxu0 0
        %2486 = vmatpush.bf16.xpose.msra.mxu0 0
        %2487 = vmatpush.bf16.xpose.msra.mxu0 0
        %2488 = vmatpush.bf16.xpose.msra.mxu0 0
        %2489 = vmatpush.bf16.xpose.msra.mxu0 0
        %2490 = vmatpush.bf16.xpose.msra.mxu0 %v2340
        %2491 = vmatpush.bf16.xpose.msra.mxu0 %v2324
        %2492 = vmatmul.bf16.gmra.mxu0 %v2209
        %v2493 = vpop.f32.mrf.mxu0
        %v2494 = vadd.f32 %v2481, %v2493
        %v2495 = vpop.f32.mrf.mxu0
        %2496 = vdwg.mxu0
        %2497 = vmatpush.bf16.xpose.msra.mxu0 0
        %2498 = vmatpush.bf16.xpose.msra.mxu0 0
        %2499 = vmatpush.bf16.xpose.msra.mxu0 0
        %2500 = vmatpush.bf16.xpose.msra.mxu0 0
        %2501 = vmatpush.bf16.xpose.msra.mxu0 0
        %2502 = vmatpush.bf16.xpose.msra.mxu0 0
        %2503 = vmatpush.bf16.xpose.msra.mxu0 %v2341
        %2504 = vmatpush.bf16.xpose.msra.mxu0 %v2325
        %2505 = vmatmul.bf16.gmra.mxu0 %v2210
        %v2506 = vpop.f32.mrf.mxu0
        %v2507 = vadd.f32 %v2494, %v2506
        %v2508 = vpop.f32.mrf.mxu0
        %2509 = vdwg.mxu0
        %2510 = vmatpush.bf16.xpose.msra.mxu0 0
        %2511 = vmatpush.bf16.xpose.msra.mxu0 0
        %2512 = vmatpush.bf16.xpose.msra.mxu0 0
        %2513 = vmatpush.bf16.xpose.msra.mxu0 0
        %2514 = vmatpush.bf16.xpose.msra.mxu0 0
        %2515 = vmatpush.bf16.xpose.msra.mxu0 0
        %2516 = vmatpush.bf16.xpose.msra.mxu0 %v2342
        %2517 = vmatpush.bf16.xpose.msra.mxu0 %v2326
        %2518 = vmatmul.bf16.gmra.mxu0 %v2211
        %v2519 = vpop.f32.mrf.mxu0
        %v2520 = vadd.f32 %v2507, %v2519
        %v2521 = vpop.f32.mrf.mxu0
        %2522 = vdwg.mxu0
        %2523 = vmatpush.bf16.xpose.msra.mxu0 0
        %2524 = vmatpush.bf16.xpose.msra.mxu0 0
        %2525 = vmatpush.bf16.xpose.msra.mxu0 0
        %2526 = vmatpush.bf16.xpose.msra.mxu0 0
        %2527 = vmatpush.bf16.xpose.msra.mxu0 0
        %2528 = vmatpush.bf16.xpose.msra.mxu0 0
        %2529 = vmatpush.bf16.xpose.msra.mxu0 %v2343
        %2530 = vmatpush.bf16.xpose.msra.mxu0 %v2327
        %2531 = vmatmul.bf16.gmra.mxu0 %v2212
        %v2532 = vpop.f32.mrf.mxu0
        %v2533 = vadd.f32 %v2520, %v2532
        %v2534 = vpop.f32.mrf.mxu0
        %2535 = vdwg.mxu0
        %2536 = vmatpush.bf16.xpose.msra.mxu0 0
        %2537 = vmatpush.bf16.xpose.msra.mxu0 0
        %2538 = vmatpush.bf16.xpose.msra.mxu0 0
        %2539 = vmatpush.bf16.xpose.msra.mxu0 0
        %2540 = vmatpush.bf16.xpose.msra.mxu0 0
        %2541 = vmatpush.bf16.xpose.msra.mxu0 0
        %2542 = vmatpush.bf16.xpose.msra.mxu0 %v2344
        %2543 = vmatpush.bf16.xpose.msra.mxu0 %v2328
        %2544 = vmatmul.bf16.gmra.mxu0 %v2213
        %v2545 = vpop.f32.mrf.mxu0
        %v2546 = vadd.f32 %v2533, %v2545
        %v2547 = vpop.f32.mrf.mxu0
        %2548 = vdwg.mxu0
        %2549 = vmatpush.bf16.xpose.msra.mxu0 0
        %2550 = vmatpush.bf16.xpose.msra.mxu0 0
        %2551 = vmatpush.bf16.xpose.msra.mxu0 0
        %2552 = vmatpush.bf16.xpose.msra.mxu0 0
        %2553 = vmatpush.bf16.xpose.msra.mxu0 0
        %2554 = vmatpush.bf16.xpose.msra.mxu0 0
        %2555 = vmatpush.bf16.xpose.msra.mxu0 %v2345
        %2556 = vmatpush.bf16.xpose.msra.mxu0 %v2329
        %2557 = vmatmul.bf16.gmra.mxu0 %v2214
        %v2558 = vpop.f32.mrf.mxu0
        %v2559 = vadd.f32 %v2546, %v2558
        %v2560 = vpop.f32.mrf.mxu0
        %2561 = vdwg.mxu0
        %2562 = vmatpush.bf16.xpose.msra.mxu0 0
        %2563 = vmatpush.bf16.xpose.msra.mxu0 0
        %2564 = vmatpush.bf16.xpose.msra.mxu0 0
        %2565 = vmatpush.bf16.xpose.msra.mxu0 0
        %2566 = vmatpush.bf16.xpose.msra.mxu0 0
        %2567 = vmatpush.bf16.xpose.msra.mxu0 0
        %2568 = vmatpush.bf16.xpose.msra.mxu0 %v2346
        %2569 = vmatpush.bf16.xpose.msra.mxu0 %v2330
        %2570 = vmatmul.bf16.gmra.mxu0 %v2215
        %v2571 = vpop.f32.mrf.mxu0
        %v2572 = vadd.f32 %v2559, %v2571
        %v2573 = vpop.f32.mrf.mxu0
        %2574 = vdwg.mxu0
        %2575 = vmatpush.bf16.xpose.msra.mxu0 0
        %2576 = vmatpush.bf16.xpose.msra.mxu0 0
        %2577 = vmatpush.bf16.xpose.msra.mxu0 0
        %2578 = vmatpush.bf16.xpose.msra.mxu0 0
        %2579 = vmatpush.bf16.xpose.msra.mxu0 0
        %2580 = vmatpush.bf16.xpose.msra.mxu0 0
        %2581 = vmatpush.bf16.xpose.msra.mxu0 %v2347
        %2582 = vmatpush.bf16.xpose.msra.mxu0 %v2331
        %2583 = vmatmul.bf16.gmra.mxu0 %v2216
        %v2584 = vpop.f32.mrf.mxu0
        %v2585 = vadd.f32 %v2572, %v2584
        %v2586 = vpop.f32.mrf.mxu0
        %2587 = vdwg.mxu0
        %v2588 = vadd.f32 %v2585, %v1711
        %v2589 = vld [vmem:[%s29] sm:$0x1]
        %v2590 = vld [vmem:[%s31] sm:$0x1]
        %v2591 = vsel %vm1298, %v2588, 0.0
        %2592 = vadd.xlane.f32.xlu0 %v2591
        %v2593 = vpop.xlane.xlu0 %2592
        %v2594 = vmul.f32 %v2593, %v1684
        %v2595 = vsub.f32 %v2588, %v2594
        %v2596 = vmul.f32 %v2595, %v2595
        %v2597 = vsel %vm1298, %v2596, 0.0
        %2598 = vadd.xlane.f32.xlu0 %v2597
        %v2599 = vpop.xlane.xlu0 %2598
        %v2600 = vmul.f32 %v2599, %v1684
        %v2601 = vadd.f32 %v2600, 1e-05
        %v2602 = vrsqrt.pop %v2601
        %v2603 = vmul.f32 %v2602, %v2601
        %v2604 = vmul.f32 %v2603, %v2602
        %v2605 = vmul.f32 0.5, %v2604
        %v2606 = vsub.f32 1.5, %v2605
        %v2607 = vmul.f32 %v2602, %v2606
        %vm2608 = vweird.f32 %v2601
        %vm2609 = vweird.f32 %v2602
        %vm2610 = vmor %vm2608, %vm2609
        %v2611 = vsel %vm2610, %v2602, %v2607
        %v2612 = vmul.f32 %v2595, %v2611
        %v2614 = vperm.slane %v2589, 0
        %v2616 = vmul.f32 %v2612, %v2614
        %v2618 = vperm.slane %v2590, 0
        %v2620 = vadd.f32 %v2616, %v2618
        %s2621 = scalar_lea.vmem %s9, 16
        %v2622 = vld [vmem:[%s2621] sm:$0xf]
        %v2623 = vld [vmem:[%s2621 + $0x4] sm:$0xf]
        %v2624 = vld [vmem:[%s2621 + $0x8] sm:$0xf]
        %v2625 = vld [vmem:[%s2621 + $0xc] sm:$0xf]
        %v2626 = vpack.c.bf16 %v2620, %v2620
        %s2627 = scalar_lea.vmem %s11, 1
        %v2628 = vld [vmem:[%s2627] sm:$0x1]
        %v2630 = vperm.slane %v2628, 0
        %v2636 = vunpack.c.l.b16 %v2622
        %v2637 = vunpack.c.l.b16 %v2623
        %v2638 = vunpack.c.l.b16 %v2624
        %v2639 = vunpack.c.l.b16 %v2625
        %v2640 = vpack.c.b16 %v2637, %v2636
        %v2641 = vpack.c.b16 %v2639, %v2638
        %v2645 = vsel %vm1298, %v2626, 0
        %2647 = vmatpush.bf16.msra.mxu0 0
        %2648 = vmatpush.bf16.msra.mxu0 0
        %2649 = vmatpush.bf16.msra.mxu0 0
        %2650 = vmatpush.bf16.msra.mxu0 0
        %2651 = vmatpush.bf16.msra.mxu0 0
        %2652 = vmatpush.bf16.msra.mxu0 0
        %2653 = vmatpush.bf16.msra.mxu0 %v2641
        %2654 = vmatpush.bf16.msra.mxu0 %v2640
        %2655 = vmatmul.bf16.gmra.mxu0 %v2645
        %v2656 = vpop.f32.mrf.mxu0
        %v2657 = vadd.f32 %v2630, %v2656
        %v2658 = vpop.f32.mrf.mxu0
        %2659 = vdwg.mxu0
        %s2660 = scalar_lea.vmem %s13, 16
        %v2661 = vld [vmem:[%s2660] sm:$0xf]
        %v2662 = vld [vmem:[%s2660 + $0x4] sm:$0xf]
        %v2663 = vld [vmem:[%s2660 + $0x8] sm:$0xf]
        %v2664 = vld [vmem:[%s2660 + $0xc] sm:$0xf]
        %v2665 = vmul.f32 %v2657, 0.35355338
        %2667 = vrot.lane.b32.xlu0 %v2657, 96
        %v2668 = vpop.permute.xlu0 %2667
        %v2670 = vsel %vm1326, %v2665, 0
        %v2672 = vsel %vm1326, %v2668, 0
        %2674 = vmatpush.xpose.msra.mxu0 0.0
        %2675 = vmatpush.xpose.msra.mxu0 0.0
        %2676 = vmatpush.xpose.msra.mxu0 0.0
        %2677 = vmatpush.xpose.msra.mxu0 0.0
        %2678 = vmatpush.xpose.msra.mxu0 0.0
        %2679 = vmatpush.xpose.msra.mxu0 0.0
        %2680 = vmatpush.xpose.msra.mxu0 0.0
        %2681 = vmatpush.xpose.msra.mxu0 0.0
        %2682 = vmatpush.xpose.msra.mxu0 0.0
        %2683 = vmatpush.xpose.msra.mxu0 0.0
        %2684 = vmatpush.xpose.msra.mxu0 0.0
        %2685 = vmatpush.xpose.msra.mxu0 0.0
        %2686 = vmatpush.xpose.msra.mxu0 0.0
        %2687 = vmatpush.xpose.msra.mxu0 0.0
        %2688 = vmatpush.xpose.msra.mxu0 0.0
        %2689 = vmatpush.xpose.msra.mxu0 %v2672
        %2690 = vmatmul.f32.gmra.mxu0 %v2670
        %v2691 = vpop.f32.mrf.mxu0
        %v2692 = vadd.f32 %v1321, %v2691
        %2693 = vdwg.mxu0
        %v2694 = vsel %vm1326, %v2692, -inf
        %2695 = vmax.xlane.f32.xlu0 %v2694
        %v2696 = vpop.xlane.xlu0 %2695
        %v2697 = vsub.f32 %v2692, %v2696
        %v2698 = vmul.f32 %v2697, 1.442695
        %v2699 = vpow.pop %v2698
        %v2700 = vsel %vm1326, %v2699, 0.0
        %2701 = vadd.xlane.f32.xlu0 %v2700
        %v2702 = vpop.xlane.xlu0 %2701
        %v2703 = vrcp.pop %v2702
        %2704 = vrot.lane.b32.xlu0 %v2657, 64
        %v2705 = vpop.permute.xlu0 %2704
        %v2708 = vsel %vm1326, %v2699, 0
        %2710 = vmatpush.msra.mxu0 0.0
        %2711 = vmatpush.msra.mxu0 0.0
        %2712 = vmatpush.msra.mxu0 0.0
        %2713 = vmatpush.msra.mxu0 0.0
        %2714 = vmatpush.msra.mxu0 0.0
        %2715 = vmatpush.msra.mxu0 0.0
        %2716 = vmatpush.msra.mxu0 0.0
        %2717 = vmatpush.msra.mxu0 0.0
        %2718 = vmatpush.msra.mxu0 0.0
        %2719 = vmatpush.msra.mxu0 0.0
        %2720 = vmatpush.msra.mxu0 0.0
        %2721 = vmatpush.msra.mxu0 0.0
        %2722 = vmatpush.msra.mxu0 0.0
        %2723 = vmatpush.msra.mxu0 0.0
        %2724 = vmatpush.msra.mxu0 0.0
        %2725 = vmatpush.msra.mxu0 %v2705
        %2726 = vmatmul.f32.gmra.mxu0 %v2708
        %v2727 = vpop.f32.mrf.mxu0
        %v2728 = vadd.f32 0.0, %v2727
        %2729 = vdwg.mxu0
        %v2730 = vmul.f32 %v2728, %v2703
        %v2731 = vpack.c.bf16 %v2730, %v2730
        %2732 = vrot.lane.b32.xlu0 %v2665, 120
        %v2733 = vpop.permute.xlu0 %2732
        %2734 = vrot.lane.b32.xlu0 %v2657, 88
        %v2735 = vpop.permute.xlu0 %2734
        %v2736 = vsel %vm1326, %v2733, 0
        %v2738 = vsel %vm1326, %v2735, 0
        %2740 = vmatpush.xpose.msra.mxu0 0.0
        %2741 = vmatpush.xpose.msra.mxu0 0.0
        %2742 = vmatpush.xpose.msra.mxu0 0.0
        %2743 = vmatpush.xpose.msra.mxu0 0.0
        %2744 = vmatpush.xpose.msra.mxu0 0.0
        %2745 = vmatpush.xpose.msra.mxu0 0.0
        %2746 = vmatpush.xpose.msra.mxu0 0.0
        %2747 = vmatpush.xpose.msra.mxu0 0.0
        %2748 = vmatpush.xpose.msra.mxu0 0.0
        %2749 = vmatpush.xpose.msra.mxu0 0.0
        %2750 = vmatpush.xpose.msra.mxu0 0.0
        %2751 = vmatpush.xpose.msra.mxu0 0.0
        %2752 = vmatpush.xpose.msra.mxu0 0.0
        %2753 = vmatpush.xpose.msra.mxu0 0.0
        %2754 = vmatpush.xpose.msra.mxu0 0.0
        %2755 = vmatpush.xpose.msra.mxu0 %v2738
        %2756 = vmatmul.f32.gmra.mxu0 %v2736
        %v2757 = vpop.f32.mrf.mxu0
        %v2758 = vadd.f32 %v1321, %v2757
        %2759 = vdwg.mxu0
        %v2760 = vsel %vm1326, %v2758, -inf
        %2761 = vmax.xlane.f32.xlu0 %v2760
        %v2762 = vpop.xlane.xlu0 %2761
        %v2763 = vsub.f32 %v2758, %v2762
        %v2764 = vmul.f32 %v2763, 1.442695
        %v2765 = vpow.pop %v2764
        %v2766 = vsel %vm1326, %v2765, 0.0
        %2767 = vadd.xlane.f32.xlu0 %v2766
        %v2768 = vpop.xlane.xlu0 %2767
        %v2769 = vrcp.pop %v2768
        %2770 = vrot.lane.b32.xlu0 %v2657, 56
        %v2771 = vpop.permute.xlu0 %2770
        %v2774 = vsel %vm1326, %v2765, 0
        %2776 = vmatpush.msra.mxu0 0.0
        %2777 = vmatpush.msra.mxu0 0.0
        %2778 = vmatpush.msra.mxu0 0.0
        %2779 = vmatpush.msra.mxu0 0.0
        %2780 = vmatpush.msra.mxu0 0.0
        %2781 = vmatpush.msra.mxu0 0.0
        %2782 = vmatpush.msra.mxu0 0.0
        %2783 = vmatpush.msra.mxu0 0.0
        %2784 = vmatpush.msra.mxu0 0.0
        %2785 = vmatpush.msra.mxu0 0.0
        %2786 = vmatpush.msra.mxu0 0.0
        %2787 = vmatpush.msra.mxu0 0.0
        %2788 = vmatpush.msra.mxu0 0.0
        %2789 = vmatpush.msra.mxu0 0.0
        %2790 = vmatpush.msra.mxu0 0.0
        %2791 = vmatpush.msra.mxu0 %v2771
        %2792 = vmatmul.f32.gmra.mxu0 %v2774
        %v2793 = vpop.f32.mrf.mxu0
        %v2794 = vadd.f32 0.0, %v2793
        %2795 = vdwg.mxu0
        %v2796 = vmul.f32 %v2794, %v2769
        %v2797 = vpack.c.bf16 %v2796, %v2796
        %v2799 = vsel %vm1326, %v2797, 0
        %v2802 = vsel %vm1459, %v2662, 0
        %2804 = vmatpush.bf16.msra.mxu0 0
        %2805 = vmatpush.bf16.msra.mxu0 0
        %2806 = vmatpush.bf16.msra.mxu0 0
        %2807 = vmatpush.bf16.msra.mxu0 0
        %2808 = vmatpush.bf16.msra.mxu0 0
        %2809 = vmatpush.bf16.msra.mxu0 0
        %2810 = vmatpush.bf16.msra.mxu0 0
        %2811 = vmatpush.bf16.msra.mxu0 %v2802
        %2812 = vmatmul.bf16.gmra.mxu0 %v2799
        %v2813 = vpop.f32.mrf.mxu0
        %v2814 = vadd.f32 0.0, %v2813
        %v2815 = vpop.f32.mrf.mxu0
        %2816 = vdwg.mxu0
        %v2818 = vsel %vm1326, %v2731, 0
        %v2821 = vsel %vm1459, %v2661, 0
        %2823 = vmatpush.bf16.msra.mxu0 0
        %2824 = vmatpush.bf16.msra.mxu0 0
        %2825 = vmatpush.bf16.msra.mxu0 0
        %2826 = vmatpush.bf16.msra.mxu0 0
        %2827 = vmatpush.bf16.msra.mxu0 0
        %2828 = vmatpush.bf16.msra.mxu0 0
        %2829 = vmatpush.bf16.msra.mxu0 0
        %2830 = vmatpush.bf16.msra.mxu0 %v2821
        %2831 = vmatmul.bf16.gmra.mxu0 %v2818
        %v2832 = vpop.f32.mrf.mxu0
        %v2833 = vadd.f32 %v2814, %v2832
        %v2834 = vpop.f32.mrf.mxu0
        %2835 = vdwg.mxu0
        %2836 = vrot.lane.b32.xlu0 %v2665, 112
        %v2837 = vpop.permute.xlu0 %2836
        %2838 = vrot.lane.b32.xlu0 %v2657, 80
        %v2839 = vpop.permute.xlu0 %2838
        %v2840 = vsel %vm1326, %v2837, 0
        %v2842 = vsel %vm1326, %v2839, 0
        %2844 = vmatpush.xpose.msra.mxu0 0.0
        %2845 = vmatpush.xpose.msra.mxu0 0.0
        %2846 = vmatpush.xpose.msra.mxu0 0.0
        %2847 = vmatpush.xpose.msra.mxu0 0.0
        %2848 = vmatpush.xpose.msra.mxu0 0.0
        %2849 = vmatpush.xpose.msra.mxu0 0.0
        %2850 = vmatpush.xpose.msra.mxu0 0.0
        %2851 = vmatpush.xpose.msra.mxu0 0.0
        %2852 = vmatpush.xpose.msra.mxu0 0.0
        %2853 = vmatpush.xpose.msra.mxu0 0.0
        %2854 = vmatpush.xpose.msra.mxu0 0.0
        %2855 = vmatpush.xpose.msra.mxu0 0.0
        %2856 = vmatpush.xpose.msra.mxu0 0.0
        %2857 = vmatpush.xpose.msra.mxu0 0.0
        %2858 = vmatpush.xpose.msra.mxu0 0.0
        %2859 = vmatpush.xpose.msra.mxu0 %v2842
        %2860 = vmatmul.f32.gmra.mxu0 %v2840
        %v2861 = vpop.f32.mrf.mxu0
        %v2862 = vadd.f32 %v1321, %v2861
        %2863 = vdwg.mxu0
        %v2864 = vsel %vm1326, %v2862, -inf
        %2865 = vmax.xlane.f32.xlu0 %v2864
        %v2866 = vpop.xlane.xlu0 %2865
        %v2867 = vsub.f32 %v2862, %v2866
        %v2868 = vmul.f32 %v2867, 1.442695
        %v2869 = vpow.pop %v2868
        %v2870 = vsel %vm1326, %v2869, 0.0
        %2871 = vadd.xlane.f32.xlu0 %v2870
        %v2872 = vpop.xlane.xlu0 %2871
        %v2873 = vrcp.pop %v2872
        %2874 = vrot.lane.b32.xlu0 %v2657, 48
        %v2875 = vpop.permute.xlu0 %2874
        %v2878 = vsel %vm1326, %v2869, 0
        %2880 = vmatpush.msra.mxu0 0.0
        %2881 = vmatpush.msra.mxu0 0.0
        %2882 = vmatpush.msra.mxu0 0.0
        %2883 = vmatpush.msra.mxu0 0.0
        %2884 = vmatpush.msra.mxu0 0.0
        %2885 = vmatpush.msra.mxu0 0.0
        %2886 = vmatpush.msra.mxu0 0.0
        %2887 = vmatpush.msra.mxu0 0.0
        %2888 = vmatpush.msra.mxu0 0.0
        %2889 = vmatpush.msra.mxu0 0.0
        %2890 = vmatpush.msra.mxu0 0.0
        %2891 = vmatpush.msra.mxu0 0.0
        %2892 = vmatpush.msra.mxu0 0.0
        %2893 = vmatpush.msra.mxu0 0.0
        %2894 = vmatpush.msra.mxu0 0.0
        %2895 = vmatpush.msra.mxu0 %v2875
        %2896 = vmatmul.f32.gmra.mxu0 %v2878
        %v2897 = vpop.f32.mrf.mxu0
        %v2898 = vadd.f32 0.0, %v2897
        %2899 = vdwg.mxu0
        %v2900 = vmul.f32 %v2898, %v2873
        %v2901 = vpack.c.bf16 %v2900, %v2900
        %v2903 = vsel %vm1326, %v2901, 0
        %v2906 = vsel %vm1459, %v2663, 0
        %2908 = vmatpush.bf16.msra.mxu0 0
        %2909 = vmatpush.bf16.msra.mxu0 0
        %2910 = vmatpush.bf16.msra.mxu0 0
        %2911 = vmatpush.bf16.msra.mxu0 0
        %2912 = vmatpush.bf16.msra.mxu0 0
        %2913 = vmatpush.bf16.msra.mxu0 0
        %2914 = vmatpush.bf16.msra.mxu0 0
        %2915 = vmatpush.bf16.msra.mxu0 %v2906
        %2916 = vmatmul.bf16.gmra.mxu0 %v2903
        %v2917 = vpop.f32.mrf.mxu0
        %v2918 = vadd.f32 0.0, %v2917
        %v2919 = vpop.f32.mrf.mxu0
        %2920 = vdwg.mxu0
        %v2921 = vadd.f32 %v2833, %v2918
        %2922 = vrot.lane.b32.xlu0 %v2665, 104
        %v2923 = vpop.permute.xlu0 %2922
        %2924 = vrot.lane.b32.xlu0 %v2657, 72
        %v2925 = vpop.permute.xlu0 %2924
        %v2926 = vsel %vm1326, %v2923, 0
        %v2928 = vsel %vm1326, %v2925, 0
        %2930 = vmatpush.xpose.msra.mxu0 0.0
        %2931 = vmatpush.xpose.msra.mxu0 0.0
        %2932 = vmatpush.xpose.msra.mxu0 0.0
        %2933 = vmatpush.xpose.msra.mxu0 0.0
        %2934 = vmatpush.xpose.msra.mxu0 0.0
        %2935 = vmatpush.xpose.msra.mxu0 0.0
        %2936 = vmatpush.xpose.msra.mxu0 0.0
        %2937 = vmatpush.xpose.msra.mxu0 0.0
        %2938 = vmatpush.xpose.msra.mxu0 0.0
        %2939 = vmatpush.xpose.msra.mxu0 0.0
        %2940 = vmatpush.xpose.msra.mxu0 0.0
        %2941 = vmatpush.xpose.msra.mxu0 0.0
        %2942 = vmatpush.xpose.msra.mxu0 0.0
        %2943 = vmatpush.xpose.msra.mxu0 0.0
        %2944 = vmatpush.xpose.msra.mxu0 0.0
        %2945 = vmatpush.xpose.msra.mxu0 %v2928
        %2946 = vmatmul.f32.gmra.mxu0 %v2926
        %v2947 = vpop.f32.mrf.mxu0
        %v2948 = vadd.f32 %v1321, %v2947
        %2949 = vdwg.mxu0
        %v2950 = vsel %vm1326, %v2948, -inf
        %2951 = vmax.xlane.f32.xlu0 %v2950
        %v2952 = vpop.xlane.xlu0 %2951
        %v2953 = vsub.f32 %v2948, %v2952
        %v2954 = vmul.f32 %v2953, 1.442695
        %v2955 = vpow.pop %v2954
        %v2956 = vsel %vm1326, %v2955, 0.0
        %2957 = vadd.xlane.f32.xlu0 %v2956
        %v2958 = vpop.xlane.xlu0 %2957
        %v2959 = vrcp.pop %v2958
        %2960 = vrot.lane.b32.xlu0 %v2657, 40
        %v2961 = vpop.permute.xlu0 %2960
        %v2964 = vsel %vm1326, %v2955, 0
        %2966 = vmatpush.msra.mxu0 0.0
        %2967 = vmatpush.msra.mxu0 0.0
        %2968 = vmatpush.msra.mxu0 0.0
        %2969 = vmatpush.msra.mxu0 0.0
        %2970 = vmatpush.msra.mxu0 0.0
        %2971 = vmatpush.msra.mxu0 0.0
        %2972 = vmatpush.msra.mxu0 0.0
        %2973 = vmatpush.msra.mxu0 0.0
        %2974 = vmatpush.msra.mxu0 0.0
        %2975 = vmatpush.msra.mxu0 0.0
        %2976 = vmatpush.msra.mxu0 0.0
        %2977 = vmatpush.msra.mxu0 0.0
        %2978 = vmatpush.msra.mxu0 0.0
        %2979 = vmatpush.msra.mxu0 0.0
        %2980 = vmatpush.msra.mxu0 0.0
        %2981 = vmatpush.msra.mxu0 %v2961
        %2982 = vmatmul.f32.gmra.mxu0 %v2964
        %v2983 = vpop.f32.mrf.mxu0
        %v2984 = vadd.f32 0.0, %v2983
        %2985 = vdwg.mxu0
        %v2986 = vmul.f32 %v2984, %v2959
        %v2987 = vpack.c.bf16 %v2986, %v2986
        %v2989 = vsel %vm1326, %v2987, 0
        %v2992 = vsel %vm1459, %v2664, 0
        %2994 = vmatpush.bf16.msra.mxu0 0
        %2995 = vmatpush.bf16.msra.mxu0 0
        %2996 = vmatpush.bf16.msra.mxu0 0
        %2997 = vmatpush.bf16.msra.mxu0 0
        %2998 = vmatpush.bf16.msra.mxu0 0
        %2999 = vmatpush.bf16.msra.mxu0 0
        %3000 = vmatpush.bf16.msra.mxu0 0
        %3001 = vmatpush.bf16.msra.mxu0 %v2992
        %3002 = vmatmul.bf16.gmra.mxu0 %v2989
        %v3003 = vpop.f32.mrf.mxu0
        %v3004 = vadd.f32 0.0, %v3003
        %v3005 = vpop.f32.mrf.mxu0
        %3006 = vdwg.mxu0
        %v3007 = vadd.f32 %v2921, %v3004
        %s3008 = scalar_lea.vmem %s15, 1
        %v3009 = vld [vmem:[%s3008] sm:$0x1]
        %v3011 = vperm.slane %v3009, 0
        %v3013 = vadd.f32 %v3007, %v3011
        %v3014 = vadd.f32 %v3013, %v2620
        %s3015 = scalar_lea.vmem %s17, 1
        %v3016 = vld [vmem:[%s3015] sm:$0x1]
        %s3017 = scalar_lea.vmem %s19, 1
        %v3018 = vld [vmem:[%s3017] sm:$0x1]
        %v3019 = vsel %vm1298, %v3014, 0.0
        %3020 = vadd.xlane.f32.xlu0 %v3019
        %v3021 = vpop.xlane.xlu0 %3020
        %v3022 = vmul.f32 %v3021, %v1684
        %v3023 = vsub.f32 %v3014, %v3022
        %v3024 = vmul.f32 %v3023, %v3023
        %v3025 = vsel %vm1298, %v3024, 0.0
        %3026 = vadd.xlane.f32.xlu0 %v3025
        %v3027 = vpop.xlane.xlu0 %3026
        %v3028 = vmul.f32 %v3027, %v1684
        %v3029 = vadd.f32 %v3028, 1e-05
        %v3030 = vrsqrt.pop %v3029
        %v3031 = vmul.f32 %v3030, %v3029
        %v3032 = vmul.f32 %v3031, %v3030
        %v3033 = vmul.f32 0.5, %v3032
        %v3034 = vsub.f32 1.5, %v3033
        %v3035 = vmul.f32 %v3030, %v3034
        %vm3036 = vweird.f32 %v3029
        %vm3037 = vweird.f32 %v3030
        %vm3038 = vmor %vm3036, %vm3037
        %v3039 = vsel %vm3038, %v3030, %v3035
        %v3040 = vmul.f32 %v3023, %v3039
        %v3042 = vperm.slane %v3016, 0
        %v3044 = vmul.f32 %v3040, %v3042
        %v3046 = vperm.slane %v3018, 0
        %v3048 = vadd.f32 %v3044, %v3046
        %s3049 = scalar_lea.vmem [#allocation2], 256
        %v3050 = vld [vmem:[%s3049] sm:$0xff]
        %v3051 = vld [vmem:[%s3049 + $0x8] sm:$0xff]
        %v3052 = vld [vmem:[%s3049 + $0x10] sm:$0xff]
        %v3053 = vld [vmem:[%s3049 + $0x18] sm:$0xff]
        %v3054 = vld [vmem:[%s3049 + $0x20] sm:$0xff]
        %v3055 = vld [vmem:[%s3049 + $0x28] sm:$0xff]
        %v3056 = vld [vmem:[%s3049 + $0x30] sm:$0xff]
        %v3057 = vld [vmem:[%s3049 + $0x38] sm:$0xff]
        %v3058 = vld [vmem:[%s3049 + $0x40] sm:$0xff]
        %v3059 = vld [vmem:[%s3049 + $0x48] sm:$0xff]
        %v3060 = vld [vmem:[%s3049 + $0x50] sm:$0xff]
        %v3061 = vld [vmem:[%s3049 + $0x58] sm:$0xff]
        %v3062 = vld [vmem:[%s3049 + $0x60] sm:$0xff]
        %v3063 = vld [vmem:[%s3049 + $0x68] sm:$0xff]
        %v3064 = vld [vmem:[%s3049 + $0x70] sm:$0xff]
        %v3065 = vld [vmem:[%s3049 + $0x78] sm:$0xff]
        %v3066 = vld [vmem:[%s3049 + $0x80] sm:$0xff]
        %v3067 = vld [vmem:[%s3049 + $0x88] sm:$0xff]
        %v3068 = vld [vmem:[%s3049 + $0x90] sm:$0xff]
        %v3069 = vld [vmem:[%s3049 + $0x98] sm:$0xff]
        %v3070 = vld [vmem:[%s3049 + $0xa0] sm:$0xff]
        %v3071 = vld [vmem:[%s3049 + $0xa8] sm:$0xff]
        %v3072 = vld [vmem:[%s3049 + $0xb0] sm:$0xff]
        %v3073 = vld [vmem:[%s3049 + $0xb8] sm:$0xff]
        %v3074 = vld [vmem:[%s3049 + $0xc0] sm:$0xff]
        %v3075 = vld [vmem:[%s3049 + $0xc8] sm:$0xff]
        %v3076 = vld [vmem:[%s3049 + $0xd0] sm:$0xff]
        %v3077 = vld [vmem:[%s3049 + $0xd8] sm:$0xff]
        %v3078 = vld [vmem:[%s3049 + $0xe0] sm:$0xff]
        %v3079 = vld [vmem:[%s3049 + $0xe8] sm:$0xff]
        %v3080 = vld [vmem:[%s3049 + $0xf0] sm:$0xff]
        %v3081 = vld [vmem:[%s3049 + $0xf8] sm:$0xff]
        %s3082 = scalar_lea.vmem %s23, 16
        %v3083 = vld [vmem:[%s3082] sm:$0xff]
        %v3084 = vld [vmem:[%s3082 + $0x8] sm:$0xff]
        %s3085 = scalar_lea.vmem [#allocation4], 256
        %v3086 = vld [vmem:[%s3085] sm:$0xff]
        %v3087 = vld [vmem:[%s3085 + $0x8] sm:$0xff]
        %v3088 = vld [vmem:[%s3085 + $0x10] sm:$0xff]
        %v3089 = vld [vmem:[%s3085 + $0x18] sm:$0xff]
        %v3090 = vld [vmem:[%s3085 + $0x20] sm:$0xff]
        %v3091 = vld [vmem:[%s3085 + $0x28] sm:$0xff]
        %v3092 = vld [vmem:[%s3085 + $0x30] sm:$0xff]
        %v3093 = vld [vmem:[%s3085 + $0x38] sm:$0xff]
        %v3094 = vld [vmem:[%s3085 + $0x40] sm:$0xff]
        %v3095 = vld [vmem:[%s3085 + $0x48] sm:$0xff]
        %v3096 = vld [vmem:[%s3085 + $0x50] sm:$0xff]
        %v3097 = vld [vmem:[%s3085 + $0x58] sm:$0xff]
        %v3098 = vld [vmem:[%s3085 + $0x60] sm:$0xff]
        %v3099 = vld [vmem:[%s3085 + $0x68] sm:$0xff]
        %v3100 = vld [vmem:[%s3085 + $0x70] sm:$0xff]
        %v3101 = vld [vmem:[%s3085 + $0x78] sm:$0xff]
        %v3102 = vld [vmem:[%s3085 + $0x80] sm:$0xff]
        %v3103 = vld [vmem:[%s3085 + $0x88] sm:$0xff]
        %v3104 = vld [vmem:[%s3085 + $0x90] sm:$0xff]
        %v3105 = vld [vmem:[%s3085 + $0x98] sm:$0xff]
        %v3106 = vld [vmem:[%s3085 + $0xa0] sm:$0xff]
        %v3107 = vld [vmem:[%s3085 + $0xa8] sm:$0xff]
        %v3108 = vld [vmem:[%s3085 + $0xb0] sm:$0xff]
        %v3109 = vld [vmem:[%s3085 + $0xb8] sm:$0xff]
        %v3110 = vld [vmem:[%s3085 + $0xc0] sm:$0xff]
        %v3111 = vld [vmem:[%s3085 + $0xc8] sm:$0xff]
        %v3112 = vld [vmem:[%s3085 + $0xd0] sm:$0xff]
        %v3113 = vld [vmem:[%s3085 + $0xd8] sm:$0xff]
        %v3114 = vld [vmem:[%s3085 + $0xe0] sm:$0xff]
        %v3115 = vld [vmem:[%s3085 + $0xe8] sm:$0xff]
        %v3116 = vld [vmem:[%s3085 + $0xf0] sm:$0xff]
        %v3117 = vld [vmem:[%s3085 + $0xf8] sm:$0xff]
        %s3118 = scalar_lea.vmem %s27, 1
        %v3119 = vld [vmem:[%s3118] sm:$0x1]
        %v3120 = vpack.c.bf16 %v3048, %v3048
        %v3123 = vperm.slane %v3083, 0
        %v3124 = vperm.slane %v3083, 1
        %v3125 = vperm.slane %v3083, 2
        %v3126 = vperm.slane %v3083, 3
        %v3127 = vperm.slane %v3083, 4
        %v3128 = vperm.slane %v3083, 5
        %v3129 = vperm.slane %v3083, 6
        %v3130 = vperm.slane %v3083, 7
        %v3131 = vperm.slane %v3084, 0
        %v3132 = vperm.slane %v3084, 1
        %v3133 = vperm.slane %v3084, 2
        %v3134 = vperm.slane %v3084, 3
        %v3135 = vperm.slane %v3084, 4
        %v3136 = vperm.slane %v3084, 5
        %v3137 = vperm.slane %v3084, 6
        %v3138 = vperm.slane %v3084, 7
        %v3187 = vunpack.c.l.b16 %v3050
        %v3188 = vunpack.c.h.b16 %v3050
        %v3189 = vunpack.c.l.b16 %v3051
        %v3190 = vunpack.c.h.b16 %v3051
        %v3191 = vunpack.c.l.b16 %v3052
        %v3192 = vunpack.c.h.b16 %v3052
        %v3193 = vunpack.c.l.b16 %v3053
        %v3194 = vunpack.c.h.b16 %v3053
        %v3195 = vunpack.c.l.b16 %v3054
        %v3196 = vunpack.c.h.b16 %v3054
        %v3197 = vunpack.c.l.b16 %v3055
        %v3198 = vunpack.c.h.b16 %v3055
        %v3199 = vunpack.c.l.b16 %v3056
        %v3200 = vunpack.c.h.b16 %v3056
        %v3201 = vunpack.c.l.b16 %v3057
        %v3202 = vunpack.c.h.b16 %v3057
        %v3203 = vunpack.c.l.b16 %v3058
        %v3204 = vunpack.c.h.b16 %v3058
        %v3205 = vunpack.c.l.b16 %v3059
        %v3206 = vunpack.c.h.b16 %v3059
        %v3207 = vunpack.c.l.b16 %v3060
        %v3208 = vunpack.c.h.b16 %v3060
        %v3209 = vunpack.c.l.b16 %v3061
        %v3210 = vunpack.c.h.b16 %v3061
        %v3211 = vunpack.c.l.b16 %v3062
        %v3212 = vunpack.c.h.b16 %v3062
        %v3213 = vunpack.c.l.b16 %v3063
        %v3214 = vunpack.c.h.b16 %v3063
        %v3215 = vunpack.c.l.b16 %v3064
        %v3216 = vunpack.c.h.b16 %v3064
        %v3217 = vunpack.c.l.b16 %v3065
        %v3218 = vunpack.c.h.b16 %v3065
        %v3219 = vunpack.c.l.b16 %v3066
        %v3220 = vunpack.c.h.b16 %v3066
        %v3221 = vunpack.c.l.b16 %v3067
        %v3222 = vunpack.c.h.b16 %v3067
        %v3223 = vunpack.c.l.b16 %v3068
        %v3224 = vunpack.c.h.b16 %v3068
        %v3225 = vunpack.c.l.b16 %v3069
        %v3226 = vunpack.c.h.b16 %v3069
        %v3227 = vunpack.c.l.b16 %v3070
        %v3228 = vunpack.c.h.b16 %v3070
        %v3229 = vunpack.c.l.b16 %v3071
        %v3230 = vunpack.c.h.b16 %v3071
        %v3231 = vunpack.c.l.b16 %v3072
        %v3232 = vunpack.c.h.b16 %v3072
        %v3233 = vunpack.c.l.b16 %v3073
        %v3234 = vunpack.c.h.b16 %v3073
        %v3235 = vunpack.c.l.b16 %v3074
        %v3236 = vunpack.c.h.b16 %v3074
        %v3237 = vunpack.c.l.b16 %v3075
        %v3238 = vunpack.c.h.b16 %v3075
        %v3239 = vunpack.c.l.b16 %v3076
        %v3240 = vunpack.c.h.b16 %v3076
        %v3241 = vunpack.c.l.b16 %v3077
        %v3242 = vunpack.c.h.b16 %v3077
        %v3243 = vunpack.c.l.b16 %v3078
        %v3244 = vunpack.c.h.b16 %v3078
        %v3245 = vunpack.c.l.b16 %v3079
        %v3246 = vunpack.c.h.b16 %v3079
        %v3247 = vunpack.c.l.b16 %v3080
        %v3248 = vunpack.c.h.b16 %v3080
        %v3249 = vunpack.c.l.b16 %v3081
        %v3250 = vunpack.c.h.b16 %v3081
        %v3251 = vpack.c.b16 %v3203, %v3187
        %v3252 = vpack.c.b16 %v3204, %v3188
        %v3253 = vpack.c.b16 %v3205, %v3189
        %v3254 = vpack.c.b16 %v3206, %v3190
        %v3255 = vpack.c.b16 %v3207, %v3191
        %v3256 = vpack.c.b16 %v3208, %v3192
        %v3257 = vpack.c.b16 %v3209, %v3193
        %v3258 = vpack.c.b16 %v3210, %v3194
        %v3259 = vpack.c.b16 %v3211, %v3195
        %v3260 = vpack.c.b16 %v3212, %v3196
        %v3261 = vpack.c.b16 %v3213, %v3197
        %v3262 = vpack.c.b16 %v3214, %v3198
        %v3263 = vpack.c.b16 %v3215, %v3199
        %v3264 = vpack.c.b16 %v3216, %v3200
        %v3265 = vpack.c.b16 %v3217, %v3201
        %v3266 = vpack.c.b16 %v3218, %v3202
        %v3267 = vpack.c.b16 %v3235, %v3219
        %v3268 = vpack.c.b16 %v3236, %v3220
        %v3269 = vpack.c.b16 %v3237, %v3221
        %v3270 = vpack.c.b16 %v3238, %v3222
        %v3271 = vpack.c.b16 %v3239, %v3223
        %v3272 = vpack.c.b16 %v3240, %v3224
        %v3273 = vpack.c.b16 %v3241, %v3225
        %v3274 = vpack.c.b16 %v3242, %v3226
        %v3275 = vpack.c.b16 %v3243, %v3227
        %v3276 = vpack.c.b16 %v3244, %v3228
        %v3277 = vpack.c.b16 %v3245, %v3229
        %v3278 = vpack.c.b16 %v3246, %v3230
        %v3279 = vpack.c.b16 %v3247, %v3231
        %v3280 = vpack.c.b16 %v3248, %v3232
        %v3281 = vpack.c.b16 %v3249, %v3233
        %v3282 = vpack.c.b16 %v3250, %v3234
        %v3316 = vsel %vm1298, %v3120, 0
        %3318 = vmatpush.bf16.msra.mxu0 0
        %3319 = vmatpush.bf16.msra.mxu0 0
        %3320 = vmatpush.bf16.msra.mxu0 0
        %3321 = vmatpush.bf16.msra.mxu0 0
        %3322 = vmatpush.bf16.msra.mxu0 0
        %3323 = vmatpush.bf16.msra.mxu0 0
        %3324 = vmatpush.bf16.msra.mxu0 %v3267
        %3325 = vmatpush.bf16.msra.mxu0 %v3251
        %3326 = vmatmul.bf16.gmra.mxu0 %v3316
        %v3327 = vpop.f32.mrf.mxu0
        %v3328 = vadd.f32 %v3123, %v3327
        %v3329 = vpop.f32.mrf.mxu0
        %3330 = vdwg.mxu0
        %3331 = vmatpush.bf16.msra.mxu0 0
        %3332 = vmatpush.bf16.msra.mxu0 0
        %3333 = vmatpush.bf16.msra.mxu0 0
        %3334 = vmatpush.bf16.msra.mxu0 0
        %3335 = vmatpush.bf16.msra.mxu0 0
        %3336 = vmatpush.bf16.msra.mxu0 0
        %3337 = vmatpush.bf16.msra.mxu0 %v3268
        %3338 = vmatpush.bf16.msra.mxu0 %v3252
        %3339 = vmatmul.bf16.gmra.mxu0 %v3316
        %v3340 = vpop.f32.mrf.mxu0
        %v3341 = vadd.f32 %v3124, %v3340
        %v3342 = vpop.f32.mrf.mxu0
        %3343 = vdwg.mxu0
        %3344 = vmatpush.bf16.msra.mxu0 0
        %3345 = vmatpush.bf16.msra.mxu0 0
        %3346 = vmatpush.bf16.msra.mxu0 0
        %3347 = vmatpush.bf16.msra.mxu0 0
        %3348 = vmatpush.bf16.msra.mxu0 0
        %3349 = vmatpush.bf16.msra.mxu0 0
        %3350 = vmatpush.bf16.msra.mxu0 %v3269
        %3351 = vmatpush.bf16.msra.mxu0 %v3253
        %3352 = vmatmul.bf16.gmra.mxu0 %v3316
        %v3353 = vpop.f32.mrf.mxu0
        %v3354 = vadd.f32 %v3125, %v3353
        %v3355 = vpop.f32.mrf.mxu0
        %3356 = vdwg.mxu0
        %3357 = vmatpush.bf16.msra.mxu0 0
        %3358 = vmatpush.bf16.msra.mxu0 0
        %3359 = vmatpush.bf16.msra.mxu0 0
        %3360 = vmatpush.bf16.msra.mxu0 0
        %3361 = vmatpush.bf16.msra.mxu0 0
        %3362 = vmatpush.bf16.msra.mxu0 0
        %3363 = vmatpush.bf16.msra.mxu0 %v3270
        %3364 = vmatpush.bf16.msra.mxu0 %v3254
        %3365 = vmatmul.bf16.gmra.mxu0 %v3316
        %v3366 = vpop.f32.mrf.mxu0
        %v3367 = vadd.f32 %v3126, %v3366
        %v3368 = vpop.f32.mrf.mxu0
        %3369 = vdwg.mxu0
        %3370 = vmatpush.bf16.msra.mxu0 0
        %3371 = vmatpush.bf16.msra.mxu0 0
        %3372 = vmatpush.bf16.msra.mxu0 0
        %3373 = vmatpush.bf16.msra.mxu0 0
        %3374 = vmatpush.bf16.msra.mxu0 0
        %3375 = vmatpush.bf16.msra.mxu0 0
        %3376 = vmatpush.bf16.msra.mxu0 %v3271
        %3377 = vmatpush.bf16.msra.mxu0 %v3255
        %3378 = vmatmul.bf16.gmra.mxu0 %v3316
        %v3379 = vpop.f32.mrf.mxu0
        %v3380 = vadd.f32 %v3127, %v3379
        %v3381 = vpop.f32.mrf.mxu0
        %3382 = vdwg.mxu0
        %3383 = vmatpush.bf16.msra.mxu0 0
        %3384 = vmatpush.bf16.msra.mxu0 0
        %3385 = vmatpush.bf16.msra.mxu0 0
        %3386 = vmatpush.bf16.msra.mxu0 0
        %3387 = vmatpush.bf16.msra.mxu0 0
        %3388 = vmatpush.bf16.msra.mxu0 0
        %3389 = vmatpush.bf16.msra.mxu0 %v3272
        %3390 = vmatpush.bf16.msra.mxu0 %v3256
        %3391 = vmatmul.bf16.gmra.mxu0 %v3316
        %v3392 = vpop.f32.mrf.mxu0
        %v3393 = vadd.f32 %v3128, %v3392
        %v3394 = vpop.f32.mrf.mxu0
        %3395 = vdwg.mxu0
        %3396 = vmatpush.bf16.msra.mxu0 0
        %3397 = vmatpush.bf16.msra.mxu0 0
        %3398 = vmatpush.bf16.msra.mxu0 0
        %3399 = vmatpush.bf16.msra.mxu0 0
        %3400 = vmatpush.bf16.msra.mxu0 0
        %3401 = vmatpush.bf16.msra.mxu0 0
        %3402 = vmatpush.bf16.msra.mxu0 %v3273
        %3403 = vmatpush.bf16.msra.mxu0 %v3257
        %3404 = vmatmul.bf16.gmra.mxu0 %v3316
        %v3405 = vpop.f32.mrf.mxu0
        %v3406 = vadd.f32 %v3129, %v3405
        %v3407 = vpop.f32.mrf.mxu0
        %3408 = vdwg.mxu0
        %3409 = vmatpush.bf16.msra.mxu0 0
        %3410 = vmatpush.bf16.msra.mxu0 0
        %3411 = vmatpush.bf16.msra.mxu0 0
        %3412 = vmatpush.bf16.msra.mxu0 0
        %3413 = vmatpush.bf16.msra.mxu0 0
        %3414 = vmatpush.bf16.msra.mxu0 0
        %3415 = vmatpush.bf16.msra.mxu0 %v3274
        %3416 = vmatpush.bf16.msra.mxu0 %v3258
        %3417 = vmatmul.bf16.gmra.mxu0 %v3316
        %v3418 = vpop.f32.mrf.mxu0
        %v3419 = vadd.f32 %v3130, %v3418
        %v3420 = vpop.f32.mrf.mxu0
        %3421 = vdwg.mxu0
        %3422 = vmatpush.bf16.msra.mxu0 0
        %3423 = vmatpush.bf16.msra.mxu0 0
        %3424 = vmatpush.bf16.msra.mxu0 0
        %3425 = vmatpush.bf16.msra.mxu0 0
        %3426 = vmatpush.bf16.msra.mxu0 0
        %3427 = vmatpush.bf16.msra.mxu0 0
        %3428 = vmatpush.bf16.msra.mxu0 %v3275
        %3429 = vmatpush.bf16.msra.mxu0 %v3259
        %3430 = vmatmul.bf16.gmra.mxu0 %v3316
        %v3431 = vpop.f32.mrf.mxu0
        %v3432 = vadd.f32 %v3131, %v3431
        %v3433 = vpop.f32.mrf.mxu0
        %3434 = vdwg.mxu0
        %3435 = vmatpush.bf16.msra.mxu0 0
        %3436 = vmatpush.bf16.msra.mxu0 0
        %3437 = vmatpush.bf16.msra.mxu0 0
        %3438 = vmatpush.bf16.msra.mxu0 0
        %3439 = vmatpush.bf16.msra.mxu0 0
        %3440 = vmatpush.bf16.msra.mxu0 0
        %3441 = vmatpush.bf16.msra.mxu0 %v3276
        %3442 = vmatpush.bf16.msra.mxu0 %v3260
        %3443 = vmatmul.bf16.gmra.mxu0 %v3316
        %v3444 = vpop.f32.mrf.mxu0
        %v3445 = vadd.f32 %v3132, %v3444
        %v3446 = vpop.f32.mrf.mxu0
        %3447 = vdwg.mxu0
        %3448 = vmatpush.bf16.msra.mxu0 0
        %3449 = vmatpush.bf16.msra.mxu0 0
        %3450 = vmatpush.bf16.msra.mxu0 0
        %3451 = vmatpush.bf16.msra.mxu0 0
        %3452 = vmatpush.bf16.msra.mxu0 0
        %3453 = vmatpush.bf16.msra.mxu0 0
        %3454 = vmatpush.bf16.msra.mxu0 %v3277
        %3455 = vmatpush.bf16.msra.mxu0 %v3261
        %3456 = vmatmul.bf16.gmra.mxu0 %v3316
        %v3457 = vpop.f32.mrf.mxu0
        %v3458 = vadd.f32 %v3133, %v3457
        %v3459 = vpop.f32.mrf.mxu0
        %3460 = vdwg.mxu0
        %3461 = vmatpush.bf16.msra.mxu0 0
        %3462 = vmatpush.bf16.msra.mxu0 0
        %3463 = vmatpush.bf16.msra.mxu0 0
        %3464 = vmatpush.bf16.msra.mxu0 0
        %3465 = vmatpush.bf16.msra.mxu0 0
        %3466 = vmatpush.bf16.msra.mxu0 0
        %3467 = vmatpush.bf16.msra.mxu0 %v3278
        %3468 = vmatpush.bf16.msra.mxu0 %v3262
        %3469 = vmatmul.bf16.gmra.mxu0 %v3316
        %v3470 = vpop.f32.mrf.mxu0
        %v3471 = vadd.f32 %v3134, %v3470
        %v3472 = vpop.f32.mrf.mxu0
        %3473 = vdwg.mxu0
        %3474 = vmatpush.bf16.msra.mxu0 0
        %3475 = vmatpush.bf16.msra.mxu0 0
        %3476 = vmatpush.bf16.msra.mxu0 0
        %3477 = vmatpush.bf16.msra.mxu0 0
        %3478 = vmatpush.bf16.msra.mxu0 0
        %3479 = vmatpush.bf16.msra.mxu0 0
        %3480 = vmatpush.bf16.msra.mxu0 %v3279
        %3481 = vmatpush.bf16.msra.mxu0 %v3263
        %3482 = vmatmul.bf16.gmra.mxu0 %v3316
        %v3483 = vpop.f32.mrf.mxu0
        %v3484 = vadd.f32 %v3135, %v3483
        %v3485 = vpop.f32.mrf.mxu0
        %3486 = vdwg.mxu0
        %3487 = vmatpush.bf16.msra.mxu0 0
        %3488 = vmatpush.bf16.msra.mxu0 0
        %3489 = vmatpush.bf16.msra.mxu0 0
        %3490 = vmatpush.bf16.msra.mxu0 0
        %3491 = vmatpush.bf16.msra.mxu0 0
        %3492 = vmatpush.bf16.msra.mxu0 0
        %3493 = vmatpush.bf16.msra.mxu0 %v3280
        %3494 = vmatpush.bf16.msra.mxu0 %v3264
        %3495 = vmatmul.bf16.gmra.mxu0 %v3316
        %v3496 = vpop.f32.mrf.mxu0
        %v3497 = vadd.f32 %v3136, %v3496
        %v3498 = vpop.f32.mrf.mxu0
        %3499 = vdwg.mxu0
        %3500 = vmatpush.bf16.msra.mxu0 0
        %3501 = vmatpush.bf16.msra.mxu0 0
        %3502 = vmatpush.bf16.msra.mxu0 0
        %3503 = vmatpush.bf16.msra.mxu0 0
        %3504 = vmatpush.bf16.msra.mxu0 0
        %3505 = vmatpush.bf16.msra.mxu0 0
        %3506 = vmatpush.bf16.msra.mxu0 %v3281
        %3507 = vmatpush.bf16.msra.mxu0 %v3265
        %3508 = vmatmul.bf16.gmra.mxu0 %v3316
        %v3509 = vpop.f32.mrf.mxu0
        %v3510 = vadd.f32 %v3137, %v3509
        %v3511 = vpop.f32.mrf.mxu0
        %3512 = vdwg.mxu0
        %3513 = vmatpush.bf16.msra.mxu0 0
        %3514 = vmatpush.bf16.msra.mxu0 0
        %3515 = vmatpush.bf16.msra.mxu0 0
        %3516 = vmatpush.bf16.msra.mxu0 0
        %3517 = vmatpush.bf16.msra.mxu0 0
        %3518 = vmatpush.bf16.msra.mxu0 0
        %3519 = vmatpush.bf16.msra.mxu0 %v3282
        %3520 = vmatpush.bf16.msra.mxu0 %v3266
        %3521 = vmatmul.bf16.gmra.mxu0 %v3316
        %v3522 = vpop.f32.mrf.mxu0
        %v3523 = vadd.f32 %v3138, %v3522
        %v3524 = vpop.f32.mrf.mxu0
        %3525 = vdwg.mxu0
        %v3526 = vmax.f32 %v3328, 0.0
        %v3527 = vmax.f32 %v3341, 0.0
        %v3528 = vmax.f32 %v3354, 0.0
        %v3529 = vmax.f32 %v3367, 0.0
        %v3530 = vmax.f32 %v3380, 0.0
        %v3531 = vmax.f32 %v3393, 0.0
        %v3532 = vmax.f32 %v3406, 0.0
        %v3533 = vmax.f32 %v3419, 0.0
        %v3534 = vmax.f32 %v3432, 0.0
        %v3535 = vmax.f32 %v3445, 0.0
        %v3536 = vmax.f32 %v3458, 0.0
        %v3537 = vmax.f32 %v3471, 0.0
        %v3538 = vmax.f32 %v3484, 0.0
        %v3539 = vmax.f32 %v3497, 0.0
        %v3540 = vmax.f32 %v3510, 0.0
        %v3541 = vmax.f32 %v3523, 0.0
        %v3542 = vpack.c.bf16 %v3526, %v3526
        %v3543 = vpack.c.bf16 %v3527, %v3527
        %v3544 = vpack.c.bf16 %v3528, %v3528
        %v3545 = vpack.c.bf16 %v3529, %v3529
        %v3546 = vpack.c.bf16 %v3530, %v3530
        %v3547 = vpack.c.bf16 %v3531, %v3531
        %v3548 = vpack.c.bf16 %v3532, %v3532
        %v3549 = vpack.c.bf16 %v3533, %v3533
        %v3550 = vpack.c.bf16 %v3534, %v3534
        %v3551 = vpack.c.bf16 %v3535, %v3535
        %v3552 = vpack.c.bf16 %v3536, %v3536
        %v3553 = vpack.c.bf16 %v3537, %v3537
        %v3554 = vpack.c.bf16 %v3538, %v3538
        %v3555 = vpack.c.bf16 %v3539, %v3539
        %v3556 = vpack.c.bf16 %v3540, %v3540
        %v3557 = vpack.c.bf16 %v3541, %v3541
        %v3559 = vperm.slane %v3119, 0
        %v3593 = vunpack.c.l.b16 %v3086
        %v3594 = vunpack.c.h.b16 %v3086
        %v3595 = vunpack.c.l.b16 %v3087
        %v3596 = vunpack.c.h.b16 %v3087
        %v3597 = vunpack.c.l.b16 %v3088
        %v3598 = vunpack.c.h.b16 %v3088
        %v3599 = vunpack.c.l.b16 %v3089
        %v3600 = vunpack.c.h.b16 %v3089
        %v3601 = vunpack.c.l.b16 %v3090
        %v3602 = vunpack.c.h.b16 %v3090
        %v3603 = vunpack.c.l.b16 %v3091
        %v3604 = vunpack.c.h.b16 %v3091
        %v3605 = vunpack.c.l.b16 %v3092
        %v3606 = vunpack.c.h.b16 %v3092
        %v3607 = vunpack.c.l.b16 %v3093
        %v3608 = vunpack.c.h.b16 %v3093
        %v3609 = vunpack.c.l.b16 %v3094
        %v3610 = vunpack.c.h.b16 %v3094
        %v3611 = vunpack.c.l.b16 %v3095
        %v3612 = vunpack.c.h.b16 %v3095
        %v3613 = vunpack.c.l.b16 %v3096
        %v3614 = vunpack.c.h.b16 %v3096
        %v3615 = vunpack.c.l.b16 %v3097
        %v3616 = vunpack.c.h.b16 %v3097
        %v3617 = vunpack.c.l.b16 %v3098
        %v3618 = vunpack.c.h.b16 %v3098
        %v3619 = vunpack.c.l.b16 %v3099
        %v3620 = vunpack.c.h.b16 %v3099
        %v3621 = vunpack.c.l.b16 %v3100
        %v3622 = vunpack.c.h.b16 %v3100
        %v3623 = vunpack.c.l.b16 %v3101
        %v3624 = vunpack.c.h.b16 %v3101
        %v3625 = vunpack.c.l.b16 %v3102
        %v3626 = vunpack.c.h.b16 %v3102
        %v3627 = vunpack.c.l.b16 %v3103
        %v3628 = vunpack.c.h.b16 %v3103
        %v3629 = vunpack.c.l.b16 %v3104
        %v3630 = vunpack.c.h.b16 %v3104
        %v3631 = vunpack.c.l.b16 %v3105
        %v3632 = vunpack.c.h.b16 %v3105
        %v3633 = vunpack.c.l.b16 %v3106
        %v3634 = vunpack.c.h.b16 %v3106
        %v3635 = vunpack.c.l.b16 %v3107
        %v3636 = vunpack.c.h.b16 %v3107
        %v3637 = vunpack.c.l.b16 %v3108
        %v3638 = vunpack.c.h.b16 %v3108
        %v3639 = vunpack.c.l.b16 %v3109
        %v3640 = vunpack.c.h.b16 %v3109
        %v3641 = vunpack.c.l.b16 %v3110
        %v3642 = vunpack.c.h.b16 %v3110
        %v3643 = vunpack.c.l.b16 %v3111
        %v3644 = vunpack.c.h.b16 %v3111
        %v3645 = vunpack.c.l.b16 %v3112
        %v3646 = vunpack.c.h.b16 %v3112
        %v3647 = vunpack.c.l.b16 %v3113
        %v3648 = vunpack.c.h.b16 %v3113
        %v3649 = vunpack.c.l.b16 %v3114
        %v3650 = vunpack.c.h.b16 %v3114
        %v3651 = vunpack.c.l.b16 %v3115
        %v3652 = vunpack.c.h.b16 %v3115
        %v3653 = vunpack.c.l.b16 %v3116
        %v3654 = vunpack.c.h.b16 %v3116
        %v3655 = vunpack.c.l.b16 %v3117
        %v3656 = vunpack.c.h.b16 %v3117
        %v3657 = vpack.c.b16 %v3609, %v3593
        %v3658 = vpack.c.b16 %v3610, %v3594
        %v3659 = vpack.c.b16 %v3611, %v3595
        %v3660 = vpack.c.b16 %v3612, %v3596
        %v3661 = vpack.c.b16 %v3613, %v3597
        %v3662 = vpack.c.b16 %v3614, %v3598
        %v3663 = vpack.c.b16 %v3615, %v3599
        %v3664 = vpack.c.b16 %v3616, %v3600
        %v3665 = vpack.c.b16 %v3617, %v3601
        %v3666 = vpack.c.b16 %v3618, %v3602
        %v3667 = vpack.c.b16 %v3619, %v3603
        %v3668 = vpack.c.b16 %v3620, %v3604
        %v3669 = vpack.c.b16 %v3621, %v3605
        %v3670 = vpack.c.b16 %v3622, %v3606
        %v3671 = vpack.c.b16 %v3623, %v3607
        %v3672 = vpack.c.b16 %v3624, %v3608
        %v3673 = vpack.c.b16 %v3641, %v3625
        %v3674 = vpack.c.b16 %v3642, %v3626
        %v3675 = vpack.c.b16 %v3643, %v3627
        %v3676 = vpack.c.b16 %v3644, %v3628
        %v3677 = vpack.c.b16 %v3645, %v3629
        %v3678 = vpack.c.b16 %v3646, %v3630
        %v3679 = vpack.c.b16 %v3647, %v3631
        %v3680 = vpack.c.b16 %v3648, %v3632
        %v3681 = vpack.c.b16 %v3649, %v3633
        %v3682 = vpack.c.b16 %v3650, %v3634
        %v3683 = vpack.c.b16 %v3651, %v3635
        %v3684 = vpack.c.b16 %v3652, %v3636
        %v3685 = vpack.c.b16 %v3653, %v3637
        %v3686 = vpack.c.b16 %v3654, %v3638
        %v3687 = vpack.c.b16 %v3655, %v3639
        %v3688 = vpack.c.b16 %v3656, %v3640
        %3721 = vmatpush.bf16.xpose.msra.mxu0 0
        %3722 = vmatpush.bf16.xpose.msra.mxu0 0
        %3723 = vmatpush.bf16.xpose.msra.mxu0 0
        %3724 = vmatpush.bf16.xpose.msra.mxu0 0
        %3725 = vmatpush.bf16.xpose.msra.mxu0 0
        %3726 = vmatpush.bf16.xpose.msra.mxu0 0
        %3727 = vmatpush.bf16.xpose.msra.mxu0 %v3673
        %3728 = vmatpush.bf16.xpose.msra.mxu0 %v3657
        %3729 = vmatmul.bf16.gmra.mxu0 %v3542
        %v3730 = vpop.f32.mrf.mxu0
        %v3731 = vadd.f32 %v3559, %v3730
        %v3732 = vpop.f32.mrf.mxu0
        %3733 = vdwg.mxu0
        %3734 = vmatpush.bf16.xpose.msra.mxu0 0
        %3735 = vmatpush.bf16.xpose.msra.mxu0 0
        %3736 = vmatpush.bf16.xpose.msra.mxu0 0
        %3737 = vmatpush.bf16.xpose.msra.mxu0 0
        %3738 = vmatpush.bf16.xpose.msra.mxu0 0
        %3739 = vmatpush.bf16.xpose.msra.mxu0 0
        %3740 = vmatpush.bf16.xpose.msra.mxu0 %v3674
        %3741 = vmatpush.bf16.xpose.msra.mxu0 %v3658
        %3742 = vmatmul.bf16.gmra.mxu0 %v3543
        %v3743 = vpop.f32.mrf.mxu0
        %v3744 = vadd.f32 %v3731, %v3743
        %v3745 = vpop.f32.mrf.mxu0
        %3746 = vdwg.mxu0
        %3747 = vmatpush.bf16.xpose.msra.mxu0 0
        %3748 = vmatpush.bf16.xpose.msra.mxu0 0
        %3749 = vmatpush.bf16.xpose.msra.mxu0 0
        %3750 = vmatpush.bf16.xpose.msra.mxu0 0
        %3751 = vmatpush.bf16.xpose.msra.mxu0 0
        %3752 = vmatpush.bf16.xpose.msra.mxu0 0
        %3753 = vmatpush.bf16.xpose.msra.mxu0 %v3675
        %3754 = vmatpush.bf16.xpose.msra.mxu0 %v3659
        %3755 = vmatmul.bf16.gmra.mxu0 %v3544
        %v3756 = vpop.f32.mrf.mxu0
        %v3757 = vadd.f32 %v3744, %v3756
        %v3758 = vpop.f32.mrf.mxu0
        %3759 = vdwg.mxu0
        %3760 = vmatpush.bf16.xpose.msra.mxu0 0
        %3761 = vmatpush.bf16.xpose.msra.mxu0 0
        %3762 = vmatpush.bf16.xpose.msra.mxu0 0
        %3763 = vmatpush.bf16.xpose.msra.mxu0 0
        %3764 = vmatpush.bf16.xpose.msra.mxu0 0
        %3765 = vmatpush.bf16.xpose.msra.mxu0 0
        %3766 = vmatpush.bf16.xpose.msra.mxu0 %v3676
        %3767 = vmatpush.bf16.xpose.msra.mxu0 %v3660
        %3768 = vmatmul.bf16.gmra.mxu0 %v3545
        %v3769 = vpop.f32.mrf.mxu0
        %v3770 = vadd.f32 %v3757, %v3769
        %v3771 = vpop.f32.mrf.mxu0
        %3772 = vdwg.mxu0
        %3773 = vmatpush.bf16.xpose.msra.mxu0 0
        %3774 = vmatpush.bf16.xpose.msra.mxu0 0
        %3775 = vmatpush.bf16.xpose.msra.mxu0 0
        %3776 = vmatpush.bf16.xpose.msra.mxu0 0
        %3777 = vmatpush.bf16.xpose.msra.mxu0 0
        %3778 = vmatpush.bf16.xpose.msra.mxu0 0
        %3779 = vmatpush.bf16.xpose.msra.mxu0 %v3677
        %3780 = vmatpush.bf16.xpose.msra.mxu0 %v3661
        %3781 = vmatmul.bf16.gmra.mxu0 %v3546
        %v3782 = vpop.f32.mrf.mxu0
        %v3783 = vadd.f32 %v3770, %v3782
        %v3784 = vpop.f32.mrf.mxu0
        %3785 = vdwg.mxu0
        %3786 = vmatpush.bf16.xpose.msra.mxu0 0
        %3787 = vmatpush.bf16.xpose.msra.mxu0 0
        %3788 = vmatpush.bf16.xpose.msra.mxu0 0
        %3789 = vmatpush.bf16.xpose.msra.mxu0 0
        %3790 = vmatpush.bf16.xpose.msra.mxu0 0
        %3791 = vmatpush.bf16.xpose.msra.mxu0 0
        %3792 = vmatpush.bf16.xpose.msra.mxu0 %v3678
        %3793 = vmatpush.bf16.xpose.msra.mxu0 %v3662
        %3794 = vmatmul.bf16.gmra.mxu0 %v3547
        %v3795 = vpop.f32.mrf.mxu0
        %v3796 = vadd.f32 %v3783, %v3795
        %v3797 = vpop.f32.mrf.mxu0
        %3798 = vdwg.mxu0
        %3799 = vmatpush.bf16.xpose.msra.mxu0 0
        %3800 = vmatpush.bf16.xpose.msra.mxu0 0
        %3801 = vmatpush.bf16.xpose.msra.mxu0 0
        %3802 = vmatpush.bf16.xpose.msra.mxu0 0
        %3803 = vmatpush.bf16.xpose.msra.mxu0 0
        %3804 = vmatpush.bf16.xpose.msra.mxu0 0
        %3805 = vmatpush.bf16.xpose.msra.mxu0 %v3679
        %3806 = vmatpush.bf16.xpose.msra.mxu0 %v3663
        %3807 = vmatmul.bf16.gmra.mxu0 %v3548
        %v3808 = vpop.f32.mrf.mxu0
        %v3809 = vadd.f32 %v3796, %v3808
        %v3810 = vpop.f32.mrf.mxu0
        %3811 = vdwg.mxu0
        %3812 = vmatpush.bf16.xpose.msra.mxu0 0
        %3813 = vmatpush.bf16.xpose.msra.mxu0 0
        %3814 = vmatpush.bf16.xpose.msra.mxu0 0
        %3815 = vmatpush.bf16.xpose.msra.mxu0 0
        %3816 = vmatpush.bf16.xpose.msra.mxu0 0
        %3817 = vmatpush.bf16.xpose.msra.mxu0 0
        %3818 = vmatpush.bf16.xpose.msra.mxu0 %v3680
        %3819 = vmatpush.bf16.xpose.msra.mxu0 %v3664
        %3820 = vmatmul.bf16.gmra.mxu0 %v3549
        %v3821 = vpop.f32.mrf.mxu0
        %v3822 = vadd.f32 %v3809, %v3821
        %v3823 = vpop.f32.mrf.mxu0
        %3824 = vdwg.mxu0
        %3825 = vmatpush.bf16.xpose.msra.mxu0 0
        %3826 = vmatpush.bf16.xpose.msra.mxu0 0
        %3827 = vmatpush.bf16.xpose.msra.mxu0 0
        %3828 = vmatpush.bf16.xpose.msra.mxu0 0
        %3829 = vmatpush.bf16.xpose.msra.mxu0 0
        %3830 = vmatpush.bf16.xpose.msra.mxu0 0
        %3831 = vmatpush.bf16.xpose.msra.mxu0 %v3681
        %3832 = vmatpush.bf16.xpose.msra.mxu0 %v3665
        %3833 = vmatmul.bf16.gmra.mxu0 %v3550
        %v3834 = vpop.f32.mrf.mxu0
        %v3835 = vadd.f32 %v3822, %v3834
        %v3836 = vpop.f32.mrf.mxu0
        %3837 = vdwg.mxu0
        %3838 = vmatpush.bf16.xpose.msra.mxu0 0
        %3839 = vmatpush.bf16.xpose.msra.mxu0 0
        %3840 = vmatpush.bf16.xpose.msra.mxu0 0
        %3841 = vmatpush.bf16.xpose.msra.mxu0 0
        %3842 = vmatpush.bf16.xpose.msra.mxu0 0
        %3843 = vmatpush.bf16.xpose.msra.mxu0 0
        %3844 = vmatpush.bf16.xpose.msra.mxu0 %v3682
        %3845 = vmatpush.bf16.xpose.msra.mxu0 %v3666
        %3846 = vmatmul.bf16.gmra.mxu0 %v3551
        %v3847 = vpop.f32.mrf.mxu0
        %v3848 = vadd.f32 %v3835, %v3847
        %v3849 = vpop.f32.mrf.mxu0
        %3850 = vdwg.mxu0
        %3851 = vmatpush.bf16.xpose.msra.mxu0 0
        %3852 = vmatpush.bf16.xpose.msra.mxu0 0
        %3853 = vmatpush.bf16.xpose.msra.mxu0 0
        %3854 = vmatpush.bf16.xpose.msra.mxu0 0
        %3855 = vmatpush.bf16.xpose.msra.mxu0 0
        %3856 = vmatpush.bf16.xpose.msra.mxu0 0
        %3857 = vmatpush.bf16.xpose.msra.mxu0 %v3683
        %3858 = vmatpush.bf16.xpose.msra.mxu0 %v3667
        %3859 = vmatmul.bf16.gmra.mxu0 %v3552
        %v3860 = vpop.f32.mrf.mxu0
        %v3861 = vadd.f32 %v3848, %v3860
        %v3862 = vpop.f32.mrf.mxu0
        %3863 = vdwg.mxu0
        %3864 = vmatpush.bf16.xpose.msra.mxu0 0
        %3865 = vmatpush.bf16.xpose.msra.mxu0 0
        %3866 = vmatpush.bf16.xpose.msra.mxu0 0
        %3867 = vmatpush.bf16.xpose.msra.mxu0 0
        %3868 = vmatpush.bf16.xpose.msra.mxu0 0
        %3869 = vmatpush.bf16.xpose.msra.mxu0 0
        %3870 = vmatpush.bf16.xpose.msra.mxu0 %v3684
        %3871 = vmatpush.bf16.xpose.msra.mxu0 %v3668
        %3872 = vmatmul.bf16.gmra.mxu0 %v3553
        %v3873 = vpop.f32.mrf.mxu0
        %v3874 = vadd.f32 %v3861, %v3873
        %v3875 = vpop.f32.mrf.mxu0
        %3876 = vdwg.mxu0
        %3877 = vmatpush.bf16.xpose.msra.mxu0 0
        %3878 = vmatpush.bf16.xpose.msra.mxu0 0
        %3879 = vmatpush.bf16.xpose.msra.mxu0 0
        %3880 = vmatpush.bf16.xpose.msra.mxu0 0
        %3881 = vmatpush.bf16.xpose.msra.mxu0 0
        %3882 = vmatpush.bf16.xpose.msra.mxu0 0
        %3883 = vmatpush.bf16.xpose.msra.mxu0 %v3685
        %3884 = vmatpush.bf16.xpose.msra.mxu0 %v3669
        %3885 = vmatmul.bf16.gmra.mxu0 %v3554
        %v3886 = vpop.f32.mrf.mxu0
        %v3887 = vadd.f32 %v3874, %v3886
        %v3888 = vpop.f32.mrf.mxu0
        %3889 = vdwg.mxu0
        %3890 = vmatpush.bf16.xpose.msra.mxu0 0
        %3891 = vmatpush.bf16.xpose.msra.mxu0 0
        %3892 = vmatpush.bf16.xpose.msra.mxu0 0
        %3893 = vmatpush.bf16.xpose.msra.mxu0 0
        %3894 = vmatpush.bf16.xpose.msra.mxu0 0
        %3895 = vmatpush.bf16.xpose.msra.mxu0 0
        %3896 = vmatpush.bf16.xpose.msra.mxu0 %v3686
        %3897 = vmatpush.bf16.xpose.msra.mxu0 %v3670
        %3898 = vmatmul.bf16.gmra.mxu0 %v3555
        %v3899 = vpop.f32.mrf.mxu0
        %v3900 = vadd.f32 %v3887, %v3899
        %v3901 = vpop.f32.mrf.mxu0
        %3902 = vdwg.mxu0
        %3903 = vmatpush.bf16.xpose.msra.mxu0 0
        %3904 = vmatpush.bf16.xpose.msra.mxu0 0
        %3905 = vmatpush.bf16.xpose.msra.mxu0 0
        %3906 = vmatpush.bf16.xpose.msra.mxu0 0
        %3907 = vmatpush.bf16.xpose.msra.mxu0 0
        %3908 = vmatpush.bf16.xpose.msra.mxu0 0
        %3909 = vmatpush.bf16.xpose.msra.mxu0 %v3687
        %3910 = vmatpush.bf16.xpose.msra.mxu0 %v3671
        %3911 = vmatmul.bf16.gmra.mxu0 %v3556
        %v3912 = vpop.f32.mrf.mxu0
        %v3913 = vadd.f32 %v3900, %v3912
        %v3914 = vpop.f32.mrf.mxu0
        %3915 = vdwg.mxu0
        %3916 = vmatpush.bf16.xpose.msra.mxu0 0
        %3917 = vmatpush.bf16.xpose.msra.mxu0 0
        %3918 = vmatpush.bf16.xpose.msra.mxu0 0
        %3919 = vmatpush.bf16.xpose.msra.mxu0 0
        %3920 = vmatpush.bf16.xpose.msra.mxu0 0
        %3921 = vmatpush.bf16.xpose.msra.mxu0 0
        %3922 = vmatpush.bf16.xpose.msra.mxu0 %v3688
        %3923 = vmatpush.bf16.xpose.msra.mxu0 %v3672
        %3924 = vmatmul.bf16.gmra.mxu0 %v3557
        %v3925 = vpop.f32.mrf.mxu0
        %v3926 = vadd.f32 %v3913, %v3925
        %v3927 = vpop.f32.mrf.mxu0
        %3928 = vdwg.mxu0
        %v3929 = vadd.f32 %v3926, %v3048
        %s3930 = scalar_lea.vmem %s29, 1
        %v3931 = vld [vmem:[%s3930] sm:$0x1]
        %s3932 = scalar_lea.vmem %s31, 1
        %v3933 = vld [vmem:[%s3932] sm:$0x1]
        %v3934 = vsel %vm1298, %v3929, 0.0
        %3935 = vadd.xlane.f32.xlu0 %v3934
        %v3936 = vpop.xlane.xlu0 %3935
        %v3937 = vmul.f32 %v3936, %v1684
        %v3938 = vsub.f32 %v3929, %v3937
        %v3939 = vmul.f32 %v3938, %v3938
        %v3940 = vsel %vm1298, %v3939, 0.0
        %3941 = vadd.xlane.f32.xlu0 %v3940
        %v3942 = vpop.xlane.xlu0 %3941
        %v3943 = vmul.f32 %v3942, %v1684
        %v3944 = vadd.f32 %v3943, 1e-05
        %v3945 = vrsqrt.pop %v3944
        %v3946 = vmul.f32 %v3945, %v3944
        %v3947 = vmul.f32 %v3946, %v3945
        %v3948 = vmul.f32 0.5, %v3947
        %v3949 = vsub.f32 1.5, %v3948
        %v3950 = vmul.f32 %v3945, %v3949
        %vm3951 = vweird.f32 %v3944
        %vm3952 = vweird.f32 %v3945
        %vm3953 = vmor %vm3951, %vm3952
        %v3954 = vsel %vm3953, %v3945, %v3950
        %v3955 = vmul.f32 %v3938, %v3954
        %v3957 = vperm.slane %v3931, 0
        %v3959 = vmul.f32 %v3955, %v3957
        %v3961 = vperm.slane %v3933, 0
        %v3963 = vadd.f32 %v3959, %v3961
        %v3964 = vld [vmem:[%s33] sm:$0xf]
        %v3965 = vld [vmem:[%s33 + $0x4] sm:$0xf]
        %v3966 = vld [vmem:[%s33 + $0x8] sm:$0xf]
        %v3967 = vld [vmem:[%s33 + $0xc] sm:$0xf]
        %v3968 = vpack.c.bf16 %v1264, %v1264
        %v3969 = vld [vmem:[%s35] sm:$0x1]
        %v3971 = vperm.slane %v3969, 0
        %v3977 = vunpack.c.l.b16 %v3964
        %v3978 = vunpack.c.l.b16 %v3965
        %v3979 = vunpack.c.l.b16 %v3966
        %v3980 = vunpack.c.l.b16 %v3967
        %v3981 = vpack.c.b16 %v3978, %v3977
        %v3982 = vpack.c.b16 %v3980, %v3979
        %v3986 = vsel %vm1298, %v3968, 0
        %3988 = vmatpush.bf16.msra.mxu0 0
        %3989 = vmatpush.bf16.msra.mxu0 0
        %3990 = vmatpush.bf16.msra.mxu0 0
        %3991 = vmatpush.bf16.msra.mxu0 0
        %3992 = vmatpush.bf16.msra.mxu0 0
        %3993 = vmatpush.bf16.msra.mxu0 0
        %3994 = vmatpush.bf16.msra.mxu0 %v3982
        %3995 = vmatpush.bf16.msra.mxu0 %v3981
        %3996 = vmatmul.bf16.gmra.mxu0 %v3986
        %v3997 = vpop.f32.mrf.mxu0
        %v3998 = vadd.f32 %v3971, %v3997
        %v3999 = vpop.f32.mrf.mxu0
        %4000 = vdwg.mxu0
        %v4001 = vld [vmem:[%s37] sm:$0xf]
        %v4002 = vld [vmem:[%s37 + $0x4] sm:$0xf]
        %v4003 = vld [vmem:[%s37 + $0x8] sm:$0xf]
        %v4004 = vld [vmem:[%s37 + $0xc] sm:$0xf]
        %v4005 = vmul.f32 %v3998, 0.35355338
        %4007 = vrot.lane.b32.xlu0 %v3998, 96
        %v4008 = vpop.permute.xlu0 %4007
        %v4010 = vsel %vm1326, %v4005, 0
        %v4012 = vsel %vm1326, %v4008, 0
        %4014 = vmatpush.xpose.msra.mxu0 0.0
        %4015 = vmatpush.xpose.msra.mxu0 0.0
        %4016 = vmatpush.xpose.msra.mxu0 0.0
        %4017 = vmatpush.xpose.msra.mxu0 0.0
        %4018 = vmatpush.xpose.msra.mxu0 0.0
        %4019 = vmatpush.xpose.msra.mxu0 0.0
        %4020 = vmatpush.xpose.msra.mxu0 0.0
        %4021 = vmatpush.xpose.msra.mxu0 0.0
        %4022 = vmatpush.xpose.msra.mxu0 0.0
        %4023 = vmatpush.xpose.msra.mxu0 0.0
        %4024 = vmatpush.xpose.msra.mxu0 0.0
        %4025 = vmatpush.xpose.msra.mxu0 0.0
        %4026 = vmatpush.xpose.msra.mxu0 0.0
        %4027 = vmatpush.xpose.msra.mxu0 0.0
        %4028 = vmatpush.xpose.msra.mxu0 0.0
        %4029 = vmatpush.xpose.msra.mxu0 %v4012
        %4030 = vmatmul.f32.gmra.mxu0 %v4010
        %v4031 = vpop.f32.mrf.mxu0
        %v4032 = vadd.f32 %v1276, %v4031
        %4033 = vdwg.mxu0
        %v4034 = vsel %vm1326, %v4032, -inf
        %4035 = vmax.xlane.f32.xlu0 %v4034
        %v4036 = vpop.xlane.xlu0 %4035
        %v4037 = vsub.f32 %v4032, %v4036
        %v4038 = vmul.f32 %v4037, 1.442695
        %v4039 = vpow.pop %v4038
        %v4040 = vsel %vm1326, %v4039, 0.0
        %4041 = vadd.xlane.f32.xlu0 %v4040
        %v4042 = vpop.xlane.xlu0 %4041
        %v4043 = vrcp.pop %v4042
        %4044 = vrot.lane.b32.xlu0 %v3998, 64
        %v4045 = vpop.permute.xlu0 %4044
        %v4048 = vsel %vm1326, %v4039, 0
        %4050 = vmatpush.msra.mxu0 0.0
        %4051 = vmatpush.msra.mxu0 0.0
        %4052 = vmatpush.msra.mxu0 0.0
        %4053 = vmatpush.msra.mxu0 0.0
        %4054 = vmatpush.msra.mxu0 0.0
        %4055 = vmatpush.msra.mxu0 0.0
        %4056 = vmatpush.msra.mxu0 0.0
        %4057 = vmatpush.msra.mxu0 0.0
        %4058 = vmatpush.msra.mxu0 0.0
        %4059 = vmatpush.msra.mxu0 0.0
        %4060 = vmatpush.msra.mxu0 0.0
        %4061 = vmatpush.msra.mxu0 0.0
        %4062 = vmatpush.msra.mxu0 0.0
        %4063 = vmatpush.msra.mxu0 0.0
        %4064 = vmatpush.msra.mxu0 0.0
        %4065 = vmatpush.msra.mxu0 %v4045
        %4066 = vmatmul.f32.gmra.mxu0 %v4048
        %v4067 = vpop.f32.mrf.mxu0
        %v4068 = vadd.f32 0.0, %v4067
        %4069 = vdwg.mxu0
        %v4070 = vmul.f32 %v4068, %v4043
        %v4071 = vpack.c.bf16 %v4070, %v4070
        %4072 = vrot.lane.b32.xlu0 %v4005, 120
        %v4073 = vpop.permute.xlu0 %4072
        %4074 = vrot.lane.b32.xlu0 %v3998, 88
        %v4075 = vpop.permute.xlu0 %4074
        %v4076 = vsel %vm1326, %v4073, 0
        %v4078 = vsel %vm1326, %v4075, 0
        %4080 = vmatpush.xpose.msra.mxu0 0.0
        %4081 = vmatpush.xpose.msra.mxu0 0.0
        %4082 = vmatpush.xpose.msra.mxu0 0.0
        %4083 = vmatpush.xpose.msra.mxu0 0.0
        %4084 = vmatpush.xpose.msra.mxu0 0.0
        %4085 = vmatpush.xpose.msra.mxu0 0.0
        %4086 = vmatpush.xpose.msra.mxu0 0.0
        %4087 = vmatpush.xpose.msra.mxu0 0.0
        %4088 = vmatpush.xpose.msra.mxu0 0.0
        %4089 = vmatpush.xpose.msra.mxu0 0.0
        %4090 = vmatpush.xpose.msra.mxu0 0.0
        %4091 = vmatpush.xpose.msra.mxu0 0.0
        %4092 = vmatpush.xpose.msra.mxu0 0.0
        %4093 = vmatpush.xpose.msra.mxu0 0.0
        %4094 = vmatpush.xpose.msra.mxu0 0.0
        %4095 = vmatpush.xpose.msra.mxu0 %v4078
        %4096 = vmatmul.f32.gmra.mxu0 %v4076
        %v4097 = vpop.f32.mrf.mxu0
        %v4098 = vadd.f32 %v1276, %v4097
        %4099 = vdwg.mxu0
        %v4100 = vsel %vm1326, %v4098, -inf
        %4101 = vmax.xlane.f32.xlu0 %v4100
        %v4102 = vpop.xlane.xlu0 %4101
        %v4103 = vsub.f32 %v4098, %v4102
        %v4104 = vmul.f32 %v4103, 1.442695
        %v4105 = vpow.pop %v4104
        %v4106 = vsel %vm1326, %v4105, 0.0
        %4107 = vadd.xlane.f32.xlu0 %v4106
        %v4108 = vpop.xlane.xlu0 %4107
        %v4109 = vrcp.pop %v4108
        %4110 = vrot.lane.b32.xlu0 %v3998, 56
        %v4111 = vpop.permute.xlu0 %4110
        %v4114 = vsel %vm1326, %v4105, 0
        %4116 = vmatpush.msra.mxu0 0.0
        %4117 = vmatpush.msra.mxu0 0.0
        %4118 = vmatpush.msra.mxu0 0.0
        %4119 = vmatpush.msra.mxu0 0.0
        %4120 = vmatpush.msra.mxu0 0.0
        %4121 = vmatpush.msra.mxu0 0.0
        %4122 = vmatpush.msra.mxu0 0.0
        %4123 = vmatpush.msra.mxu0 0.0
        %4124 = vmatpush.msra.mxu0 0.0
        %4125 = vmatpush.msra.mxu0 0.0
        %4126 = vmatpush.msra.mxu0 0.0
        %4127 = vmatpush.msra.mxu0 0.0
        %4128 = vmatpush.msra.mxu0 0.0
        %4129 = vmatpush.msra.mxu0 0.0
        %4130 = vmatpush.msra.mxu0 0.0
        %4131 = vmatpush.msra.mxu0 %v4111
        %4132 = vmatmul.f32.gmra.mxu0 %v4114
        %v4133 = vpop.f32.mrf.mxu0
        %v4134 = vadd.f32 0.0, %v4133
        %4135 = vdwg.mxu0
        %v4136 = vmul.f32 %v4134, %v4109
        %v4137 = vpack.c.bf16 %v4136, %v4136
        %v4139 = vsel %vm1326, %v4137, 0
        %v4142 = vsel %vm1459, %v4002, 0
        %4144 = vmatpush.bf16.msra.mxu0 0
        %4145 = vmatpush.bf16.msra.mxu0 0
        %4146 = vmatpush.bf16.msra.mxu0 0
        %4147 = vmatpush.bf16.msra.mxu0 0
        %4148 = vmatpush.bf16.msra.mxu0 0
        %4149 = vmatpush.bf16.msra.mxu0 0
        %4150 = vmatpush.bf16.msra.mxu0 0
        %4151 = vmatpush.bf16.msra.mxu0 %v4142
        %4152 = vmatmul.bf16.gmra.mxu0 %v4139
        %v4153 = vpop.f32.mrf.mxu0
        %v4154 = vadd.f32 0.0, %v4153
        %v4155 = vpop.f32.mrf.mxu0
        %4156 = vdwg.mxu0
        %v4158 = vsel %vm1326, %v4071, 0
        %v4161 = vsel %vm1459, %v4001, 0
        %4163 = vmatpush.bf16.msra.mxu0 0
        %4164 = vmatpush.bf16.msra.mxu0 0
        %4165 = vmatpush.bf16.msra.mxu0 0
        %4166 = vmatpush.bf16.msra.mxu0 0
        %4167 = vmatpush.bf16.msra.mxu0 0
        %4168 = vmatpush.bf16.msra.mxu0 0
        %4169 = vmatpush.bf16.msra.mxu0 0
        %4170 = vmatpush.bf16.msra.mxu0 %v4161
        %4171 = vmatmul.bf16.gmra.mxu0 %v4158
        %v4172 = vpop.f32.mrf.mxu0
        %v4173 = vadd.f32 %v4154, %v4172
        %v4174 = vpop.f32.mrf.mxu0
        %4175 = vdwg.mxu0
        %4176 = vrot.lane.b32.xlu0 %v4005, 112
        %v4177 = vpop.permute.xlu0 %4176
        %4178 = vrot.lane.b32.xlu0 %v3998, 80
        %v4179 = vpop.permute.xlu0 %4178
        %v4180 = vsel %vm1326, %v4177, 0
        %v4182 = vsel %vm1326, %v4179, 0
        %4184 = vmatpush.xpose.msra.mxu0 0.0
        %4185 = vmatpush.xpose.msra.mxu0 0.0
        %4186 = vmatpush.xpose.msra.mxu0 0.0
        %4187 = vmatpush.xpose.msra.mxu0 0.0
        %4188 = vmatpush.xpose.msra.mxu0 0.0
        %4189 = vmatpush.xpose.msra.mxu0 0.0
        %4190 = vmatpush.xpose.msra.mxu0 0.0
        %4191 = vmatpush.xpose.msra.mxu0 0.0
        %4192 = vmatpush.xpose.msra.mxu0 0.0
        %4193 = vmatpush.xpose.msra.mxu0 0.0
        %4194 = vmatpush.xpose.msra.mxu0 0.0
        %4195 = vmatpush.xpose.msra.mxu0 0.0
        %4196 = vmatpush.xpose.msra.mxu0 0.0
        %4197 = vmatpush.xpose.msra.mxu0 0.0
        %4198 = vmatpush.xpose.msra.mxu0 0.0
        %4199 = vmatpush.xpose.msra.mxu0 %v4182
        %4200 = vmatmul.f32.gmra.mxu0 %v4180
        %v4201 = vpop.f32.mrf.mxu0
        %v4202 = vadd.f32 %v1276, %v4201
        %4203 = vdwg.mxu0
        %v4204 = vsel %vm1326, %v4202, -inf
        %4205 = vmax.xlane.f32.xlu0 %v4204
        %v4206 = vpop.xlane.xlu0 %4205
        %v4207 = vsub.f32 %v4202, %v4206
        %v4208 = vmul.f32 %v4207, 1.442695
        %v4209 = vpow.pop %v4208
        %v4210 = vsel %vm1326, %v4209, 0.0
        %4211 = vadd.xlane.f32.xlu0 %v4210
        %v4212 = vpop.xlane.xlu0 %4211
        %v4213 = vrcp.pop %v4212
        %4214 = vrot.lane.b32.xlu0 %v3998, 48
        %v4215 = vpop.permute.xlu0 %4214
        %v4218 = vsel %vm1326, %v4209, 0
        %4220 = vmatpush.msra.mxu0 0.0
        %4221 = vmatpush.msra.mxu0 0.0
        %4222 = vmatpush.msra.mxu0 0.0
        %4223 = vmatpush.msra.mxu0 0.0
        %4224 = vmatpush.msra.mxu0 0.0
        %4225 = vmatpush.msra.mxu0 0.0
        %4226 = vmatpush.msra.mxu0 0.0
        %4227 = vmatpush.msra.mxu0 0.0
        %4228 = vmatpush.msra.mxu0 0.0
        %4229 = vmatpush.msra.mxu0 0.0
        %4230 = vmatpush.msra.mxu0 0.0
        %4231 = vmatpush.msra.mxu0 0.0
        %4232 = vmatpush.msra.mxu0 0.0
        %4233 = vmatpush.msra.mxu0 0.0
        %4234 = vmatpush.msra.mxu0 0.0
        %4235 = vmatpush.msra.mxu0 %v4215
        %4236 = vmatmul.f32.gmra.mxu0 %v4218
        %v4237 = vpop.f32.mrf.mxu0
        %v4238 = vadd.f32 0.0, %v4237
        %4239 = vdwg.mxu0
        %v4240 = vmul.f32 %v4238, %v4213
        %v4241 = vpack.c.bf16 %v4240, %v4240
        %v4243 = vsel %vm1326, %v4241, 0
        %v4246 = vsel %vm1459, %v4003, 0
        %4248 = vmatpush.bf16.msra.mxu0 0
        %4249 = vmatpush.bf16.msra.mxu0 0
        %4250 = vmatpush.bf16.msra.mxu0 0
        %4251 = vmatpush.bf16.msra.mxu0 0
        %4252 = vmatpush.bf16.msra.mxu0 0
        %4253 = vmatpush.bf16.msra.mxu0 0
        %4254 = vmatpush.bf16.msra.mxu0 0
        %4255 = vmatpush.bf16.msra.mxu0 %v4246
        %4256 = vmatmul.bf16.gmra.mxu0 %v4243
        %v4257 = vpop.f32.mrf.mxu0
        %v4258 = vadd.f32 0.0, %v4257
        %v4259 = vpop.f32.mrf.mxu0
        %4260 = vdwg.mxu0
        %v4261 = vadd.f32 %v4173, %v4258
        %4262 = vrot.lane.b32.xlu0 %v4005, 104
        %v4263 = vpop.permute.xlu0 %4262
        %4264 = vrot.lane.b32.xlu0 %v3998, 72
        %v4265 = vpop.permute.xlu0 %4264
        %v4266 = vsel %vm1326, %v4263, 0
        %v4268 = vsel %vm1326, %v4265, 0
        %4270 = vmatpush.xpose.msra.mxu0 0.0
        %4271 = vmatpush.xpose.msra.mxu0 0.0
        %4272 = vmatpush.xpose.msra.mxu0 0.0
        %4273 = vmatpush.xpose.msra.mxu0 0.0
        %4274 = vmatpush.xpose.msra.mxu0 0.0
        %4275 = vmatpush.xpose.msra.mxu0 0.0
        %4276 = vmatpush.xpose.msra.mxu0 0.0
        %4277 = vmatpush.xpose.msra.mxu0 0.0
        %4278 = vmatpush.xpose.msra.mxu0 0.0
        %4279 = vmatpush.xpose.msra.mxu0 0.0
        %4280 = vmatpush.xpose.msra.mxu0 0.0
        %4281 = vmatpush.xpose.msra.mxu0 0.0
        %4282 = vmatpush.xpose.msra.mxu0 0.0
        %4283 = vmatpush.xpose.msra.mxu0 0.0
        %4284 = vmatpush.xpose.msra.mxu0 0.0
        %4285 = vmatpush.xpose.msra.mxu0 %v4268
        %4286 = vmatmul.f32.gmra.mxu0 %v4266
        %v4287 = vpop.f32.mrf.mxu0
        %v4288 = vadd.f32 %v1276, %v4287
        %4289 = vdwg.mxu0
        %v4290 = vsel %vm1326, %v4288, -inf
        %4291 = vmax.xlane.f32.xlu0 %v4290
        %v4292 = vpop.xlane.xlu0 %4291
        %v4293 = vsub.f32 %v4288, %v4292
        %v4294 = vmul.f32 %v4293, 1.442695
        %v4295 = vpow.pop %v4294
        %v4296 = vsel %vm1326, %v4295, 0.0
        %4297 = vadd.xlane.f32.xlu0 %v4296
        %v4298 = vpop.xlane.xlu0 %4297
        %v4299 = vrcp.pop %v4298
        %4300 = vrot.lane.b32.xlu0 %v3998, 40
        %v4301 = vpop.permute.xlu0 %4300
        %v4304 = vsel %vm1326, %v4295, 0
        %4306 = vmatpush.msra.mxu0 0.0
        %4307 = vmatpush.msra.mxu0 0.0
        %4308 = vmatpush.msra.mxu0 0.0
        %4309 = vmatpush.msra.mxu0 0.0
        %4310 = vmatpush.msra.mxu0 0.0
        %4311 = vmatpush.msra.mxu0 0.0
        %4312 = vmatpush.msra.mxu0 0.0
        %4313 = vmatpush.msra.mxu0 0.0
        %4314 = vmatpush.msra.mxu0 0.0
        %4315 = vmatpush.msra.mxu0 0.0
        %4316 = vmatpush.msra.mxu0 0.0
        %4317 = vmatpush.msra.mxu0 0.0
        %4318 = vmatpush.msra.mxu0 0.0
        %4319 = vmatpush.msra.mxu0 0.0
        %4320 = vmatpush.msra.mxu0 0.0
        %4321 = vmatpush.msra.mxu0 %v4301
        %4322 = vmatmul.f32.gmra.mxu0 %v4304
        %v4323 = vpop.f32.mrf.mxu0
        %v4324 = vadd.f32 0.0, %v4323
        %4325 = vdwg.mxu0
        %v4326 = vmul.f32 %v4324, %v4299
        %v4327 = vpack.c.bf16 %v4326, %v4326
        %v4329 = vsel %vm1326, %v4327, 0
        %v4332 = vsel %vm1459, %v4004, 0
        %4334 = vmatpush.bf16.msra.mxu0 0
        %4335 = vmatpush.bf16.msra.mxu0 0
        %4336 = vmatpush.bf16.msra.mxu0 0
        %4337 = vmatpush.bf16.msra.mxu0 0
        %4338 = vmatpush.bf16.msra.mxu0 0
        %4339 = vmatpush.bf16.msra.mxu0 0
        %4340 = vmatpush.bf16.msra.mxu0 0
        %4341 = vmatpush.bf16.msra.mxu0 %v4332
        %4342 = vmatmul.bf16.gmra.mxu0 %v4329
        %v4343 = vpop.f32.mrf.mxu0
        %v4344 = vadd.f32 0.0, %v4343
        %v4345 = vpop.f32.mrf.mxu0
        %4346 = vdwg.mxu0
        %v4347 = vadd.f32 %v4261, %v4344
        %v4348 = vld [vmem:[%s39] sm:$0x1]
        %v4350 = vperm.slane %v4348, 0
        %v4352 = vadd.f32 %v4347, %v4350
        %v4353 = vadd.f32 %v4352, %v1264
        %v4354 = vld [vmem:[%s41] sm:$0x1]
        %v4355 = vld [vmem:[%s43] sm:$0x1]
        %v4356 = vsel %vm1298, %v4353, 0.0
        %4357 = vadd.xlane.f32.xlu0 %v4356
        %v4358 = vpop.xlane.xlu0 %4357
        %v4359 = vmul.f32 %v4358, %v1684
        %v4360 = vsub.f32 %v4353, %v4359
        %v4361 = vmul.f32 %v4360, %v4360
        %v4362 = vsel %vm1298, %v4361, 0.0
        %4363 = vadd.xlane.f32.xlu0 %v4362
        %v4364 = vpop.xlane.xlu0 %4363
        %v4365 = vmul.f32 %v4364, %v1684
        %v4366 = vadd.f32 %v4365, 1e-05
        %v4367 = vrsqrt.pop %v4366
        %v4368 = vmul.f32 %v4367, %v4366
        %v4369 = vmul.f32 %v4368, %v4367
        %v4370 = vmul.f32 0.5, %v4369
        %v4371 = vsub.f32 1.5, %v4370
        %v4372 = vmul.f32 %v4367, %v4371
        %vm4373 = vweird.f32 %v4366
        %vm4374 = vweird.f32 %v4367
        %vm4375 = vmor %vm4373, %vm4374
        %v4376 = vsel %vm4375, %v4367, %v4372
        %v4377 = vmul.f32 %v4360, %v4376
        %v4379 = vperm.slane %v4354, 0
        %v4381 = vmul.f32 %v4377, %v4379
        %v4383 = vperm.slane %v4355, 0
        %v4385 = vadd.f32 %v4381, %v4383
        %v4386 = vld [vmem:[%s45] sm:$0xf]
        %v4387 = vld [vmem:[%s45 + $0x4] sm:$0xf]
        %v4388 = vld [vmem:[%s45 + $0x8] sm:$0xf]
        %v4389 = vld [vmem:[%s45 + $0xc] sm:$0xf]
        %v4390 = vpack.c.bf16 %v4385, %v4385
        %v4391 = vld [vmem:[%s47] sm:$0x1]
        %v4393 = vperm.slane %v4391, 0
        %v4399 = vunpack.c.l.b16 %v4386
        %v4400 = vunpack.c.l.b16 %v4387
        %v4401 = vunpack.c.l.b16 %v4388
        %v4402 = vunpack.c.l.b16 %v4389
        %v4403 = vpack.c.b16 %v4400, %v4399
        %v4404 = vpack.c.b16 %v4402, %v4401
        %v4408 = vsel %vm1298, %v4390, 0
        %4410 = vmatpush.bf16.msra.mxu0 0
        %4411 = vmatpush.bf16.msra.mxu0 0
        %4412 = vmatpush.bf16.msra.mxu0 0
        %4413 = vmatpush.bf16.msra.mxu0 0
        %4414 = vmatpush.bf16.msra.mxu0 0
        %4415 = vmatpush.bf16.msra.mxu0 0
        %4416 = vmatpush.bf16.msra.mxu0 %v4404
        %4417 = vmatpush.bf16.msra.mxu0 %v4403
        %4418 = vmatmul.bf16.gmra.mxu0 %v4408
        %v4419 = vpop.f32.mrf.mxu0
        %v4420 = vadd.f32 %v4393, %v4419
        %v4421 = vpop.f32.mrf.mxu0
        %4422 = vdwg.mxu0
        %v4423 = vld [vmem:[%s49] sm:$0xf]
        %v4424 = vld [vmem:[%s49 + $0x4] sm:$0xf]
        %v4425 = vld [vmem:[%s49 + $0x8] sm:$0xf]
        %v4426 = vld [vmem:[%s49 + $0xc] sm:$0xf]
        %v4427 = vpack.c.bf16 %v3963, %v3963
        %v4428 = vld [vmem:[%s51] sm:$0x1]
        %v4430 = vperm.slane %v4428, 0
        %v4436 = vunpack.c.l.b16 %v4423
        %v4437 = vunpack.c.l.b16 %v4424
        %v4438 = vunpack.c.l.b16 %v4425
        %v4439 = vunpack.c.l.b16 %v4426
        %v4440 = vpack.c.b16 %v4437, %v4436
        %v4441 = vpack.c.b16 %v4439, %v4438
        %v4445 = vsel %vm1298, %v4427, 0
        %4447 = vmatpush.bf16.msra.mxu0 0
        %4448 = vmatpush.bf16.msra.mxu0 0
        %4449 = vmatpush.bf16.msra.mxu0 0
        %4450 = vmatpush.bf16.msra.mxu0 0
        %4451 = vmatpush.bf16.msra.mxu0 0
        %4452 = vmatpush.bf16.msra.mxu0 0
        %4453 = vmatpush.bf16.msra.mxu0 %v4441
        %4454 = vmatpush.bf16.msra.mxu0 %v4440
        %4455 = vmatmul.bf16.gmra.mxu0 %v4445
        %v4456 = vpop.f32.mrf.mxu0
        %v4457 = vadd.f32 %v4430, %v4456
        %v4458 = vpop.f32.mrf.mxu0
        %4459 = vdwg.mxu0
        %v4460 = vld [vmem:[%s53] sm:$0xf]
        %v4461 = vld [vmem:[%s53 + $0x4] sm:$0xf]
        %v4462 = vld [vmem:[%s53 + $0x8] sm:$0xf]
        %v4463 = vld [vmem:[%s53 + $0xc] sm:$0xf]
        %v4464 = vmul.f32 %v4420, 0.35355338
        %v4466 = vsel %vm1326, %v4464, 0
        %v4469 = vsel %vm1326, %v4457, 0
        %4471 = vmatpush.xpose.msra.mxu0 0.0
        %4472 = vmatpush.xpose.msra.mxu0 0.0
        %4473 = vmatpush.xpose.msra.mxu0 0.0
        %4474 = vmatpush.xpose.msra.mxu0 0.0
        %4475 = vmatpush.xpose.msra.mxu0 0.0
        %4476 = vmatpush.xpose.msra.mxu0 0.0
        %4477 = vmatpush.xpose.msra.mxu0 0.0
        %4478 = vmatpush.xpose.msra.mxu0 0.0
        %4479 = vmatpush.xpose.msra.mxu0 0.0
        %4480 = vmatpush.xpose.msra.mxu0 0.0
        %4481 = vmatpush.xpose.msra.mxu0 0.0
        %4482 = vmatpush.xpose.msra.mxu0 0.0
        %4483 = vmatpush.xpose.msra.mxu0 0.0
        %4484 = vmatpush.xpose.msra.mxu0 0.0
        %4485 = vmatpush.xpose.msra.mxu0 0.0
        %4486 = vmatpush.xpose.msra.mxu0 %v4469
        %4487 = vmatmul.f32.gmra.mxu0 %v4466
        %v4488 = vpop.f32.mrf.mxu0
        %v4489 = vadd.f32 0.0, %v4488
        %4490 = vdwg.mxu0
        %v4491 = vsel %vm1326, %v4489, -inf
        %4492 = vmax.xlane.f32.xlu0 %v4491
        %v4493 = vpop.xlane.xlu0 %4492
        %v4494 = vsub.f32 %v4489, %v4493
        %v4495 = vmul.f32 %v4494, 1.442695
        %v4496 = vpow.pop %v4495
        %v4497 = vsel %vm1326, %v4496, 0.0
        %4498 = vadd.xlane.f32.xlu0 %v4497
        %v4499 = vpop.xlane.xlu0 %4498
        %v4500 = vrcp.pop %v4499
        %4501 = vrot.lane.b32.xlu0 %v4457, 96
        %v4502 = vpop.permute.xlu0 %4501
        %v4505 = vsel %vm1326, %v4496, 0
        %4507 = vmatpush.msra.mxu0 0.0
        %4508 = vmatpush.msra.mxu0 0.0
        %4509 = vmatpush.msra.mxu0 0.0
        %4510 = vmatpush.msra.mxu0 0.0
        %4511 = vmatpush.msra.mxu0 0.0
        %4512 = vmatpush.msra.mxu0 0.0
        %4513 = vmatpush.msra.mxu0 0.0
        %4514 = vmatpush.msra.mxu0 0.0
        %4515 = vmatpush.msra.mxu0 0.0
        %4516 = vmatpush.msra.mxu0 0.0
        %4517 = vmatpush.msra.mxu0 0.0
        %4518 = vmatpush.msra.mxu0 0.0
        %4519 = vmatpush.msra.mxu0 0.0
        %4520 = vmatpush.msra.mxu0 0.0
        %4521 = vmatpush.msra.mxu0 0.0
        %4522 = vmatpush.msra.mxu0 %v4502
        %4523 = vmatmul.f32.gmra.mxu0 %v4505
        %v4524 = vpop.f32.mrf.mxu0
        %v4525 = vadd.f32 0.0, %v4524
        %4526 = vdwg.mxu0
        %v4527 = vmul.f32 %v4525, %v4500
        %v4528 = vpack.c.bf16 %v4527, %v4527
        %4529 = vrot.lane.b32.xlu0 %v4464, 120
        %v4530 = vpop.permute.xlu0 %4529
        %4531 = vrot.lane.b32.xlu0 %v4457, 120
        %v4532 = vpop.permute.xlu0 %4531
        %v4533 = vsel %vm1326, %v4530, 0
        %v4535 = vsel %vm1326, %v4532, 0
        %4537 = vmatpush.xpose.msra.mxu0 0.0
        %4538 = vmatpush.xpose.msra.mxu0 0.0
        %4539 = vmatpush.xpose.msra.mxu0 0.0
        %4540 = vmatpush.xpose.msra.mxu0 0.0
        %4541 = vmatpush.xpose.msra.mxu0 0.0
        %4542 = vmatpush.xpose.msra.mxu0 0.0
        %4543 = vmatpush.xpose.msra.mxu0 0.0
        %4544 = vmatpush.xpose.msra.mxu0 0.0
        %4545 = vmatpush.xpose.msra.mxu0 0.0
        %4546 = vmatpush.xpose.msra.mxu0 0.0
        %4547 = vmatpush.xpose.msra.mxu0 0.0
        %4548 = vmatpush.xpose.msra.mxu0 0.0
        %4549 = vmatpush.xpose.msra.mxu0 0.0
        %4550 = vmatpush.xpose.msra.mxu0 0.0
        %4551 = vmatpush.xpose.msra.mxu0 0.0
        %4552 = vmatpush.xpose.msra.mxu0 %v4535
        %4553 = vmatmul.f32.gmra.mxu0 %v4533
        %v4554 = vpop.f32.mrf.mxu0
        %v4555 = vadd.f32 0.0, %v4554
        %4556 = vdwg.mxu0
        %v4557 = vsel %vm1326, %v4555, -inf
        %4558 = vmax.xlane.f32.xlu0 %v4557
        %v4559 = vpop.xlane.xlu0 %4558
        %v4560 = vsub.f32 %v4555, %v4559
        %v4561 = vmul.f32 %v4560, 1.442695
        %v4562 = vpow.pop %v4561
        %v4563 = vsel %vm1326, %v4562, 0.0
        %4564 = vadd.xlane.f32.xlu0 %v4563
        %v4565 = vpop.xlane.xlu0 %4564
        %v4566 = vrcp.pop %v4565
        %4567 = vrot.lane.b32.xlu0 %v4457, 88
        %v4568 = vpop.permute.xlu0 %4567
        %v4571 = vsel %vm1326, %v4562, 0
        %4573 = vmatpush.msra.mxu0 0.0
        %4574 = vmatpush.msra.mxu0 0.0
        %4575 = vmatpush.msra.mxu0 0.0
        %4576 = vmatpush.msra.mxu0 0.0
        %4577 = vmatpush.msra.mxu0 0.0
        %4578 = vmatpush.msra.mxu0 0.0
        %4579 = vmatpush.msra.mxu0 0.0
        %4580 = vmatpush.msra.mxu0 0.0
        %4581 = vmatpush.msra.mxu0 0.0
        %4582 = vmatpush.msra.mxu0 0.0
        %4583 = vmatpush.msra.mxu0 0.0
        %4584 = vmatpush.msra.mxu0 0.0
        %4585 = vmatpush.msra.mxu0 0.0
        %4586 = vmatpush.msra.mxu0 0.0
        %4587 = vmatpush.msra.mxu0 0.0
        %4588 = vmatpush.msra.mxu0 %v4568
        %4589 = vmatmul.f32.gmra.mxu0 %v4571
        %v4590 = vpop.f32.mrf.mxu0
        %v4591 = vadd.f32 0.0, %v4590
        %4592 = vdwg.mxu0
        %v4593 = vmul.f32 %v4591, %v4566
        %v4594 = vpack.c.bf16 %v4593, %v4593
        %v4596 = vsel %vm1326, %v4594, 0
        %v4599 = vsel %vm1459, %v4461, 0
        %4601 = vmatpush.bf16.msra.mxu0 0
        %4602 = vmatpush.bf16.msra.mxu0 0
        %4603 = vmatpush.bf16.msra.mxu0 0
        %4604 = vmatpush.bf16.msra.mxu0 0
        %4605 = vmatpush.bf16.msra.mxu0 0
        %4606 = vmatpush.bf16.msra.mxu0 0
        %4607 = vmatpush.bf16.msra.mxu0 0
        %4608 = vmatpush.bf16.msra.mxu0 %v4599
        %4609 = vmatmul.bf16.gmra.mxu0 %v4596
        %v4610 = vpop.f32.mrf.mxu0
        %v4611 = vadd.f32 0.0, %v4610
        %v4612 = vpop.f32.mrf.mxu0
        %4613 = vdwg.mxu0
        %v4615 = vsel %vm1326, %v4528, 0
        %v4618 = vsel %vm1459, %v4460, 0
        %4620 = vmatpush.bf16.msra.mxu0 0
        %4621 = vmatpush.bf16.msra.mxu0 0
        %4622 = vmatpush.bf16.msra.mxu0 0
        %4623 = vmatpush.bf16.msra.mxu0 0
        %4624 = vmatpush.bf16.msra.mxu0 0
        %4625 = vmatpush.bf16.msra.mxu0 0
        %4626 = vmatpush.bf16.msra.mxu0 0
        %4627 = vmatpush.bf16.msra.mxu0 %v4618
        %4628 = vmatmul.bf16.gmra.mxu0 %v4615
        %v4629 = vpop.f32.mrf.mxu0
        %v4630 = vadd.f32 %v4611, %v4629
        %v4631 = vpop.f32.mrf.mxu0
        %4632 = vdwg.mxu0
        %4633 = vrot.lane.b32.xlu0 %v4464, 112
        %v4634 = vpop.permute.xlu0 %4633
        %4635 = vrot.lane.b32.xlu0 %v4457, 112
        %v4636 = vpop.permute.xlu0 %4635
        %v4637 = vsel %vm1326, %v4634, 0
        %v4639 = vsel %vm1326, %v4636, 0
        %4641 = vmatpush.xpose.msra.mxu0 0.0
        %4642 = vmatpush.xpose.msra.mxu0 0.0
        %4643 = vmatpush.xpose.msra.mxu0 0.0
        %4644 = vmatpush.xpose.msra.mxu0 0.0
        %4645 = vmatpush.xpose.msra.mxu0 0.0
        %4646 = vmatpush.xpose.msra.mxu0 0.0
        %4647 = vmatpush.xpose.msra.mxu0 0.0
        %4648 = vmatpush.xpose.msra.mxu0 0.0
        %4649 = vmatpush.xpose.msra.mxu0 0.0
        %4650 = vmatpush.xpose.msra.mxu0 0.0
        %4651 = vmatpush.xpose.msra.mxu0 0.0
        %4652 = vmatpush.xpose.msra.mxu0 0.0
        %4653 = vmatpush.xpose.msra.mxu0 0.0
        %4654 = vmatpush.xpose.msra.mxu0 0.0
        %4655 = vmatpush.xpose.msra.mxu0 0.0
        %4656 = vmatpush.xpose.msra.mxu0 %v4639
        %4657 = vmatmul.f32.gmra.mxu0 %v4637
        %v4658 = vpop.f32.mrf.mxu0
        %v4659 = vadd.f32 0.0, %v4658
        %4660 = vdwg.mxu0
        %v4661 = vsel %vm1326, %v4659, -inf
        %4662 = vmax.xlane.f32.xlu0 %v4661
        %v4663 = vpop.xlane.xlu0 %4662
        %v4664 = vsub.f32 %v4659, %v4663
        %v4665 = vmul.f32 %v4664, 1.442695
        %v4666 = vpow.pop %v4665
        %v4667 = vsel %vm1326, %v4666, 0.0
        %4668 = vadd.xlane.f32.xlu0 %v4667
        %v4669 = vpop.xlane.xlu0 %4668
        %v4670 = vrcp.pop %v4669
        %4671 = vrot.lane.b32.xlu0 %v4457, 80
        %v4672 = vpop.permute.xlu0 %4671
        %v4675 = vsel %vm1326, %v4666, 0
        %4677 = vmatpush.msra.mxu0 0.0
        %4678 = vmatpush.msra.mxu0 0.0
        %4679 = vmatpush.msra.mxu0 0.0
        %4680 = vmatpush.msra.mxu0 0.0
        %4681 = vmatpush.msra.mxu0 0.0
        %4682 = vmatpush.msra.mxu0 0.0
        %4683 = vmatpush.msra.mxu0 0.0
        %4684 = vmatpush.msra.mxu0 0.0
        %4685 = vmatpush.msra.mxu0 0.0
        %4686 = vmatpush.msra.mxu0 0.0
        %4687 = vmatpush.msra.mxu0 0.0
        %4688 = vmatpush.msra.mxu0 0.0
        %4689 = vmatpush.msra.mxu0 0.0
        %4690 = vmatpush.msra.mxu0 0.0
        %4691 = vmatpush.msra.mxu0 0.0
        %4692 = vmatpush.msra.mxu0 %v4672
        %4693 = vmatmul.f32.gmra.mxu0 %v4675
        %v4694 = vpop.f32.mrf.mxu0
        %v4695 = vadd.f32 0.0, %v4694
        %4696 = vdwg.mxu0
        %v4697 = vmul.f32 %v4695, %v4670
        %v4698 = vpack.c.bf16 %v4697, %v4697
        %v4700 = vsel %vm1326, %v4698, 0
        %v4703 = vsel %vm1459, %v4462, 0
        %4705 = vmatpush.bf16.msra.mxu0 0
        %4706 = vmatpush.bf16.msra.mxu0 0
        %4707 = vmatpush.bf16.msra.mxu0 0
        %4708 = vmatpush.bf16.msra.mxu0 0
        %4709 = vmatpush.bf16.msra.mxu0 0
        %4710 = vmatpush.bf16.msra.mxu0 0
        %4711 = vmatpush.bf16.msra.mxu0 0
        %4712 = vmatpush.bf16.msra.mxu0 %v4703
        %4713 = vmatmul.bf16.gmra.mxu0 %v4700
        %v4714 = vpop.f32.mrf.mxu0
        %v4715 = vadd.f32 0.0, %v4714
        %v4716 = vpop.f32.mrf.mxu0
        %4717 = vdwg.mxu0
        %v4718 = vadd.f32 %v4630, %v4715
        %4719 = vrot.lane.b32.xlu0 %v4464, 104
        %v4720 = vpop.permute.xlu0 %4719
        %4721 = vrot.lane.b32.xlu0 %v4457, 104
        %v4722 = vpop.permute.xlu0 %4721
        %v4723 = vsel %vm1326, %v4720, 0
        %v4725 = vsel %vm1326, %v4722, 0
        %4727 = vmatpush.xpose.msra.mxu0 0.0
        %4728 = vmatpush.xpose.msra.mxu0 0.0
        %4729 = vmatpush.xpose.msra.mxu0 0.0
        %4730 = vmatpush.xpose.msra.mxu0 0.0
        %4731 = vmatpush.xpose.msra.mxu0 0.0
        %4732 = vmatpush.xpose.msra.mxu0 0.0
        %4733 = vmatpush.xpose.msra.mxu0 0.0
        %4734 = vmatpush.xpose.msra.mxu0 0.0
        %4735 = vmatpush.xpose.msra.mxu0 0.0
        %4736 = vmatpush.xpose.msra.mxu0 0.0
        %4737 = vmatpush.xpose.msra.mxu0 0.0
        %4738 = vmatpush.xpose.msra.mxu0 0.0
        %4739 = vmatpush.xpose.msra.mxu0 0.0
        %4740 = vmatpush.xpose.msra.mxu0 0.0
        %4741 = vmatpush.xpose.msra.mxu0 0.0
        %4742 = vmatpush.xpose.msra.mxu0 %v4725
        %4743 = vmatmul.f32.gmra.mxu0 %v4723
        %v4744 = vpop.f32.mrf.mxu0
        %v4745 = vadd.f32 0.0, %v4744
        %4746 = vdwg.mxu0
        %v4747 = vsel %vm1326, %v4745, -inf
        %4748 = vmax.xlane.f32.xlu0 %v4747
        %v4749 = vpop.xlane.xlu0 %4748
        %v4750 = vsub.f32 %v4745, %v4749
        %v4751 = vmul.f32 %v4750, 1.442695
        %v4752 = vpow.pop %v4751
        %v4753 = vsel %vm1326, %v4752, 0.0
        %4754 = vadd.xlane.f32.xlu0 %v4753
        %v4755 = vpop.xlane.xlu0 %4754
        %v4756 = vrcp.pop %v4755
        %4757 = vrot.lane.b32.xlu0 %v4457, 72
        %v4758 = vpop.permute.xlu0 %4757
        %v4761 = vsel %vm1326, %v4752, 0
        %4763 = vmatpush.msra.mxu0 0.0
        %4764 = vmatpush.msra.mxu0 0.0
        %4765 = vmatpush.msra.mxu0 0.0
        %4766 = vmatpush.msra.mxu0 0.0
        %4767 = vmatpush.msra.mxu0 0.0
        %4768 = vmatpush.msra.mxu0 0.0
        %4769 = vmatpush.msra.mxu0 0.0
        %4770 = vmatpush.msra.mxu0 0.0
        %4771 = vmatpush.msra.mxu0 0.0
        %4772 = vmatpush.msra.mxu0 0.0
        %4773 = vmatpush.msra.mxu0 0.0
        %4774 = vmatpush.msra.mxu0 0.0
        %4775 = vmatpush.msra.mxu0 0.0
        %4776 = vmatpush.msra.mxu0 0.0
        %4777 = vmatpush.msra.mxu0 0.0
        %4778 = vmatpush.msra.mxu0 %v4758
        %4779 = vmatmul.f32.gmra.mxu0 %v4761
        %v4780 = vpop.f32.mrf.mxu0
        %v4781 = vadd.f32 0.0, %v4780
        %4782 = vdwg.mxu0
        %v4783 = vmul.f32 %v4781, %v4756
        %v4784 = vpack.c.bf16 %v4783, %v4783
        %v4786 = vsel %vm1326, %v4784, 0
        %v4789 = vsel %vm1459, %v4463, 0
        %4791 = vmatpush.bf16.msra.mxu0 0
        %4792 = vmatpush.bf16.msra.mxu0 0
        %4793 = vmatpush.bf16.msra.mxu0 0
        %4794 = vmatpush.bf16.msra.mxu0 0
        %4795 = vmatpush.bf16.msra.mxu0 0
        %4796 = vmatpush.bf16.msra.mxu0 0
        %4797 = vmatpush.bf16.msra.mxu0 0
        %4798 = vmatpush.bf16.msra.mxu0 %v4789
        %4799 = vmatmul.bf16.gmra.mxu0 %v4786
        %v4800 = vpop.f32.mrf.mxu0
        %v4801 = vadd.f32 0.0, %v4800
        %v4802 = vpop.f32.mrf.mxu0
        %4803 = vdwg.mxu0
        %v4804 = vadd.f32 %v4718, %v4801
        %v4805 = vld [vmem:[%s55] sm:$0x1]
        %v4807 = vperm.slane %v4805, 0
        %v4809 = vadd.f32 %v4804, %v4807
        %v4810 = vadd.f32 %v4809, %v4385
        %v4811 = vld [vmem:[%s57] sm:$0x1]
        %v4812 = vld [vmem:[%s59] sm:$0x1]
        %v4813 = vsel %vm1298, %v4810, 0.0
        %4814 = vadd.xlane.f32.xlu0 %v4813
        %v4815 = vpop.xlane.xlu0 %4814
        %v4816 = vmul.f32 %v4815, %v1684
        %v4817 = vsub.f32 %v4810, %v4816
        %v4818 = vmul.f32 %v4817, %v4817
        %v4819 = vsel %vm1298, %v4818, 0.0
        %4820 = vadd.xlane.f32.xlu0 %v4819
        %v4821 = vpop.xlane.xlu0 %4820
        %v4822 = vmul.f32 %v4821, %v1684
        %v4823 = vadd.f32 %v4822, 1e-05
        %v4824 = vrsqrt.pop %v4823
        %v4825 = vmul.f32 %v4824, %v4823
        %v4826 = vmul.f32 %v4825, %v4824
        %v4827 = vmul.f32 0.5, %v4826
        %v4828 = vsub.f32 1.5, %v4827
        %v4829 = vmul.f32 %v4824, %v4828
        %vm4830 = vweird.f32 %v4823
        %vm4831 = vweird.f32 %v4824
        %vm4832 = vmor %vm4830, %vm4831
        %v4833 = vsel %vm4832, %v4824, %v4829
        %v4834 = vmul.f32 %v4817, %v4833
        %v4836 = vperm.slane %v4811, 0
        %v4838 = vmul.f32 %v4834, %v4836
        %v4840 = vperm.slane %v4812, 0
        %v4842 = vadd.f32 %v4838, %v4840
        %v4843 = vld [vmem:[#allocation6] sm:$0xff]
        %v4844 = vld [vmem:[#allocation6 + $0x8] sm:$0xff]
        %v4845 = vld [vmem:[#allocation6 + $0x10] sm:$0xff]
        %v4846 = vld [vmem:[#allocation6 + $0x18] sm:$0xff]
        %v4847 = vld [vmem:[#allocation6 + $0x20] sm:$0xff]
        %v4848 = vld [vmem:[#allocation6 + $0x28] sm:$0xff]
        %v4849 = vld [vmem:[#allocation6 + $0x30] sm:$0xff]
        %v4850 = vld [vmem:[#allocation6 + $0x38] sm:$0xff]
        %v4851 = vld [vmem:[#allocation6 + $0x40] sm:$0xff]
        %v4852 = vld [vmem:[#allocation6 + $0x48] sm:$0xff]
        %v4853 = vld [vmem:[#allocation6 + $0x50] sm:$0xff]
        %v4854 = vld [vmem:[#allocation6 + $0x58] sm:$0xff]
        %v4855 = vld [vmem:[#allocation6 + $0x60] sm:$0xff]
        %v4856 = vld [vmem:[#allocation6 + $0x68] sm:$0xff]
        %v4857 = vld [vmem:[#allocation6 + $0x70] sm:$0xff]
        %v4858 = vld [vmem:[#allocation6 + $0x78] sm:$0xff]
        %v4859 = vld [vmem:[#allocation6 + $0x80] sm:$0xff]
        %v4860 = vld [vmem:[#allocation6 + $0x88] sm:$0xff]
        %v4861 = vld [vmem:[#allocation6 + $0x90] sm:$0xff]
        %v4862 = vld [vmem:[#allocation6 + $0x98] sm:$0xff]
        %v4863 = vld [vmem:[#allocation6 + $0xa0] sm:$0xff]
        %v4864 = vld [vmem:[#allocation6 + $0xa8] sm:$0xff]
        %v4865 = vld [vmem:[#allocation6 + $0xb0] sm:$0xff]
        %v4866 = vld [vmem:[#allocation6 + $0xb8] sm:$0xff]
        %v4867 = vld [vmem:[#allocation6 + $0xc0] sm:$0xff]
        %v4868 = vld [vmem:[#allocation6 + $0xc8] sm:$0xff]
        %v4869 = vld [vmem:[#allocation6 + $0xd0] sm:$0xff]
        %v4870 = vld [vmem:[#allocation6 + $0xd8] sm:$0xff]
        %v4871 = vld [vmem:[#allocation6 + $0xe0] sm:$0xff]
        %v4872 = vld [vmem:[#allocation6 + $0xe8] sm:$0xff]
        %v4873 = vld [vmem:[#allocation6 + $0xf0] sm:$0xff]
        %v4874 = vld [vmem:[#allocation6 + $0xf8] sm:$0xff]
        %v4875 = vld [vmem:[%s63] sm:$0xff]
        %v4876 = vld [vmem:[%s63 + $0x8] sm:$0xff]
        %v4877 = vld [vmem:[#allocation7] sm:$0xff]
        %v4878 = vld [vmem:[#allocation7 + $0x8] sm:$0xff]
        %v4879 = vld [vmem:[#allocation7 + $0x10] sm:$0xff]
        %v4880 = vld [vmem:[#allocation7 + $0x18] sm:$0xff]
        %v4881 = vld [vmem:[#allocation7 + $0x20] sm:$0xff]
        %v4882 = vld [vmem:[#allocation7 + $0x28] sm:$0xff]
        %v4883 = vld [vmem:[#allocation7 + $0x30] sm:$0xff]
        %v4884 = vld [vmem:[#allocation7 + $0x38] sm:$0xff]
        %v4885 = vld [vmem:[#allocation7 + $0x40] sm:$0xff]
        %v4886 = vld [vmem:[#allocation7 + $0x48] sm:$0xff]
        %v4887 = vld [vmem:[#allocation7 + $0x50] sm:$0xff]
        %v4888 = vld [vmem:[#allocation7 + $0x58] sm:$0xff]
        %v4889 = vld [vmem:[#allocation7 + $0x60] sm:$0xff]
        %v4890 = vld [vmem:[#allocation7 + $0x68] sm:$0xff]
        %v4891 = vld [vmem:[#allocation7 + $0x70] sm:$0xff]
        %v4892 = vld [vmem:[#allocation7 + $0x78] sm:$0xff]
        %v4893 = vld [vmem:[#allocation7 + $0x80] sm:$0xff]
        %v4894 = vld [vmem:[#allocation7 + $0x88] sm:$0xff]
        %v4895 = vld [vmem:[#allocation7 + $0x90] sm:$0xff]
        %v4896 = vld [vmem:[#allocation7 + $0x98] sm:$0xff]
        %v4897 = vld [vmem:[#allocation7 + $0xa0] sm:$0xff]
        %v4898 = vld [vmem:[#allocation7 + $0xa8] sm:$0xff]
        %v4899 = vld [vmem:[#allocation7 + $0xb0] sm:$0xff]
        %v4900 = vld [vmem:[#allocation7 + $0xb8] sm:$0xff]
        %v4901 = vld [vmem:[#allocation7 + $0xc0] sm:$0xff]
        %v4902 = vld [vmem:[#allocation7 + $0xc8] sm:$0xff]
        %v4903 = vld [vmem:[#allocation7 + $0xd0] sm:$0xff]
        %v4904 = vld [vmem:[#allocation7 + $0xd8] sm:$0xff]
        %v4905 = vld [vmem:[#allocation7 + $0xe0] sm:$0xff]
        %v4906 = vld [vmem:[#allocation7 + $0xe8] sm:$0xff]
        %v4907 = vld [vmem:[#allocation7 + $0xf0] sm:$0xff]
        %v4908 = vld [vmem:[#allocation7 + $0xf8] sm:$0xff]
        %v4909 = vld [vmem:[%s67] sm:$0x1]
        %v4910 = vpack.c.bf16 %v4842, %v4842
        %v4913 = vperm.slane %v4875, 0
        %v4914 = vperm.slane %v4875, 1
        %v4915 = vperm.slane %v4875, 2
        %v4916 = vperm.slane %v4875, 3
        %v4917 = vperm.slane %v4875, 4
        %v4918 = vperm.slane %v4875, 5
        %v4919 = vperm.slane %v4875, 6
        %v4920 = vperm.slane %v4875, 7
        %v4921 = vperm.slane %v4876, 0
        %v4922 = vperm.slane %v4876, 1
        %v4923 = vperm.slane %v4876, 2
        %v4924 = vperm.slane %v4876, 3
        %v4925 = vperm.slane %v4876, 4
        %v4926 = vperm.slane %v4876, 5
        %v4927 = vperm.slane %v4876, 6
        %v4928 = vperm.slane %v4876, 7
        %v4977 = vunpack.c.l.b16 %v4843
        %v4978 = vunpack.c.h.b16 %v4843
        %v4979 = vunpack.c.l.b16 %v4844
        %v4980 = vunpack.c.h.b16 %v4844
        %v4981 = vunpack.c.l.b16 %v4845
        %v4982 = vunpack.c.h.b16 %v4845
        %v4983 = vunpack.c.l.b16 %v4846
        %v4984 = vunpack.c.h.b16 %v4846
        %v4985 = vunpack.c.l.b16 %v4847
        %v4986 = vunpack.c.h.b16 %v4847
        %v4987 = vunpack.c.l.b16 %v4848
        %v4988 = vunpack.c.h.b16 %v4848
        %v4989 = vunpack.c.l.b16 %v4849
        %v4990 = vunpack.c.h.b16 %v4849
        %v4991 = vunpack.c.l.b16 %v4850
        %v4992 = vunpack.c.h.b16 %v4850
        %v4993 = vunpack.c.l.b16 %v4851
        %v4994 = vunpack.c.h.b16 %v4851
        %v4995 = vunpack.c.l.b16 %v4852
        %v4996 = vunpack.c.h.b16 %v4852
        %v4997 = vunpack.c.l.b16 %v4853
        %v4998 = vunpack.c.h.b16 %v4853
        %v4999 = vunpack.c.l.b16 %v4854
        %v5000 = vunpack.c.h.b16 %v4854
        %v5001 = vunpack.c.l.b16 %v4855
        %v5002 = vunpack.c.h.b16 %v4855
        %v5003 = vunpack.c.l.b16 %v4856
        %v5004 = vunpack.c.h.b16 %v4856
        %v5005 = vunpack.c.l.b16 %v4857
        %v5006 = vunpack.c.h.b16 %v4857
        %v5007 = vunpack.c.l.b16 %v4858
        %v5008 = vunpack.c.h.b16 %v4858
        %v5009 = vunpack.c.l.b16 %v4859
        %v5010 = vunpack.c.h.b16 %v4859
        %v5011 = vunpack.c.l.b16 %v4860
        %v5012 = vunpack.c.h.b16 %v4860
        %v5013 = vunpack.c.l.b16 %v4861
        %v5014 = vunpack.c.h.b16 %v4861
        %v5015 = vunpack.c.l.b16 %v4862
        %v5016 = vunpack.c.h.b16 %v4862
        %v5017 = vunpack.c.l.b16 %v4863
        %v5018 = vunpack.c.h.b16 %v4863
        %v5019 = vunpack.c.l.b16 %v4864
        %v5020 = vunpack.c.h.b16 %v4864
        %v5021 = vunpack.c.l.b16 %v4865
        %v5022 = vunpack.c.h.b16 %v4865
        %v5023 = vunpack.c.l.b16 %v4866
        %v5024 = vunpack.c.h.b16 %v4866
        %v5025 = vunpack.c.l.b16 %v4867
        %v5026 = vunpack.c.h.b16 %v4867
        %v5027 = vunpack.c.l.b16 %v4868
        %v5028 = vunpack.c.h.b16 %v4868
        %v5029 = vunpack.c.l.b16 %v4869
        %v5030 = vunpack.c.h.b16 %v4869
        %v5031 = vunpack.c.l.b16 %v4870
        %v5032 = vunpack.c.h.b16 %v4870
        %v5033 = vunpack.c.l.b16 %v4871
        %v5034 = vunpack.c.h.b16 %v4871
        %v5035 = vunpack.c.l.b16 %v4872
        %v5036 = vunpack.c.h.b16 %v4872
        %v5037 = vunpack.c.l.b16 %v4873
        %v5038 = vunpack.c.h.b16 %v4873
        %v5039 = vunpack.c.l.b16 %v4874
        %v5040 = vunpack.c.h.b16 %v4874
        %v5041 = vpack.c.b16 %v4993, %v4977
        %v5042 = vpack.c.b16 %v4994, %v4978
        %v5043 = vpack.c.b16 %v4995, %v4979
        %v5044 = vpack.c.b16 %v4996, %v4980
        %v5045 = vpack.c.b16 %v4997, %v4981
        %v5046 = vpack.c.b16 %v4998, %v4982
        %v5047 = vpack.c.b16 %v4999, %v4983
        %v5048 = vpack.c.b16 %v5000, %v4984
        %v5049 = vpack.c.b16 %v5001, %v4985
        %v5050 = vpack.c.b16 %v5002, %v4986
        %v5051 = vpack.c.b16 %v5003, %v4987
        %v5052 = vpack.c.b16 %v5004, %v4988
        %v5053 = vpack.c.b16 %v5005, %v4989
        %v5054 = vpack.c.b16 %v5006, %v4990
        %v5055 = vpack.c.b16 %v5007, %v4991
        %v5056 = vpack.c.b16 %v5008, %v4992
        %v5057 = vpack.c.b16 %v5025, %v5009
        %v5058 = vpack.c.b16 %v5026, %v5010
        %v5059 = vpack.c.b16 %v5027, %v5011
        %v5060 = vpack.c.b16 %v5028, %v5012
        %v5061 = vpack.c.b16 %v5029, %v5013
        %v5062 = vpack.c.b16 %v5030, %v5014
        %v5063 = vpack.c.b16 %v5031, %v5015
        %v5064 = vpack.c.b16 %v5032, %v5016
        %v5065 = vpack.c.b16 %v5033, %v5017
        %v5066 = vpack.c.b16 %v5034, %v5018
        %v5067 = vpack.c.b16 %v5035, %v5019
        %v5068 = vpack.c.b16 %v5036, %v5020
        %v5069 = vpack.c.b16 %v5037, %v5021
        %v5070 = vpack.c.b16 %v5038, %v5022
        %v5071 = vpack.c.b16 %v5039, %v5023
        %v5072 = vpack.c.b16 %v5040, %v5024
        %v5106 = vsel %vm1298, %v4910, 0
        %5108 = vmatpush.bf16.msra.mxu0 0
        %5109 = vmatpush.bf16.msra.mxu0 0
        %5110 = vmatpush.bf16.msra.mxu0 0
        %5111 = vmatpush.bf16.msra.mxu0 0
        %5112 = vmatpush.bf16.msra.mxu0 0
        %5113 = vmatpush.bf16.msra.mxu0 0
        %5114 = vmatpush.bf16.msra.mxu0 %v5057
        %5115 = vmatpush.bf16.msra.mxu0 %v5041
        %5116 = vmatmul.bf16.gmra.mxu0 %v5106
        %v5117 = vpop.f32.mrf.mxu0
        %v5118 = vadd.f32 %v4913, %v5117
        %v5119 = vpop.f32.mrf.mxu0
        %5120 = vdwg.mxu0
        %5121 = vmatpush.bf16.msra.mxu0 0
        %5122 = vmatpush.bf16.msra.mxu0 0
        %5123 = vmatpush.bf16.msra.mxu0 0
        %5124 = vmatpush.bf16.msra.mxu0 0
        %5125 = vmatpush.bf16.msra.mxu0 0
        %5126 = vmatpush.bf16.msra.mxu0 0
        %5127 = vmatpush.bf16.msra.mxu0 %v5058
        %5128 = vmatpush.bf16.msra.mxu0 %v5042
        %5129 = vmatmul.bf16.gmra.mxu0 %v5106
        %v5130 = vpop.f32.mrf.mxu0
        %v5131 = vadd.f32 %v4914, %v5130
        %v5132 = vpop.f32.mrf.mxu0
        %5133 = vdwg.mxu0
        %5134 = vmatpush.bf16.msra.mxu0 0
        %5135 = vmatpush.bf16.msra.mxu0 0
        %5136 = vmatpush.bf16.msra.mxu0 0
        %5137 = vmatpush.bf16.msra.mxu0 0
        %5138 = vmatpush.bf16.msra.mxu0 0
        %5139 = vmatpush.bf16.msra.mxu0 0
        %5140 = vmatpush.bf16.msra.mxu0 %v5059
        %5141 = vmatpush.bf16.msra.mxu0 %v5043
        %5142 = vmatmul.bf16.gmra.mxu0 %v5106
        %v5143 = vpop.f32.mrf.mxu0
        %v5144 = vadd.f32 %v4915, %v5143
        %v5145 = vpop.f32.mrf.mxu0
        %5146 = vdwg.mxu0
        %5147 = vmatpush.bf16.msra.mxu0 0
        %5148 = vmatpush.bf16.msra.mxu0 0
        %5149 = vmatpush.bf16.msra.mxu0 0
        %5150 = vmatpush.bf16.msra.mxu0 0
        %5151 = vmatpush.bf16.msra.mxu0 0
        %5152 = vmatpush.bf16.msra.mxu0 0
        %5153 = vmatpush.bf16.msra.mxu0 %v5060
        %5154 = vmatpush.bf16.msra.mxu0 %v5044
        %5155 = vmatmul.bf16.gmra.mxu0 %v5106
        %v5156 = vpop.f32.mrf.mxu0
        %v5157 = vadd.f32 %v4916, %v5156
        %v5158 = vpop.f32.mrf.mxu0
        %5159 = vdwg.mxu0
        %5160 = vmatpush.bf16.msra.mxu0 0
        %5161 = vmatpush.bf16.msra.mxu0 0
        %5162 = vmatpush.bf16.msra.mxu0 0
        %5163 = vmatpush.bf16.msra.mxu0 0
        %5164 = vmatpush.bf16.msra.mxu0 0
        %5165 = vmatpush.bf16.msra.mxu0 0
        %5166 = vmatpush.bf16.msra.mxu0 %v5061
        %5167 = vmatpush.bf16.msra.mxu0 %v5045
        %5168 = vmatmul.bf16.gmra.mxu0 %v5106
        %v5169 = vpop.f32.mrf.mxu0
        %v5170 = vadd.f32 %v4917, %v5169
        %v5171 = vpop.f32.mrf.mxu0
        %5172 = vdwg.mxu0
        %5173 = vmatpush.bf16.msra.mxu0 0
        %5174 = vmatpush.bf16.msra.mxu0 0
        %5175 = vmatpush.bf16.msra.mxu0 0
        %5176 = vmatpush.bf16.msra.mxu0 0
        %5177 = vmatpush.bf16.msra.mxu0 0
        %5178 = vmatpush.bf16.msra.mxu0 0
        %5179 = vmatpush.bf16.msra.mxu0 %v5062
        %5180 = vmatpush.bf16.msra.mxu0 %v5046
        %5181 = vmatmul.bf16.gmra.mxu0 %v5106
        %v5182 = vpop.f32.mrf.mxu0
        %v5183 = vadd.f32 %v4918, %v5182
        %v5184 = vpop.f32.mrf.mxu0
        %5185 = vdwg.mxu0
        %5186 = vmatpush.bf16.msra.mxu0 0
        %5187 = vmatpush.bf16.msra.mxu0 0
        %5188 = vmatpush.bf16.msra.mxu0 0
        %5189 = vmatpush.bf16.msra.mxu0 0
        %5190 = vmatpush.bf16.msra.mxu0 0
        %5191 = vmatpush.bf16.msra.mxu0 0
        %5192 = vmatpush.bf16.msra.mxu0 %v5063
        %5193 = vmatpush.bf16.msra.mxu0 %v5047
        %5194 = vmatmul.bf16.gmra.mxu0 %v5106
        %v5195 = vpop.f32.mrf.mxu0
        %v5196 = vadd.f32 %v4919, %v5195
        %v5197 = vpop.f32.mrf.mxu0
        %5198 = vdwg.mxu0
        %5199 = vmatpush.bf16.msra.mxu0 0
        %5200 = vmatpush.bf16.msra.mxu0 0
        %5201 = vmatpush.bf16.msra.mxu0 0
        %5202 = vmatpush.bf16.msra.mxu0 0
        %5203 = vmatpush.bf16.msra.mxu0 0
        %5204 = vmatpush.bf16.msra.mxu0 0
        %5205 = vmatpush.bf16.msra.mxu0 %v5064
        %5206 = vmatpush.bf16.msra.mxu0 %v5048
        %5207 = vmatmul.bf16.gmra.mxu0 %v5106
        %v5208 = vpop.f32.mrf.mxu0
        %v5209 = vadd.f32 %v4920, %v5208
        %v5210 = vpop.f32.mrf.mxu0
        %5211 = vdwg.mxu0
        %5212 = vmatpush.bf16.msra.mxu0 0
        %5213 = vmatpush.bf16.msra.mxu0 0
        %5214 = vmatpush.bf16.msra.mxu0 0
        %5215 = vmatpush.bf16.msra.mxu0 0
        %5216 = vmatpush.bf16.msra.mxu0 0
        %5217 = vmatpush.bf16.msra.mxu0 0
        %5218 = vmatpush.bf16.msra.mxu0 %v5065
        %5219 = vmatpush.bf16.msra.mxu0 %v5049
        %5220 = vmatmul.bf16.gmra.mxu0 %v5106
        %v5221 = vpop.f32.mrf.mxu0
        %v5222 = vadd.f32 %v4921, %v5221
        %v5223 = vpop.f32.mrf.mxu0
        %5224 = vdwg.mxu0
        %5225 = vmatpush.bf16.msra.mxu0 0
        %5226 = vmatpush.bf16.msra.mxu0 0
        %5227 = vmatpush.bf16.msra.mxu0 0
        %5228 = vmatpush.bf16.msra.mxu0 0
        %5229 = vmatpush.bf16.msra.mxu0 0
        %5230 = vmatpush.bf16.msra.mxu0 0
        %5231 = vmatpush.bf16.msra.mxu0 %v5066
        %5232 = vmatpush.bf16.msra.mxu0 %v5050
        %5233 = vmatmul.bf16.gmra.mxu0 %v5106
        %v5234 = vpop.f32.mrf.mxu0
        %v5235 = vadd.f32 %v4922, %v5234
        %v5236 = vpop.f32.mrf.mxu0
        %5237 = vdwg.mxu0
        %5238 = vmatpush.bf16.msra.mxu0 0
        %5239 = vmatpush.bf16.msra.mxu0 0
        %5240 = vmatpush.bf16.msra.mxu0 0
        %5241 = vmatpush.bf16.msra.mxu0 0
        %5242 = vmatpush.bf16.msra.mxu0 0
        %5243 = vmatpush.bf16.msra.mxu0 0
        %5244 = vmatpush.bf16.msra.mxu0 %v5067
        %5245 = vmatpush.bf16.msra.mxu0 %v5051
        %5246 = vmatmul.bf16.gmra.mxu0 %v5106
        %v5247 = vpop.f32.mrf.mxu0
        %v5248 = vadd.f32 %v4923, %v5247
        %v5249 = vpop.f32.mrf.mxu0
        %5250 = vdwg.mxu0
        %5251 = vmatpush.bf16.msra.mxu0 0
        %5252 = vmatpush.bf16.msra.mxu0 0
        %5253 = vmatpush.bf16.msra.mxu0 0
        %5254 = vmatpush.bf16.msra.mxu0 0
        %5255 = vmatpush.bf16.msra.mxu0 0
        %5256 = vmatpush.bf16.msra.mxu0 0
        %5257 = vmatpush.bf16.msra.mxu0 %v5068
        %5258 = vmatpush.bf16.msra.mxu0 %v5052
        %5259 = vmatmul.bf16.gmra.mxu0 %v5106
        %v5260 = vpop.f32.mrf.mxu0
        %v5261 = vadd.f32 %v4924, %v5260
        %v5262 = vpop.f32.mrf.mxu0
        %5263 = vdwg.mxu0
        %5264 = vmatpush.bf16.msra.mxu0 0
        %5265 = vmatpush.bf16.msra.mxu0 0
        %5266 = vmatpush.bf16.msra.mxu0 0
        %5267 = vmatpush.bf16.msra.mxu0 0
        %5268 = vmatpush.bf16.msra.mxu0 0
        %5269 = vmatpush.bf16.msra.mxu0 0
        %5270 = vmatpush.bf16.msra.mxu0 %v5069
        %5271 = vmatpush.bf16.msra.mxu0 %v5053
        %5272 = vmatmul.bf16.gmra.mxu0 %v5106
        %v5273 = vpop.f32.mrf.mxu0
        %v5274 = vadd.f32 %v4925, %v5273
        %v5275 = vpop.f32.mrf.mxu0
        %5276 = vdwg.mxu0
        %5277 = vmatpush.bf16.msra.mxu0 0
        %5278 = vmatpush.bf16.msra.mxu0 0
        %5279 = vmatpush.bf16.msra.mxu0 0
        %5280 = vmatpush.bf16.msra.mxu0 0
        %5281 = vmatpush.bf16.msra.mxu0 0
        %5282 = vmatpush.bf16.msra.mxu0 0
        %5283 = vmatpush.bf16.msra.mxu0 %v5070
        %5284 = vmatpush.bf16.msra.mxu0 %v5054
        %5285 = vmatmul.bf16.gmra.mxu0 %v5106
        %v5286 = vpop.f32.mrf.mxu0
        %v5287 = vadd.f32 %v4926, %v5286
        %v5288 = vpop.f32.mrf.mxu0
        %5289 = vdwg.mxu0
        %5290 = vmatpush.bf16.msra.mxu0 0
        %5291 = vmatpush.bf16.msra.mxu0 0
        %5292 = vmatpush.bf16.msra.mxu0 0
        %5293 = vmatpush.bf16.msra.mxu0 0
        %5294 = vmatpush.bf16.msra.mxu0 0
        %5295 = vmatpush.bf16.msra.mxu0 0
        %5296 = vmatpush.bf16.msra.mxu0 %v5071
        %5297 = vmatpush.bf16.msra.mxu0 %v5055
        %5298 = vmatmul.bf16.gmra.mxu0 %v5106
        %v5299 = vpop.f32.mrf.mxu0
        %v5300 = vadd.f32 %v4927, %v5299
        %v5301 = vpop.f32.mrf.mxu0
        %5302 = vdwg.mxu0
        %5303 = vmatpush.bf16.msra.mxu0 0
        %5304 = vmatpush.bf16.msra.mxu0 0
        %5305 = vmatpush.bf16.msra.mxu0 0
        %5306 = vmatpush.bf16.msra.mxu0 0
        %5307 = vmatpush.bf16.msra.mxu0 0
        %5308 = vmatpush.bf16.msra.mxu0 0
        %5309 = vmatpush.bf16.msra.mxu0 %v5072
        %5310 = vmatpush.bf16.msra.mxu0 %v5056
        %5311 = vmatmul.bf16.gmra.mxu0 %v5106
        %v5312 = vpop.f32.mrf.mxu0
        %v5313 = vadd.f32 %v4928, %v5312
        %v5314 = vpop.f32.mrf.mxu0
        %5315 = vdwg.mxu0
        %v5316 = vmax.f32 %v5118, 0.0
        %v5317 = vmax.f32 %v5131, 0.0
        %v5318 = vmax.f32 %v5144, 0.0
        %v5319 = vmax.f32 %v5157, 0.0
        %v5320 = vmax.f32 %v5170, 0.0
        %v5321 = vmax.f32 %v5183, 0.0
        %v5322 = vmax.f32 %v5196, 0.0
        %v5323 = vmax.f32 %v5209, 0.0
        %v5324 = vmax.f32 %v5222, 0.0
        %v5325 = vmax.f32 %v5235, 0.0
        %v5326 = vmax.f32 %v5248, 0.0
        %v5327 = vmax.f32 %v5261, 0.0
        %v5328 = vmax.f32 %v5274, 0.0
        %v5329 = vmax.f32 %v5287, 0.0
        %v5330 = vmax.f32 %v5300, 0.0
        %v5331 = vmax.f32 %v5313, 0.0
        %v5332 = vpack.c.bf16 %v5316, %v5316
        %v5333 = vpack.c.bf16 %v5317, %v5317
        %v5334 = vpack.c.bf16 %v5318, %v5318
        %v5335 = vpack.c.bf16 %v5319, %v5319
        %v5336 = vpack.c.bf16 %v5320, %v5320
        %v5337 = vpack.c.bf16 %v5321, %v5321
        %v5338 = vpack.c.bf16 %v5322, %v5322
        %v5339 = vpack.c.bf16 %v5323, %v5323
        %v5340 = vpack.c.bf16 %v5324, %v5324
        %v5341 = vpack.c.bf16 %v5325, %v5325
        %v5342 = vpack.c.bf16 %v5326, %v5326
        %v5343 = vpack.c.bf16 %v5327, %v5327
        %v5344 = vpack.c.bf16 %v5328, %v5328
        %v5345 = vpack.c.bf16 %v5329, %v5329
        %v5346 = vpack.c.bf16 %v5330, %v5330
        %v5347 = vpack.c.bf16 %v5331, %v5331
        %v5349 = vperm.slane %v4909, 0
        %v5383 = vunpack.c.l.b16 %v4877
        %v5384 = vunpack.c.h.b16 %v4877
        %v5385 = vunpack.c.l.b16 %v4878
        %v5386 = vunpack.c.h.b16 %v4878
        %v5387 = vunpack.c.l.b16 %v4879
        %v5388 = vunpack.c.h.b16 %v4879
        %v5389 = vunpack.c.l.b16 %v4880
        %v5390 = vunpack.c.h.b16 %v4880
        %v5391 = vunpack.c.l.b16 %v4881
        %v5392 = vunpack.c.h.b16 %v4881
        %v5393 = vunpack.c.l.b16 %v4882
        %v5394 = vunpack.c.h.b16 %v4882
        %v5395 = vunpack.c.l.b16 %v4883
        %v5396 = vunpack.c.h.b16 %v4883
        %v5397 = vunpack.c.l.b16 %v4884
        %v5398 = vunpack.c.h.b16 %v4884
        %v5399 = vunpack.c.l.b16 %v4885
        %v5400 = vunpack.c.h.b16 %v4885
        %v5401 = vunpack.c.l.b16 %v4886
        %v5402 = vunpack.c.h.b16 %v4886
        %v5403 = vunpack.c.l.b16 %v4887
        %v5404 = vunpack.c.h.b16 %v4887
        %v5405 = vunpack.c.l.b16 %v4888
        %v5406 = vunpack.c.h.b16 %v4888
        %v5407 = vunpack.c.l.b16 %v4889
        %v5408 = vunpack.c.h.b16 %v4889
        %v5409 = vunpack.c.l.b16 %v4890
        %v5410 = vunpack.c.h.b16 %v4890
        %v5411 = vunpack.c.l.b16 %v4891
        %v5412 = vunpack.c.h.b16 %v4891
        %v5413 = vunpack.c.l.b16 %v4892
        %v5414 = vunpack.c.h.b16 %v4892
        %v5415 = vunpack.c.l.b16 %v4893
        %v5416 = vunpack.c.h.b16 %v4893
        %v5417 = vunpack.c.l.b16 %v4894
        %v5418 = vunpack.c.h.b16 %v4894
        %v5419 = vunpack.c.l.b16 %v4895
        %v5420 = vunpack.c.h.b16 %v4895
        %v5421 = vunpack.c.l.b16 %v4896
        %v5422 = vunpack.c.h.b16 %v4896
        %v5423 = vunpack.c.l.b16 %v4897
        %v5424 = vunpack.c.h.b16 %v4897
        %v5425 = vunpack.c.l.b16 %v4898
        %v5426 = vunpack.c.h.b16 %v4898
        %v5427 = vunpack.c.l.b16 %v4899
        %v5428 = vunpack.c.h.b16 %v4899
        %v5429 = vunpack.c.l.b16 %v4900
        %v5430 = vunpack.c.h.b16 %v4900
        %v5431 = vunpack.c.l.b16 %v4901
        %v5432 = vunpack.c.h.b16 %v4901
        %v5433 = vunpack.c.l.b16 %v4902
        %v5434 = vunpack.c.h.b16 %v4902
        %v5435 = vunpack.c.l.b16 %v4903
        %v5436 = vunpack.c.h.b16 %v4903
        %v5437 = vunpack.c.l.b16 %v4904
        %v5438 = vunpack.c.h.b16 %v4904
        %v5439 = vunpack.c.l.b16 %v4905
        %v5440 = vunpack.c.h.b16 %v4905
        %v5441 = vunpack.c.l.b16 %v4906
        %v5442 = vunpack.c.h.b16 %v4906
        %v5443 = vunpack.c.l.b16 %v4907
        %v5444 = vunpack.c.h.b16 %v4907
        %v5445 = vunpack.c.l.b16 %v4908
        %v5446 = vunpack.c.h.b16 %v4908
        %v5447 = vpack.c.b16 %v5399, %v5383
        %v5448 = vpack.c.b16 %v5400, %v5384
        %v5449 = vpack.c.b16 %v5401, %v5385
        %v5450 = vpack.c.b16 %v5402, %v5386
        %v5451 = vpack.c.b16 %v5403, %v5387
        %v5452 = vpack.c.b16 %v5404, %v5388
        %v5453 = vpack.c.b16 %v5405, %v5389
        %v5454 = vpack.c.b16 %v5406, %v5390
        %v5455 = vpack.c.b16 %v5407, %v5391
        %v5456 = vpack.c.b16 %v5408, %v5392
        %v5457 = vpack.c.b16 %v5409, %v5393
        %v5458 = vpack.c.b16 %v5410, %v5394
        %v5459 = vpack.c.b16 %v5411, %v5395
        %v5460 = vpack.c.b16 %v5412, %v5396
        %v5461 = vpack.c.b16 %v5413, %v5397
        %v5462 = vpack.c.b16 %v5414, %v5398
        %v5463 = vpack.c.b16 %v5431, %v5415
        %v5464 = vpack.c.b16 %v5432, %v5416
        %v5465 = vpack.c.b16 %v5433, %v5417
        %v5466 = vpack.c.b16 %v5434, %v5418
        %v5467 = vpack.c.b16 %v5435, %v5419
        %v5468 = vpack.c.b16 %v5436, %v5420
        %v5469 = vpack.c.b16 %v5437, %v5421
        %v5470 = vpack.c.b16 %v5438, %v5422
        %v5471 = vpack.c.b16 %v5439, %v5423
        %v5472 = vpack.c.b16 %v5440, %v5424
        %v5473 = vpack.c.b16 %v5441, %v5425
        %v5474 = vpack.c.b16 %v5442, %v5426
        %v5475 = vpack.c.b16 %v5443, %v5427
        %v5476 = vpack.c.b16 %v5444, %v5428
        %v5477 = vpack.c.b16 %v5445, %v5429
        %v5478 = vpack.c.b16 %v5446, %v5430
        %5511 = vmatpush.bf16.xpose.msra.mxu0 0
        %5512 = vmatpush.bf16.xpose.msra.mxu0 0
        %5513 = vmatpush.bf16.xpose.msra.mxu0 0
        %5514 = vmatpush.bf16.xpose.msra.mxu0 0
        %5515 = vmatpush.bf16.xpose.msra.mxu0 0
        %5516 = vmatpush.bf16.xpose.msra.mxu0 0
        %5517 = vmatpush.bf16.xpose.msra.mxu0 %v5463
        %5518 = vmatpush.bf16.xpose.msra.mxu0 %v5447
        %5519 = vmatmul.bf16.gmra.mxu0 %v5332
        %v5520 = vpop.f32.mrf.mxu0
        %v5521 = vadd.f32 %v5349, %v5520
        %v5522 = vpop.f32.mrf.mxu0
        %5523 = vdwg.mxu0
        %5524 = vmatpush.bf16.xpose.msra.mxu0 0
        %5525 = vmatpush.bf16.xpose.msra.mxu0 0
        %5526 = vmatpush.bf16.xpose.msra.mxu0 0
        %5527 = vmatpush.bf16.xpose.msra.mxu0 0
        %5528 = vmatpush.bf16.xpose.msra.mxu0 0
        %5529 = vmatpush.bf16.xpose.msra.mxu0 0
        %5530 = vmatpush.bf16.xpose.msra.mxu0 %v5464
        %5531 = vmatpush.bf16.xpose.msra.mxu0 %v5448
        %5532 = vmatmul.bf16.gmra.mxu0 %v5333
        %v5533 = vpop.f32.mrf.mxu0
        %v5534 = vadd.f32 %v5521, %v5533
        %v5535 = vpop.f32.mrf.mxu0
        %5536 = vdwg.mxu0
        %5537 = vmatpush.bf16.xpose.msra.mxu0 0
        %5538 = vmatpush.bf16.xpose.msra.mxu0 0
        %5539 = vmatpush.bf16.xpose.msra.mxu0 0
        %5540 = vmatpush.bf16.xpose.msra.mxu0 0
        %5541 = vmatpush.bf16.xpose.msra.mxu0 0
        %5542 = vmatpush.bf16.xpose.msra.mxu0 0
        %5543 = vmatpush.bf16.xpose.msra.mxu0 %v5465
        %5544 = vmatpush.bf16.xpose.msra.mxu0 %v5449
        %5545 = vmatmul.bf16.gmra.mxu0 %v5334
        %v5546 = vpop.f32.mrf.mxu0
        %v5547 = vadd.f32 %v5534, %v5546
        %v5548 = vpop.f32.mrf.mxu0
        %5549 = vdwg.mxu0
        %5550 = vmatpush.bf16.xpose.msra.mxu0 0
        %5551 = vmatpush.bf16.xpose.msra.mxu0 0
        %5552 = vmatpush.bf16.xpose.msra.mxu0 0
        %5553 = vmatpush.bf16.xpose.msra.mxu0 0
        %5554 = vmatpush.bf16.xpose.msra.mxu0 0
        %5555 = vmatpush.bf16.xpose.msra.mxu0 0
        %5556 = vmatpush.bf16.xpose.msra.mxu0 %v5466
        %5557 = vmatpush.bf16.xpose.msra.mxu0 %v5450
        %5558 = vmatmul.bf16.gmra.mxu0 %v5335
        %v5559 = vpop.f32.mrf.mxu0
        %v5560 = vadd.f32 %v5547, %v5559
        %v5561 = vpop.f32.mrf.mxu0
        %5562 = vdwg.mxu0
        %5563 = vmatpush.bf16.xpose.msra.mxu0 0
        %5564 = vmatpush.bf16.xpose.msra.mxu0 0
        %5565 = vmatpush.bf16.xpose.msra.mxu0 0
        %5566 = vmatpush.bf16.xpose.msra.mxu0 0
        %5567 = vmatpush.bf16.xpose.msra.mxu0 0
        %5568 = vmatpush.bf16.xpose.msra.mxu0 0
        %5569 = vmatpush.bf16.xpose.msra.mxu0 %v5467
        %5570 = vmatpush.bf16.xpose.msra.mxu0 %v5451
        %5571 = vmatmul.bf16.gmra.mxu0 %v5336
        %v5572 = vpop.f32.mrf.mxu0
        %v5573 = vadd.f32 %v5560, %v5572
        %v5574 = vpop.f32.mrf.mxu0
        %5575 = vdwg.mxu0
        %5576 = vmatpush.bf16.xpose.msra.mxu0 0
        %5577 = vmatpush.bf16.xpose.msra.mxu0 0
        %5578 = vmatpush.bf16.xpose.msra.mxu0 0
        %5579 = vmatpush.bf16.xpose.msra.mxu0 0
        %5580 = vmatpush.bf16.xpose.msra.mxu0 0
        %5581 = vmatpush.bf16.xpose.msra.mxu0 0
        %5582 = vmatpush.bf16.xpose.msra.mxu0 %v5468
        %5583 = vmatpush.bf16.xpose.msra.mxu0 %v5452
        %5584 = vmatmul.bf16.gmra.mxu0 %v5337
        %v5585 = vpop.f32.mrf.mxu0
        %v5586 = vadd.f32 %v5573, %v5585
        %v5587 = vpop.f32.mrf.mxu0
        %5588 = vdwg.mxu0
        %5589 = vmatpush.bf16.xpose.msra.mxu0 0
        %5590 = vmatpush.bf16.xpose.msra.mxu0 0
        %5591 = vmatpush.bf16.xpose.msra.mxu0 0
        %5592 = vmatpush.bf16.xpose.msra.mxu0 0
        %5593 = vmatpush.bf16.xpose.msra.mxu0 0
        %5594 = vmatpush.bf16.xpose.msra.mxu0 0
        %5595 = vmatpush.bf16.xpose.msra.mxu0 %v5469
        %5596 = vmatpush.bf16.xpose.msra.mxu0 %v5453
        %5597 = vmatmul.bf16.gmra.mxu0 %v5338
        %v5598 = vpop.f32.mrf.mxu0
        %v5599 = vadd.f32 %v5586, %v5598
        %v5600 = vpop.f32.mrf.mxu0
        %5601 = vdwg.mxu0
        %5602 = vmatpush.bf16.xpose.msra.mxu0 0
        %5603 = vmatpush.bf16.xpose.msra.mxu0 0
        %5604 = vmatpush.bf16.xpose.msra.mxu0 0
        %5605 = vmatpush.bf16.xpose.msra.mxu0 0
        %5606 = vmatpush.bf16.xpose.msra.mxu0 0
        %5607 = vmatpush.bf16.xpose.msra.mxu0 0
        %5608 = vmatpush.bf16.xpose.msra.mxu0 %v5470
        %5609 = vmatpush.bf16.xpose.msra.mxu0 %v5454
        %5610 = vmatmul.bf16.gmra.mxu0 %v5339
        %v5611 = vpop.f32.mrf.mxu0
        %v5612 = vadd.f32 %v5599, %v5611
        %v5613 = vpop.f32.mrf.mxu0
        %5614 = vdwg.mxu0
        %5615 = vmatpush.bf16.xpose.msra.mxu0 0
        %5616 = vmatpush.bf16.xpose.msra.mxu0 0
        %5617 = vmatpush.bf16.xpose.msra.mxu0 0
        %5618 = vmatpush.bf16.xpose.msra.mxu0 0
        %5619 = vmatpush.bf16.xpose.msra.mxu0 0
        %5620 = vmatpush.bf16.xpose.msra.mxu0 0
        %5621 = vmatpush.bf16.xpose.msra.mxu0 %v5471
        %5622 = vmatpush.bf16.xpose.msra.mxu0 %v5455
        %5623 = vmatmul.bf16.gmra.mxu0 %v5340
        %v5624 = vpop.f32.mrf.mxu0
        %v5625 = vadd.f32 %v5612, %v5624
        %v5626 = vpop.f32.mrf.mxu0
        %5627 = vdwg.mxu0
        %5628 = vmatpush.bf16.xpose.msra.mxu0 0
        %5629 = vmatpush.bf16.xpose.msra.mxu0 0
        %5630 = vmatpush.bf16.xpose.msra.mxu0 0
        %5631 = vmatpush.bf16.xpose.msra.mxu0 0
        %5632 = vmatpush.bf16.xpose.msra.mxu0 0
        %5633 = vmatpush.bf16.xpose.msra.mxu0 0
        %5634 = vmatpush.bf16.xpose.msra.mxu0 %v5472
        %5635 = vmatpush.bf16.xpose.msra.mxu0 %v5456
        %5636 = vmatmul.bf16.gmra.mxu0 %v5341
        %v5637 = vpop.f32.mrf.mxu0
        %v5638 = vadd.f32 %v5625, %v5637
        %v5639 = vpop.f32.mrf.mxu0
        %5640 = vdwg.mxu0
        %5641 = vmatpush.bf16.xpose.msra.mxu0 0
        %5642 = vmatpush.bf16.xpose.msra.mxu0 0
        %5643 = vmatpush.bf16.xpose.msra.mxu0 0
        %5644 = vmatpush.bf16.xpose.msra.mxu0 0
        %5645 = vmatpush.bf16.xpose.msra.mxu0 0
        %5646 = vmatpush.bf16.xpose.msra.mxu0 0
        %5647 = vmatpush.bf16.xpose.msra.mxu0 %v5473
        %5648 = vmatpush.bf16.xpose.msra.mxu0 %v5457
        %5649 = vmatmul.bf16.gmra.mxu0 %v5342
        %v5650 = vpop.f32.mrf.mxu0
        %v5651 = vadd.f32 %v5638, %v5650
        %v5652 = vpop.f32.mrf.mxu0
        %5653 = vdwg.mxu0
        %5654 = vmatpush.bf16.xpose.msra.mxu0 0
        %5655 = vmatpush.bf16.xpose.msra.mxu0 0
        %5656 = vmatpush.bf16.xpose.msra.mxu0 0
        %5657 = vmatpush.bf16.xpose.msra.mxu0 0
        %5658 = vmatpush.bf16.xpose.msra.mxu0 0
        %5659 = vmatpush.bf16.xpose.msra.mxu0 0
        %5660 = vmatpush.bf16.xpose.msra.mxu0 %v5474
        %5661 = vmatpush.bf16.xpose.msra.mxu0 %v5458
        %5662 = vmatmul.bf16.gmra.mxu0 %v5343
        %v5663 = vpop.f32.mrf.mxu0
        %v5664 = vadd.f32 %v5651, %v5663
        %v5665 = vpop.f32.mrf.mxu0
        %5666 = vdwg.mxu0
        %5667 = vmatpush.bf16.xpose.msra.mxu0 0
        %5668 = vmatpush.bf16.xpose.msra.mxu0 0
        %5669 = vmatpush.bf16.xpose.msra.mxu0 0
        %5670 = vmatpush.bf16.xpose.msra.mxu0 0
        %5671 = vmatpush.bf16.xpose.msra.mxu0 0
        %5672 = vmatpush.bf16.xpose.msra.mxu0 0
        %5673 = vmatpush.bf16.xpose.msra.mxu0 %v5475
        %5674 = vmatpush.bf16.xpose.msra.mxu0 %v5459
        %5675 = vmatmul.bf16.gmra.mxu0 %v5344
        %v5676 = vpop.f32.mrf.mxu0
        %v5677 = vadd.f32 %v5664, %v5676
        %v5678 = vpop.f32.mrf.mxu0
        %5679 = vdwg.mxu0
        %5680 = vmatpush.bf16.xpose.msra.mxu0 0
        %5681 = vmatpush.bf16.xpose.msra.mxu0 0
        %5682 = vmatpush.bf16.xpose.msra.mxu0 0
        %5683 = vmatpush.bf16.xpose.msra.mxu0 0
        %5684 = vmatpush.bf16.xpose.msra.mxu0 0
        %5685 = vmatpush.bf16.xpose.msra.mxu0 0
        %5686 = vmatpush.bf16.xpose.msra.mxu0 %v5476
        %5687 = vmatpush.bf16.xpose.msra.mxu0 %v5460
        %5688 = vmatmul.bf16.gmra.mxu0 %v5345
        %v5689 = vpop.f32.mrf.mxu0
        %v5690 = vadd.f32 %v5677, %v5689
        %v5691 = vpop.f32.mrf.mxu0
        %5692 = vdwg.mxu0
        %5693 = vmatpush.bf16.xpose.msra.mxu0 0
        %5694 = vmatpush.bf16.xpose.msra.mxu0 0
        %5695 = vmatpush.bf16.xpose.msra.mxu0 0
        %5696 = vmatpush.bf16.xpose.msra.mxu0 0
        %5697 = vmatpush.bf16.xpose.msra.mxu0 0
        %5698 = vmatpush.bf16.xpose.msra.mxu0 0
        %5699 = vmatpush.bf16.xpose.msra.mxu0 %v5477
        %5700 = vmatpush.bf16.xpose.msra.mxu0 %v5461
        %5701 = vmatmul.bf16.gmra.mxu0 %v5346
        %v5702 = vpop.f32.mrf.mxu0
        %v5703 = vadd.f32 %v5690, %v5702
        %v5704 = vpop.f32.mrf.mxu0
        %5705 = vdwg.mxu0
        %5706 = vmatpush.bf16.xpose.msra.mxu0 0
        %5707 = vmatpush.bf16.xpose.msra.mxu0 0
        %5708 = vmatpush.bf16.xpose.msra.mxu0 0
        %5709 = vmatpush.bf16.xpose.msra.mxu0 0
        %5710 = vmatpush.bf16.xpose.msra.mxu0 0
        %5711 = vmatpush.bf16.xpose.msra.mxu0 0
        %5712 = vmatpush.bf16.xpose.msra.mxu0 %v5478
        %5713 = vmatpush.bf16.xpose.msra.mxu0 %v5462
        %5714 = vmatmul.bf16.gmra.mxu0 %v5347
        %v5715 = vpop.f32.mrf.mxu0
        %v5716 = vadd.f32 %v5703, %v5715
        %v5717 = vpop.f32.mrf.mxu0
        %5718 = vdwg.mxu0
        %v5719 = vadd.f32 %v5716, %v4842
        %v5720 = vld [vmem:[%s69] sm:$0x1]
        %v5721 = vld [vmem:[%s71] sm:$0x1]
        %v5722 = vsel %vm1298, %v5719, 0.0
        %5723 = vadd.xlane.f32.xlu0 %v5722
        %v5724 = vpop.xlane.xlu0 %5723
        %v5725 = vmul.f32 %v5724, %v1684
        %v5726 = vsub.f32 %v5719, %v5725
        %v5727 = vmul.f32 %v5726, %v5726
        %v5728 = vsel %vm1298, %v5727, 0.0
        %5729 = vadd.xlane.f32.xlu0 %v5728
        %v5730 = vpop.xlane.xlu0 %5729
        %v5731 = vmul.f32 %v5730, %v1684
        %v5732 = vadd.f32 %v5731, 1e-05
        %v5733 = vrsqrt.pop %v5732
        %v5734 = vmul.f32 %v5733, %v5732
        %v5735 = vmul.f32 %v5734, %v5733
        %v5736 = vmul.f32 0.5, %v5735
        %v5737 = vsub.f32 1.5, %v5736
        %v5738 = vmul.f32 %v5733, %v5737
        %vm5739 = vweird.f32 %v5732
        %vm5740 = vweird.f32 %v5733
        %vm5741 = vmor %vm5739, %vm5740
        %v5742 = vsel %vm5741, %v5733, %v5738
        %v5743 = vmul.f32 %v5726, %v5742
        %v5745 = vperm.slane %v5720, 0
        %v5747 = vmul.f32 %v5743, %v5745
        %v5749 = vperm.slane %v5721, 0
        %v5751 = vadd.f32 %v5747, %v5749
        %s5752 = scalar_lea.vmem %s33, 16
        %v5753 = vld [vmem:[%s5752] sm:$0xf]
        %v5754 = vld [vmem:[%s5752 + $0x4] sm:$0xf]
        %v5755 = vld [vmem:[%s5752 + $0x8] sm:$0xf]
        %v5756 = vld [vmem:[%s5752 + $0xc] sm:$0xf]
        %v5757 = vpack.c.bf16 %v5751, %v5751
        %s5758 = scalar_lea.vmem %s35, 1
        %v5759 = vld [vmem:[%s5758] sm:$0x1]
        %v5761 = vperm.slane %v5759, 0
        %v5767 = vunpack.c.l.b16 %v5753
        %v5768 = vunpack.c.l.b16 %v5754
        %v5769 = vunpack.c.l.b16 %v5755
        %v5770 = vunpack.c.l.b16 %v5756
        %v5771 = vpack.c.b16 %v5768, %v5767
        %v5772 = vpack.c.b16 %v5770, %v5769
        %v5776 = vsel %vm1298, %v5757, 0
        %5778 = vmatpush.bf16.msra.mxu0 0
        %5779 = vmatpush.bf16.msra.mxu0 0
        %5780 = vmatpush.bf16.msra.mxu0 0
        %5781 = vmatpush.bf16.msra.mxu0 0
        %5782 = vmatpush.bf16.msra.mxu0 0
        %5783 = vmatpush.bf16.msra.mxu0 0
        %5784 = vmatpush.bf16.msra.mxu0 %v5772
        %5785 = vmatpush.bf16.msra.mxu0 %v5771
        %5786 = vmatmul.bf16.gmra.mxu0 %v5776
        %v5787 = vpop.f32.mrf.mxu0
        %v5788 = vadd.f32 %v5761, %v5787
        %v5789 = vpop.f32.mrf.mxu0
        %5790 = vdwg.mxu0
        %s5791 = scalar_lea.vmem %s37, 16
        %v5792 = vld [vmem:[%s5791] sm:$0xf]
        %v5793 = vld [vmem:[%s5791 + $0x4] sm:$0xf]
        %v5794 = vld [vmem:[%s5791 + $0x8] sm:$0xf]
        %v5795 = vld [vmem:[%s5791 + $0xc] sm:$0xf]
        %v5796 = vmul.f32 %v5788, 0.35355338
        %5798 = vrot.lane.b32.xlu0 %v5788, 96
        %v5799 = vpop.permute.xlu0 %5798
        %v5801 = vsel %vm1326, %v5796, 0
        %v5803 = vsel %vm1326, %v5799, 0
        %5805 = vmatpush.xpose.msra.mxu0 0.0
        %5806 = vmatpush.xpose.msra.mxu0 0.0
        %5807 = vmatpush.xpose.msra.mxu0 0.0
        %5808 = vmatpush.xpose.msra.mxu0 0.0
        %5809 = vmatpush.xpose.msra.mxu0 0.0
        %5810 = vmatpush.xpose.msra.mxu0 0.0
        %5811 = vmatpush.xpose.msra.mxu0 0.0
        %5812 = vmatpush.xpose.msra.mxu0 0.0
        %5813 = vmatpush.xpose.msra.mxu0 0.0
        %5814 = vmatpush.xpose.msra.mxu0 0.0
        %5815 = vmatpush.xpose.msra.mxu0 0.0
        %5816 = vmatpush.xpose.msra.mxu0 0.0
        %5817 = vmatpush.xpose.msra.mxu0 0.0
        %5818 = vmatpush.xpose.msra.mxu0 0.0
        %5819 = vmatpush.xpose.msra.mxu0 0.0
        %5820 = vmatpush.xpose.msra.mxu0 %v5803
        %5821 = vmatmul.f32.gmra.mxu0 %v5801
        %v5822 = vpop.f32.mrf.mxu0
        %v5823 = vadd.f32 %v1276, %v5822
        %5824 = vdwg.mxu0
        %v5825 = vsel %vm1326, %v5823, -inf
        %5826 = vmax.xlane.f32.xlu0 %v5825
        %v5827 = vpop.xlane.xlu0 %5826
        %v5828 = vsub.f32 %v5823, %v5827
        %v5829 = vmul.f32 %v5828, 1.442695
        %v5830 = vpow.pop %v5829
        %v5831 = vsel %vm1326, %v5830, 0.0
        %5832 = vadd.xlane.f32.xlu0 %v5831
        %v5833 = vpop.xlane.xlu0 %5832
        %v5834 = vrcp.pop %v5833
        %5835 = vrot.lane.b32.xlu0 %v5788, 64
        %v5836 = vpop.permute.xlu0 %5835
        %v5839 = vsel %vm1326, %v5830, 0
        %5841 = vmatpush.msra.mxu0 0.0
        %5842 = vmatpush.msra.mxu0 0.0
        %5843 = vmatpush.msra.mxu0 0.0
        %5844 = vmatpush.msra.mxu0 0.0
        %5845 = vmatpush.msra.mxu0 0.0
        %5846 = vmatpush.msra.mxu0 0.0
        %5847 = vmatpush.msra.mxu0 0.0
        %5848 = vmatpush.msra.mxu0 0.0
        %5849 = vmatpush.msra.mxu0 0.0
        %5850 = vmatpush.msra.mxu0 0.0
        %5851 = vmatpush.msra.mxu0 0.0
        %5852 = vmatpush.msra.mxu0 0.0
        %5853 = vmatpush.msra.mxu0 0.0
        %5854 = vmatpush.msra.mxu0 0.0
        %5855 = vmatpush.msra.mxu0 0.0
        %5856 = vmatpush.msra.mxu0 %v5836
        %5857 = vmatmul.f32.gmra.mxu0 %v5839
        %v5858 = vpop.f32.mrf.mxu0
        %v5859 = vadd.f32 0.0, %v5858
        %5860 = vdwg.mxu0
        %v5861 = vmul.f32 %v5859, %v5834
        %v5862 = vpack.c.bf16 %v5861, %v5861
        %5863 = vrot.lane.b32.xlu0 %v5796, 120
        %v5864 = vpop.permute.xlu0 %5863
        %5865 = vrot.lane.b32.xlu0 %v5788, 88
        %v5866 = vpop.permute.xlu0 %5865
        %v5867 = vsel %vm1326, %v5864, 0
        %v5869 = vsel %vm1326, %v5866, 0
        %5871 = vmatpush.xpose.msra.mxu0 0.0
        %5872 = vmatpush.xpose.msra.mxu0 0.0
        %5873 = vmatpush.xpose.msra.mxu0 0.0
        %5874 = vmatpush.xpose.msra.mxu0 0.0
        %5875 = vmatpush.xpose.msra.mxu0 0.0
        %5876 = vmatpush.xpose.msra.mxu0 0.0
        %5877 = vmatpush.xpose.msra.mxu0 0.0
        %5878 = vmatpush.xpose.msra.mxu0 0.0
        %5879 = vmatpush.xpose.msra.mxu0 0.0
        %5880 = vmatpush.xpose.msra.mxu0 0.0
        %5881 = vmatpush.xpose.msra.mxu0 0.0
        %5882 = vmatpush.xpose.msra.mxu0 0.0
        %5883 = vmatpush.xpose.msra.mxu0 0.0
        %5884 = vmatpush.xpose.msra.mxu0 0.0
        %5885 = vmatpush.xpose.msra.mxu0 0.0
        %5886 = vmatpush.xpose.msra.mxu0 %v5869
        %5887 = vmatmul.f32.gmra.mxu0 %v5867
        %v5888 = vpop.f32.mrf.mxu0
        %v5889 = vadd.f32 %v1276, %v5888
        %5890 = vdwg.mxu0
        %v5891 = vsel %vm1326, %v5889, -inf
        %5892 = vmax.xlane.f32.xlu0 %v5891
        %v5893 = vpop.xlane.xlu0 %5892
        %v5894 = vsub.f32 %v5889, %v5893
        %v5895 = vmul.f32 %v5894, 1.442695
        %v5896 = vpow.pop %v5895
        %v5897 = vsel %vm1326, %v5896, 0.0
        %5898 = vadd.xlane.f32.xlu0 %v5897
        %v5899 = vpop.xlane.xlu0 %5898
        %v5900 = vrcp.pop %v5899
        %5901 = vrot.lane.b32.xlu0 %v5788, 56
        %v5902 = vpop.permute.xlu0 %5901
        %v5905 = vsel %vm1326, %v5896, 0
        %5907 = vmatpush.msra.mxu0 0.0
        %5908 = vmatpush.msra.mxu0 0.0
        %5909 = vmatpush.msra.mxu0 0.0
        %5910 = vmatpush.msra.mxu0 0.0
        %5911 = vmatpush.msra.mxu0 0.0
        %5912 = vmatpush.msra.mxu0 0.0
        %5913 = vmatpush.msra.mxu0 0.0
        %5914 = vmatpush.msra.mxu0 0.0
        %5915 = vmatpush.msra.mxu0 0.0
        %5916 = vmatpush.msra.mxu0 0.0
        %5917 = vmatpush.msra.mxu0 0.0
        %5918 = vmatpush.msra.mxu0 0.0
        %5919 = vmatpush.msra.mxu0 0.0
        %5920 = vmatpush.msra.mxu0 0.0
        %5921 = vmatpush.msra.mxu0 0.0
        %5922 = vmatpush.msra.mxu0 %v5902
        %5923 = vmatmul.f32.gmra.mxu0 %v5905
        %v5924 = vpop.f32.mrf.mxu0
        %v5925 = vadd.f32 0.0, %v5924
        %5926 = vdwg.mxu0
        %v5927 = vmul.f32 %v5925, %v5900
        %v5928 = vpack.c.bf16 %v5927, %v5927
        %v5930 = vsel %vm1326, %v5928, 0
        %v5933 = vsel %vm1459, %v5793, 0
        %5935 = vmatpush.bf16.msra.mxu0 0
        %5936 = vmatpush.bf16.msra.mxu0 0
        %5937 = vmatpush.bf16.msra.mxu0 0
        %5938 = vmatpush.bf16.msra.mxu0 0
        %5939 = vmatpush.bf16.msra.mxu0 0
        %5940 = vmatpush.bf16.msra.mxu0 0
        %5941 = vmatpush.bf16.msra.mxu0 0
        %5942 = vmatpush.bf16.msra.mxu0 %v5933
        %5943 = vmatmul.bf16.gmra.mxu0 %v5930
        %v5944 = vpop.f32.mrf.mxu0
        %v5945 = vadd.f32 0.0, %v5944
        %v5946 = vpop.f32.mrf.mxu0
        %5947 = vdwg.mxu0
        %v5949 = vsel %vm1326, %v5862, 0
        %v5952 = vsel %vm1459, %v5792, 0
        %5954 = vmatpush.bf16.msra.mxu0 0
        %5955 = vmatpush.bf16.msra.mxu0 0
        %5956 = vmatpush.bf16.msra.mxu0 0
        %5957 = vmatpush.bf16.msra.mxu0 0
        %5958 = vmatpush.bf16.msra.mxu0 0
        %5959 = vmatpush.bf16.msra.mxu0 0
        %5960 = vmatpush.bf16.msra.mxu0 0
        %5961 = vmatpush.bf16.msra.mxu0 %v5952
        %5962 = vmatmul.bf16.gmra.mxu0 %v5949
        %v5963 = vpop.f32.mrf.mxu0
        %v5964 = vadd.f32 %v5945, %v5963
        %v5965 = vpop.f32.mrf.mxu0
        %5966 = vdwg.mxu0
        %5967 = vrot.lane.b32.xlu0 %v5796, 112
        %v5968 = vpop.permute.xlu0 %5967
        %5969 = vrot.lane.b32.xlu0 %v5788, 80
        %v5970 = vpop.permute.xlu0 %5969
        %v5971 = vsel %vm1326, %v5968, 0
        %v5973 = vsel %vm1326, %v5970, 0
        %5975 = vmatpush.xpose.msra.mxu0 0.0
        %5976 = vmatpush.xpose.msra.mxu0 0.0
        %5977 = vmatpush.xpose.msra.mxu0 0.0
        %5978 = vmatpush.xpose.msra.mxu0 0.0
        %5979 = vmatpush.xpose.msra.mxu0 0.0
        %5980 = vmatpush.xpose.msra.mxu0 0.0
        %5981 = vmatpush.xpose.msra.mxu0 0.0
        %5982 = vmatpush.xpose.msra.mxu0 0.0
        %5983 = vmatpush.xpose.msra.mxu0 0.0
        %5984 = vmatpush.xpose.msra.mxu0 0.0
        %5985 = vmatpush.xpose.msra.mxu0 0.0
        %5986 = vmatpush.xpose.msra.mxu0 0.0
        %5987 = vmatpush.xpose.msra.mxu0 0.0
        %5988 = vmatpush.xpose.msra.mxu0 0.0
        %5989 = vmatpush.xpose.msra.mxu0 0.0
        %5990 = vmatpush.xpose.msra.mxu0 %v5973
        %5991 = vmatmul.f32.gmra.mxu0 %v5971
        %v5992 = vpop.f32.mrf.mxu0
        %v5993 = vadd.f32 %v1276, %v5992
        %5994 = vdwg.mxu0
        %v5995 = vsel %vm1326, %v5993, -inf
        %5996 = vmax.xlane.f32.xlu0 %v5995
        %v5997 = vpop.xlane.xlu0 %5996
        %v5998 = vsub.f32 %v5993, %v5997
        %v5999 = vmul.f32 %v5998, 1.442695
        %v6000 = vpow.pop %v5999
        %v6001 = vsel %vm1326, %v6000, 0.0
        %6002 = vadd.xlane.f32.xlu0 %v6001
        %v6003 = vpop.xlane.xlu0 %6002
        %v6004 = vrcp.pop %v6003
        %6005 = vrot.lane.b32.xlu0 %v5788, 48
        %v6006 = vpop.permute.xlu0 %6005
        %v6009 = vsel %vm1326, %v6000, 0
        %6011 = vmatpush.msra.mxu0 0.0
        %6012 = vmatpush.msra.mxu0 0.0
        %6013 = vmatpush.msra.mxu0 0.0
        %6014 = vmatpush.msra.mxu0 0.0
        %6015 = vmatpush.msra.mxu0 0.0
        %6016 = vmatpush.msra.mxu0 0.0
        %6017 = vmatpush.msra.mxu0 0.0
        %6018 = vmatpush.msra.mxu0 0.0
        %6019 = vmatpush.msra.mxu0 0.0
        %6020 = vmatpush.msra.mxu0 0.0
        %6021 = vmatpush.msra.mxu0 0.0
        %6022 = vmatpush.msra.mxu0 0.0
        %6023 = vmatpush.msra.mxu0 0.0
        %6024 = vmatpush.msra.mxu0 0.0
        %6025 = vmatpush.msra.mxu0 0.0
        %6026 = vmatpush.msra.mxu0 %v6006
        %6027 = vmatmul.f32.gmra.mxu0 %v6009
        %v6028 = vpop.f32.mrf.mxu0
        %v6029 = vadd.f32 0.0, %v6028
        %6030 = vdwg.mxu0
        %v6031 = vmul.f32 %v6029, %v6004
        %v6032 = vpack.c.bf16 %v6031, %v6031
        %v6034 = vsel %vm1326, %v6032, 0
        %v6037 = vsel %vm1459, %v5794, 0
        %6039 = vmatpush.bf16.msra.mxu0 0
        %6040 = vmatpush.bf16.msra.mxu0 0
        %6041 = vmatpush.bf16.msra.mxu0 0
        %6042 = vmatpush.bf16.msra.mxu0 0
        %6043 = vmatpush.bf16.msra.mxu0 0
        %6044 = vmatpush.bf16.msra.mxu0 0
        %6045 = vmatpush.bf16.msra.mxu0 0
        %6046 = vmatpush.bf16.msra.mxu0 %v6037
        %6047 = vmatmul.bf16.gmra.mxu0 %v6034
        %v6048 = vpop.f32.mrf.mxu0
        %v6049 = vadd.f32 0.0, %v6048
        %v6050 = vpop.f32.mrf.mxu0
        %6051 = vdwg.mxu0
        %v6052 = vadd.f32 %v5964, %v6049
        %6053 = vrot.lane.b32.xlu0 %v5796, 104
        %v6054 = vpop.permute.xlu0 %6053
        %6055 = vrot.lane.b32.xlu0 %v5788, 72
        %v6056 = vpop.permute.xlu0 %6055
        %v6057 = vsel %vm1326, %v6054, 0
        %v6059 = vsel %vm1326, %v6056, 0
        %6061 = vmatpush.xpose.msra.mxu0 0.0
        %6062 = vmatpush.xpose.msra.mxu0 0.0
        %6063 = vmatpush.xpose.msra.mxu0 0.0
        %6064 = vmatpush.xpose.msra.mxu0 0.0
        %6065 = vmatpush.xpose.msra.mxu0 0.0
        %6066 = vmatpush.xpose.msra.mxu0 0.0
        %6067 = vmatpush.xpose.msra.mxu0 0.0
        %6068 = vmatpush.xpose.msra.mxu0 0.0
        %6069 = vmatpush.xpose.msra.mxu0 0.0
        %6070 = vmatpush.xpose.msra.mxu0 0.0
        %6071 = vmatpush.xpose.msra.mxu0 0.0
        %6072 = vmatpush.xpose.msra.mxu0 0.0
        %6073 = vmatpush.xpose.msra.mxu0 0.0
        %6074 = vmatpush.xpose.msra.mxu0 0.0
        %6075 = vmatpush.xpose.msra.mxu0 0.0
        %6076 = vmatpush.xpose.msra.mxu0 %v6059
        %6077 = vmatmul.f32.gmra.mxu0 %v6057
        %v6078 = vpop.f32.mrf.mxu0
        %v6079 = vadd.f32 %v1276, %v6078
        %6080 = vdwg.mxu0
        %v6081 = vsel %vm1326, %v6079, -inf
        %6082 = vmax.xlane.f32.xlu0 %v6081
        %v6083 = vpop.xlane.xlu0 %6082
        %v6084 = vsub.f32 %v6079, %v6083
        %v6085 = vmul.f32 %v6084, 1.442695
        %v6086 = vpow.pop %v6085
        %v6087 = vsel %vm1326, %v6086, 0.0
        %6088 = vadd.xlane.f32.xlu0 %v6087
        %v6089 = vpop.xlane.xlu0 %6088
        %v6090 = vrcp.pop %v6089
        %6091 = vrot.lane.b32.xlu0 %v5788, 40
        %v6092 = vpop.permute.xlu0 %6091
        %v6095 = vsel %vm1326, %v6086, 0
        %6097 = vmatpush.msra.mxu0 0.0
        %6098 = vmatpush.msra.mxu0 0.0
        %6099 = vmatpush.msra.mxu0 0.0
        %6100 = vmatpush.msra.mxu0 0.0
        %6101 = vmatpush.msra.mxu0 0.0
        %6102 = vmatpush.msra.mxu0 0.0
        %6103 = vmatpush.msra.mxu0 0.0
        %6104 = vmatpush.msra.mxu0 0.0
        %6105 = vmatpush.msra.mxu0 0.0
        %6106 = vmatpush.msra.mxu0 0.0
        %6107 = vmatpush.msra.mxu0 0.0
        %6108 = vmatpush.msra.mxu0 0.0
        %6109 = vmatpush.msra.mxu0 0.0
        %6110 = vmatpush.msra.mxu0 0.0
        %6111 = vmatpush.msra.mxu0 0.0
        %6112 = vmatpush.msra.mxu0 %v6092
        %6113 = vmatmul.f32.gmra.mxu0 %v6095
        %v6114 = vpop.f32.mrf.mxu0
        %v6115 = vadd.f32 0.0, %v6114
        %6116 = vdwg.mxu0
        %v6117 = vmul.f32 %v6115, %v6090
        %v6118 = vpack.c.bf16 %v6117, %v6117
        %v6120 = vsel %vm1326, %v6118, 0
        %v6123 = vsel %vm1459, %v5795, 0
        %6125 = vmatpush.bf16.msra.mxu0 0
        %6126 = vmatpush.bf16.msra.mxu0 0
        %6127 = vmatpush.bf16.msra.mxu0 0
        %6128 = vmatpush.bf16.msra.mxu0 0
        %6129 = vmatpush.bf16.msra.mxu0 0
        %6130 = vmatpush.bf16.msra.mxu0 0
        %6131 = vmatpush.bf16.msra.mxu0 0
        %6132 = vmatpush.bf16.msra.mxu0 %v6123
        %6133 = vmatmul.bf16.gmra.mxu0 %v6120
        %v6134 = vpop.f32.mrf.mxu0
        %v6135 = vadd.f32 0.0, %v6134
        %v6136 = vpop.f32.mrf.mxu0
        %6137 = vdwg.mxu0
        %v6138 = vadd.f32 %v6052, %v6135
        %s6139 = scalar_lea.vmem %s39, 1
        %v6140 = vld [vmem:[%s6139] sm:$0x1]
        %v6142 = vperm.slane %v6140, 0
        %v6144 = vadd.f32 %v6138, %v6142
        %v6145 = vadd.f32 %v6144, %v5751
        %s6146 = scalar_lea.vmem %s41, 1
        %v6147 = vld [vmem:[%s6146] sm:$0x1]
        %s6148 = scalar_lea.vmem %s43, 1
        %v6149 = vld [vmem:[%s6148] sm:$0x1]
        %v6150 = vsel %vm1298, %v6145, 0.0
        %6151 = vadd.xlane.f32.xlu0 %v6150
        %v6152 = vpop.xlane.xlu0 %6151
        %v6153 = vmul.f32 %v6152, %v1684
        %v6154 = vsub.f32 %v6145, %v6153
        %v6155 = vmul.f32 %v6154, %v6154
        %v6156 = vsel %vm1298, %v6155, 0.0
        %6157 = vadd.xlane.f32.xlu0 %v6156
        %v6158 = vpop.xlane.xlu0 %6157
        %v6159 = vmul.f32 %v6158, %v1684
        %v6160 = vadd.f32 %v6159, 1e-05
        %v6161 = vrsqrt.pop %v6160
        %v6162 = vmul.f32 %v6161, %v6160
        %v6163 = vmul.f32 %v6162, %v6161
        %v6164 = vmul.f32 0.5, %v6163
        %v6165 = vsub.f32 1.5, %v6164
        %v6166 = vmul.f32 %v6161, %v6165
        %vm6167 = vweird.f32 %v6160
        %vm6168 = vweird.f32 %v6161
        %vm6169 = vmor %vm6167, %vm6168
        %v6170 = vsel %vm6169, %v6161, %v6166
        %v6171 = vmul.f32 %v6154, %v6170
        %v6173 = vperm.slane %v6147, 0
        %v6175 = vmul.f32 %v6171, %v6173
        %v6177 = vperm.slane %v6149, 0
        %v6179 = vadd.f32 %v6175, %v6177
        %s6180 = scalar_lea.vmem %s45, 16
        %v6181 = vld [vmem:[%s6180] sm:$0xf]
        %v6182 = vld [vmem:[%s6180 + $0x4] sm:$0xf]
        %v6183 = vld [vmem:[%s6180 + $0x8] sm:$0xf]
        %v6184 = vld [vmem:[%s6180 + $0xc] sm:$0xf]
        %v6185 = vpack.c.bf16 %v6179, %v6179
        %s6186 = scalar_lea.vmem %s47, 1
        %v6187 = vld [vmem:[%s6186] sm:$0x1]
        %v6189 = vperm.slane %v6187, 0
        %v6195 = vunpack.c.l.b16 %v6181
        %v6196 = vunpack.c.l.b16 %v6182
        %v6197 = vunpack.c.l.b16 %v6183
        %v6198 = vunpack.c.l.b16 %v6184
        %v6199 = vpack.c.b16 %v6196, %v6195
        %v6200 = vpack.c.b16 %v6198, %v6197
        %v6204 = vsel %vm1298, %v6185, 0
        %6206 = vmatpush.bf16.msra.mxu0 0
        %6207 = vmatpush.bf16.msra.mxu0 0
        %6208 = vmatpush.bf16.msra.mxu0 0
        %6209 = vmatpush.bf16.msra.mxu0 0
        %6210 = vmatpush.bf16.msra.mxu0 0
        %6211 = vmatpush.bf16.msra.mxu0 0
        %6212 = vmatpush.bf16.msra.mxu0 %v6200
        %6213 = vmatpush.bf16.msra.mxu0 %v6199
        %6214 = vmatmul.bf16.gmra.mxu0 %v6204
        %v6215 = vpop.f32.mrf.mxu0
        %v6216 = vadd.f32 %v6189, %v6215
        %v6217 = vpop.f32.mrf.mxu0
        %6218 = vdwg.mxu0
        %s6219 = scalar_lea.vmem %s49, 16
        %v6220 = vld [vmem:[%s6219] sm:$0xf]
        %v6221 = vld [vmem:[%s6219 + $0x4] sm:$0xf]
        %v6222 = vld [vmem:[%s6219 + $0x8] sm:$0xf]
        %v6223 = vld [vmem:[%s6219 + $0xc] sm:$0xf]
        %s6224 = scalar_lea.vmem %s51, 1
        %v6225 = vld [vmem:[%s6224] sm:$0x1]
        %v6227 = vperm.slane %v6225, 0
        %v6233 = vunpack.c.l.b16 %v6220
        %v6234 = vunpack.c.l.b16 %v6221
        %v6235 = vunpack.c.l.b16 %v6222
        %v6236 = vunpack.c.l.b16 %v6223
        %v6237 = vpack.c.b16 %v6234, %v6233
        %v6238 = vpack.c.b16 %v6236, %v6235
        %6241 = vmatpush.bf16.msra.mxu0 0
        %6242 = vmatpush.bf16.msra.mxu0 0
        %6243 = vmatpush.bf16.msra.mxu0 0
        %6244 = vmatpush.bf16.msra.mxu0 0
        %6245 = vmatpush.bf16.msra.mxu0 0
        %6246 = vmatpush.bf16.msra.mxu0 0
        %6247 = vmatpush.bf16.msra.mxu0 %v6238
        %6248 = vmatpush.bf16.msra.mxu0 %v6237
        %6249 = vmatmul.bf16.gmra.mxu0 %v4445
        %v6250 = vpop.f32.mrf.mxu0
        %v6251 = vadd.f32 %v6227, %v6250
        %v6252 = vpop.f32.mrf.mxu0
        %6253 = vdwg.mxu0
        %s6254 = scalar_lea.vmem %s53, 16
        %v6255 = vld [vmem:[%s6254] sm:$0xf]
        %v6256 = vld [vmem:[%s6254 + $0x4] sm:$0xf]
        %v6257 = vld [vmem:[%s6254 + $0x8] sm:$0xf]
        %v6258 = vld [vmem:[%s6254 + $0xc] sm:$0xf]
        %v6259 = vmul.f32 %v6216, 0.35355338
        %v6261 = vsel %vm1326, %v6259, 0
        %v6264 = vsel %vm1326, %v6251, 0
        %6266 = vmatpush.xpose.msra.mxu0 0.0
        %6267 = vmatpush.xpose.msra.mxu0 0.0
        %6268 = vmatpush.xpose.msra.mxu0 0.0
        %6269 = vmatpush.xpose.msra.mxu0 0.0
        %6270 = vmatpush.xpose.msra.mxu0 0.0
        %6271 = vmatpush.xpose.msra.mxu0 0.0
        %6272 = vmatpush.xpose.msra.mxu0 0.0
        %6273 = vmatpush.xpose.msra.mxu0 0.0
        %6274 = vmatpush.xpose.msra.mxu0 0.0
        %6275 = vmatpush.xpose.msra.mxu0 0.0
        %6276 = vmatpush.xpose.msra.mxu0 0.0
        %6277 = vmatpush.xpose.msra.mxu0 0.0
        %6278 = vmatpush.xpose.msra.mxu0 0.0
        %6279 = vmatpush.xpose.msra.mxu0 0.0
        %6280 = vmatpush.xpose.msra.mxu0 0.0
        %6281 = vmatpush.xpose.msra.mxu0 %v6264
        %6282 = vmatmul.f32.gmra.mxu0 %v6261
        %v6283 = vpop.f32.mrf.mxu0
        %v6284 = vadd.f32 0.0, %v6283
        %6285 = vdwg.mxu0
        %v6286 = vsel %vm1326, %v6284, -inf
        %6287 = vmax.xlane.f32.xlu0 %v6286
        %v6288 = vpop.xlane.xlu0 %6287
        %v6289 = vsub.f32 %v6284, %v6288
        %v6290 = vmul.f32 %v6289, 1.442695
        %v6291 = vpow.pop %v6290
        %v6292 = vsel %vm1326, %v6291, 0.0
        %6293 = vadd.xlane.f32.xlu0 %v6292
        %v6294 = vpop.xlane.xlu0 %6293
        %v6295 = vrcp.pop %v6294
        %6296 = vrot.lane.b32.xlu0 %v6251, 96
        %v6297 = vpop.permute.xlu0 %6296
        %v6300 = vsel %vm1326, %v6291, 0
        %6302 = vmatpush.msra.mxu0 0.0
        %6303 = vmatpush.msra.mxu0 0.0
        %6304 = vmatpush.msra.mxu0 0.0
        %6305 = vmatpush.msra.mxu0 0.0
        %6306 = vmatpush.msra.mxu0 0.0
        %6307 = vmatpush.msra.mxu0 0.0
        %6308 = vmatpush.msra.mxu0 0.0
        %6309 = vmatpush.msra.mxu0 0.0
        %6310 = vmatpush.msra.mxu0 0.0
        %6311 = vmatpush.msra.mxu0 0.0
        %6312 = vmatpush.msra.mxu0 0.0
        %6313 = vmatpush.msra.mxu0 0.0
        %6314 = vmatpush.msra.mxu0 0.0
        %6315 = vmatpush.msra.mxu0 0.0
        %6316 = vmatpush.msra.mxu0 0.0
        %6317 = vmatpush.msra.mxu0 %v6297
        %6318 = vmatmul.f32.gmra.mxu0 %v6300
        %v6319 = vpop.f32.mrf.mxu0
        %v6320 = vadd.f32 0.0, %v6319
        %6321 = vdwg.mxu0
        %v6322 = vmul.f32 %v6320, %v6295
        %v6323 = vpack.c.bf16 %v6322, %v6322
        %6324 = vrot.lane.b32.xlu0 %v6259, 120
        %v6325 = vpop.permute.xlu0 %6324
        %6326 = vrot.lane.b32.xlu0 %v6251, 120
        %v6327 = vpop.permute.xlu0 %6326
        %v6328 = vsel %vm1326, %v6325, 0
        %v6330 = vsel %vm1326, %v6327, 0
        %6332 = vmatpush.xpose.msra.mxu0 0.0
        %6333 = vmatpush.xpose.msra.mxu0 0.0
        %6334 = vmatpush.xpose.msra.mxu0 0.0
        %6335 = vmatpush.xpose.msra.mxu0 0.0
        %6336 = vmatpush.xpose.msra.mxu0 0.0
        %6337 = vmatpush.xpose.msra.mxu0 0.0
        %6338 = vmatpush.xpose.msra.mxu0 0.0
        %6339 = vmatpush.xpose.msra.mxu0 0.0
        %6340 = vmatpush.xpose.msra.mxu0 0.0
        %6341 = vmatpush.xpose.msra.mxu0 0.0
        %6342 = vmatpush.xpose.msra.mxu0 0.0
        %6343 = vmatpush.xpose.msra.mxu0 0.0
        %6344 = vmatpush.xpose.msra.mxu0 0.0
        %6345 = vmatpush.xpose.msra.mxu0 0.0
        %6346 = vmatpush.xpose.msra.mxu0 0.0
        %6347 = vmatpush.xpose.msra.mxu0 %v6330
        %6348 = vmatmul.f32.gmra.mxu0 %v6328
        %v6349 = vpop.f32.mrf.mxu0
        %v6350 = vadd.f32 0.0, %v6349
        %6351 = vdwg.mxu0
        %v6352 = vsel %vm1326, %v6350, -inf
        %6353 = vmax.xlane.f32.xlu0 %v6352
        %v6354 = vpop.xlane.xlu0 %6353
        %v6355 = vsub.f32 %v6350, %v6354
        %v6356 = vmul.f32 %v6355, 1.442695
        %v6357 = vpow.pop %v6356
        %v6358 = vsel %vm1326, %v6357, 0.0
        %6359 = vadd.xlane.f32.xlu0 %v6358
        %v6360 = vpop.xlane.xlu0 %6359
        %v6361 = vrcp.pop %v6360
        %6362 = vrot.lane.b32.xlu0 %v6251, 88
        %v6363 = vpop.permute.xlu0 %6362
        %v6366 = vsel %vm1326, %v6357, 0
        %6368 = vmatpush.msra.mxu0 0.0
        %6369 = vmatpush.msra.mxu0 0.0
        %6370 = vmatpush.msra.mxu0 0.0
        %6371 = vmatpush.msra.mxu0 0.0
        %6372 = vmatpush.msra.mxu0 0.0
        %6373 = vmatpush.msra.mxu0 0.0
        %6374 = vmatpush.msra.mxu0 0.0
        %6375 = vmatpush.msra.mxu0 0.0
        %6376 = vmatpush.msra.mxu0 0.0
        %6377 = vmatpush.msra.mxu0 0.0
        %6378 = vmatpush.msra.mxu0 0.0
        %6379 = vmatpush.msra.mxu0 0.0
        %6380 = vmatpush.msra.mxu0 0.0
        %6381 = vmatpush.msra.mxu0 0.0
        %6382 = vmatpush.msra.mxu0 0.0
        %6383 = vmatpush.msra.mxu0 %v6363
        %6384 = vmatmul.f32.gmra.mxu0 %v6366
        %v6385 = vpop.f32.mrf.mxu0
        %v6386 = vadd.f32 0.0, %v6385
        %6387 = vdwg.mxu0
        %v6388 = vmul.f32 %v6386, %v6361
        %v6389 = vpack.c.bf16 %v6388, %v6388
        %v6391 = vsel %vm1326, %v6389, 0
        %v6394 = vsel %vm1459, %v6256, 0
        %6396 = vmatpush.bf16.msra.mxu0 0
        %6397 = vmatpush.bf16.msra.mxu0 0
        %6398 = vmatpush.bf16.msra.mxu0 0
        %6399 = vmatpush.bf16.msra.mxu0 0
        %6400 = vmatpush.bf16.msra.mxu0 0
        %6401 = vmatpush.bf16.msra.mxu0 0
        %6402 = vmatpush.bf16.msra.mxu0 0
        %6403 = vmatpush.bf16.msra.mxu0 %v6394
        %6404 = vmatmul.bf16.gmra.mxu0 %v6391
        %v6405 = vpop.f32.mrf.mxu0
        %v6406 = vadd.f32 0.0, %v6405
        %v6407 = vpop.f32.mrf.mxu0
        %6408 = vdwg.mxu0
        %v6410 = vsel %vm1326, %v6323, 0
        %v6413 = vsel %vm1459, %v6255, 0
        %6415 = vmatpush.bf16.msra.mxu0 0
        %6416 = vmatpush.bf16.msra.mxu0 0
        %6417 = vmatpush.bf16.msra.mxu0 0
        %6418 = vmatpush.bf16.msra.mxu0 0
        %6419 = vmatpush.bf16.msra.mxu0 0
        %6420 = vmatpush.bf16.msra.mxu0 0
        %6421 = vmatpush.bf16.msra.mxu0 0
        %6422 = vmatpush.bf16.msra.mxu0 %v6413
        %6423 = vmatmul.bf16.gmra.mxu0 %v6410
        %v6424 = vpop.f32.mrf.mxu0
        %v6425 = vadd.f32 %v6406, %v6424
        %v6426 = vpop.f32.mrf.mxu0
        %6427 = vdwg.mxu0
        %6428 = vrot.lane.b32.xlu0 %v6259, 112
        %v6429 = vpop.permute.xlu0 %6428
        %6430 = vrot.lane.b32.xlu0 %v6251, 112
        %v6431 = vpop.permute.xlu0 %6430
        %v6432 = vsel %vm1326, %v6429, 0
        %v6434 = vsel %vm1326, %v6431, 0
        %6436 = vmatpush.xpose.msra.mxu0 0.0
        %6437 = vmatpush.xpose.msra.mxu0 0.0
        %6438 = vmatpush.xpose.msra.mxu0 0.0
        %6439 = vmatpush.xpose.msra.mxu0 0.0
        %6440 = vmatpush.xpose.msra.mxu0 0.0
        %6441 = vmatpush.xpose.msra.mxu0 0.0
        %6442 = vmatpush.xpose.msra.mxu0 0.0
        %6443 = vmatpush.xpose.msra.mxu0 0.0
        %6444 = vmatpush.xpose.msra.mxu0 0.0
        %6445 = vmatpush.xpose.msra.mxu0 0.0
        %6446 = vmatpush.xpose.msra.mxu0 0.0
        %6447 = vmatpush.xpose.msra.mxu0 0.0
        %6448 = vmatpush.xpose.msra.mxu0 0.0
        %6449 = vmatpush.xpose.msra.mxu0 0.0
        %6450 = vmatpush.xpose.msra.mxu0 0.0
        %6451 = vmatpush.xpose.msra.mxu0 %v6434
        %6452 = vmatmul.f32.gmra.mxu0 %v6432
        %v6453 = vpop.f32.mrf.mxu0
        %v6454 = vadd.f32 0.0, %v6453
        %6455 = vdwg.mxu0
        %v6456 = vsel %vm1326, %v6454, -inf
        %6457 = vmax.xlane.f32.xlu0 %v6456
        %v6458 = vpop.xlane.xlu0 %6457
        %v6459 = vsub.f32 %v6454, %v6458
        %v6460 = vmul.f32 %v6459, 1.442695
        %v6461 = vpow.pop %v6460
        %v6462 = vsel %vm1326, %v6461, 0.0
        %6463 = vadd.xlane.f32.xlu0 %v6462
        %v6464 = vpop.xlane.xlu0 %6463
        %v6465 = vrcp.pop %v6464
        %6466 = vrot.lane.b32.xlu0 %v6251, 80
        %v6467 = vpop.permute.xlu0 %6466
        %v6470 = vsel %vm1326, %v6461, 0
        %6472 = vmatpush.msra.mxu0 0.0
        %6473 = vmatpush.msra.mxu0 0.0
        %6474 = vmatpush.msra.mxu0 0.0
        %6475 = vmatpush.msra.mxu0 0.0
        %6476 = vmatpush.msra.mxu0 0.0
        %6477 = vmatpush.msra.mxu0 0.0
        %6478 = vmatpush.msra.mxu0 0.0
        %6479 = vmatpush.msra.mxu0 0.0
        %6480 = vmatpush.msra.mxu0 0.0
        %6481 = vmatpush.msra.mxu0 0.0
        %6482 = vmatpush.msra.mxu0 0.0
        %6483 = vmatpush.msra.mxu0 0.0
        %6484 = vmatpush.msra.mxu0 0.0
        %6485 = vmatpush.msra.mxu0 0.0
        %6486 = vmatpush.msra.mxu0 0.0
        %6487 = vmatpush.msra.mxu0 %v6467
        %6488 = vmatmul.f32.gmra.mxu0 %v6470
        %v6489 = vpop.f32.mrf.mxu0
        %v6490 = vadd.f32 0.0, %v6489
        %6491 = vdwg.mxu0
        %v6492 = vmul.f32 %v6490, %v6465
        %v6493 = vpack.c.bf16 %v6492, %v6492
        %v6495 = vsel %vm1326, %v6493, 0
        %v6498 = vsel %vm1459, %v6257, 0
        %6500 = vmatpush.bf16.msra.mxu0 0
        %6501 = vmatpush.bf16.msra.mxu0 0
        %6502 = vmatpush.bf16.msra.mxu0 0
        %6503 = vmatpush.bf16.msra.mxu0 0
        %6504 = vmatpush.bf16.msra.mxu0 0
        %6505 = vmatpush.bf16.msra.mxu0 0
        %6506 = vmatpush.bf16.msra.mxu0 0
        %6507 = vmatpush.bf16.msra.mxu0 %v6498
        %6508 = vmatmul.bf16.gmra.mxu0 %v6495
        %v6509 = vpop.f32.mrf.mxu0
        %v6510 = vadd.f32 0.0, %v6509
        %v6511 = vpop.f32.mrf.mxu0
        %6512 = vdwg.mxu0
        %v6513 = vadd.f32 %v6425, %v6510
        %6514 = vrot.lane.b32.xlu0 %v6259, 104
        %v6515 = vpop.permute.xlu0 %6514
        %6516 = vrot.lane.b32.xlu0 %v6251, 104
        %v6517 = vpop.permute.xlu0 %6516
        %v6518 = vsel %vm1326, %v6515, 0
        %v6520 = vsel %vm1326, %v6517, 0
        %6522 = vmatpush.xpose.msra.mxu0 0.0
        %6523 = vmatpush.xpose.msra.mxu0 0.0
        %6524 = vmatpush.xpose.msra.mxu0 0.0
        %6525 = vmatpush.xpose.msra.mxu0 0.0
        %6526 = vmatpush.xpose.msra.mxu0 0.0
        %6527 = vmatpush.xpose.msra.mxu0 0.0
        %6528 = vmatpush.xpose.msra.mxu0 0.0
        %6529 = vmatpush.xpose.msra.mxu0 0.0
        %6530 = vmatpush.xpose.msra.mxu0 0.0
        %6531 = vmatpush.xpose.msra.mxu0 0.0
        %6532 = vmatpush.xpose.msra.mxu0 0.0
        %6533 = vmatpush.xpose.msra.mxu0 0.0
        %6534 = vmatpush.xpose.msra.mxu0 0.0
        %6535 = vmatpush.xpose.msra.mxu0 0.0
        %6536 = vmatpush.xpose.msra.mxu0 0.0
        %6537 = vmatpush.xpose.msra.mxu0 %v6520
        %6538 = vmatmul.f32.gmra.mxu0 %v6518
        %v6539 = vpop.f32.mrf.mxu0
        %v6540 = vadd.f32 0.0, %v6539
        %6541 = vdwg.mxu0
        %v6542 = vsel %vm1326, %v6540, -inf
        %6543 = vmax.xlane.f32.xlu0 %v6542
        %v6544 = vpop.xlane.xlu0 %6543
        %v6545 = vsub.f32 %v6540, %v6544
        %v6546 = vmul.f32 %v6545, 1.442695
        %v6547 = vpow.pop %v6546
        %v6548 = vsel %vm1326, %v6547, 0.0
        %6549 = vadd.xlane.f32.xlu0 %v6548
        %v6550 = vpop.xlane.xlu0 %6549
        %v6551 = vrcp.pop %v6550
        %6552 = vrot.lane.b32.xlu0 %v6251, 72
        %v6553 = vpop.permute.xlu0 %6552
        %v6556 = vsel %vm1326, %v6547, 0
        %6558 = vmatpush.msra.mxu0 0.0
        %6559 = vmatpush.msra.mxu0 0.0
        %6560 = vmatpush.msra.mxu0 0.0
        %6561 = vmatpush.msra.mxu0 0.0
        %6562 = vmatpush.msra.mxu0 0.0
        %6563 = vmatpush.msra.mxu0 0.0
        %6564 = vmatpush.msra.mxu0 0.0
        %6565 = vmatpush.msra.mxu0 0.0
        %6566 = vmatpush.msra.mxu0 0.0
        %6567 = vmatpush.msra.mxu0 0.0
        %6568 = vmatpush.msra.mxu0 0.0
        %6569 = vmatpush.msra.mxu0 0.0
        %6570 = vmatpush.msra.mxu0 0.0
        %6571 = vmatpush.msra.mxu0 0.0
        %6572 = vmatpush.msra.mxu0 0.0
        %6573 = vmatpush.msra.mxu0 %v6553
        %6574 = vmatmul.f32.gmra.mxu0 %v6556
        %v6575 = vpop.f32.mrf.mxu0
        %v6576 = vadd.f32 0.0, %v6575
        %6577 = vdwg.mxu0
        %v6578 = vmul.f32 %v6576, %v6551
        %v6579 = vpack.c.bf16 %v6578, %v6578
        %v6581 = vsel %vm1326, %v6579, 0
        %v6584 = vsel %vm1459, %v6258, 0
        %6586 = vmatpush.bf16.msra.mxu0 0
        %6587 = vmatpush.bf16.msra.mxu0 0
        %6588 = vmatpush.bf16.msra.mxu0 0
        %6589 = vmatpush.bf16.msra.mxu0 0
        %6590 = vmatpush.bf16.msra.mxu0 0
        %6591 = vmatpush.bf16.msra.mxu0 0
        %6592 = vmatpush.bf16.msra.mxu0 0
        %6593 = vmatpush.bf16.msra.mxu0 %v6584
        %6594 = vmatmul.bf16.gmra.mxu0 %v6581
        %v6595 = vpop.f32.mrf.mxu0
        %v6596 = vadd.f32 0.0, %v6595
        %v6597 = vpop.f32.mrf.mxu0
        %6598 = vdwg.mxu0
        %v6599 = vadd.f32 %v6513, %v6596
        %s6600 = scalar_lea.vmem %s55, 1
        %v6601 = vld [vmem:[%s6600] sm:$0x1]
        %v6603 = vperm.slane %v6601, 0
        %v6605 = vadd.f32 %v6599, %v6603
        %v6606 = vadd.f32 %v6605, %v6179
        %s6607 = scalar_lea.vmem %s57, 1
        %v6608 = vld [vmem:[%s6607] sm:$0x1]
        %s6609 = scalar_lea.vmem %s59, 1
        %v6610 = vld [vmem:[%s6609] sm:$0x1]
        %v6611 = vsel %vm1298, %v6606, 0.0
        %6612 = vadd.xlane.f32.xlu0 %v6611
        %v6613 = vpop.xlane.xlu0 %6612
        %v6614 = vmul.f32 %v6613, %v1684
        %v6615 = vsub.f32 %v6606, %v6614
        %v6616 = vmul.f32 %v6615, %v6615
        %v6617 = vsel %vm1298, %v6616, 0.0
        %6618 = vadd.xlane.f32.xlu0 %v6617
        %v6619 = vpop.xlane.xlu0 %6618
        %v6620 = vmul.f32 %v6619, %v1684
        %v6621 = vadd.f32 %v6620, 1e-05
        %v6622 = vrsqrt.pop %v6621
        %v6623 = vmul.f32 %v6622, %v6621
        %v6624 = vmul.f32 %v6623, %v6622
        %v6625 = vmul.f32 0.5, %v6624
        %v6626 = vsub.f32 1.5, %v6625
        %v6627 = vmul.f32 %v6622, %v6626
        %vm6628 = vweird.f32 %v6621
        %vm6629 = vweird.f32 %v6622
        %vm6630 = vmor %vm6628, %vm6629
        %v6631 = vsel %vm6630, %v6622, %v6627
        %v6632 = vmul.f32 %v6615, %v6631
        %v6634 = vperm.slane %v6608, 0
        %v6636 = vmul.f32 %v6632, %v6634
        %v6638 = vperm.slane %v6610, 0
        %v6640 = vadd.f32 %v6636, %v6638
        %s6641 = scalar_lea.vmem [#allocation6], 256
        %v6642 = vld [vmem:[%s6641] sm:$0xff]
        %v6643 = vld [vmem:[%s6641 + $0x8] sm:$0xff]
        %v6644 = vld [vmem:[%s6641 + $0x10] sm:$0xff]
        %v6645 = vld [vmem:[%s6641 + $0x18] sm:$0xff]
        %v6646 = vld [vmem:[%s6641 + $0x20] sm:$0xff]
        %v6647 = vld [vmem:[%s6641 + $0x28] sm:$0xff]
        %v6648 = vld [vmem:[%s6641 + $0x30] sm:$0xff]
        %v6649 = vld [vmem:[%s6641 + $0x38] sm:$0xff]
        %v6650 = vld [vmem:[%s6641 + $0x40] sm:$0xff]
        %v6651 = vld [vmem:[%s6641 + $0x48] sm:$0xff]
        %v6652 = vld [vmem:[%s6641 + $0x50] sm:$0xff]
        %v6653 = vld [vmem:[%s6641 + $0x58] sm:$0xff]
        %v6654 = vld [vmem:[%s6641 + $0x60] sm:$0xff]
        %v6655 = vld [vmem:[%s6641 + $0x68] sm:$0xff]
        %v6656 = vld [vmem:[%s6641 + $0x70] sm:$0xff]
        %v6657 = vld [vmem:[%s6641 + $0x78] sm:$0xff]
        %v6658 = vld [vmem:[%s6641 + $0x80] sm:$0xff]
        %v6659 = vld [vmem:[%s6641 + $0x88] sm:$0xff]
        %v6660 = vld [vmem:[%s6641 + $0x90] sm:$0xff]
        %v6661 = vld [vmem:[%s6641 + $0x98] sm:$0xff]
        %v6662 = vld [vmem:[%s6641 + $0xa0] sm:$0xff]
        %v6663 = vld [vmem:[%s6641 + $0xa8] sm:$0xff]
        %v6664 = vld [vmem:[%s6641 + $0xb0] sm:$0xff]
        %v6665 = vld [vmem:[%s6641 + $0xb8] sm:$0xff]
        %v6666 = vld [vmem:[%s6641 + $0xc0] sm:$0xff]
        %v6667 = vld [vmem:[%s6641 + $0xc8] sm:$0xff]
        %v6668 = vld [vmem:[%s6641 + $0xd0] sm:$0xff]
        %v6669 = vld [vmem:[%s6641 + $0xd8] sm:$0xff]
        %v6670 = vld [vmem:[%s6641 + $0xe0] sm:$0xff]
        %v6671 = vld [vmem:[%s6641 + $0xe8] sm:$0xff]
        %v6672 = vld [vmem:[%s6641 + $0xf0] sm:$0xff]
        %v6673 = vld [vmem:[%s6641 + $0xf8] sm:$0xff]
        %s6674 = scalar_lea.vmem %s63, 16
        %v6675 = vld [vmem:[%s6674] sm:$0xff]
        %v6676 = vld [vmem:[%s6674 + $0x8] sm:$0xff]
        %s6677 = scalar_lea.vmem [#allocation7], 256
        %v6678 = vld [vmem:[%s6677] sm:$0xff]
        %v6679 = vld [vmem:[%s6677 + $0x8] sm:$0xff]
        %v6680 = vld [vmem:[%s6677 + $0x10] sm:$0xff]
        %v6681 = vld [vmem:[%s6677 + $0x18] sm:$0xff]
        %v6682 = vld [vmem:[%s6677 + $0x20] sm:$0xff]
        %v6683 = vld [vmem:[%s6677 + $0x28] sm:$0xff]
        %v6684 = vld [vmem:[%s6677 + $0x30] sm:$0xff]
        %v6685 = vld [vmem:[%s6677 + $0x38] sm:$0xff]
        %v6686 = vld [vmem:[%s6677 + $0x40] sm:$0xff]
        %v6687 = vld [vmem:[%s6677 + $0x48] sm:$0xff]
        %v6688 = vld [vmem:[%s6677 + $0x50] sm:$0xff]
        %v6689 = vld [vmem:[%s6677 + $0x58] sm:$0xff]
        %v6690 = vld [vmem:[%s6677 + $0x60] sm:$0xff]
        %v6691 = vld [vmem:[%s6677 + $0x68] sm:$0xff]
        %v6692 = vld [vmem:[%s6677 + $0x70] sm:$0xff]
        %v6693 = vld [vmem:[%s6677 + $0x78] sm:$0xff]
        %v6694 = vld [vmem:[%s6677 + $0x80] sm:$0xff]
        %v6695 = vld [vmem:[%s6677 + $0x88] sm:$0xff]
        %v6696 = vld [vmem:[%s6677 + $0x90] sm:$0xff]
        %v6697 = vld [vmem:[%s6677 + $0x98] sm:$0xff]
        %v6698 = vld [vmem:[%s6677 + $0xa0] sm:$0xff]
        %v6699 = vld [vmem:[%s6677 + $0xa8] sm:$0xff]
        %v6700 = vld [vmem:[%s6677 + $0xb0] sm:$0xff]
        %v6701 = vld [vmem:[%s6677 + $0xb8] sm:$0xff]
        %v6702 = vld [vmem:[%s6677 + $0xc0] sm:$0xff]
        %v6703 = vld [vmem:[%s6677 + $0xc8] sm:$0xff]
        %v6704 = vld [vmem:[%s6677 + $0xd0] sm:$0xff]
        %v6705 = vld [vmem:[%s6677 + $0xd8] sm:$0xff]
        %v6706 = vld [vmem:[%s6677 + $0xe0] sm:$0xff]
        %v6707 = vld [vmem:[%s6677 + $0xe8] sm:$0xff]
        %v6708 = vld [vmem:[%s6677 + $0xf0] sm:$0xff]
        %v6709 = vld [vmem:[%s6677 + $0xf8] sm:$0xff]
        %s6710 = scalar_lea.vmem %s67, 1
        %v6711 = vld [vmem:[%s6710] sm:$0x1]
        %v6712 = vpack.c.bf16 %v6640, %v6640
        %v6715 = vperm.slane %v6675, 0
        %v6716 = vperm.slane %v6675, 1
        %v6717 = vperm.slane %v6675, 2
        %v6718 = vperm.slane %v6675, 3
        %v6719 = vperm.slane %v6675, 4
        %v6720 = vperm.slane %v6675, 5
        %v6721 = vperm.slane %v6675, 6
        %v6722 = vperm.slane %v6675, 7
        %v6723 = vperm.slane %v6676, 0
        %v6724 = vperm.slane %v6676, 1
        %v6725 = vperm.slane %v6676, 2
        %v6726 = vperm.slane %v6676, 3
        %v6727 = vperm.slane %v6676, 4
        %v6728 = vperm.slane %v6676, 5
        %v6729 = vperm.slane %v6676, 6
        %v6730 = vperm.slane %v6676, 7
        %v6779 = vunpack.c.l.b16 %v6642
        %v6780 = vunpack.c.h.b16 %v6642
        %v6781 = vunpack.c.l.b16 %v6643
        %v6782 = vunpack.c.h.b16 %v6643
        %v6783 = vunpack.c.l.b16 %v6644
        %v6784 = vunpack.c.h.b16 %v6644
        %v6785 = vunpack.c.l.b16 %v6645
        %v6786 = vunpack.c.h.b16 %v6645
        %v6787 = vunpack.c.l.b16 %v6646
        %v6788 = vunpack.c.h.b16 %v6646
        %v6789 = vunpack.c.l.b16 %v6647
        %v6790 = vunpack.c.h.b16 %v6647
        %v6791 = vunpack.c.l.b16 %v6648
        %v6792 = vunpack.c.h.b16 %v6648
        %v6793 = vunpack.c.l.b16 %v6649
        %v6794 = vunpack.c.h.b16 %v6649
        %v6795 = vunpack.c.l.b16 %v6650
        %v6796 = vunpack.c.h.b16 %v6650
        %v6797 = vunpack.c.l.b16 %v6651
        %v6798 = vunpack.c.h.b16 %v6651
        %v6799 = vunpack.c.l.b16 %v6652
        %v6800 = vunpack.c.h.b16 %v6652
        %v6801 = vunpack.c.l.b16 %v6653
        %v6802 = vunpack.c.h.b16 %v6653
        %v6803 = vunpack.c.l.b16 %v6654
        %v6804 = vunpack.c.h.b16 %v6654
        %v6805 = vunpack.c.l.b16 %v6655
        %v6806 = vunpack.c.h.b16 %v6655
        %v6807 = vunpack.c.l.b16 %v6656
        %v6808 = vunpack.c.h.b16 %v6656
        %v6809 = vunpack.c.l.b16 %v6657
        %v6810 = vunpack.c.h.b16 %v6657
        %v6811 = vunpack.c.l.b16 %v6658
        %v6812 = vunpack.c.h.b16 %v6658
        %v6813 = vunpack.c.l.b16 %v6659
        %v6814 = vunpack.c.h.b16 %v6659
        %v6815 = vunpack.c.l.b16 %v6660
        %v6816 = vunpack.c.h.b16 %v6660
        %v6817 = vunpack.c.l.b16 %v6661
        %v6818 = vunpack.c.h.b16 %v6661
        %v6819 = vunpack.c.l.b16 %v6662
        %v6820 = vunpack.c.h.b16 %v6662
        %v6821 = vunpack.c.l.b16 %v6663
        %v6822 = vunpack.c.h.b16 %v6663
        %v6823 = vunpack.c.l.b16 %v6664
        %v6824 = vunpack.c.h.b16 %v6664
        %v6825 = vunpack.c.l.b16 %v6665
        %v6826 = vunpack.c.h.b16 %v6665
        %v6827 = vunpack.c.l.b16 %v6666
        %v6828 = vunpack.c.h.b16 %v6666
        %v6829 = vunpack.c.l.b16 %v6667
        %v6830 = vunpack.c.h.b16 %v6667
        %v6831 = vunpack.c.l.b16 %v6668
        %v6832 = vunpack.c.h.b16 %v6668
        %v6833 = vunpack.c.l.b16 %v6669
        %v6834 = vunpack.c.h.b16 %v6669
        %v6835 = vunpack.c.l.b16 %v6670
        %v6836 = vunpack.c.h.b16 %v6670
        %v6837 = vunpack.c.l.b16 %v6671
        %v6838 = vunpack.c.h.b16 %v6671
        %v6839 = vunpack.c.l.b16 %v6672
        %v6840 = vunpack.c.h.b16 %v6672
        %v6841 = vunpack.c.l.b16 %v6673
        %v6842 = vunpack.c.h.b16 %v6673
        %v6843 = vpack.c.b16 %v6795, %v6779
        %v6844 = vpack.c.b16 %v6796, %v6780
        %v6845 = vpack.c.b16 %v6797, %v6781
        %v6846 = vpack.c.b16 %v6798, %v6782
        %v6847 = vpack.c.b16 %v6799, %v6783
        %v6848 = vpack.c.b16 %v6800, %v6784
        %v6849 = vpack.c.b16 %v6801, %v6785
        %v6850 = vpack.c.b16 %v6802, %v6786
        %v6851 = vpack.c.b16 %v6803, %v6787
        %v6852 = vpack.c.b16 %v6804, %v6788
        %v6853 = vpack.c.b16 %v6805, %v6789
        %v6854 = vpack.c.b16 %v6806, %v6790
        %v6855 = vpack.c.b16 %v6807, %v6791
        %v6856 = vpack.c.b16 %v6808, %v6792
        %v6857 = vpack.c.b16 %v6809, %v6793
        %v6858 = vpack.c.b16 %v6810, %v6794
        %v6859 = vpack.c.b16 %v6827, %v6811
        %v6860 = vpack.c.b16 %v6828, %v6812
        %v6861 = vpack.c.b16 %v6829, %v6813
        %v6862 = vpack.c.b16 %v6830, %v6814
        %v6863 = vpack.c.b16 %v6831, %v6815
        %v6864 = vpack.c.b16 %v6832, %v6816
        %v6865 = vpack.c.b16 %v6833, %v6817
        %v6866 = vpack.c.b16 %v6834, %v6818
        %v6867 = vpack.c.b16 %v6835, %v6819
        %v6868 = vpack.c.b16 %v6836, %v6820
        %v6869 = vpack.c.b16 %v6837, %v6821
        %v6870 = vpack.c.b16 %v6838, %v6822
        %v6871 = vpack.c.b16 %v6839, %v6823
        %v6872 = vpack.c.b16 %v6840, %v6824
        %v6873 = vpack.c.b16 %v6841, %v6825
        %v6874 = vpack.c.b16 %v6842, %v6826
        %v6908 = vsel %vm1298, %v6712, 0
        %6910 = vmatpush.bf16.msra.mxu0 0
        %6911 = vmatpush.bf16.msra.mxu0 0
        %6912 = vmatpush.bf16.msra.mxu0 0
        %6913 = vmatpush.bf16.msra.mxu0 0
        %6914 = vmatpush.bf16.msra.mxu0 0
        %6915 = vmatpush.bf16.msra.mxu0 0
        %6916 = vmatpush.bf16.msra.mxu0 %v6859
        %6917 = vmatpush.bf16.msra.mxu0 %v6843
        %6918 = vmatmul.bf16.gmra.mxu0 %v6908
        %v6919 = vpop.f32.mrf.mxu0
        %v6920 = vadd.f32 %v6715, %v6919
        %v6921 = vpop.f32.mrf.mxu0
        %6922 = vdwg.mxu0
        %6923 = vmatpush.bf16.msra.mxu0 0
        %6924 = vmatpush.bf16.msra.mxu0 0
        %6925 = vmatpush.bf16.msra.mxu0 0
        %6926 = vmatpush.bf16.msra.mxu0 0
        %6927 = vmatpush.bf16.msra.mxu0 0
        %6928 = vmatpush.bf16.msra.mxu0 0
        %6929 = vmatpush.bf16.msra.mxu0 %v6860
        %6930 = vmatpush.bf16.msra.mxu0 %v6844
        %6931 = vmatmul.bf16.gmra.mxu0 %v6908
        %v6932 = vpop.f32.mrf.mxu0
        %v6933 = vadd.f32 %v6716, %v6932
        %v6934 = vpop.f32.mrf.mxu0
        %6935 = vdwg.mxu0
        %6936 = vmatpush.bf16.msra.mxu0 0
        %6937 = vmatpush.bf16.msra.mxu0 0
        %6938 = vmatpush.bf16.msra.mxu0 0
        %6939 = vmatpush.bf16.msra.mxu0 0
        %6940 = vmatpush.bf16.msra.mxu0 0
        %6941 = vmatpush.bf16.msra.mxu0 0
        %6942 = vmatpush.bf16.msra.mxu0 %v6861
        %6943 = vmatpush.bf16.msra.mxu0 %v6845
        %6944 = vmatmul.bf16.gmra.mxu0 %v6908
        %v6945 = vpop.f32.mrf.mxu0
        %v6946 = vadd.f32 %v6717, %v6945
        %v6947 = vpop.f32.mrf.mxu0
        %6948 = vdwg.mxu0
        %6949 = vmatpush.bf16.msra.mxu0 0
        %6950 = vmatpush.bf16.msra.mxu0 0
        %6951 = vmatpush.bf16.msra.mxu0 0
        %6952 = vmatpush.bf16.msra.mxu0 0
        %6953 = vmatpush.bf16.msra.mxu0 0
        %6954 = vmatpush.bf16.msra.mxu0 0
        %6955 = vmatpush.bf16.msra.mxu0 %v6862
        %6956 = vmatpush.bf16.msra.mxu0 %v6846
        %6957 = vmatmul.bf16.gmra.mxu0 %v6908
        %v6958 = vpop.f32.mrf.mxu0
        %v6959 = vadd.f32 %v6718, %v6958
        %v6960 = vpop.f32.mrf.mxu0
        %6961 = vdwg.mxu0
        %6962 = vmatpush.bf16.msra.mxu0 0
        %6963 = vmatpush.bf16.msra.mxu0 0
        %6964 = vmatpush.bf16.msra.mxu0 0
        %6965 = vmatpush.bf16.msra.mxu0 0
        %6966 = vmatpush.bf16.msra.mxu0 0
        %6967 = vmatpush.bf16.msra.mxu0 0
        %6968 = vmatpush.bf16.msra.mxu0 %v6863
        %6969 = vmatpush.bf16.msra.mxu0 %v6847
        %6970 = vmatmul.bf16.gmra.mxu0 %v6908
        %v6971 = vpop.f32.mrf.mxu0
        %v6972 = vadd.f32 %v6719, %v6971
        %v6973 = vpop.f32.mrf.mxu0
        %6974 = vdwg.mxu0
        %6975 = vmatpush.bf16.msra.mxu0 0
        %6976 = vmatpush.bf16.msra.mxu0 0
        %6977 = vmatpush.bf16.msra.mxu0 0
        %6978 = vmatpush.bf16.msra.mxu0 0
        %6979 = vmatpush.bf16.msra.mxu0 0
        %6980 = vmatpush.bf16.msra.mxu0 0
        %6981 = vmatpush.bf16.msra.mxu0 %v6864
        %6982 = vmatpush.bf16.msra.mxu0 %v6848
        %6983 = vmatmul.bf16.gmra.mxu0 %v6908
        %v6984 = vpop.f32.mrf.mxu0
        %v6985 = vadd.f32 %v6720, %v6984
        %v6986 = vpop.f32.mrf.mxu0
        %6987 = vdwg.mxu0
        %6988 = vmatpush.bf16.msra.mxu0 0
        %6989 = vmatpush.bf16.msra.mxu0 0
        %6990 = vmatpush.bf16.msra.mxu0 0
        %6991 = vmatpush.bf16.msra.mxu0 0
        %6992 = vmatpush.bf16.msra.mxu0 0
        %6993 = vmatpush.bf16.msra.mxu0 0
        %6994 = vmatpush.bf16.msra.mxu0 %v6865
        %6995 = vmatpush.bf16.msra.mxu0 %v6849
        %6996 = vmatmul.bf16.gmra.mxu0 %v6908
        %v6997 = vpop.f32.mrf.mxu0
        %v6998 = vadd.f32 %v6721, %v6997
        %v6999 = vpop.f32.mrf.mxu0
        %7000 = vdwg.mxu0
        %7001 = vmatpush.bf16.msra.mxu0 0
        %7002 = vmatpush.bf16.msra.mxu0 0
        %7003 = vmatpush.bf16.msra.mxu0 0
        %7004 = vmatpush.bf16.msra.mxu0 0
        %7005 = vmatpush.bf16.msra.mxu0 0
        %7006 = vmatpush.bf16.msra.mxu0 0
        %7007 = vmatpush.bf16.msra.mxu0 %v6866
        %7008 = vmatpush.bf16.msra.mxu0 %v6850
        %7009 = vmatmul.bf16.gmra.mxu0 %v6908
        %v7010 = vpop.f32.mrf.mxu0
        %v7011 = vadd.f32 %v6722, %v7010
        %v7012 = vpop.f32.mrf.mxu0
        %7013 = vdwg.mxu0
        %7014 = vmatpush.bf16.msra.mxu0 0
        %7015 = vmatpush.bf16.msra.mxu0 0
        %7016 = vmatpush.bf16.msra.mxu0 0
        %7017 = vmatpush.bf16.msra.mxu0 0
        %7018 = vmatpush.bf16.msra.mxu0 0
        %7019 = vmatpush.bf16.msra.mxu0 0
        %7020 = vmatpush.bf16.msra.mxu0 %v6867
        %7021 = vmatpush.bf16.msra.mxu0 %v6851
        %7022 = vmatmul.bf16.gmra.mxu0 %v6908
        %v7023 = vpop.f32.mrf.mxu0
        %v7024 = vadd.f32 %v6723, %v7023
        %v7025 = vpop.f32.mrf.mxu0
        %7026 = vdwg.mxu0
        %7027 = vmatpush.bf16.msra.mxu0 0
        %7028 = vmatpush.bf16.msra.mxu0 0
        %7029 = vmatpush.bf16.msra.mxu0 0
        %7030 = vmatpush.bf16.msra.mxu0 0
        %7031 = vmatpush.bf16.msra.mxu0 0
        %7032 = vmatpush.bf16.msra.mxu0 0
        %7033 = vmatpush.bf16.msra.mxu0 %v6868
        %7034 = vmatpush.bf16.msra.mxu0 %v6852
        %7035 = vmatmul.bf16.gmra.mxu0 %v6908
        %v7036 = vpop.f32.mrf.mxu0
        %v7037 = vadd.f32 %v6724, %v7036
        %v7038 = vpop.f32.mrf.mxu0
        %7039 = vdwg.mxu0
        %7040 = vmatpush.bf16.msra.mxu0 0
        %7041 = vmatpush.bf16.msra.mxu0 0
        %7042 = vmatpush.bf16.msra.mxu0 0
        %7043 = vmatpush.bf16.msra.mxu0 0
        %7044 = vmatpush.bf16.msra.mxu0 0
        %7045 = vmatpush.bf16.msra.mxu0 0
        %7046 = vmatpush.bf16.msra.mxu0 %v6869
        %7047 = vmatpush.bf16.msra.mxu0 %v6853
        %7048 = vmatmul.bf16.gmra.mxu0 %v6908
        %v7049 = vpop.f32.mrf.mxu0
        %v7050 = vadd.f32 %v6725, %v7049
        %v7051 = vpop.f32.mrf.mxu0
        %7052 = vdwg.mxu0
        %7053 = vmatpush.bf16.msra.mxu0 0
        %7054 = vmatpush.bf16.msra.mxu0 0
        %7055 = vmatpush.bf16.msra.mxu0 0
        %7056 = vmatpush.bf16.msra.mxu0 0
        %7057 = vmatpush.bf16.msra.mxu0 0
        %7058 = vmatpush.bf16.msra.mxu0 0
        %7059 = vmatpush.bf16.msra.mxu0 %v6870
        %7060 = vmatpush.bf16.msra.mxu0 %v6854
        %7061 = vmatmul.bf16.gmra.mxu0 %v6908
        %v7062 = vpop.f32.mrf.mxu0
        %v7063 = vadd.f32 %v6726, %v7062
        %v7064 = vpop.f32.mrf.mxu0
        %7065 = vdwg.mxu0
        %7066 = vmatpush.bf16.msra.mxu0 0
        %7067 = vmatpush.bf16.msra.mxu0 0
        %7068 = vmatpush.bf16.msra.mxu0 0
        %7069 = vmatpush.bf16.msra.mxu0 0
        %7070 = vmatpush.bf16.msra.mxu0 0
        %7071 = vmatpush.bf16.msra.mxu0 0
        %7072 = vmatpush.bf16.msra.mxu0 %v6871
        %7073 = vmatpush.bf16.msra.mxu0 %v6855
        %7074 = vmatmul.bf16.gmra.mxu0 %v6908
        %v7075 = vpop.f32.mrf.mxu0
        %v7076 = vadd.f32 %v6727, %v7075
        %v7077 = vpop.f32.mrf.mxu0
        %7078 = vdwg.mxu0
        %7079 = vmatpush.bf16.msra.mxu0 0
        %7080 = vmatpush.bf16.msra.mxu0 0
        %7081 = vmatpush.bf16.msra.mxu0 0
        %7082 = vmatpush.bf16.msra.mxu0 0
        %7083 = vmatpush.bf16.msra.mxu0 0
        %7084 = vmatpush.bf16.msra.mxu0 0
        %7085 = vmatpush.bf16.msra.mxu0 %v6872
        %7086 = vmatpush.bf16.msra.mxu0 %v6856
        %7087 = vmatmul.bf16.gmra.mxu0 %v6908
        %v7088 = vpop.f32.mrf.mxu0
        %v7089 = vadd.f32 %v6728, %v7088
        %v7090 = vpop.f32.mrf.mxu0
        %7091 = vdwg.mxu0
        %7092 = vmatpush.bf16.msra.mxu0 0
        %7093 = vmatpush.bf16.msra.mxu0 0
        %7094 = vmatpush.bf16.msra.mxu0 0
        %7095 = vmatpush.bf16.msra.mxu0 0
        %7096 = vmatpush.bf16.msra.mxu0 0
        %7097 = vmatpush.bf16.msra.mxu0 0
        %7098 = vmatpush.bf16.msra.mxu0 %v6873
        %7099 = vmatpush.bf16.msra.mxu0 %v6857
        %7100 = vmatmul.bf16.gmra.mxu0 %v6908
        %v7101 = vpop.f32.mrf.mxu0
        %v7102 = vadd.f32 %v6729, %v7101
        %v7103 = vpop.f32.mrf.mxu0
        %7104 = vdwg.mxu0
        %7105 = vmatpush.bf16.msra.mxu0 0
        %7106 = vmatpush.bf16.msra.mxu0 0
        %7107 = vmatpush.bf16.msra.mxu0 0
        %7108 = vmatpush.bf16.msra.mxu0 0
        %7109 = vmatpush.bf16.msra.mxu0 0
        %7110 = vmatpush.bf16.msra.mxu0 0
        %7111 = vmatpush.bf16.msra.mxu0 %v6874
        %7112 = vmatpush.bf16.msra.mxu0 %v6858
        %7113 = vmatmul.bf16.gmra.mxu0 %v6908
        %v7114 = vpop.f32.mrf.mxu0
        %v7115 = vadd.f32 %v6730, %v7114
        %v7116 = vpop.f32.mrf.mxu0
        %7117 = vdwg.mxu0
        %v7118 = vmax.f32 %v6920, 0.0
        %v7119 = vmax.f32 %v6933, 0.0
        %v7120 = vmax.f32 %v6946, 0.0
        %v7121 = vmax.f32 %v6959, 0.0
        %v7122 = vmax.f32 %v6972, 0.0
        %v7123 = vmax.f32 %v6985, 0.0
        %v7124 = vmax.f32 %v6998, 0.0
        %v7125 = vmax.f32 %v7011, 0.0
        %v7126 = vmax.f32 %v7024, 0.0
        %v7127 = vmax.f32 %v7037, 0.0
        %v7128 = vmax.f32 %v7050, 0.0
        %v7129 = vmax.f32 %v7063, 0.0
        %v7130 = vmax.f32 %v7076, 0.0
        %v7131 = vmax.f32 %v7089, 0.0
        %v7132 = vmax.f32 %v7102, 0.0
        %v7133 = vmax.f32 %v7115, 0.0
        %v7134 = vpack.c.bf16 %v7118, %v7118
        %v7135 = vpack.c.bf16 %v7119, %v7119
        %v7136 = vpack.c.bf16 %v7120, %v7120
        %v7137 = vpack.c.bf16 %v7121, %v7121
        %v7138 = vpack.c.bf16 %v7122, %v7122
        %v7139 = vpack.c.bf16 %v7123, %v7123
        %v7140 = vpack.c.bf16 %v7124, %v7124
        %v7141 = vpack.c.bf16 %v7125, %v7125
        %v7142 = vpack.c.bf16 %v7126, %v7126
        %v7143 = vpack.c.bf16 %v7127, %v7127
        %v7144 = vpack.c.bf16 %v7128, %v7128
        %v7145 = vpack.c.bf16 %v7129, %v7129
        %v7146 = vpack.c.bf16 %v7130, %v7130
        %v7147 = vpack.c.bf16 %v7131, %v7131
        %v7148 = vpack.c.bf16 %v7132, %v7132
        %v7149 = vpack.c.bf16 %v7133, %v7133
        %v7151 = vperm.slane %v6711, 0
        %v7185 = vunpack.c.l.b16 %v6678
        %v7186 = vunpack.c.h.b16 %v6678
        %v7187 = vunpack.c.l.b16 %v6679
        %v7188 = vunpack.c.h.b16 %v6679
        %v7189 = vunpack.c.l.b16 %v6680
        %v7190 = vunpack.c.h.b16 %v6680
        %v7191 = vunpack.c.l.b16 %v6681
        %v7192 = vunpack.c.h.b16 %v6681
        %v7193 = vunpack.c.l.b16 %v6682
        %v7194 = vunpack.c.h.b16 %v6682
        %v7195 = vunpack.c.l.b16 %v6683
        %v7196 = vunpack.c.h.b16 %v6683
        %v7197 = vunpack.c.l.b16 %v6684
        %v7198 = vunpack.c.h.b16 %v6684
        %v7199 = vunpack.c.l.b16 %v6685
        %v7200 = vunpack.c.h.b16 %v6685
        %v7201 = vunpack.c.l.b16 %v6686
        %v7202 = vunpack.c.h.b16 %v6686
        %v7203 = vunpack.c.l.b16 %v6687
        %v7204 = vunpack.c.h.b16 %v6687
        %v7205 = vunpack.c.l.b16 %v6688
        %v7206 = vunpack.c.h.b16 %v6688
        %v7207 = vunpack.c.l.b16 %v6689
        %v7208 = vunpack.c.h.b16 %v6689
        %v7209 = vunpack.c.l.b16 %v6690
        %v7210 = vunpack.c.h.b16 %v6690
        %v7211 = vunpack.c.l.b16 %v6691
        %v7212 = vunpack.c.h.b16 %v6691
        %v7213 = vunpack.c.l.b16 %v6692
        %v7214 = vunpack.c.h.b16 %v6692
        %v7215 = vunpack.c.l.b16 %v6693
        %v7216 = vunpack.c.h.b16 %v6693
        %v7217 = vunpack.c.l.b16 %v6694
        %v7218 = vunpack.c.h.b16 %v6694
        %v7219 = vunpack.c.l.b16 %v6695
        %v7220 = vunpack.c.h.b16 %v6695
        %v7221 = vunpack.c.l.b16 %v6696
        %v7222 = vunpack.c.h.b16 %v6696
        %v7223 = vunpack.c.l.b16 %v6697
        %v7224 = vunpack.c.h.b16 %v6697
        %v7225 = vunpack.c.l.b16 %v6698
        %v7226 = vunpack.c.h.b16 %v6698
        %v7227 = vunpack.c.l.b16 %v6699
        %v7228 = vunpack.c.h.b16 %v6699
        %v7229 = vunpack.c.l.b16 %v6700
        %v7230 = vunpack.c.h.b16 %v6700
        %v7231 = vunpack.c.l.b16 %v6701
        %v7232 = vunpack.c.h.b16 %v6701
        %v7233 = vunpack.c.l.b16 %v6702
        %v7234 = vunpack.c.h.b16 %v6702
        %v7235 = vunpack.c.l.b16 %v6703
        %v7236 = vunpack.c.h.b16 %v6703
        %v7237 = vunpack.c.l.b16 %v6704
        %v7238 = vunpack.c.h.b16 %v6704
        %v7239 = vunpack.c.l.b16 %v6705
        %v7240 = vunpack.c.h.b16 %v6705
        %v7241 = vunpack.c.l.b16 %v6706
        %v7242 = vunpack.c.h.b16 %v6706
        %v7243 = vunpack.c.l.b16 %v6707
        %v7244 = vunpack.c.h.b16 %v6707
        %v7245 = vunpack.c.l.b16 %v6708
        %v7246 = vunpack.c.h.b16 %v6708
        %v7247 = vunpack.c.l.b16 %v6709
        %v7248 = vunpack.c.h.b16 %v6709
        %v7249 = vpack.c.b16 %v7201, %v7185
        %v7250 = vpack.c.b16 %v7202, %v7186
        %v7251 = vpack.c.b16 %v7203, %v7187
        %v7252 = vpack.c.b16 %v7204, %v7188
        %v7253 = vpack.c.b16 %v7205, %v7189
        %v7254 = vpack.c.b16 %v7206, %v7190
        %v7255 = vpack.c.b16 %v7207, %v7191
        %v7256 = vpack.c.b16 %v7208, %v7192
        %v7257 = vpack.c.b16 %v7209, %v7193
        %v7258 = vpack.c.b16 %v7210, %v7194
        %v7259 = vpack.c.b16 %v7211, %v7195
        %v7260 = vpack.c.b16 %v7212, %v7196
        %v7261 = vpack.c.b16 %v7213, %v7197
        %v7262 = vpack.c.b16 %v7214, %v7198
        %v7263 = vpack.c.b16 %v7215, %v7199
        %v7264 = vpack.c.b16 %v7216, %v7200
        %v7265 = vpack.c.b16 %v7233, %v7217
        %v7266 = vpack.c.b16 %v7234, %v7218
        %v7267 = vpack.c.b16 %v7235, %v7219
        %v7268 = vpack.c.b16 %v7236, %v7220
        %v7269 = vpack.c.b16 %v7237, %v7221
        %v7270 = vpack.c.b16 %v7238, %v7222
        %v7271 = vpack.c.b16 %v7239, %v7223
        %v7272 = vpack.c.b16 %v7240, %v7224
        %v7273 = vpack.c.b16 %v7241, %v7225
        %v7274 = vpack.c.b16 %v7242, %v7226
        %v7275 = vpack.c.b16 %v7243, %v7227
        %v7276 = vpack.c.b16 %v7244, %v7228
        %v7277 = vpack.c.b16 %v7245, %v7229
        %v7278 = vpack.c.b16 %v7246, %v7230
        %v7279 = vpack.c.b16 %v7247, %v7231
        %v7280 = vpack.c.b16 %v7248, %v7232
        %7313 = vmatpush.bf16.xpose.msra.mxu0 0
        %7314 = vmatpush.bf16.xpose.msra.mxu0 0
        %7315 = vmatpush.bf16.xpose.msra.mxu0 0
        %7316 = vmatpush.bf16.xpose.msra.mxu0 0
        %7317 = vmatpush.bf16.xpose.msra.mxu0 0
        %7318 = vmatpush.bf16.xpose.msra.mxu0 0
        %7319 = vmatpush.bf16.xpose.msra.mxu0 %v7265
        %7320 = vmatpush.bf16.xpose.msra.mxu0 %v7249
        %7321 = vmatmul.bf16.gmra.mxu0 %v7134
        %v7322 = vpop.f32.mrf.mxu0
        %v7323 = vadd.f32 %v7151, %v7322
        %v7324 = vpop.f32.mrf.mxu0
        %7325 = vdwg.mxu0
        %7326 = vmatpush.bf16.xpose.msra.mxu0 0
        %7327 = vmatpush.bf16.xpose.msra.mxu0 0
        %7328 = vmatpush.bf16.xpose.msra.mxu0 0
        %7329 = vmatpush.bf16.xpose.msra.mxu0 0
        %7330 = vmatpush.bf16.xpose.msra.mxu0 0
        %7331 = vmatpush.bf16.xpose.msra.mxu0 0
        %7332 = vmatpush.bf16.xpose.msra.mxu0 %v7266
        %7333 = vmatpush.bf16.xpose.msra.mxu0 %v7250
        %7334 = vmatmul.bf16.gmra.mxu0 %v7135
        %v7335 = vpop.f32.mrf.mxu0
        %v7336 = vadd.f32 %v7323, %v7335
        %v7337 = vpop.f32.mrf.mxu0
        %7338 = vdwg.mxu0
        %7339 = vmatpush.bf16.xpose.msra.mxu0 0
        %7340 = vmatpush.bf16.xpose.msra.mxu0 0
        %7341 = vmatpush.bf16.xpose.msra.mxu0 0
        %7342 = vmatpush.bf16.xpose.msra.mxu0 0
        %7343 = vmatpush.bf16.xpose.msra.mxu0 0
        %7344 = vmatpush.bf16.xpose.msra.mxu0 0
        %7345 = vmatpush.bf16.xpose.msra.mxu0 %v7267
        %7346 = vmatpush.bf16.xpose.msra.mxu0 %v7251
        %7347 = vmatmul.bf16.gmra.mxu0 %v7136
        %v7348 = vpop.f32.mrf.mxu0
        %v7349 = vadd.f32 %v7336, %v7348
        %v7350 = vpop.f32.mrf.mxu0
        %7351 = vdwg.mxu0
        %7352 = vmatpush.bf16.xpose.msra.mxu0 0
        %7353 = vmatpush.bf16.xpose.msra.mxu0 0
        %7354 = vmatpush.bf16.xpose.msra.mxu0 0
        %7355 = vmatpush.bf16.xpose.msra.mxu0 0
        %7356 = vmatpush.bf16.xpose.msra.mxu0 0
        %7357 = vmatpush.bf16.xpose.msra.mxu0 0
        %7358 = vmatpush.bf16.xpose.msra.mxu0 %v7268
        %7359 = vmatpush.bf16.xpose.msra.mxu0 %v7252
        %7360 = vmatmul.bf16.gmra.mxu0 %v7137
        %v7361 = vpop.f32.mrf.mxu0
        %v7362 = vadd.f32 %v7349, %v7361
        %v7363 = vpop.f32.mrf.mxu0
        %7364 = vdwg.mxu0
        %7365 = vmatpush.bf16.xpose.msra.mxu0 0
        %7366 = vmatpush.bf16.xpose.msra.mxu0 0
        %7367 = vmatpush.bf16.xpose.msra.mxu0 0
        %7368 = vmatpush.bf16.xpose.msra.mxu0 0
        %7369 = vmatpush.bf16.xpose.msra.mxu0 0
        %7370 = vmatpush.bf16.xpose.msra.mxu0 0
        %7371 = vmatpush.bf16.xpose.msra.mxu0 %v7269
        %7372 = vmatpush.bf16.xpose.msra.mxu0 %v7253
        %7373 = vmatmul.bf16.gmra.mxu0 %v7138
        %v7374 = vpop.f32.mrf.mxu0
        %v7375 = vadd.f32 %v7362, %v7374
        %v7376 = vpop.f32.mrf.mxu0
        %7377 = vdwg.mxu0
        %7378 = vmatpush.bf16.xpose.msra.mxu0 0
        %7379 = vmatpush.bf16.xpose.msra.mxu0 0
        %7380 = vmatpush.bf16.xpose.msra.mxu0 0
        %7381 = vmatpush.bf16.xpose.msra.mxu0 0
        %7382 = vmatpush.bf16.xpose.msra.mxu0 0
        %7383 = vmatpush.bf16.xpose.msra.mxu0 0
        %7384 = vmatpush.bf16.xpose.msra.mxu0 %v7270
        %7385 = vmatpush.bf16.xpose.msra.mxu0 %v7254
        %7386 = vmatmul.bf16.gmra.mxu0 %v7139
        %v7387 = vpop.f32.mrf.mxu0
        %v7388 = vadd.f32 %v7375, %v7387
        %v7389 = vpop.f32.mrf.mxu0
        %7390 = vdwg.mxu0
        %7391 = vmatpush.bf16.xpose.msra.mxu0 0
        %7392 = vmatpush.bf16.xpose.msra.mxu0 0
        %7393 = vmatpush.bf16.xpose.msra.mxu0 0
        %7394 = vmatpush.bf16.xpose.msra.mxu0 0
        %7395 = vmatpush.bf16.xpose.msra.mxu0 0
        %7396 = vmatpush.bf16.xpose.msra.mxu0 0
        %7397 = vmatpush.bf16.xpose.msra.mxu0 %v7271
        %7398 = vmatpush.bf16.xpose.msra.mxu0 %v7255
        %7399 = vmatmul.bf16.gmra.mxu0 %v7140
        %v7400 = vpop.f32.mrf.mxu0
        %v7401 = vadd.f32 %v7388, %v7400
        %v7402 = vpop.f32.mrf.mxu0
        %7403 = vdwg.mxu0
        %7404 = vmatpush.bf16.xpose.msra.mxu0 0
        %7405 = vmatpush.bf16.xpose.msra.mxu0 0
        %7406 = vmatpush.bf16.xpose.msra.mxu0 0
        %7407 = vmatpush.bf16.xpose.msra.mxu0 0
        %7408 = vmatpush.bf16.xpose.msra.mxu0 0
        %7409 = vmatpush.bf16.xpose.msra.mxu0 0
        %7410 = vmatpush.bf16.xpose.msra.mxu0 %v7272
        %7411 = vmatpush.bf16.xpose.msra.mxu0 %v7256
        %7412 = vmatmul.bf16.gmra.mxu0 %v7141
        %v7413 = vpop.f32.mrf.mxu0
        %v7414 = vadd.f32 %v7401, %v7413
        %v7415 = vpop.f32.mrf.mxu0
        %7416 = vdwg.mxu0
        %7417 = vmatpush.bf16.xpose.msra.mxu0 0
        %7418 = vmatpush.bf16.xpose.msra.mxu0 0
        %7419 = vmatpush.bf16.xpose.msra.mxu0 0
        %7420 = vmatpush.bf16.xpose.msra.mxu0 0
        %7421 = vmatpush.bf16.xpose.msra.mxu0 0
        %7422 = vmatpush.bf16.xpose.msra.mxu0 0
        %7423 = vmatpush.bf16.xpose.msra.mxu0 %v7273
        %7424 = vmatpush.bf16.xpose.msra.mxu0 %v7257
        %7425 = vmatmul.bf16.gmra.mxu0 %v7142
        %v7426 = vpop.f32.mrf.mxu0
        %v7427 = vadd.f32 %v7414, %v7426
        %v7428 = vpop.f32.mrf.mxu0
        %7429 = vdwg.mxu0
        %7430 = vmatpush.bf16.xpose.msra.mxu0 0
        %7431 = vmatpush.bf16.xpose.msra.mxu0 0
        %7432 = vmatpush.bf16.xpose.msra.mxu0 0
        %7433 = vmatpush.bf16.xpose.msra.mxu0 0
        %7434 = vmatpush.bf16.xpose.msra.mxu0 0
        %7435 = vmatpush.bf16.xpose.msra.mxu0 0
        %7436 = vmatpush.bf16.xpose.msra.mxu0 %v7274
        %7437 = vmatpush.bf16.xpose.msra.mxu0 %v7258
        %7438 = vmatmul.bf16.gmra.mxu0 %v7143
        %v7439 = vpop.f32.mrf.mxu0
        %v7440 = vadd.f32 %v7427, %v7439
        %v7441 = vpop.f32.mrf.mxu0
        %7442 = vdwg.mxu0
        %7443 = vmatpush.bf16.xpose.msra.mxu0 0
        %7444 = vmatpush.bf16.xpose.msra.mxu0 0
        %7445 = vmatpush.bf16.xpose.msra.mxu0 0
        %7446 = vmatpush.bf16.xpose.msra.mxu0 0
        %7447 = vmatpush.bf16.xpose.msra.mxu0 0
        %7448 = vmatpush.bf16.xpose.msra.mxu0 0
        %7449 = vmatpush.bf16.xpose.msra.mxu0 %v7275
        %7450 = vmatpush.bf16.xpose.msra.mxu0 %v7259
        %7451 = vmatmul.bf16.gmra.mxu0 %v7144
        %v7452 = vpop.f32.mrf.mxu0
        %v7453 = vadd.f32 %v7440, %v7452
        %v7454 = vpop.f32.mrf.mxu0
        %7455 = vdwg.mxu0
        %7456 = vmatpush.bf16.xpose.msra.mxu0 0
        %7457 = vmatpush.bf16.xpose.msra.mxu0 0
        %7458 = vmatpush.bf16.xpose.msra.mxu0 0
        %7459 = vmatpush.bf16.xpose.msra.mxu0 0
        %7460 = vmatpush.bf16.xpose.msra.mxu0 0
        %7461 = vmatpush.bf16.xpose.msra.mxu0 0
        %7462 = vmatpush.bf16.xpose.msra.mxu0 %v7276
        %7463 = vmatpush.bf16.xpose.msra.mxu0 %v7260
        %7464 = vmatmul.bf16.gmra.mxu0 %v7145
        %v7465 = vpop.f32.mrf.mxu0
        %v7466 = vadd.f32 %v7453, %v7465
        %v7467 = vpop.f32.mrf.mxu0
        %7468 = vdwg.mxu0
        %7469 = vmatpush.bf16.xpose.msra.mxu0 0
        %7470 = vmatpush.bf16.xpose.msra.mxu0 0
        %7471 = vmatpush.bf16.xpose.msra.mxu0 0
        %7472 = vmatpush.bf16.xpose.msra.mxu0 0
        %7473 = vmatpush.bf16.xpose.msra.mxu0 0
        %7474 = vmatpush.bf16.xpose.msra.mxu0 0
        %7475 = vmatpush.bf16.xpose.msra.mxu0 %v7277
        %7476 = vmatpush.bf16.xpose.msra.mxu0 %v7261
        %7477 = vmatmul.bf16.gmra.mxu0 %v7146
        %v7478 = vpop.f32.mrf.mxu0
        %v7479 = vadd.f32 %v7466, %v7478
        %v7480 = vpop.f32.mrf.mxu0
        %7481 = vdwg.mxu0
        %7482 = vmatpush.bf16.xpose.msra.mxu0 0
        %7483 = vmatpush.bf16.xpose.msra.mxu0 0
        %7484 = vmatpush.bf16.xpose.msra.mxu0 0
        %7485 = vmatpush.bf16.xpose.msra.mxu0 0
        %7486 = vmatpush.bf16.xpose.msra.mxu0 0
        %7487 = vmatpush.bf16.xpose.msra.mxu0 0
        %7488 = vmatpush.bf16.xpose.msra.mxu0 %v7278
        %7489 = vmatpush.bf16.xpose.msra.mxu0 %v7262
        %7490 = vmatmul.bf16.gmra.mxu0 %v7147
        %v7491 = vpop.f32.mrf.mxu0
        %v7492 = vadd.f32 %v7479, %v7491
        %v7493 = vpop.f32.mrf.mxu0
        %7494 = vdwg.mxu0
        %7495 = vmatpush.bf16.xpose.msra.mxu0 0
        %7496 = vmatpush.bf16.xpose.msra.mxu0 0
        %7497 = vmatpush.bf16.xpose.msra.mxu0 0
        %7498 = vmatpush.bf16.xpose.msra.mxu0 0
        %7499 = vmatpush.bf16.xpose.msra.mxu0 0
        %7500 = vmatpush.bf16.xpose.msra.mxu0 0
        %7501 = vmatpush.bf16.xpose.msra.mxu0 %v7279
        %7502 = vmatpush.bf16.xpose.msra.mxu0 %v7263
        %7503 = vmatmul.bf16.gmra.mxu0 %v7148
        %v7504 = vpop.f32.mrf.mxu0
        %v7505 = vadd.f32 %v7492, %v7504
        %v7506 = vpop.f32.mrf.mxu0
        %7507 = vdwg.mxu0
        %7508 = vmatpush.bf16.xpose.msra.mxu0 0
        %7509 = vmatpush.bf16.xpose.msra.mxu0 0
        %7510 = vmatpush.bf16.xpose.msra.mxu0 0
        %7511 = vmatpush.bf16.xpose.msra.mxu0 0
        %7512 = vmatpush.bf16.xpose.msra.mxu0 0
        %7513 = vmatpush.bf16.xpose.msra.mxu0 0
        %7514 = vmatpush.bf16.xpose.msra.mxu0 %v7280
        %7515 = vmatpush.bf16.xpose.msra.mxu0 %v7264
        %7516 = vmatmul.bf16.gmra.mxu0 %v7149
        %v7517 = vpop.f32.mrf.mxu0
        %v7518 = vadd.f32 %v7505, %v7517
        %v7519 = vpop.f32.mrf.mxu0
        %7520 = vdwg.mxu0
        %v7521 = vadd.f32 %v7518, %v6640
        %s7522 = scalar_lea.vmem %s69, 1
        %v7523 = vld [vmem:[%s7522] sm:$0x1]
        %s7524 = scalar_lea.vmem %s71, 1
        %v7525 = vld [vmem:[%s7524] sm:$0x1]
        %v7526 = vsel %vm1298, %v7521, 0.0
        %7527 = vadd.xlane.f32.xlu0 %v7526
        %v7528 = vpop.xlane.xlu0 %7527
        %v7529 = vmul.f32 %v7528, %v1684
        %v7530 = vsub.f32 %v7521, %v7529
        %v7531 = vmul.f32 %v7530, %v7530
        %v7532 = vsel %vm1298, %v7531, 0.0
        %7533 = vadd.xlane.f32.xlu0 %v7532
        %v7534 = vpop.xlane.xlu0 %7533
        %v7535 = vmul.f32 %v7534, %v1684
        %v7536 = vadd.f32 %v7535, 1e-05
        %v7537 = vrsqrt.pop %v7536
        %v7538 = vmul.f32 %v7537, %v7536
        %v7539 = vmul.f32 %v7538, %v7537
        %v7540 = vmul.f32 0.5, %v7539
        %v7541 = vsub.f32 1.5, %v7540
        %v7542 = vmul.f32 %v7537, %v7541
        %vm7543 = vweird.f32 %v7536
        %vm7544 = vweird.f32 %v7537
        %vm7545 = vmor %vm7543, %vm7544
        %v7546 = vsel %vm7545, %v7537, %v7542
        %v7547 = vmul.f32 %v7530, %v7546
        %v7549 = vperm.slane %v7523, 0
        %v7551 = vmul.f32 %v7547, %v7549
        %v7553 = vperm.slane %v7525, 0
        %v7555 = vadd.f32 %v7551, %v7553
        %v7556 = vld [vmem:[%s73] sm:$0xf]
        %v7557 = vld [vmem:[%s73 + $0x4] sm:$0xf]
        %v7558 = vld [vmem:[%s73 + $0x8] sm:$0xf]
        %v7559 = vld [vmem:[%s73 + $0xc] sm:$0xf]
        %v7560 = vpack.c.bf16 %v7555, %v7555
        %v7561 = vld [vmem:[%s75] sm:$0x1]
        %v7563 = vperm.slane %v7561, 0
        %v7569 = vunpack.c.l.b16 %v7556
        %v7570 = vunpack.c.l.b16 %v7557
        %v7571 = vunpack.c.l.b16 %v7558
        %v7572 = vunpack.c.l.b16 %v7559
        %v7573 = vpack.c.b16 %v7570, %v7569
        %v7574 = vpack.c.b16 %v7572, %v7571
        %v7578 = vsel %vm1298, %v7560, 0
        %7580 = vmatpush.bf16.msra.mxu0 0
        %7581 = vmatpush.bf16.msra.mxu0 0
        %7582 = vmatpush.bf16.msra.mxu0 0
        %7583 = vmatpush.bf16.msra.mxu0 0
        %7584 = vmatpush.bf16.msra.mxu0 0
        %7585 = vmatpush.bf16.msra.mxu0 0
        %7586 = vmatpush.bf16.msra.mxu0 %v7574
        %7587 = vmatpush.bf16.msra.mxu0 %v7573
        %7588 = vmatmul.bf16.gmra.mxu0 %v7578
        %v7589 = vpop.f32.mrf.mxu0
        %v7590 = vadd.f32 %v7563, %v7589
        %v7591 = vpop.f32.mrf.mxu0
        %7592 = vdwg.mxu0
        %7593 = vst [vmem:[%s1261] sm:$0xff] %v7590
        %p7594 = scmp.lt.s32.totalorder %s91, 1
        %s7595 = scalar_select %p7594, %s91, 1
        %s7596 = smul.addr %s7595, 8
        %s7597 = scalar_lea.vmem %s77, %s7596
        // Predicated region
        $region189: #{transformer_forward.1} parent=171 // pred_check
          %p7598 = pneg %p927
        $region190: #{transformer_forward.1} parent=171 // pred_check_branch
          %7600 = sbr.rel (%p7598) target = $region192
        $region191: #{transformer_forward.1} parent=171 // pred_region
          _
        $region192: #{transformer_forward.1} parent=171 // pred_fallthru
          _
      $region172: #{transformer_forward.1} parent=5 // pred_fallthru
        _
      %p7601 = scmp.le.s32.totalorder 2, %s86
      // Predicated region
      $region193: #{transformer_forward.1} parent=5 // pred_check
        %p7602 = pneg %p7601
      $region194: #{transformer_forward.1} parent=5 // pred_check_branch
        %7604 = sbr.rel (%p7602) target = $region196
      $region195: #{transformer_forward.1} parent=5 // pred_region
        %s7605 = ssub.s32 %s86, 2
        // Predicated region
        $region197: #{transformer_forward.1} parent=195 // pred_check
          %p7606 = pneg %p933
        $region198: #{transformer_forward.1} parent=195 // pred_check_branch
          %7608 = sbr.rel (%p7606) target = $region200
        $region199: #{transformer_forward.1} parent=195 // pred_region
          %p7609 = scmp.lt.s32.totalorder %s92, 1
          %s7610 = scalar_select %p7609, %s92, 1
          %s7611 = smul.addr %s7610, 8
          %s7612 = scalar_lea.vmem %s77, %s7611
        $region200: #{transformer_forward.1} parent=195 // pred_fallthru
          _
      $region196: #{transformer_forward.1} parent=5 // pred_fallthru
        _
    $region6: #{transformer_forward.1} parent=1 // loop_footer
      %s90 = sadd.s32 1, %s86
    $region7: #{transformer_forward.1} parent=1 // loop_footer_branch
      %85 = sbr.rel target = $region3
    $region8: #{transformer_forward.1} parent=1 // loop_exit
      _
    %7613 = vsyncpa [#allocation3], 1
    %s7614 = scalar_lea.sflag [#allocation3], 1
    %7615 = vsyncpa %s7614, 1
    %7616 = vsyncpa [#allocation5], 1
    %7617 = vsyncpa [#allocation8], 1

</llo_original>
